<compile_context>
chip_gen: v7x
topology: tpu7x:2x2x1
jax: 0.10.0
libtpu: 0.0.40
codegen_flags: <defaults>
</compile_context>

<pallas_src>
import functools

import jax
import jax.numpy as jnp
from jax import lax
from jax.experimental import pallas as pl
from jax.experimental.pallas import tpu as pltpu

_F32 = jnp.float32


def _rmsnorm(v_f32, w_ref, eps):
    # lane-axis reduce (XLU) + rsqrt (EUP) -> cheap
    var = jnp.mean(v_f32 * v_f32, axis=-1, keepdims=True)
    return v_f32 * lax.rsqrt(var + eps) * w_ref[...].astype(_F32)


# --------------------------------------------------------------------------
# Kernel 1: input RMSNorm + packed QKV projection + per-head q/k RMSNorm.
# Runs once per token tile (grid = (B, S/block)), so no redundant work.
# Outputs Q/K/V in head-major (B, H, S, Dh) layout so the attention kernel
# gets natural (H, tile, Dh) blocks with no in-loop relayout.
# --------------------------------------------------------------------------
def _qkv_proj_kernel(
    x_ref,       # (ts, D)   hidden_states rows for this tile
    ln1_ref,     # (1, D)    input_layernorm weight (f32)
    wqkv_ref,    # (D, 3D)   packed [Wq | Wk | Wv]   (compute dtype)
    qn_ref,      # (1, Dh)   per-head q-norm weight (f32)
    kn_ref,      # (1, Dh)   per-head k-norm weight (f32)
    q_out,       # (H, ts, Dh)
    k_out,       # (H, ts, Dh)
    v_out,       # (H, ts, Dh)
    *,
    num_heads,
    head_dim,
    dim,
    eps,
    sm_scale,
    compute_dtype,
):
    x = x_ref[...].astype(_F32)                                   # (ts, D)
    xn = _rmsnorm(x, ln1_ref, eps).astype(compute_dtype)
    # single MXU pass for Q, K and V (fused N = 3D)
    qkv = jnp.dot(xn, wqkv_ref[...], preferred_element_type=_F32)  # (ts, 3D)
    qn_w = qn_ref[...].astype(_F32)
    kn_w = kn_ref[...].astype(_F32)
    # Per-head norm + store (cold path: once per token, not per q-tile).
    for h in range(num_heads):
        lo = h * head_dim
        qh = qkv[:, lo:lo + head_dim]
        qh = qh * lax.rsqrt(jnp.mean(qh * qh, axis=-1, keepdims=True) + eps) * qn_w
        q_out[h] = (qh * sm_scale).astype(q_out.dtype)
        kh = qkv[:, dim + lo:dim + lo + head_dim]
        kh = kh * lax.rsqrt(jnp.mean(kh * kh, axis=-1, keepdims=True) + eps) * kn_w
        k_out[h] = kh.astype(k_out.dtype)
        v_out[h] = qkv[:, 2 * dim + lo:2 * dim + lo + head_dim].astype(v_out.dtype)


# --------------------------------------------------------------------------
# Kernel 2: flash attention (online softmax, head-batched) + O projection +
# residual + post-norm + chunked SwiGLU MLP + residual.
# grid = (B, q_tiles, kv_tiles); kv axis last and "arbitrary".
# --------------------------------------------------------------------------
def _attn_mlp_kernel(
    x_ref,       # (tq, D)        original hidden rows (residual #1)
    q_ref,       # (H, tq, Dh)    normed + scaled Q   (compute dtype)
    k_ref,       # (H, tk, Dh)    normed K            (compute dtype)
    v_ref,       # (H, tk, Dh)    V                   (compute dtype)
    wo_ref,      # (D, D)
    ln2_ref,     # (1, D)
    wgu_ref,     # (D, 2*Hmlp)    per-chunk packed [gate_c | up_c] blocks
    wdn_ref,     # (Hmlp, D)
    out_ref,     # (tq, D)
    m_scr,       # VMEM (H, tq, 1)   running max (f32)
    l_scr,       # VMEM (H, tq, 1)   running sum (f32)
    acc_scr,     # VMEM (H, tq, Dh)  running PV accumulator (f32)
    *,
    num_heads,
    head_dim,
    dim,
    mlp_hidden,
    mlp_chunk,
    eps,
    compute_dtype,
):
    ki = pl.program_id(2)
    nk = pl.num_programs(2)

    @pl.when(ki == 0)
    def _init():
        m_scr[...] = jnp.full(m_scr.shape, -jnp.inf, dtype=m_scr.dtype)
        l_scr[...] = jnp.zeros(l_scr.shape, dtype=l_scr.dtype)
        acc_scr[...] = jnp.zeros(acc_scr.shape, dtype=acc_scr.dtype)

    # ---- head-batched online-softmax update (hot path) --------------------
    q = q_ref[...]                                                # (H, tq, Dh)
    k = k_ref[...]                                                # (H, tk, Dh)
    v = v_ref[...]                                                # (H, tk, Dh)
    s = jnp.einsum("hqd,hkd->hqk", q, k,
                   preferred_element_type=_F32)                   # (H, tq, tk)
    m_prev = m_scr[...]
    m_new = jnp.maximum(m_prev, jnp.max(s, axis=-1, keepdims=True))
    alpha = jnp.exp(m_prev - m_new)
    p = jnp.exp(s - m_new)                                        # (H, tq, tk)
    l_scr[...] = alpha * l_scr[...] + jnp.sum(p, axis=-1, keepdims=True)
    acc_scr[...] = alpha * acc_scr[...] + jnp.einsum(
        "hqk,hkd->hqd", p.astype(compute_dtype), v,
        preferred_element_type=_F32)
    m_scr[...] = m_new

    # ---- finalize at last kv tile -----------------------------------------
    @pl.when(ki == nk - 1)
    def _finalize():
        inv_l = pl.reciprocal(l_scr[...], approx=True)            # (H, tq, 1)
        attn3 = acc_scr[...] * inv_l                              # (H, tq, Dh)
        attn = jnp.concatenate(
            [attn3[h] for h in range(num_heads)], axis=-1
        ).astype(compute_dtype)                                   # (tq, D)
        o = jnp.dot(attn, wo_ref[...], preferred_element_type=_F32)
        h1 = x_ref[...].astype(_F32) + o                          # residual #1

        h1n = _rmsnorm(h1, ln2_ref, eps).astype(compute_dtype)
        # SwiGLU MLP, chunked over mlp_hidden: live intermediate is
        # (tq, 2*mlp_chunk) instead of (tq, 2*mlp_hidden).
        dn = jnp.zeros((h1n.shape[0], dim), _F32)
        for c in range(mlp_hidden // mlp_chunk):
            base = 2 * c * mlp_chunk
            gu = jnp.dot(h1n, wgu_ref[:, base:base + 2 * mlp_chunk],
                         preferred_element_type=_F32)             # (tq, 2c)
            g = gu[:, :mlp_chunk]
            u = gu[:, mlp_chunk:]
            act = (g * jax.nn.sigmoid(g) * u).astype(compute_dtype)
            dn = dn + jnp.dot(act, wdn_ref[c * mlp_chunk:(c + 1) * mlp_chunk, :],
                              preferred_element_type=_F32)
        out_ref[...] = (h1 + dn).astype(out_ref.dtype)            # residual #2


# --------------------------------------------------------------------------
# Wrapper
# --------------------------------------------------------------------------
def transformer_block(
    x,
    params,
    *,
    num_heads,
    eps=1e-6,
    block_q=None,
    block_kv=None,
    block_proj=None,
    mlp_chunk=None,
    compute_dtype=jnp.bfloat16,
):
    B, S, D = x.shape
    assert D % num_heads == 0
    head_dim = D // num_heads
    mlp_hidden = params["w_gate"].shape[1]

    # ---- hardware-aware defaults (v5e/v6e: 128 MiB VMEM; v7x: 64 MiB) -----
    try:
        vmem_cap = int(pltpu.get_tpu_info().vmem_capacity_bytes)
    except Exception:
        vmem_cap = 128 * 1024 * 1024
    small_vmem = vmem_cap <= 64 * 1024 * 1024
    vmem_limit = int(min(vmem_cap - 16 * 1024 * 1024, 100 * 1024 * 1024))

    block_q = block_q or min(S, 512)
    block_kv = block_kv or min(S, 256 if small_vmem else 512)
    block_proj = block_proj or min(S, 512)
    if mlp_chunk is None:
        target = 512 if small_vmem else 1024
        mlp_chunk = mlp_hidden
        for cand in (target, target // 2, 256, 128):
            if mlp_hidden % cand == 0:
                mlp_chunk = cand
                break

    assert S % block_q == 0 and S % block_kv == 0 and S % block_proj == 0
    assert D % 128 == 0 and mlp_hidden % 128 == 0 and head_dim % 8 == 0
    # bf16 sublane packing granule is 16
    assert block_q % 16 == 0 and block_kv % 16 == 0 and block_proj % 16 == 0
    assert mlp_hidden % mlp_chunk == 0 and mlp_chunk % 128 == 0

    cd = compute_dtype
    xc = x.astype(cd)
    w_qkv = jnp.concatenate(
        [params["w_q"], params["w_k"], params["w_v"]], axis=1).astype(cd)
    w_o = params["w_o"].astype(cd)
    w_down = params["w_down"].astype(cd)
    # pack gate/up per MLP chunk: [gate_c0 | up_c0 | gate_c1 | up_c1 | ...]
    gu_blocks = []
    for c0 in range(0, mlp_hidden, mlp_chunk):
        gu_blocks.append(params["w_gate"][:, c0:c0 + mlp_chunk])
        gu_blocks.append(params["w_up"][:, c0:c0 + mlp_chunk])
    w_gu = jnp.concatenate(gu_blocks, axis=1).astype(cd)
    ln1 = params["ln1_w"].reshape(1, D).astype(jnp.float32)
    ln2 = params["ln2_w"].reshape(1, D).astype(jnp.float32)
    qn = params["q_norm_w"].reshape(1, head_dim).astype(jnp.float32)
    kn = params["k_norm_w"].reshape(1, head_dim).astype(jnp.float32)

    proj_kernel = functools.partial(
        _qkv_proj_kernel, num_heads=num_heads, head_dim=head_dim, dim=D,
        eps=eps, sm_scale=head_dim ** -0.5, compute_dtype=cd)
    attn_kernel = functools.partial(
        _attn_mlp_kernel, num_heads=num_heads, head_dim=head_dim, dim=D,
        mlp_hidden=mlp_hidden, mlp_chunk=mlp_chunk, eps=eps, compute_dtype=cd)

    qkv_cost = pl.CostEstimate(
        flops=int(2 * B * S * D * 3 * D),
        transcendentals=0,
        bytes_accessed=int((B * S * D + D * 3 * D + 3 * B * S * D) * 2))
    attn_cost = pl.CostEstimate(
        flops=int(4 * B * S * S * D + 2 * B * S * D * D
                  + 6 * B * S * D * mlp_hidden),
        transcendentals=int(B * num_heads * S * S + 2 * B * S * mlp_hidden),
        bytes_accessed=int((5 * B * S * D + D * D + 3 * D * mlp_hidden) * 2))

    def run(single_buffer):
        def wspec(shape, n_grid):
            idx = (lambda b, si: (0, 0)) if n_grid == 2 else \
                  (lambda b, qi, ki: (0, 0))
            if single_buffer:
                # constant index_map + 1 buffer: weight stays VMEM-resident
                # with half the footprint of the default double buffering.
                return pl.BlockSpec(shape, idx, pipeline_mode=pl.Buffered(1))
            return pl.BlockSpec(shape, idx)

        # ---- pass 1: QKV projection (once over tokens) ---------------------
        qkv_out_spec = pl.BlockSpec((None, num_heads, block_proj, head_dim),
                                    lambda b, si: (b, 0, si, 0))
        q_hbm, k_hbm, v_hbm = pl.pallas_call(
            proj_kernel,
            out_shape=(jax.ShapeDtypeStruct((B, num_heads, S, head_dim), cd),
                       jax.ShapeDtypeStruct((B, num_heads, S, head_dim), cd),
                       jax.ShapeDtypeStruct((B, num_heads, S, head_dim), cd)),
            grid_spec=pltpu.PrefetchScalarGridSpec(
                num_scalar_prefetch=0,
                grid=(B, S // block_proj),
                in_specs=[
                    pl.BlockSpec((None, block_proj, D), lambda b, si: (b, si, 0)),
                    wspec((1, D), 2),
                    wspec((D, 3 * D), 2),
                    wspec((1, head_dim), 2),
                    wspec((1, head_dim), 2),
                ],
                out_specs=[qkv_out_spec, qkv_out_spec, qkv_out_spec],
            ),
            compiler_params=pltpu.CompilerParams(
                dimension_semantics=("parallel", "parallel"),
                vmem_limit_bytes=vmem_limit),
            cost_estimate=qkv_cost,
        )(xc, ln1, w_qkv, qn, kn)

        # ---- pass 2: flash attention + O proj + residuals + MLP ------------
        return pl.pallas_call(
            attn_kernel,
            out_shape=jax.ShapeDtypeStruct((B, S, D), cd),
            grid_spec=pltpu.PrefetchScalarGridSpec(
                num_scalar_prefetch=0,
                grid=(B, S // block_q, S // block_kv),
                in_specs=[
                    pl.BlockSpec((None, block_q, D),
                                 lambda b, qi, ki: (b, qi, 0)),
                    pl.BlockSpec((None, num_heads, block_q, head_dim),
                                 lambda b, qi, ki: (b, 0, qi, 0)),
                    pl.BlockSpec((None, num_heads, block_kv, head_dim),
                                 lambda b, qi, ki: (b, 0, ki, 0)),
                    pl.BlockSpec((None, num_heads, block_kv, head_dim),
                                 lambda b, qi, ki: (b, 0, ki, 0)),
                    wspec((D, D), 3),
                    wspec((1, D), 3),
                    wspec((D, 2 * mlp_hidden), 3),
                    wspec((mlp_hidden, D), 3),
                ],
                out_specs=pl.BlockSpec((None, block_q, D),
                                       lambda b, qi, ki: (b, qi, 0)),
                scratch_shapes=[
                    pltpu.VMEM((num_heads, block_q, 1), jnp.float32),        # m
                    pltpu.VMEM((num_heads, block_q, 1), jnp.float32),        # l
                    pltpu.VMEM((num_heads, block_q, head_dim), jnp.float32),  # acc
                ],
            ),
            compiler_params=pltpu.CompilerParams(
                dimension_semantics=("parallel", "parallel", "arbitrary"),
                vmem_limit_bytes=vmem_limit),
            cost_estimate=attn_cost,
        )(xc, q_hbm, k_hbm, v_hbm, w_o, ln2, w_gu, w_down)

    try:
        return run(single_buffer=True)
    except Exception:
        # pipeline_mode=pl.Buffered(1) unsupported on this JAX/Mosaic version.
        return run(single_buffer=False)


# --------------------------------------------------------------------------
# Pure-JAX reference (same mixed bf16/f32 precision strategy as the kernels)
# --------------------------------------------------------------------------
def ref_block(x, params, *, num_heads, eps=1e-6, compute_dtype=jnp.bfloat16):
    f32 = jnp.float32
    cd = compute_dtype
    B, S, D = x.shape
    Dh = D // num_heads

    def rms(v, w):
        vf = v.astype(f32)
        var = jnp.mean(vf * vf, axis=-1, keepdims=True)
        return vf * jax.lax.rsqrt(var + eps) * w.astype(f32)

    def mm(a, w):
        return jnp.matmul(a.astype(cd), w.astype(cd), preferred_element_type=f32)

    xc = x.astype(cd)
    resid = xc.astype(f32)
    hn = rms(xc, params["ln1_w"]).astype(cd)
    q = mm(hn, params["w_q"]).reshape(B, S, num_heads, Dh)
    k = mm(hn, params["w_k"]).reshape(B, S, num_heads, Dh)
    v = mm(hn, params["w_v"]).reshape(B, S, num_heads, Dh)
    q = rms(q, params["q_norm_w"]) * (Dh ** -0.5)
    k = rms(k, params["k_norm_w"])
    s = jnp.einsum("bqhd,bkhd->bhqk", q.astype(cd), k.astype(cd),
                   preferred_element_type=f32)
    p = jax.nn.softmax(s, axis=-1)
    attn = jnp.einsum("bhqk,bkhd->bqhd", p.astype(cd), v.astype(cd),
                      preferred_element_type=f32).reshape(B, S, D)
    o = mm(attn, params["w_o"])
    h1 = resid + o
    h1n = rms(h1, params["ln2_w"]).astype(cd)
    gate = mm(h1n, params["w_gate"])
    up = mm(h1n, params["w_up"])
    act = gate * jax.nn.sigmoid(gate) * up
    dn = mm(act, params["w_down"])
    return h1 + dn  # f32 (no final cast; used only for comparison)


# --------------------------------------------------------------------------
# Demo / smoke test
# --------------------------------------------------------------------------
if __name__ == "__main__":
    B, S, D = 2, 256, 256
    num_heads = 2
    head_dim = D // num_heads
    mlp_hidden = int(D * 4.0)

    key = jax.random.PRNGKey(0)
    ks = jax.random.split(key, 12)

    def w(k, shape, fan_in):
        return jax.random.normal(k, shape, jnp.float32) * (fan_in ** -0.5)

    x = jax.random.normal(ks[0], (B, S, D), jnp.float32)
    params = {
        "ln1_w": 1.0 + 0.1 * jax.random.normal(ks[1], (D,), jnp.float32),
        "w_q": w(ks[2], (D, D), D),
        "w_k": w(ks[3], (D, D), D),
        "w_v": w(ks[4], (D, D), D),
        "q_norm_w": 1.0 + 0.1 * jax.random.normal(ks[5], (head_dim,), jnp.float32),
        "k_norm_w": 1.0 + 0.1 * jax.random.normal(ks[6], (head_dim,), jnp.float32),
        "w_o": w(ks[7], (D, D), D),
        "ln2_w": 1.0 + 0.1 * jax.random.normal(ks[8], (D,), jnp.float32),
        "w_gate": w(ks[9], (D, mlp_hidden), D),
        "w_up": w(ks[10], (D, mlp_hidden), D),
        "w_down": w(ks[11], (mlp_hidden, D), mlp_hidden),
    }

    out = transformer_block(x, params, num_heads=num_heads,
                            block_q=128, block_kv=128)
    out = jax.block_until_ready(out)

    ref = jax.block_until_ready(ref_block(x, params, num_heads=num_heads))
    out_f32 = out.astype(jnp.float32)
    rel_err = float(jnp.max(jnp.abs(out_f32 - ref) / (1.0 + jnp.abs(ref))))
    assert bool(jnp.isfinite(out_f32).all()), "non-finite values in kernel output"
    assert rel_err < 2e-2, f"kernel/reference mismatch: rel_err={rel_err}"

    print("KERNEL_OK")
</pallas_src>

<mosaic_0001>
module attributes {stable_mosaic.version = 11 : i64} {
  func.func @_qkv_proj_kernel(%arg0: i32, %arg1: i32, %arg2: memref<1x256x256xbf16, #tpu.memory_space<vmem>>, %arg3: memref<1x256xf32, #tpu.memory_space<vmem>>, %arg4: memref<256x768xbf16, #tpu.memory_space<vmem>>, %arg5: memref<1x128xf32, #tpu.memory_space<vmem>>, %arg6: memref<1x128xf32, #tpu.memory_space<vmem>>, %arg7: memref<1x2x256x128xbf16, #tpu.memory_space<vmem>>, %arg8: memref<1x2x256x128xbf16, #tpu.memory_space<vmem>>, %arg9: memref<1x2x256x128xbf16, #tpu.memory_space<vmem>>) attributes {dimension_semantics = [#tpu.dimension_semantics<parallel>, #tpu.dimension_semantics<parallel>], iteration_bounds = array<i64: 2, 1>, scalar_prefetch = 0 : i64, scratch_operands = 0 : i64, tpu.core_type = #tpu.core_type<tc>, window_params = [{transform_indices = @transform_0, window_bounds = array<i64: 1, 256, 256>}, {pipeline_mode = #tpu.pipeline_mode<synchronous>, transform_indices = @transform_1, window_bounds = array<i64: 1, 256>}, {pipeline_mode = #tpu.pipeline_mode<synchronous>, transform_indices = @transform_2, window_bounds = array<i64: 256, 768>}, {pipeline_mode = #tpu.pipeline_mode<synchronous>, transform_indices = @transform_3, window_bounds = array<i64: 1, 128>}, {pipeline_mode = #tpu.pipeline_mode<synchronous>, transform_indices = @transform_4, window_bounds = array<i64: 1, 128>}, {transform_indices = @transform_5, window_bounds = array<i64: 1, 2, 256, 128>}, {transform_indices = @transform_6, window_bounds = array<i64: 1, 2, 256, 128>}, {transform_indices = @transform_7, window_bounds = array<i64: 1, 2, 256, 128>}]} {
    %c0 = arith.constant 0 : index
    %c0_0 = arith.constant 0 : index
    %c0_1 = arith.constant 0 : index
    %0 = vector.load %arg2[%c0, %c0_0, %c0_1] : memref<1x256x256xbf16, #tpu.memory_space<vmem>>, vector<1x256x256xbf16>
    %1 = vector.shape_cast %0 : vector<1x256x256xbf16> to vector<256x256xbf16>
    %2 = arith.extf %1 : vector<256x256xbf16> to vector<256x256xf32>
    %3 = arith.mulf %2, %2 : vector<256x256xf32>
    %cst = arith.constant dense<0.000000e+00> : vector<256xf32>
    %4 = vector.multi_reduction <add>, %3, %cst [1] : vector<256x256xf32> to vector<256xf32>
    %5 = vector.shape_cast %4 : vector<256xf32> to vector<256x1xf32>
    %cst_2 = arith.constant 2.560000e+02 : f32
    %6 = vector.broadcast %cst_2 : f32 to vector<256x1xf32>
    %7 = arith.divf %5, %6 : vector<256x1xf32>
    %cst_3 = arith.constant 9.99999997E-7 : f32
    %8 = vector.broadcast %cst_3 : f32 to vector<256x1xf32>
    %9 = arith.addf %7, %8 : vector<256x1xf32>
    %10 = math.rsqrt %9 : vector<256x1xf32>
    %11 = vector.broadcast %10 : vector<256x1xf32> to vector<256x256xf32>
    %12 = arith.mulf %2, %11 : vector<256x256xf32>
    %c0_4 = arith.constant 0 : index
    %c0_5 = arith.constant 0 : index
    %13 = vector.load %arg3[%c0_4, %c0_5] : memref<1x256xf32, #tpu.memory_space<vmem>>, vector<1x256xf32>
    %14 = vector.broadcast %13 : vector<1x256xf32> to vector<256x256xf32>
    %15 = arith.mulf %12, %14 : vector<256x256xf32>
    %16 = arith.truncf %15 : vector<256x256xf32> to vector<256x256xbf16>
    %c0_6 = arith.constant 0 : index
    %c0_7 = arith.constant 0 : index
    %17 = vector.load %arg4[%c0_6, %c0_7] : memref<256x768xbf16, #tpu.memory_space<vmem>>, vector<256x768xbf16>
    %cst_8 = arith.constant dense<0.000000e+00> : vector<256x768xf32>
    %18 = tpu.matmul %16, %17, %cst_8 {dimension_numbers = #tpu.dot_dimension_numbers<[1], [0], [0], [1], [0, 0, 1, 1], [], []>} : vector<256x256xbf16>, vector<256x768xbf16>, vector<256x768xf32> -> vector<256x768xf32>
    %c0_9 = arith.constant 0 : index
    %c0_10 = arith.constant 0 : index
    %19 = vector.load %arg5[%c0_9, %c0_10] : memref<1x128xf32, #tpu.memory_space<vmem>>, vector<1x128xf32>
    %c0_11 = arith.constant 0 : index
    %c0_12 = arith.constant 0 : index
    %20 = vector.load %arg6[%c0_11, %c0_12] : memref<1x128xf32, #tpu.memory_space<vmem>>, vector<1x128xf32>
    %21 = vector.extract_strided_slice %18 {offsets = [0, 0], sizes = [256, 128], strides = [1, 1]} : vector<256x768xf32> to vector<256x128xf32>
    %22 = arith.mulf %21, %21 : vector<256x128xf32>
    %cst_13 = arith.constant dense<0.000000e+00> : vector<256xf32>
    %23 = vector.multi_reduction <add>, %22, %cst_13 [1] : vector<256x128xf32> to vector<256xf32>
    %24 = vector.shape_cast %23 : vector<256xf32> to vector<256x1xf32>
    %cst_14 = arith.constant 1.280000e+02 : f32
    %25 = vector.broadcast %cst_14 : f32 to vector<256x1xf32>
    %26 = arith.divf %24, %25 : vector<256x1xf32>
    %cst_15 = arith.constant 9.99999997E-7 : f32
    %27 = vector.broadcast %cst_15 : f32 to vector<256x1xf32>
    %28 = arith.addf %26, %27 : vector<256x1xf32>
    %29 = math.rsqrt %28 : vector<256x1xf32>
    %30 = vector.broadcast %29 : vector<256x1xf32> to vector<256x128xf32>
    %31 = arith.mulf %21, %30 : vector<256x128xf32>
    %32 = vector.broadcast %19 : vector<1x128xf32> to vector<256x128xf32>
    %33 = arith.mulf %31, %32 : vector<256x128xf32>
    %cst_16 = arith.constant 0.0883883461 : f32
    %34 = vector.broadcast %cst_16 : f32 to vector<256x128xf32>
    %35 = arith.mulf %33, %34 : vector<256x128xf32>
    %36 = arith.truncf %35 : vector<256x128xf32> to vector<256x128xbf16>
    %c0_17 = arith.constant 0 : index
    %c0_18 = arith.constant 0 : index
    %c0_19 = arith.constant 0 : index
    %c0_20 = arith.constant 0 : index
    %37 = vector.load %arg7[%c0_17, %c0_18, %c0_19, %c0_20] : memref<1x2x256x128xbf16, #tpu.memory_space<vmem>>, vector<1x1x256x128xbf16>
    %38 = vector.shape_cast %37 : vector<1x1x256x128xbf16> to vector<256x128xbf16>
    %39 = vector.shape_cast %36 : vector<256x128xbf16> to vector<1x1x256x128xbf16>
    tpu.vector_store %arg7[%c0_17, %c0_18, %c0_19, %c0_20], %39 {strides = array<i32>} : memref<1x2x256x128xbf16, #tpu.memory_space<vmem>>, vector<1x1x256x128xbf16>,
    %40 = vector.extract_strided_slice %18 {offsets = [0, 256], sizes = [256, 128], strides = [1, 1]} : vector<256x768xf32> to vector<256x128xf32>
    %41 = arith.mulf %40, %40 : vector<256x128xf32>
    %cst_21 = arith.constant dense<0.000000e+00> : vector<256xf32>
    %42 = vector.multi_reduction <add>, %41, %cst_21 [1] : vector<256x128xf32> to vector<256xf32>
    %43 = vector.shape_cast %42 : vector<256xf32> to vector<256x1xf32>
    %cst_22 = arith.constant 1.280000e+02 : f32
    %44 = vector.broadcast %cst_22 : f32 to vector<256x1xf32>
    %45 = arith.divf %43, %44 : vector<256x1xf32>
    %cst_23 = arith.constant 9.99999997E-7 : f32
    %46 = vector.broadcast %cst_23 : f32 to vector<256x1xf32>
    %47 = arith.addf %45, %46 : vector<256x1xf32>
    %48 = math.rsqrt %47 : vector<256x1xf32>
    %49 = vector.broadcast %48 : vector<256x1xf32> to vector<256x128xf32>
    %50 = arith.mulf %40, %49 : vector<256x128xf32>
    %51 = vector.broadcast %20 : vector<1x128xf32> to vector<256x128xf32>
    %52 = arith.mulf %50, %51 : vector<256x128xf32>
    %53 = arith.truncf %52 : vector<256x128xf32> to vector<256x128xbf16>
    %c0_24 = arith.constant 0 : index
    %c0_25 = arith.constant 0 : index
    %c0_26 = arith.constant 0 : index
    %c0_27 = arith.constant 0 : index
    %54 = vector.load %arg8[%c0_24, %c0_25, %c0_26, %c0_27] : memref<1x2x256x128xbf16, #tpu.memory_space<vmem>>, vector<1x1x256x128xbf16>
    %55 = vector.shape_cast %54 : vector<1x1x256x128xbf16> to vector<256x128xbf16>
    %56 = vector.shape_cast %53 : vector<256x128xbf16> to vector<1x1x256x128xbf16>
    tpu.vector_store %arg8[%c0_24, %c0_25, %c0_26, %c0_27], %56 {strides = array<i32>} : memref<1x2x256x128xbf16, #tpu.memory_space<vmem>>, vector<1x1x256x128xbf16>,
    %57 = vector.extract_strided_slice %18 {offsets = [0, 512], sizes = [256, 128], strides = [1, 1]} : vector<256x768xf32> to vector<256x128xf32>
    %58 = arith.truncf %57 : vector<256x128xf32> to vector<256x128xbf16>
    %c0_28 = arith.constant 0 : index
    %c0_29 = arith.constant 0 : index
    %c0_30 = arith.constant 0 : index
    %c0_31 = arith.constant 0 : index
    %59 = vector.load %arg9[%c0_28, %c0_29, %c0_30, %c0_31] : memref<1x2x256x128xbf16, #tpu.memory_space<vmem>>, vector<1x1x256x128xbf16>
    %60 = vector.shape_cast %59 : vector<1x1x256x128xbf16> to vector<256x128xbf16>
    %61 = vector.shape_cast %58 : vector<256x128xbf16> to vector<1x1x256x128xbf16>
    tpu.vector_store %arg9[%c0_28, %c0_29, %c0_30, %c0_31], %61 {strides = array<i32>} : memref<1x2x256x128xbf16, #tpu.memory_space<vmem>>, vector<1x1x256x128xbf16>,
    %62 = vector.extract_strided_slice %18 {offsets = [0, 128], sizes = [256, 128], strides = [1, 1]} : vector<256x768xf32> to vector<256x128xf32>
    %63 = arith.mulf %62, %62 : vector<256x128xf32>
    %cst_32 = arith.constant dense<0.000000e+00> : vector<256xf32>
    %64 = vector.multi_reduction <add>, %63, %cst_32 [1] : vector<256x128xf32> to vector<256xf32>
    %65 = vector.shape_cast %64 : vector<256xf32> to vector<256x1xf32>
    %cst_33 = arith.constant 1.280000e+02 : f32
    %66 = vector.broadcast %cst_33 : f32 to vector<256x1xf32>
    %67 = arith.divf %65, %66 : vector<256x1xf32>
    %cst_34 = arith.constant 9.99999997E-7 : f32
    %68 = vector.broadcast %cst_34 : f32 to vector<256x1xf32>
    %69 = arith.addf %67, %68 : vector<256x1xf32>
    %70 = math.rsqrt %69 : vector<256x1xf32>
    %71 = vector.broadcast %70 : vector<256x1xf32> to vector<256x128xf32>
    %72 = arith.mulf %62, %71 : vector<256x128xf32>
    %73 = vector.broadcast %19 : vector<1x128xf32> to vector<256x128xf32>
    %74 = arith.mulf %72, %73 : vector<256x128xf32>
    %cst_35 = arith.constant 0.0883883461 : f32
    %75 = vector.broadcast %cst_35 : f32 to vector<256x128xf32>
    %76 = arith.mulf %74, %75 : vector<256x128xf32>
    %77 = arith.truncf %76 : vector<256x128xf32> to vector<256x128xbf16>
    %c0_36 = arith.constant 0 : index
    %c1 = arith.constant 1 : index
    %c0_37 = arith.constant 0 : index
    %c0_38 = arith.constant 0 : index
    %78 = vector.load %arg7[%c0_36, %c1, %c0_37, %c0_38] : memref<1x2x256x128xbf16, #tpu.memory_space<vmem>>, vector<1x1x256x128xbf16>
    %79 = vector.shape_cast %78 : vector<1x1x256x128xbf16> to vector<256x128xbf16>
    %80 = vector.shape_cast %77 : vector<256x128xbf16> to vector<1x1x256x128xbf16>
    tpu.vector_store %arg7[%c0_36, %c1, %c0_37, %c0_38], %80 {strides = array<i32>} : memref<1x2x256x128xbf16, #tpu.memory_space<vmem>>, vector<1x1x256x128xbf16>,
    %81 = vector.extract_strided_slice %18 {offsets = [0, 384], sizes = [256, 128], strides = [1, 1]} : vector<256x768xf32> to vector<256x128xf32>
    %82 = arith.mulf %81, %81 : vector<256x128xf32>
    %cst_39 = arith.constant dense<0.000000e+00> : vector<256xf32>
    %83 = vector.multi_reduction <add>, %82, %cst_39 [1] : vector<256x128xf32> to vector<256xf32>
    %84 = vector.shape_cast %83 : vector<256xf32> to vector<256x1xf32>
    %cst_40 = arith.constant 1.280000e+02 : f32
    %85 = vector.broadcast %cst_40 : f32 to vector<256x1xf32>
    %86 = arith.divf %84, %85 : vector<256x1xf32>
    %cst_41 = arith.constant 9.99999997E-7 : f32
    %87 = vector.broadcast %cst_41 : f32 to vector<256x1xf32>
    %88 = arith.addf %86, %87 : vector<256x1xf32>
    %89 = math.rsqrt %88 : vector<256x1xf32>
    %90 = vector.broadcast %89 : vector<256x1xf32> to vector<256x128xf32>
    %91 = arith.mulf %81, %90 : vector<256x128xf32>
    %92 = vector.broadcast %20 : vector<1x128xf32> to vector<256x128xf32>
    %93 = arith.mulf %91, %92 : vector<256x128xf32>
    %94 = arith.truncf %93 : vector<256x128xf32> to vector<256x128xbf16>
    %c0_42 = arith.constant 0 : index
    %c1_43 = arith.constant 1 : index
    %c0_44 = arith.constant 0 : index
    %c0_45 = arith.constant 0 : index
    %95 = vector.load %arg8[%c0_42, %c1_43, %c0_44, %c0_45] : memref<1x2x256x128xbf16, #tpu.memory_space<vmem>>, vector<1x1x256x128xbf16>
    %96 = vector.shape_cast %95 : vector<1x1x256x128xbf16> to vector<256x128xbf16>
    %97 = vector.shape_cast %94 : vector<256x128xbf16> to vector<1x1x256x128xbf16>
    tpu.vector_store %arg8[%c0_42, %c1_43, %c0_44, %c0_45], %97 {strides = array<i32>} : memref<1x2x256x128xbf16, #tpu.memory_space<vmem>>, vector<1x1x256x128xbf16>,
    %98 = vector.extract_strided_slice %18 {offsets = [0, 640], sizes = [256, 128], strides = [1, 1]} : vector<256x768xf32> to vector<256x128xf32>
    %99 = arith.truncf %98 : vector<256x128xf32> to vector<256x128xbf16>
    %c0_46 = arith.constant 0 : index
    %c1_47 = arith.constant 1 : index
    %c0_48 = arith.constant 0 : index
    %c0_49 = arith.constant 0 : index
    %100 = vector.load %arg9[%c0_46, %c1_47, %c0_48, %c0_49] : memref<1x2x256x128xbf16, #tpu.memory_space<vmem>>, vector<1x1x256x128xbf16>
    %101 = vector.shape_cast %100 : vector<1x1x256x128xbf16> to vector<256x128xbf16>
    %102 = vector.shape_cast %99 : vector<256x128xbf16> to vector<1x1x256x128xbf16>
    tpu.vector_store %arg9[%c0_46, %c1_47, %c0_48, %c0_49], %102 {strides = array<i32>} : memref<1x2x256x128xbf16, #tpu.memory_space<vmem>>, vector<1x1x256x128xbf16>,
    return
  }
  func.func @transform_0(%arg0: i32, %arg1: i32) -> (i32, i32, i32) {
    %c0_i32 = arith.constant 0 : i32
    %c0_i32_0 = arith.constant 0 : i32
    return %arg0, %arg1, %c0_i32 : i32, i32, i32
  }
  func.func @transform_1(%arg0: i32, %arg1: i32) -> (i32, i32) {
    %c0_i32 = arith.constant 0 : i32
    %c0_i32_0 = arith.constant 0 : i32
    %c0_i32_1 = arith.constant 0 : i32
    return %c0_i32, %c0_i32_0 : i32, i32
  }
  func.func @transform_2(%arg0: i32, %arg1: i32) -> (i32, i32) {
    %c0_i32 = arith.constant 0 : i32
    %c0_i32_0 = arith.constant 0 : i32
    %c0_i32_1 = arith.constant 0 : i32
    return %c0_i32, %c0_i32_0 : i32, i32
  }
  func.func @transform_3(%arg0: i32, %arg1: i32) -> (i32, i32) {
    %c0_i32 = arith.constant 0 : i32
    %c0_i32_0 = arith.constant 0 : i32
    %c0_i32_1 = arith.constant 0 : i32
    return %c0_i32, %c0_i32_0 : i32, i32
  }
  func.func @transform_4(%arg0: i32, %arg1: i32) -> (i32, i32) {
    %c0_i32 = arith.constant 0 : i32
    %c0_i32_0 = arith.constant 0 : i32
    %c0_i32_1 = arith.constant 0 : i32
    return %c0_i32, %c0_i32_0 : i32, i32
  }
  func.func @transform_5(%arg0: i32, %arg1: i32) -> (i32, i32, i32, i32) {
    %c0_i32 = arith.constant 0 : i32
    %c0_i32_0 = arith.constant 0 : i32
    %c0_i32_1 = arith.constant 0 : i32
    return %arg0, %c0_i32, %arg1, %c0_i32_0 : i32, i32, i32, i32
  }
  func.func @transform_6(%arg0: i32, %arg1: i32) -> (i32, i32, i32, i32) {
    %c0_i32 = arith.constant 0 : i32
    %c0_i32_0 = arith.constant 0 : i32
    %c0_i32_1 = arith.constant 0 : i32
    return %arg0, %c0_i32, %arg1, %c0_i32_0 : i32, i32, i32, i32
  }
  func.func @transform_7(%arg0: i32, %arg1: i32) -> (i32, i32, i32, i32) {
    %c0_i32 = arith.constant 0 : i32
    %c0_i32_0 = arith.constant 0 : i32
    %c0_i32_1 = arith.constant 0 : i32
    return %arg0, %c0_i32, %arg1, %c0_i32_0 : i32, i32, i32, i32
  }
}

module attributes {stable_mosaic.version = 11 : i64} {
  func.func @_qkv_proj_kernel(%arg0: i32, %arg1: i32, %arg2: memref<1x256x256xbf16, #tpu.memory_space<vmem>>, %arg3: memref<1x256xf32, #tpu.memory_space<vmem>>, %arg4: memref<256x768xbf16, #tpu.memory_space<vmem>>, %arg5: memref<1x128xf32, #tpu.memory_space<vmem>>, %arg6: memref<1x128xf32, #tpu.memory_space<vmem>>, %arg7: memref<1x2x256x128xbf16, #tpu.memory_space<vmem>>, %arg8: memref<1x2x256x128xbf16, #tpu.memory_space<vmem>>, %arg9: memref<1x2x256x128xbf16, #tpu.memory_space<vmem>>) attributes {dimension_semantics = [#tpu.dimension_semantics<parallel>, #tpu.dimension_semantics<parallel>], iteration_bounds = array<i64: 2, 1>, scalar_prefetch = 0 : i64, scratch_operands = 0 : i64, tpu.core_type = #tpu.core_type<tc>, window_params = [{transform_indices = @transform_0, window_bounds = array<i64: 1, 256, 256>}, {pipeline_mode = #tpu.pipeline_mode<synchronous>, transform_indices = @transform_1, window_bounds = array<i64: 1, 256>}, {pipeline_mode = #tpu.pipeline_mode<synchronous>, transform_indices = @transform_2, window_bounds = array<i64: 256, 768>}, {pipeline_mode = #tpu.pipeline_mode<synchronous>, transform_indices = @transform_3, window_bounds = array<i64: 1, 128>}, {pipeline_mode = #tpu.pipeline_mode<synchronous>, transform_indices = @transform_4, window_bounds = array<i64: 1, 128>}, {transform_indices = @transform_5, window_bounds = array<i64: 1, 2, 256, 128>}, {transform_indices = @transform_6, window_bounds = array<i64: 1, 2, 256, 128>}, {transform_indices = @transform_7, window_bounds = array<i64: 1, 2, 256, 128>}]} {
    %c0 = arith.constant 0 : index
    %c0_0 = arith.constant 0 : index
    %c0_1 = arith.constant 0 : index
    %0 = vector.load %arg2[%c0, %c0_0, %c0_1] : memref<1x256x256xbf16, #tpu.memory_space<vmem>>, vector<1x256x256xbf16>
    %1 = vector.shape_cast %0 : vector<1x256x256xbf16> to vector<256x256xbf16>
    %2 = arith.extf %1 : vector<256x256xbf16> to vector<256x256xf32>
    %3 = arith.mulf %2, %2 : vector<256x256xf32>
    %cst = arith.constant dense<0.000000e+00> : vector<256xf32>
    %4 = vector.multi_reduction <add>, %3, %cst [1] : vector<256x256xf32> to vector<256xf32>
    %5 = vector.shape_cast %4 : vector<256xf32> to vector<256x1xf32>
    %cst_2 = arith.constant 2.560000e+02 : f32
    %6 = vector.broadcast %cst_2 : f32 to vector<256x1xf32>
    %7 = arith.divf %5, %6 : vector<256x1xf32>
    %cst_3 = arith.constant 9.99999997E-7 : f32
    %8 = vector.broadcast %cst_3 : f32 to vector<256x1xf32>
    %9 = arith.addf %7, %8 : vector<256x1xf32>
    %10 = math.rsqrt %9 : vector<256x1xf32>
    %11 = vector.broadcast %10 : vector<256x1xf32> to vector<256x256xf32>
    %12 = arith.mulf %2, %11 : vector<256x256xf32>
    %c0_4 = arith.constant 0 : index
    %c0_5 = arith.constant 0 : index
    %13 = vector.load %arg3[%c0_4, %c0_5] : memref<1x256xf32, #tpu.memory_space<vmem>>, vector<1x256xf32>
    %14 = vector.broadcast %13 : vector<1x256xf32> to vector<256x256xf32>
    %15 = arith.mulf %12, %14 : vector<256x256xf32>
    %16 = arith.truncf %15 : vector<256x256xf32> to vector<256x256xbf16>
    %c0_6 = arith.constant 0 : index
    %c0_7 = arith.constant 0 : index
    %17 = vector.load %arg4[%c0_6, %c0_7] : memref<256x768xbf16, #tpu.memory_space<vmem>>, vector<256x768xbf16>
    %cst_8 = arith.constant dense<0.000000e+00> : vector<256x768xf32>
    %18 = tpu.matmul %16, %17, %cst_8 {dimension_numbers = #tpu.dot_dimension_numbers<[1], [0], [0], [1], [0, 0, 1, 1], [], []>} : vector<256x256xbf16>, vector<256x768xbf16>, vector<256x768xf32> -> vector<256x768xf32>
    %c0_9 = arith.constant 0 : index
    %c0_10 = arith.constant 0 : index
    %19 = vector.load %arg5[%c0_9, %c0_10] : memref<1x128xf32, #tpu.memory_space<vmem>>, vector<1x128xf32>
    %c0_11 = arith.constant 0 : index
    %c0_12 = arith.constant 0 : index
    %20 = vector.load %arg6[%c0_11, %c0_12] : memref<1x128xf32, #tpu.memory_space<vmem>>, vector<1x128xf32>
    %21 = vector.extract_strided_slice %18 {offsets = [0, 0], sizes = [256, 128], strides = [1, 1]} : vector<256x768xf32> to vector<256x128xf32>
    %22 = arith.mulf %21, %21 : vector<256x128xf32>
    %cst_13 = arith.constant dense<0.000000e+00> : vector<256xf32>
    %23 = vector.multi_reduction <add>, %22, %cst_13 [1] : vector<256x128xf32> to vector<256xf32>
    %24 = vector.shape_cast %23 : vector<256xf32> to vector<256x1xf32>
    %cst_14 = arith.constant 1.280000e+02 : f32
    %25 = vector.broadcast %cst_14 : f32 to vector<256x1xf32>
    %26 = arith.divf %24, %25 : vector<256x1xf32>
    %cst_15 = arith.constant 9.99999997E-7 : f32
    %27 = vector.broadcast %cst_15 : f32 to vector<256x1xf32>
    %28 = arith.addf %26, %27 : vector<256x1xf32>
    %29 = math.rsqrt %28 : vector<256x1xf32>
    %30 = vector.broadcast %29 : vector<256x1xf32> to vector<256x128xf32>
    %31 = arith.mulf %21, %30 : vector<256x128xf32>
    %32 = vector.broadcast %19 : vector<1x128xf32> to vector<256x128xf32>
    %33 = arith.mulf %31, %32 : vector<256x128xf32>
    %cst_16 = arith.constant 0.0883883461 : f32
    %34 = vector.broadcast %cst_16 : f32 to vector<256x128xf32>
    %35 = arith.mulf %33, %34 : vector<256x128xf32>
    %36 = arith.truncf %35 : vector<256x128xf32> to vector<256x128xbf16>
    %c0_17 = arith.constant 0 : index
    %c0_18 = arith.constant 0 : index
    %c0_19 = arith.constant 0 : index
    %c0_20 = arith.constant 0 : index
    %37 = vector.load %arg7[%c0_17, %c0_18, %c0_19, %c0_20] : memref<1x2x256x128xbf16, #tpu.memory_space<vmem>>, vector<1x1x256x128xbf16>
    %38 = vector.shape_cast %37 : vector<1x1x256x128xbf16> to vector<256x128xbf16>
    %39 = vector.shape_cast %36 : vector<256x128xbf16> to vector<1x1x256x128xbf16>
    tpu.vector_store %arg7[%c0_17, %c0_18, %c0_19, %c0_20], %39 {strides = array<i32>} : memref<1x2x256x128xbf16, #tpu.memory_space<vmem>>, vector<1x1x256x128xbf16>,
    %40 = vector.extract_strided_slice %18 {offsets = [0, 256], sizes = [256, 128], strides = [1, 1]} : vector<256x768xf32> to vector<256x128xf32>
    %41 = arith.mulf %40, %40 : vector<256x128xf32>
    %cst_21 = arith.constant dense<0.000000e+00> : vector<256xf32>
    %42 = vector.multi_reduction <add>, %41, %cst_21 [1] : vector<256x128xf32> to vector<256xf32>
    %43 = vector.shape_cast %42 : vector<256xf32> to vector<256x1xf32>
    %cst_22 = arith.constant 1.280000e+02 : f32
    %44 = vector.broadcast %cst_22 : f32 to vector<256x1xf32>
    %45 = arith.divf %43, %44 : vector<256x1xf32>
    %cst_23 = arith.constant 9.99999997E-7 : f32
    %46 = vector.broadcast %cst_23 : f32 to vector<256x1xf32>
    %47 = arith.addf %45, %46 : vector<256x1xf32>
    %48 = math.rsqrt %47 : vector<256x1xf32>
    %49 = vector.broadcast %48 : vector<256x1xf32> to vector<256x128xf32>
    %50 = arith.mulf %40, %49 : vector<256x128xf32>
    %51 = vector.broadcast %20 : vector<1x128xf32> to vector<256x128xf32>
    %52 = arith.mulf %50, %51 : vector<256x128xf32>
    %53 = arith.truncf %52 : vector<256x128xf32> to vector<256x128xbf16>
    %c0_24 = arith.constant 0 : index
    %c0_25 = arith.constant 0 : index
    %c0_26 = arith.constant 0 : index
    %c0_27 = arith.constant 0 : index
    %54 = vector.load %arg8[%c0_24, %c0_25, %c0_26, %c0_27] : memref<1x2x256x128xbf16, #tpu.memory_space<vmem>>, vector<1x1x256x128xbf16>
    %55 = vector.shape_cast %54 : vector<1x1x256x128xbf16> to vector<256x128xbf16>
    %56 = vector.shape_cast %53 : vector<256x128xbf16> to vector<1x1x256x128xbf16>
    tpu.vector_store %arg8[%c0_24, %c0_25, %c0_26, %c0_27], %56 {strides = array<i32>} : memref<1x2x256x128xbf16, #tpu.memory_space<vmem>>, vector<1x1x256x128xbf16>,
    %57 = vector.extract_strided_slice %18 {offsets = [0, 512], sizes = [256, 128], strides = [1, 1]} : vector<256x768xf32> to vector<256x128xf32>
    %58 = arith.truncf %57 : vector<256x128xf32> to vector<256x128xbf16>
    %c0_28 = arith.constant 0 : index
    %c0_29 = arith.constant 0 : index
    %c0_30 = arith.constant 0 : index
    %c0_31 = arith.constant 0 : index
    %59 = vector.load %arg9[%c0_28, %c0_29, %c0_30, %c0_31] : memref<1x2x256x128xbf16, #tpu.memory_space<vmem>>, vector<1x1x256x128xbf16>
    %60 = vector.shape_cast %59 : vector<1x1x256x128xbf16> to vector<256x128xbf16>
    %61 = vector.shape_cast %58 : vector<256x128xbf16> to vector<1x1x256x128xbf16>
    tpu.vector_store %arg9[%c0_28, %c0_29, %c0_30, %c0_31], %61 {strides = array<i32>} : memref<1x2x256x128xbf16, #tpu.memory_space<vmem>>, vector<1x1x256x128xbf16>,
    %62 = vector.extract_strided_slice %18 {offsets = [0, 128], sizes = [256, 128], strides = [1, 1]} : vector<256x768xf32> to vector<256x128xf32>
    %63 = arith.mulf %62, %62 : vector<256x128xf32>
    %cst_32 = arith.constant dense<0.000000e+00> : vector<256xf32>
    %64 = vector.multi_reduction <add>, %63, %cst_32 [1] : vector<256x128xf32> to vector<256xf32>
    %65 = vector.shape_cast %64 : vector<256xf32> to vector<256x1xf32>
    %cst_33 = arith.constant 1.280000e+02 : f32
    %66 = vector.broadcast %cst_33 : f32 to vector<256x1xf32>
    %67 = arith.divf %65, %66 : vector<256x1xf32>
    %cst_34 = arith.constant 9.99999997E-7 : f32
    %68 = vector.broadcast %cst_34 : f32 to vector<256x1xf32>
    %69 = arith.addf %67, %68 : vector<256x1xf32>
    %70 = math.rsqrt %69 : vector<256x1xf32>
    %71 = vector.broadcast %70 : vector<256x1xf32> to vector<256x128xf32>
    %72 = arith.mulf %62, %71 : vector<256x128xf32>
    %73 = vector.broadcast %19 : vector<1x128xf32> to vector<256x128xf32>
    %74 = arith.mulf %72, %73 : vector<256x128xf32>
    %cst_35 = arith.constant 0.0883883461 : f32
    %75 = vector.broadcast %cst_35 : f32 to vector<256x128xf32>
    %76 = arith.mulf %74, %75 : vector<256x128xf32>
    %77 = arith.truncf %76 : vector<256x128xf32> to vector<256x128xbf16>
    %c0_36 = arith.constant 0 : index
    %c1 = arith.constant 1 : index
    %c0_37 = arith.constant 0 : index
    %c0_38 = arith.constant 0 : index
    %78 = vector.load %arg7[%c0_36, %c1, %c0_37, %c0_38] : memref<1x2x256x128xbf16, #tpu.memory_space<vmem>>, vector<1x1x256x128xbf16>
    %79 = vector.shape_cast %78 : vector<1x1x256x128xbf16> to vector<256x128xbf16>
    %80 = vector.shape_cast %77 : vector<256x128xbf16> to vector<1x1x256x128xbf16>
    tpu.vector_store %arg7[%c0_36, %c1, %c0_37, %c0_38], %80 {strides = array<i32>} : memref<1x2x256x128xbf16, #tpu.memory_space<vmem>>, vector<1x1x256x128xbf16>,
    %81 = vector.extract_strided_slice %18 {offsets = [0, 384], sizes = [256, 128], strides = [1, 1]} : vector<256x768xf32> to vector<256x128xf32>
    %82 = arith.mulf %81, %81 : vector<256x128xf32>
    %cst_39 = arith.constant dense<0.000000e+00> : vector<256xf32>
    %83 = vector.multi_reduction <add>, %82, %cst_39 [1] : vector<256x128xf32> to vector<256xf32>
    %84 = vector.shape_cast %83 : vector<256xf32> to vector<256x1xf32>
    %cst_40 = arith.constant 1.280000e+02 : f32
    %85 = vector.broadcast %cst_40 : f32 to vector<256x1xf32>
    %86 = arith.divf %84, %85 : vector<256x1xf32>
    %cst_41 = arith.constant 9.99999997E-7 : f32
    %87 = vector.broadcast %cst_41 : f32 to vector<256x1xf32>
    %88 = arith.addf %86, %87 : vector<256x1xf32>
    %89 = math.rsqrt %88 : vector<256x1xf32>
    %90 = vector.broadcast %89 : vector<256x1xf32> to vector<256x128xf32>
    %91 = arith.mulf %81, %90 : vector<256x128xf32>
    %92 = vector.broadcast %20 : vector<1x128xf32> to vector<256x128xf32>
    %93 = arith.mulf %91, %92 : vector<256x128xf32>
    %94 = arith.truncf %93 : vector<256x128xf32> to vector<256x128xbf16>
    %c0_42 = arith.constant 0 : index
    %c1_43 = arith.constant 1 : index
    %c0_44 = arith.constant 0 : index
    %c0_45 = arith.constant 0 : index
    %95 = vector.load %arg8[%c0_42, %c1_43, %c0_44, %c0_45] : memref<1x2x256x128xbf16, #tpu.memory_space<vmem>>, vector<1x1x256x128xbf16>
    %96 = vector.shape_cast %95 : vector<1x1x256x128xbf16> to vector<256x128xbf16>
    %97 = vector.shape_cast %94 : vector<256x128xbf16> to vector<1x1x256x128xbf16>
    tpu.vector_store %arg8[%c0_42, %c1_43, %c0_44, %c0_45], %97 {strides = array<i32>} : memref<1x2x256x128xbf16, #tpu.memory_space<vmem>>, vector<1x1x256x128xbf16>,
    %98 = vector.extract_strided_slice %18 {offsets = [0, 640], sizes = [256, 128], strides = [1, 1]} : vector<256x768xf32> to vector<256x128xf32>
    %99 = arith.truncf %98 : vector<256x128xf32> to vector<256x128xbf16>
    %c0_46 = arith.constant 0 : index
    %c1_47 = arith.constant 1 : index
    %c0_48 = arith.constant 0 : index
    %c0_49 = arith.constant 0 : index
    %100 = vector.load %arg9[%c0_46, %c1_47, %c0_48, %c0_49] : memref<1x2x256x128xbf16, #tpu.memory_space<vmem>>, vector<1x1x256x128xbf16>
    %101 = vector.shape_cast %100 : vector<1x1x256x128xbf16> to vector<256x128xbf16>
    %102 = vector.shape_cast %99 : vector<256x128xbf16> to vector<1x1x256x128xbf16>
    tpu.vector_store %arg9[%c0_46, %c1_47, %c0_48, %c0_49], %102 {strides = array<i32>} : memref<1x2x256x128xbf16, #tpu.memory_space<vmem>>, vector<1x1x256x128xbf16>,
    return
  }
  func.func @transform_0(%arg0: i32, %arg1: i32) -> (i32, i32, i32) {
    %c0_i32 = arith.constant 0 : i32
    %c0_i32_0 = arith.constant 0 : i32
    return %arg0, %arg1, %c0_i32 : i32, i32, i32
  }
  func.func @transform_1(%arg0: i32, %arg1: i32) -> (i32, i32) {
    %c0_i32 = arith.constant 0 : i32
    %c0_i32_0 = arith.constant 0 : i32
    %c0_i32_1 = arith.constant 0 : i32
    return %c0_i32, %c0_i32_0 : i32, i32
  }
  func.func @transform_2(%arg0: i32, %arg1: i32) -> (i32, i32) {
    %c0_i32 = arith.constant 0 : i32
    %c0_i32_0 = arith.constant 0 : i32
    %c0_i32_1 = arith.constant 0 : i32
    return %c0_i32, %c0_i32_0 : i32, i32
  }
  func.func @transform_3(%arg0: i32, %arg1: i32) -> (i32, i32) {
    %c0_i32 = arith.constant 0 : i32
    %c0_i32_0 = arith.constant 0 : i32
    %c0_i32_1 = arith.constant 0 : i32
    return %c0_i32, %c0_i32_0 : i32, i32
  }
  func.func @transform_4(%arg0: i32, %arg1: i32) -> (i32, i32) {
    %c0_i32 = arith.constant 0 : i32
    %c0_i32_0 = arith.constant 0 : i32
    %c0_i32_1 = arith.constant 0 : i32
    return %c0_i32, %c0_i32_0 : i32, i32
  }
  func.func @transform_5(%arg0: i32, %arg1: i32) -> (i32, i32, i32, i32) {
    %c0_i32 = arith.constant 0 : i32
    %c0_i32_0 = arith.constant 0 : i32
    %c0_i32_1 = arith.constant 0 : i32
    return %arg0, %c0_i32, %arg1, %c0_i32_0 : i32, i32, i32, i32
  }
  func.func @transform_6(%arg0: i32, %arg1: i32) -> (i32, i32, i32, i32) {
    %c0_i32 = arith.constant 0 : i32
    %c0_i32_0 = arith.constant 0 : i32
    %c0_i32_1 = arith.constant 0 : i32
    return %arg0, %c0_i32, %arg1, %c0_i32_0 : i32, i32, i32, i32
  }
  func.func @transform_7(%arg0: i32, %arg1: i32) -> (i32, i32, i32, i32) {
    %c0_i32 = arith.constant 0 : i32
    %c0_i32_0 = arith.constant 0 : i32
    %c0_i32_1 = arith.constant 0 : i32
    return %arg0, %c0_i32, %arg1, %c0_i32_0 : i32, i32, i32, i32
  }
}

</mosaic_0001>

<llo_original>
// kernel: tpu_custom_call.1
$region0: #{tpu_custom_call.1}
  #allocation0 [shape = 'u32[]', space=smem, size = 0x4, offset = 0x4, fixed_abs, tag = 'smem constant byte address 0x4 - core index']
  #allocation1 [shape = 'u32[144,128]{1,0:T(1,128)}', space=vmem, size = 0x12000, scoped, tag = 'internal scratch']
  %s0 = inlined_call_operand.hbm [shape: bf16[2,256,256], index: 0, kind: input, shape index: {}]
  %s1 = inlined_call_operand.hbm [shape: f32[1,256], index: 1, kind: input, shape index: {}]
  %s2 = inlined_call_operand.hbm [shape: bf16[256,768], index: 2, kind: input, shape index: {}]
  %s3 = inlined_call_operand.hbm [shape: f32[1,128], index: 3, kind: input, shape index: {}]
  %s4 = inlined_call_operand.hbm [shape: f32[1,128], index: 4, kind: input, shape index: {}]
  %s5 = inlined_call_operand.hbm [shape: bf16[2,2,256,128], index: 5, kind: output, shape index: {0}]
  %s6 = inlined_call_operand.hbm [shape: bf16[2,2,256,128], index: 6, kind: output, shape index: {1}]
  %s7 = inlined_call_operand.hbm [shape: bf16[2,2,256,128], index: 7, kind: output, shape index: {2}]
  %8 = xla_tuple %s5, %s6, %s7
  %s9 = sld [smem:[#allocation0]]
  $region89: #{tpu_custom_call.1} parent=0
    _
  %s11 = ssub.s32 1, %s9
  %s12 = scalar_select 0, %s11, %s9
  $region1: #{tpu_custom_call.1} parent=0
    #allocation2 [shape = 'u8[262144]{0}', space=vmem, size = 0x40000, scoped, tag = 'input window, operand 0']
    #allocation3 [shape = 's32[2]{0}', space=sflag, size = 0x8, scoped, tag = 'scoped memory for tpu_custom_call.1']
    #allocation4 [shape = 's32[2]{0}', space=sflag, size = 0x8, scoped, tag = 'scoped memory for tpu_custom_call.1']
    #allocation5 [shape = 'u8[1024]{0}', space=vmem, size = 0x400, scoped, tag = 'input window, operand 1, single buffered']
    #allocation6 [shape = 's32[1]{0}', space=sflag, size = 0x4, scoped, tag = 'scoped memory for tpu_custom_call.1']
    #allocation7 [shape = 'u8[393216]{0}', space=vmem, size = 0x60000, scoped, tag = 'input window, operand 2, single buffered']
    #allocation8 [shape = 'u8[512]{0}', space=vmem, size = 0x400, scoped, tag = 'input window, operand 3, single buffered']
    #allocation9 [shape = 's32[1]{0}', space=sflag, size = 0x4, scoped, tag = 'scoped memory for tpu_custom_call.1']
    #allocation10 [shape = 'u8[512]{0}', space=vmem, size = 0x400, scoped, tag = 'input window, operand 4, single buffered']
    #allocation11 [shape = 'u8[262144]{0}', space=vmem, size = 0x40000, scoped, tag = 'output window, operand 0']
    #allocation12 [shape = 'u8[262144]{0}', space=vmem, size = 0x40000, scoped, tag = 'output window, operand 1']
    #allocation13 [shape = 's32[2]{0}', space=sflag, size = 0x8, scoped, tag = 'scoped memory for tpu_custom_call.1']
    #allocation14 [shape = 'u8[262144]{0}', space=vmem, size = 0x40000, scoped, tag = 'output window, operand 2']
    %13 = vsyncpa [#allocation3], 0
    %s14 = scalar_lea.sflag [#allocation3], 1
    %15 = vsyncpa %s14, 0
    %16 = vsyncpa [#allocation6], 0
    %17 = vsyncpa [#allocation9], 0
    %18 = vsyncpa [#allocation4], 0
    %s19 = scalar_lea.sflag [#allocation4], 1
    %20 = vsyncpa %s19, 0
    %21 = vsyncpa [#allocation13], 0
    %s22 = scalar_lea.sflag [#allocation13], 1
    %23 = vsyncpa %s22, 0
    loop: start=0, step=1, limit=4
    $region2: #{tpu_custom_call.1} parent=1 // loop_pre_header
      _
    $region3: #{tpu_custom_call.1} parent=1 // loop_header
      %s25 = sphi 0, %s29
      %p26 = scmp.ge.s32.totalorder %s25, 4
      %s32 = sphi 0, %s44
      %s33 = sphi 0, %s40
      %s34 = sphi 0, %s32
      %s35 = sphi 0, %s33
      %s36 = sphi 0, %s34
      %s37 = sphi 0, %s35
      %s49 = sphi 0, %s51
      %s52 = sphi 0, %s49
      %s53 = sphi 0, %s52
      %s69 = sphi 0, %s53
      %s73 = sphi 0, %s73
      %s75 = sphi 0, %s73
      %s76 = sphi 0, %s75
      %s90 = sphi 0, %s76
      %s94 = sphi 0, %s94
      %s96 = sphi 0, %s94
      %s97 = sphi 0, %s96
      %s111 = sphi 0, %s97
      %s115 = sphi 0, %s115
      %s117 = sphi 0, %s115
      %s118 = sphi 0, %s117
      %s132 = sphi 0, %s118
      %s136 = sphi 0, %s136
      %s138 = sphi 0, %s136
      %s139 = sphi 0, %s138
      %s153 = sphi 0, %s139
      %s161 = sphi 0, %s163
      %s164 = sphi 0, %s161
      %s165 = sphi 0, %s164
      %s181 = sphi 0, %s165
      %s189 = sphi 0, %s191
      %s192 = sphi 0, %s189
      %s193 = sphi 0, %s192
      %s209 = sphi 0, %s193
      %s217 = sphi 0, %s219
      %s220 = sphi 0, %s217
      %s221 = sphi 0, %s220
      %s237 = sphi 0, %s221
    $region4: #{tpu_custom_call.1} parent=1 // loop_header_branch
      %28 = sbr.rel (%p26) target = $region8
    $region5: #{tpu_custom_call.1} parent=1 // loop_body
      %s30 = ssub.s32 %s25, 1
      %s31 = ssub.s32 %s25, 2
      %s38 = sadd.s32 1, %s33
      %p39 = scmp.ge.s32.totalorder %s38, 1
      %s40 = scalar_select %p39, 0, %s38
      %s41 = sadd.s32 1, %s32
      %s42 = scalar_select %p39, %s41, %s32
      %p43 = scmp.ge.s32.totalorder %s42, 2
      %s44 = scalar_select %p43, 0, %s42
      %s45 = ssub.s32 %s32, %s44
      %s46 = ssub.s32 %s33, %s40
      %s47 = sor.u32 %s45, %s46
      %p48 = scmp.eq.s32.totalorder %s47, 0
      %s50 = sadd.s32 %s49, 1
      %s51 = scalar_select %p48, %s49, %s50
      %p54 = pneg %p48
      %p55 = scmp.eq.s32.totalorder %s25, 1
      %p56 = por %p54, %p55
      %p57 = scmp.ne.s32.totalorder %s49, %s52
      %p58 = scmp.eq.s32.totalorder %s25, 0
      %p59 = por %p57, %p58
      %p60 = scmp.ne.s32.totalorder %s49, %s52
      %p61 = scmp.eq.s32.totalorder %s30, 1
      %p62 = por %p60, %p61
      %p63 = scmp.ne.s32.totalorder %s52, %s53
      %p64 = scmp.eq.s32.totalorder %s30, 0
      %p65 = por %p63, %p64
      %p66 = scmp.ne.s32.totalorder %s52, %s53
      %p67 = scmp.eq.s32.totalorder %s31, 1
      %p68 = por %p66, %p67
      %p70 = scmp.ne.s32.totalorder %s53, %s69
      %p71 = scmp.eq.s32.totalorder %s31, 0
      %p72 = por %p70, %p71
      %s74 = sadd.s32 %s73, 1
      %p77 = scmp.eq.s32.totalorder %s25, 1
      %p78 = scmp.ne.s32.totalorder %s73, %s75
      %p79 = scmp.eq.s32.totalorder %s25, 0
      %p80 = por %p78, %p79
      %p81 = scmp.ne.s32.totalorder %s73, %s75
      %p82 = scmp.eq.s32.totalorder %s30, 1
      %p83 = por %p81, %p82
      %p84 = scmp.ne.s32.totalorder %s75, %s76
      %p85 = scmp.eq.s32.totalorder %s30, 0
      %p86 = por %p84, %p85
      %p87 = scmp.ne.s32.totalorder %s75, %s76
      %p88 = scmp.eq.s32.totalorder %s31, 1
      %p89 = por %p87, %p88
      %p91 = scmp.ne.s32.totalorder %s76, %s90
      %p92 = scmp.eq.s32.totalorder %s31, 0
      %p93 = por %p91, %p92
      %s95 = sadd.s32 %s94, 1
      %p98 = scmp.eq.s32.totalorder %s25, 1
      %p99 = scmp.ne.s32.totalorder %s94, %s96
      %p100 = scmp.eq.s32.totalorder %s25, 0
      %p101 = por %p99, %p100
      %p102 = scmp.ne.s32.totalorder %s94, %s96
      %p103 = scmp.eq.s32.totalorder %s30, 1
      %p104 = por %p102, %p103
      %p105 = scmp.ne.s32.totalorder %s96, %s97
      %p106 = scmp.eq.s32.totalorder %s30, 0
      %p107 = por %p105, %p106
      %p108 = scmp.ne.s32.totalorder %s96, %s97
      %p109 = scmp.eq.s32.totalorder %s31, 1
      %p110 = por %p108, %p109
      %p112 = scmp.ne.s32.totalorder %s97, %s111
      %p113 = scmp.eq.s32.totalorder %s31, 0
      %p114 = por %p112, %p113
      %s116 = sadd.s32 %s115, 1
      %p119 = scmp.eq.s32.totalorder %s25, 1
      %p120 = scmp.ne.s32.totalorder %s115, %s117
      %p121 = scmp.eq.s32.totalorder %s25, 0
      %p122 = por %p120, %p121
      %p123 = scmp.ne.s32.totalorder %s115, %s117
      %p124 = scmp.eq.s32.totalorder %s30, 1
      %p125 = por %p123, %p124
      %p126 = scmp.ne.s32.totalorder %s117, %s118
      %p127 = scmp.eq.s32.totalorder %s30, 0
      %p128 = por %p126, %p127
      %p129 = scmp.ne.s32.totalorder %s117, %s118
      %p130 = scmp.eq.s32.totalorder %s31, 1
      %p131 = por %p129, %p130
      %p133 = scmp.ne.s32.totalorder %s118, %s132
      %p134 = scmp.eq.s32.totalorder %s31, 0
      %p135 = por %p133, %p134
      %s137 = sadd.s32 %s136, 1
      %p140 = scmp.eq.s32.totalorder %s25, 1
      %p141 = scmp.ne.s32.totalorder %s136, %s138
      %p142 = scmp.eq.s32.totalorder %s25, 0
      %p143 = por %p141, %p142
      %p144 = scmp.ne.s32.totalorder %s136, %s138
      %p145 = scmp.eq.s32.totalorder %s30, 1
      %p146 = por %p144, %p145
      %p147 = scmp.ne.s32.totalorder %s138, %s139
      %p148 = scmp.eq.s32.totalorder %s30, 0
      %p149 = por %p147, %p148
      %p150 = scmp.ne.s32.totalorder %s138, %s139
      %p151 = scmp.eq.s32.totalorder %s31, 1
      %p152 = por %p150, %p151
      %p154 = scmp.ne.s32.totalorder %s139, %s153
      %p155 = scmp.eq.s32.totalorder %s31, 0
      %p156 = por %p154, %p155
      %s157 = ssub.s32 %s32, %s44
      %s158 = ssub.s32 %s33, %s40
      %s159 = sor.u32 %s157, %s158
      %p160 = scmp.eq.s32.totalorder %s159, 0
      %s162 = sadd.s32 %s161, 1
      %s163 = scalar_select %p160, %s161, %s162
      %p166 = pneg %p160
      %p167 = scmp.eq.s32.totalorder %s25, 1
      %p168 = por %p166, %p167
      %p169 = scmp.ne.s32.totalorder %s161, %s164
      %p170 = scmp.eq.s32.totalorder %s25, 0
      %p171 = por %p169, %p170
      %p172 = scmp.ne.s32.totalorder %s161, %s164
      %p173 = scmp.eq.s32.totalorder %s30, 1
      %p174 = por %p172, %p173
      %p175 = scmp.ne.s32.totalorder %s164, %s165
      %p176 = scmp.eq.s32.totalorder %s30, 0
      %p177 = por %p175, %p176
      %p178 = scmp.ne.s32.totalorder %s164, %s165
      %p179 = scmp.eq.s32.totalorder %s31, 1
      %p180 = por %p178, %p179
      %p182 = scmp.ne.s32.totalorder %s165, %s181
      %p183 = scmp.eq.s32.totalorder %s31, 0
      %p184 = por %p182, %p183
      %s185 = ssub.s32 %s32, %s44
      %s186 = ssub.s32 %s33, %s40
      %s187 = sor.u32 %s185, %s186
      %p188 = scmp.eq.s32.totalorder %s187, 0
      %s190 = sadd.s32 %s189, 1
      %s191 = scalar_select %p188, %s189, %s190
      %p194 = pneg %p188
      %p195 = scmp.eq.s32.totalorder %s25, 1
      %p196 = por %p194, %p195
      %p197 = scmp.ne.s32.totalorder %s189, %s192
      %p198 = scmp.eq.s32.totalorder %s25, 0
      %p199 = por %p197, %p198
      %p200 = scmp.ne.s32.totalorder %s189, %s192
      %p201 = scmp.eq.s32.totalorder %s30, 1
      %p202 = por %p200, %p201
      %p203 = scmp.ne.s32.totalorder %s192, %s193
      %p204 = scmp.eq.s32.totalorder %s30, 0
      %p205 = por %p203, %p204
      %p206 = scmp.ne.s32.totalorder %s192, %s193
      %p207 = scmp.eq.s32.totalorder %s31, 1
      %p208 = por %p206, %p207
      %p210 = scmp.ne.s32.totalorder %s193, %s209
      %p211 = scmp.eq.s32.totalorder %s31, 0
      %p212 = por %p210, %p211
      %s213 = ssub.s32 %s32, %s44
      %s214 = ssub.s32 %s33, %s40
      %s215 = sor.u32 %s213, %s214
      %p216 = scmp.eq.s32.totalorder %s215, 0
      %s218 = sadd.s32 %s217, 1
      %s219 = scalar_select %p216, %s217, %s218
      %p222 = pneg %p216
      %p223 = scmp.eq.s32.totalorder %s25, 1
      %p224 = por %p222, %p223
      %p225 = scmp.ne.s32.totalorder %s217, %s220
      %p226 = scmp.eq.s32.totalorder %s25, 0
      %p227 = por %p225, %p226
      %p228 = scmp.ne.s32.totalorder %s217, %s220
      %p229 = scmp.eq.s32.totalorder %s30, 1
      %p230 = por %p228, %p229
      %p231 = scmp.ne.s32.totalorder %s220, %s221
      %p232 = scmp.eq.s32.totalorder %s30, 0
      %p233 = por %p231, %p232
      %p234 = scmp.ne.s32.totalorder %s220, %s221
      %p235 = scmp.eq.s32.totalorder %s31, 1
      %p236 = por %p234, %p235
      %p238 = scmp.ne.s32.totalorder %s221, %s237
      %p239 = scmp.eq.s32.totalorder %s31, 0
      %p240 = por %p238, %p239
      %p241 = scmp.le.s32.totalorder 1, %s25
      %p242 = scmp.lt.s32.totalorder %s25, 3
      %p243 = pnand %p241, %p242
      %p244 = pneg %p243
      // Predicated region
      $region9: #{tpu_custom_call.1} parent=5 // pred_check
        _
      $region10: #{tpu_custom_call.1} parent=5 // pred_check_branch
        %246 = sbr.rel (%p243) target = $region12
      $region11: #{tpu_custom_call.1} parent=5 // pred_region
        %s247 = ssub.s32 %s25, 1
        // Predicated region
        $region13: #{tpu_custom_call.1} parent=11 // pred_check
          %p248 = pneg %p86
        $region14: #{tpu_custom_call.1} parent=11 // pred_check_branch
          %250 = sbr.rel (%p248) target = $region16
        $region15: #{tpu_custom_call.1} parent=11 // pred_region
          %s252 = ssub.s32 32, 32
          %253 = vsyncadd [#allocation6], %s252
          %s255 = sshll.u32 [#allocation5], 4
          %s256 = int_to_ptr.vmem [resolvable:$true] %s255
          %258 = dma.hbm_to_vmem [thread:$0]  %s1, 32, %s256, [#allocation6]
        $region16: #{tpu_custom_call.1} parent=11 // pred_fallthru
          _
        // Predicated region
        $region17: #{tpu_custom_call.1} parent=11 // pred_check
          %p259 = pneg %p107
        $region18: #{tpu_custom_call.1} parent=11 // pred_check_branch
          %261 = sbr.rel (%p259) target = $region20
        $region19: #{tpu_custom_call.1} parent=11 // pred_region
          %s263 = ssub.s32 12288, 12288
          %264 = vsyncadd [#allocation6], %s263
          %s265 = sshll.u32 [#allocation7], 4
          %s266 = int_to_ptr.vmem [resolvable:$true] %s265
          %271 = dma.hbm_to_vmem [thread:$0]  %s2, 12288, %s266, [#allocation6], 384, 384, 24
        $region20: #{tpu_custom_call.1} parent=11 // pred_fallthru
          _
        // Predicated region
        $region21: #{tpu_custom_call.1} parent=11 // pred_check
          %p272 = pneg %p128
        $region22: #{tpu_custom_call.1} parent=11 // pred_check_branch
          %274 = sbr.rel (%p272) target = $region24
        $region23: #{tpu_custom_call.1} parent=11 // pred_region
          %s276 = ssub.s32 16, 16
          %277 = vsyncadd [#allocation9], %s276
          %s279 = sshll.u32 [#allocation8], 4
          %s280 = int_to_ptr.vmem [resolvable:$true] %s279
          %282 = dma.hbm_to_vmem [thread:$0]  %s3, 16, %s280, [#allocation9]
        $region24: #{tpu_custom_call.1} parent=11 // pred_fallthru
          _
        // Predicated region
        $region25: #{tpu_custom_call.1} parent=11 // pred_check
          %p283 = pneg %p149
        $region26: #{tpu_custom_call.1} parent=11 // pred_check_branch
          %285 = sbr.rel (%p283) target = $region28
        $region27: #{tpu_custom_call.1} parent=11 // pred_region
          %s287 = ssub.s32 16, 16
          %288 = vsyncadd [#allocation9], %s287
          %s290 = sshll.u32 [#allocation10], 4
          %s291 = int_to_ptr.vmem [resolvable:$true] %s290
          %293 = dma.hbm_to_vmem [thread:$0]  %s4, 16, %s291, [#allocation9]
        $region28: #{tpu_custom_call.1} parent=11 // pred_fallthru
          _
      $region12: #{tpu_custom_call.1} parent=5 // pred_fallthru
        _
      %p294 = scmp.lt.s32.totalorder %s25, 2
      // Predicated region
      $region29: #{tpu_custom_call.1} parent=5 // pred_check
        %p295 = pneg %p294
      $region30: #{tpu_custom_call.1} parent=5 // pred_check_branch
        %297 = sbr.rel (%p295) target = $region32
      $region31: #{tpu_custom_call.1} parent=5 // pred_region
        // Predicated region
        $region33: #{tpu_custom_call.1} parent=31 // pred_check
          %p298 = pneg %p59
        $region34: #{tpu_custom_call.1} parent=31 // pred_check_branch
          %300 = sbr.rel (%p298) target = $region36
        $region35: #{tpu_custom_call.1} parent=31 // pred_region
          %s301 = sand.u32 %s49, 1
          %s302 = scalar_lea.sflag [#allocation3], %s301
          %s303 = sand.u32 %s49, 1
          %s304 = smul.addr %s303, 256
          %s305 = scalar_lea.vmem [#allocation2], %s304
          %s306 = smul.u32 32, %s33
          %s308 = ssub.s32 4096, 4096
          %309 = vsyncadd %s302, %s308
          %s310 = smul.addr %s306, 2
          %s311 = smul.addr %s32, 64
          %s312 = sadd.s32 %s310, %s311
          %s313 = smul.addr %s312, 64
          %s314 = scalar_lea.hbm %s0, %s313
          %s315 = sshll.u32 %s305, 4
          %s316 = int_to_ptr.vmem [resolvable:$true] %s315
          %321 = dma.hbm_to_vmem [thread:$0]  %s314, 4096, %s316, %s302, 128, 128, 8
        $region36: #{tpu_custom_call.1} parent=31 // pred_fallthru
          _
      $region32: #{tpu_custom_call.1} parent=5 // pred_fallthru
        _
      %p322 = scmp.le.s32.totalorder 1, %s25
      %p323 = scmp.lt.s32.totalorder %s25, 3
      %p324 = pnand %p322, %p323
      %p325 = pneg %p324
      // Predicated region
      $region37: #{tpu_custom_call.1} parent=5 // pred_check
        _
      $region38: #{tpu_custom_call.1} parent=5 // pred_check_branch
        %327 = sbr.rel (%p324) target = $region40
      $region39: #{tpu_custom_call.1} parent=5 // pred_region
        %s328 = ssub.s32 %s25, 1
        %s329 = sand.u32 %s52, 1
        %s330 = scalar_lea.sflag [#allocation3], %s329
        %s331 = sand.u32 %s52, 1
        %s332 = smul.addr %s331, 256
        %s333 = scalar_lea.vmem [#allocation2], %s332
        // Predicated region
        $region41: #{tpu_custom_call.1} parent=39 // pred_check
          %p334 = pneg %p65
        $region42: #{tpu_custom_call.1} parent=39 // pred_check_branch
          %336 = sbr.rel (%p334) target = $region44
        $region43: #{tpu_custom_call.1} parent=39 // pred_region
          %337 = dma.done %s330, 4096
        $region44: #{tpu_custom_call.1} parent=39 // pred_fallthru
          _
        // Predicated region
        $region45: #{tpu_custom_call.1} parent=39 // pred_check
          %p338 = pneg %p86
        $region46: #{tpu_custom_call.1} parent=39 // pred_check_branch
          %340 = sbr.rel (%p338) target = $region48
        $region47: #{tpu_custom_call.1} parent=39 // pred_region
          %341 = dma.done [#allocation6], 32
        $region48: #{tpu_custom_call.1} parent=39 // pred_fallthru
          _
        // Predicated region
        $region49: #{tpu_custom_call.1} parent=39 // pred_check
          %p342 = pneg %p107
        $region50: #{tpu_custom_call.1} parent=39 // pred_check_branch
          %344 = sbr.rel (%p342) target = $region52
        $region51: #{tpu_custom_call.1} parent=39 // pred_region
          %345 = dma.done [#allocation6], 12288
        $region52: #{tpu_custom_call.1} parent=39 // pred_fallthru
          _
        // Predicated region
        $region53: #{tpu_custom_call.1} parent=39 // pred_check
          %p346 = pneg %p128
        $region54: #{tpu_custom_call.1} parent=39 // pred_check_branch
          %348 = sbr.rel (%p346) target = $region56
        $region55: #{tpu_custom_call.1} parent=39 // pred_region
          %349 = dma.done [#allocation9], 16
        $region56: #{tpu_custom_call.1} parent=39 // pred_fallthru
          _
        // Predicated region
        $region57: #{tpu_custom_call.1} parent=39 // pred_check
          %p350 = pneg %p149
        $region58: #{tpu_custom_call.1} parent=39 // pred_check_branch
          %352 = sbr.rel (%p350) target = $region60
        $region59: #{tpu_custom_call.1} parent=39 // pred_region
          %353 = dma.done [#allocation9], 16
        $region60: #{tpu_custom_call.1} parent=39 // pred_fallthru
          _
        %s354 = sand.u32 %s52, 1
        %s355 = scalar_lea.sflag [#allocation3], %s354
        %s356 = sand.u32 %s52, 1
        %s357 = smul.addr %s356, 256
        %s358 = scalar_lea.vmem [#allocation2], %s357
        %p359 = pneg %p65
        %p360 = pneg %p62
        %p361 = pneg %p86
        %p362 = pneg %p83
        %p363 = pneg %p107
        %p364 = pneg %p104
        %p365 = pneg %p128
        %p366 = pneg %p125
        %p367 = pneg %p149
        %p368 = pneg %p146
        %p369 = pneg %p177
        %p370 = pneg %p174
        %s371 = sand.u32 %s164, 1
        %s372 = scalar_lea.sflag [#allocation4], %s371
        %s373 = sand.u32 %s164, 1
        %s374 = smul.addr %s373, 256
        %s375 = scalar_lea.vmem [#allocation11], %s374
        %p376 = pneg %p205
        %p377 = pneg %p202
        %s378 = sand.u32 %s30, 1
        %s379 = scalar_lea.sflag [#allocation13], %s378
        %s380 = sand.u32 %s192, 1
        %s381 = smul.addr %s380, 256
        %s382 = scalar_lea.vmem [#allocation12], %s381
        %p383 = pneg %p233
        %p384 = pneg %p230
        %s385 = sand.u32 %s30, 1
        %s386 = scalar_lea.sflag [#allocation13], %s385
        %s387 = sand.u32 %s220, 1
        %s388 = smul.addr %s387, 256
        %s389 = scalar_lea.vmem [#allocation14], %s388
        %s390 = smul.u32 32, %s35
        %s391 = smul.u32 32, %s35
        %s392 = smul.u32 32, %s35
        %s393 = smul.u32 32, %s35
        %v394 = vld [vmem:[%s333] sm:$0xff]
        %v395 = vld [vmem:[%s333 + $0x8] sm:$0xff]
        %v396 = vld [vmem:[%s333 + $0x10] sm:$0xff]
        %v397 = vld [vmem:[%s333 + $0x18] sm:$0xff]
        %v398 = vld [vmem:[%s333 + $0x20] sm:$0xff]
        %v399 = vld [vmem:[%s333 + $0x28] sm:$0xff]
        %v400 = vld [vmem:[%s333 + $0x30] sm:$0xff]
        %v401 = vld [vmem:[%s333 + $0x38] sm:$0xff]
        %v402 = vld [vmem:[%s333 + $0x40] sm:$0xff]
        %v403 = vld [vmem:[%s333 + $0x48] sm:$0xff]
        %v404 = vld [vmem:[%s333 + $0x50] sm:$0xff]
        %v405 = vld [vmem:[%s333 + $0x58] sm:$0xff]
        %v406 = vld [vmem:[%s333 + $0x60] sm:$0xff]
        %v407 = vld [vmem:[%s333 + $0x68] sm:$0xff]
        %v408 = vld [vmem:[%s333 + $0x70] sm:$0xff]
        %v409 = vld [vmem:[%s333 + $0x78] sm:$0xff]
        %v410 = vld [vmem:[%s333 + $0x80] sm:$0xff]
        %v411 = vld [vmem:[%s333 + $0x88] sm:$0xff]
        %v412 = vld [vmem:[%s333 + $0x90] sm:$0xff]
        %v413 = vld [vmem:[%s333 + $0x98] sm:$0xff]
        %v414 = vld [vmem:[%s333 + $0xa0] sm:$0xff]
        %v415 = vld [vmem:[%s333 + $0xa8] sm:$0xff]
        %v416 = vld [vmem:[%s333 + $0xb0] sm:$0xff]
        %v417 = vld [vmem:[%s333 + $0xb8] sm:$0xff]
        %v418 = vld [vmem:[%s333 + $0xc0] sm:$0xff]
        %v419 = vld [vmem:[%s333 + $0xc8] sm:$0xff]
        %v420 = vld [vmem:[%s333 + $0xd0] sm:$0xff]
        %v421 = vld [vmem:[%s333 + $0xd8] sm:$0xff]
        %v422 = vld [vmem:[%s333 + $0xe0] sm:$0xff]
        %v423 = vld [vmem:[%s333 + $0xe8] sm:$0xff]
        %v424 = vld [vmem:[%s333 + $0xf0] sm:$0xff]
        %v425 = vld [vmem:[%s333 + $0xf8] sm:$0xff]
        %v426 = vunpack.c.l.bf16 %v394
        %v427 = vunpack.c.h.bf16 %v394
        %v428 = vunpack.c.l.bf16 %v395
        %v429 = vunpack.c.h.bf16 %v395
        %v430 = vunpack.c.l.bf16 %v396
        %v431 = vunpack.c.h.bf16 %v396
        %v432 = vunpack.c.l.bf16 %v397
        %v433 = vunpack.c.h.bf16 %v397
        %v434 = vunpack.c.l.bf16 %v398
        %v435 = vunpack.c.h.bf16 %v398
        %v436 = vunpack.c.l.bf16 %v399
        %v437 = vunpack.c.h.bf16 %v399
        %v438 = vunpack.c.l.bf16 %v400
        %v439 = vunpack.c.h.bf16 %v400
        %v440 = vunpack.c.l.bf16 %v401
        %v441 = vunpack.c.h.bf16 %v401
        %v442 = vunpack.c.l.bf16 %v402
        %v443 = vunpack.c.h.bf16 %v402
        %v444 = vunpack.c.l.bf16 %v403
        %v445 = vunpack.c.h.bf16 %v403
        %v446 = vunpack.c.l.bf16 %v404
        %v447 = vunpack.c.h.bf16 %v404
        %v448 = vunpack.c.l.bf16 %v405
        %v449 = vunpack.c.h.bf16 %v405
        %v450 = vunpack.c.l.bf16 %v406
        %v451 = vunpack.c.h.bf16 %v406
        %v452 = vunpack.c.l.bf16 %v407
        %v453 = vunpack.c.h.bf16 %v407
        %v454 = vunpack.c.l.bf16 %v408
        %v455 = vunpack.c.h.bf16 %v408
        %v456 = vunpack.c.l.bf16 %v409
        %v457 = vunpack.c.h.bf16 %v409
        %v458 = vunpack.c.l.bf16 %v410
        %v459 = vunpack.c.h.bf16 %v410
        %v460 = vunpack.c.l.bf16 %v411
        %v461 = vunpack.c.h.bf16 %v411
        %v462 = vunpack.c.l.bf16 %v412
        %v463 = vunpack.c.h.bf16 %v412
        %v464 = vunpack.c.l.bf16 %v413
        %v465 = vunpack.c.h.bf16 %v413
        %v466 = vunpack.c.l.bf16 %v414
        %v467 = vunpack.c.h.bf16 %v414
        %v468 = vunpack.c.l.bf16 %v415
        %v469 = vunpack.c.h.bf16 %v415
        %v470 = vunpack.c.l.bf16 %v416
        %v471 = vunpack.c.h.bf16 %v416
        %v472 = vunpack.c.l.bf16 %v417
        %v473 = vunpack.c.h.bf16 %v417
        %v474 = vunpack.c.l.bf16 %v418
        %v475 = vunpack.c.h.bf16 %v418
        %v476 = vunpack.c.l.bf16 %v419
        %v477 = vunpack.c.h.bf16 %v419
        %v478 = vunpack.c.l.bf16 %v420
        %v479 = vunpack.c.h.bf16 %v420
        %v480 = vunpack.c.l.bf16 %v421
        %v481 = vunpack.c.h.bf16 %v421
        %v482 = vunpack.c.l.bf16 %v422
        %v483 = vunpack.c.h.bf16 %v422
        %v484 = vunpack.c.l.bf16 %v423
        %v485 = vunpack.c.h.bf16 %v423
        %v486 = vunpack.c.l.bf16 %v424
        %v487 = vunpack.c.h.bf16 %v424
        %v488 = vunpack.c.l.bf16 %v425
        %v489 = vunpack.c.h.bf16 %v425
        %v490 = vmul.f32 %v426, %v426
        %v491 = vmul.f32 %v427, %v427
        %v492 = vmul.f32 %v428, %v428
        %v493 = vmul.f32 %v429, %v429
        %v494 = vmul.f32 %v430, %v430
        %v495 = vmul.f32 %v431, %v431
        %v496 = vmul.f32 %v432, %v432
        %v497 = vmul.f32 %v433, %v433
        %v498 = vmul.f32 %v434, %v434
        %v499 = vmul.f32 %v435, %v435
        %v500 = vmul.f32 %v436, %v436
        %v501 = vmul.f32 %v437, %v437
        %v502 = vmul.f32 %v438, %v438
        %v503 = vmul.f32 %v439, %v439
        %v504 = vmul.f32 %v440, %v440
        %v505 = vmul.f32 %v441, %v441
        %v506 = vmul.f32 %v442, %v442
        %v507 = vmul.f32 %v443, %v443
        %v508 = vmul.f32 %v444, %v444
        %v509 = vmul.f32 %v445, %v445
        %v510 = vmul.f32 %v446, %v446
        %v511 = vmul.f32 %v447, %v447
        %v512 = vmul.f32 %v448, %v448
        %v513 = vmul.f32 %v449, %v449
        %v514 = vmul.f32 %v450, %v450
        %v515 = vmul.f32 %v451, %v451
        %v516 = vmul.f32 %v452, %v452
        %v517 = vmul.f32 %v453, %v453
        %v518 = vmul.f32 %v454, %v454
        %v519 = vmul.f32 %v455, %v455
        %v520 = vmul.f32 %v456, %v456
        %v521 = vmul.f32 %v457, %v457
        %v522 = vmul.f32 %v458, %v458
        %v523 = vmul.f32 %v459, %v459
        %v524 = vmul.f32 %v460, %v460
        %v525 = vmul.f32 %v461, %v461
        %v526 = vmul.f32 %v462, %v462
        %v527 = vmul.f32 %v463, %v463
        %v528 = vmul.f32 %v464, %v464
        %v529 = vmul.f32 %v465, %v465
        %v530 = vmul.f32 %v466, %v466
        %v531 = vmul.f32 %v467, %v467
        %v532 = vmul.f32 %v468, %v468
        %v533 = vmul.f32 %v469, %v469
        %v534 = vmul.f32 %v470, %v470
        %v535 = vmul.f32 %v471, %v471
        %v536 = vmul.f32 %v472, %v472
        %v537 = vmul.f32 %v473, %v473
        %v538 = vmul.f32 %v474, %v474
        %v539 = vmul.f32 %v475, %v475
        %v540 = vmul.f32 %v476, %v476
        %v541 = vmul.f32 %v477, %v477
        %v542 = vmul.f32 %v478, %v478
        %v543 = vmul.f32 %v479, %v479
        %v544 = vmul.f32 %v480, %v480
        %v545 = vmul.f32 %v481, %v481
        %v546 = vmul.f32 %v482, %v482
        %v547 = vmul.f32 %v483, %v483
        %v548 = vmul.f32 %v484, %v484
        %v549 = vmul.f32 %v485, %v485
        %v550 = vmul.f32 %v486, %v486
        %v551 = vmul.f32 %v487, %v487
        %v552 = vmul.f32 %v488, %v488
        %v553 = vmul.f32 %v489, %v489
        %v554 = vadd.f32 %v490, %v491
        %555 = vadd.xlane.f32.xlu0 %v554
        %v556 = vpop.xlane.xlu0 %555
        %v557 = vadd.f32 %v492, %v493
        %558 = vadd.xlane.f32.xlu0 %v557
        %v559 = vpop.xlane.xlu0 %558
        %v560 = vadd.f32 %v494, %v495
        %561 = vadd.xlane.f32.xlu0 %v560
        %v562 = vpop.xlane.xlu0 %561
        %v563 = vadd.f32 %v496, %v497
        %564 = vadd.xlane.f32.xlu0 %v563
        %v565 = vpop.xlane.xlu0 %564
        %v566 = vadd.f32 %v498, %v499
        %567 = vadd.xlane.f32.xlu0 %v566
        %v568 = vpop.xlane.xlu0 %567
        %v569 = vadd.f32 %v500, %v501
        %570 = vadd.xlane.f32.xlu0 %v569
        %v571 = vpop.xlane.xlu0 %570
        %v572 = vadd.f32 %v502, %v503
        %573 = vadd.xlane.f32.xlu0 %v572
        %v574 = vpop.xlane.xlu0 %573
        %v575 = vadd.f32 %v504, %v505
        %576 = vadd.xlane.f32.xlu0 %v575
        %v577 = vpop.xlane.xlu0 %576
        %v578 = vadd.f32 %v506, %v507
        %579 = vadd.xlane.f32.xlu0 %v578
        %v580 = vpop.xlane.xlu0 %579
        %v581 = vadd.f32 %v508, %v509
        %582 = vadd.xlane.f32.xlu0 %v581
        %v583 = vpop.xlane.xlu0 %582
        %v584 = vadd.f32 %v510, %v511
        %585 = vadd.xlane.f32.xlu0 %v584
        %v586 = vpop.xlane.xlu0 %585
        %v587 = vadd.f32 %v512, %v513
        %588 = vadd.xlane.f32.xlu0 %v587
        %v589 = vpop.xlane.xlu0 %588
        %v590 = vadd.f32 %v514, %v515
        %591 = vadd.xlane.f32.xlu0 %v590
        %v592 = vpop.xlane.xlu0 %591
        %v593 = vadd.f32 %v516, %v517
        %594 = vadd.xlane.f32.xlu0 %v593
        %v595 = vpop.xlane.xlu0 %594
        %v596 = vadd.f32 %v518, %v519
        %597 = vadd.xlane.f32.xlu0 %v596
        %v598 = vpop.xlane.xlu0 %597
        %v599 = vadd.f32 %v520, %v521
        %600 = vadd.xlane.f32.xlu0 %v599
        %v601 = vpop.xlane.xlu0 %600
        %v602 = vadd.f32 %v522, %v523
        %603 = vadd.xlane.f32.xlu0 %v602
        %v604 = vpop.xlane.xlu0 %603
        %v605 = vadd.f32 %v524, %v525
        %606 = vadd.xlane.f32.xlu0 %v605
        %v607 = vpop.xlane.xlu0 %606
        %v608 = vadd.f32 %v526, %v527
        %609 = vadd.xlane.f32.xlu0 %v608
        %v610 = vpop.xlane.xlu0 %609
        %v611 = vadd.f32 %v528, %v529
        %612 = vadd.xlane.f32.xlu0 %v611
        %v613 = vpop.xlane.xlu0 %612
        %v614 = vadd.f32 %v530, %v531
        %615 = vadd.xlane.f32.xlu0 %v614
        %v616 = vpop.xlane.xlu0 %615
        %v617 = vadd.f32 %v532, %v533
        %618 = vadd.xlane.f32.xlu0 %v617
        %v619 = vpop.xlane.xlu0 %618
        %v620 = vadd.f32 %v534, %v535
        %621 = vadd.xlane.f32.xlu0 %v620
        %v622 = vpop.xlane.xlu0 %621
        %v623 = vadd.f32 %v536, %v537
        %624 = vadd.xlane.f32.xlu0 %v623
        %v625 = vpop.xlane.xlu0 %624
        %v626 = vadd.f32 %v538, %v539
        %627 = vadd.xlane.f32.xlu0 %v626
        %v628 = vpop.xlane.xlu0 %627
        %v629 = vadd.f32 %v540, %v541
        %630 = vadd.xlane.f32.xlu0 %v629
        %v631 = vpop.xlane.xlu0 %630
        %v632 = vadd.f32 %v542, %v543
        %633 = vadd.xlane.f32.xlu0 %v632
        %v634 = vpop.xlane.xlu0 %633
        %v635 = vadd.f32 %v544, %v545
        %636 = vadd.xlane.f32.xlu0 %v635
        %v637 = vpop.xlane.xlu0 %636
        %v638 = vadd.f32 %v546, %v547
        %639 = vadd.xlane.f32.xlu0 %v638
        %v640 = vpop.xlane.xlu0 %639
        %v641 = vadd.f32 %v548, %v549
        %642 = vadd.xlane.f32.xlu0 %v641
        %v643 = vpop.xlane.xlu0 %642
        %v644 = vadd.f32 %v550, %v551
        %645 = vadd.xlane.f32.xlu0 %v644
        %v646 = vpop.xlane.xlu0 %645
        %v647 = vadd.f32 %v552, %v553
        %648 = vadd.xlane.f32.xlu0 %v647
        %v649 = vpop.xlane.xlu0 %648
        %v650 = vrcp.pop 256.0
        %v651 = vmul.f32 %v556, %v650
        %v652 = vmul.f32 %v559, %v650
        %v653 = vmul.f32 %v562, %v650
        %v654 = vmul.f32 %v565, %v650
        %v655 = vmul.f32 %v568, %v650
        %v656 = vmul.f32 %v571, %v650
        %v657 = vmul.f32 %v574, %v650
        %v658 = vmul.f32 %v577, %v650
        %v659 = vmul.f32 %v580, %v650
        %v660 = vmul.f32 %v583, %v650
        %v661 = vmul.f32 %v586, %v650
        %v662 = vmul.f32 %v589, %v650
        %v663 = vmul.f32 %v592, %v650
        %v664 = vmul.f32 %v595, %v650
        %v665 = vmul.f32 %v598, %v650
        %v666 = vmul.f32 %v601, %v650
        %v667 = vmul.f32 %v604, %v650
        %v668 = vmul.f32 %v607, %v650
        %v669 = vmul.f32 %v610, %v650
        %v670 = vmul.f32 %v613, %v650
        %v671 = vmul.f32 %v616, %v650
        %v672 = vmul.f32 %v619, %v650
        %v673 = vmul.f32 %v622, %v650
        %v674 = vmul.f32 %v625, %v650
        %v675 = vmul.f32 %v628, %v650
        %v676 = vmul.f32 %v631, %v650
        %v677 = vmul.f32 %v634, %v650
        %v678 = vmul.f32 %v637, %v650
        %v679 = vmul.f32 %v640, %v650
        %v680 = vmul.f32 %v643, %v650
        %v681 = vmul.f32 %v646, %v650
        %v682 = vmul.f32 %v649, %v650
        %v683 = vadd.f32 %v651, 1e-06
        %v684 = vadd.f32 %v652, 1e-06
        %v685 = vadd.f32 %v653, 1e-06
        %v686 = vadd.f32 %v654, 1e-06
        %v687 = vadd.f32 %v655, 1e-06
        %v688 = vadd.f32 %v656, 1e-06
        %v689 = vadd.f32 %v657, 1e-06
        %v690 = vadd.f32 %v658, 1e-06
        %v691 = vadd.f32 %v659, 1e-06
        %v692 = vadd.f32 %v660, 1e-06
        %v693 = vadd.f32 %v661, 1e-06
        %v694 = vadd.f32 %v662, 1e-06
        %v695 = vadd.f32 %v663, 1e-06
        %v696 = vadd.f32 %v664, 1e-06
        %v697 = vadd.f32 %v665, 1e-06
        %v698 = vadd.f32 %v666, 1e-06
        %v699 = vadd.f32 %v667, 1e-06
        %v700 = vadd.f32 %v668, 1e-06
        %v701 = vadd.f32 %v669, 1e-06
        %v702 = vadd.f32 %v670, 1e-06
        %v703 = vadd.f32 %v671, 1e-06
        %v704 = vadd.f32 %v672, 1e-06
        %v705 = vadd.f32 %v673, 1e-06
        %v706 = vadd.f32 %v674, 1e-06
        %v707 = vadd.f32 %v675, 1e-06
        %v708 = vadd.f32 %v676, 1e-06
        %v709 = vadd.f32 %v677, 1e-06
        %v710 = vadd.f32 %v678, 1e-06
        %v711 = vadd.f32 %v679, 1e-06
        %v712 = vadd.f32 %v680, 1e-06
        %v713 = vadd.f32 %v681, 1e-06
        %v714 = vadd.f32 %v682, 1e-06
        %v715 = vrsqrt.pop %v683
        %v716 = vrsqrt.pop %v684
        %v717 = vrsqrt.pop %v685
        %v718 = vrsqrt.pop %v686
        %v719 = vrsqrt.pop %v687
        %v720 = vrsqrt.pop %v688
        %v721 = vrsqrt.pop %v689
        %v722 = vrsqrt.pop %v690
        %v723 = vrsqrt.pop %v691
        %v724 = vrsqrt.pop %v692
        %v725 = vrsqrt.pop %v693
        %v726 = vrsqrt.pop %v694
        %v727 = vrsqrt.pop %v695
        %v728 = vrsqrt.pop %v696
        %v729 = vrsqrt.pop %v697
        %v730 = vrsqrt.pop %v698
        %v731 = vrsqrt.pop %v699
        %v732 = vrsqrt.pop %v700
        %v733 = vrsqrt.pop %v701
        %v734 = vrsqrt.pop %v702
        %v735 = vrsqrt.pop %v703
        %v736 = vrsqrt.pop %v704
        %v737 = vrsqrt.pop %v705
        %v738 = vrsqrt.pop %v706
        %v739 = vrsqrt.pop %v707
        %v740 = vrsqrt.pop %v708
        %v741 = vrsqrt.pop %v709
        %v742 = vrsqrt.pop %v710
        %v743 = vrsqrt.pop %v711
        %v744 = vrsqrt.pop %v712
        %v745 = vrsqrt.pop %v713
        %v746 = vrsqrt.pop %v714
        %v747 = vmul.f32 %v426, %v715
        %v748 = vmul.f32 %v427, %v715
        %v749 = vmul.f32 %v428, %v716
        %v750 = vmul.f32 %v429, %v716
        %v751 = vmul.f32 %v430, %v717
        %v752 = vmul.f32 %v431, %v717
        %v753 = vmul.f32 %v432, %v718
        %v754 = vmul.f32 %v433, %v718
        %v755 = vmul.f32 %v434, %v719
        %v756 = vmul.f32 %v435, %v719
        %v757 = vmul.f32 %v436, %v720
        %v758 = vmul.f32 %v437, %v720
        %v759 = vmul.f32 %v438, %v721
        %v760 = vmul.f32 %v439, %v721
        %v761 = vmul.f32 %v440, %v722
        %v762 = vmul.f32 %v441, %v722
        %v763 = vmul.f32 %v442, %v723
        %v764 = vmul.f32 %v443, %v723
        %v765 = vmul.f32 %v444, %v724
        %v766 = vmul.f32 %v445, %v724
        %v767 = vmul.f32 %v446, %v725
        %v768 = vmul.f32 %v447, %v725
        %v769 = vmul.f32 %v448, %v726
        %v770 = vmul.f32 %v449, %v726
        %v771 = vmul.f32 %v450, %v727
        %v772 = vmul.f32 %v451, %v727
        %v773 = vmul.f32 %v452, %v728
        %v774 = vmul.f32 %v453, %v728
        %v775 = vmul.f32 %v454, %v729
        %v776 = vmul.f32 %v455, %v729
        %v777 = vmul.f32 %v456, %v730
        %v778 = vmul.f32 %v457, %v730
        %v779 = vmul.f32 %v458, %v731
        %v780 = vmul.f32 %v459, %v731
        %v781 = vmul.f32 %v460, %v732
        %v782 = vmul.f32 %v461, %v732
        %v783 = vmul.f32 %v462, %v733
        %v784 = vmul.f32 %v463, %v733
        %v785 = vmul.f32 %v464, %v734
        %v786 = vmul.f32 %v465, %v734
        %v787 = vmul.f32 %v466, %v735
        %v788 = vmul.f32 %v467, %v735
        %v789 = vmul.f32 %v468, %v736
        %v790 = vmul.f32 %v469, %v736
        %v791 = vmul.f32 %v470, %v737
        %v792 = vmul.f32 %v471, %v737
        %v793 = vmul.f32 %v472, %v738
        %v794 = vmul.f32 %v473, %v738
        %v795 = vmul.f32 %v474, %v739
        %v796 = vmul.f32 %v475, %v739
        %v797 = vmul.f32 %v476, %v740
        %v798 = vmul.f32 %v477, %v740
        %v799 = vmul.f32 %v478, %v741
        %v800 = vmul.f32 %v479, %v741
        %v801 = vmul.f32 %v480, %v742
        %v802 = vmul.f32 %v481, %v742
        %v803 = vmul.f32 %v482, %v743
        %v804 = vmul.f32 %v483, %v743
        %v805 = vmul.f32 %v484, %v744
        %v806 = vmul.f32 %v485, %v744
        %v807 = vmul.f32 %v486, %v745
        %v808 = vmul.f32 %v487, %v745
        %v809 = vmul.f32 %v488, %v746
        %v810 = vmul.f32 %v489, %v746
        %v811 = vld [vmem:[#allocation5] sm:$0x3]
        %v813 = vlaneseq
        %v814 = vshrl.u32 %v813, 7
        %v815 = vsub.s32 0, %v814
        %v816 = vrot.slane %v811, %v815
        %v817 = vlaneseq
        %v818 = vshrl.u32 %v817, 7
        %v819 = vsub.s32 1, %v818
        %v820 = vrot.slane %v811, %v819
        %v823 = vmul.f32 %v747, %v816
        %v824 = vmul.f32 %v748, %v820
        %v825 = vmul.f32 %v749, %v816
        %v826 = vmul.f32 %v750, %v820
        %v827 = vmul.f32 %v751, %v816
        %v828 = vmul.f32 %v752, %v820
        %v829 = vmul.f32 %v753, %v816
        %v830 = vmul.f32 %v754, %v820
        %v831 = vmul.f32 %v755, %v816
        %v832 = vmul.f32 %v756, %v820
        %v833 = vmul.f32 %v757, %v816
        %v834 = vmul.f32 %v758, %v820
        %v835 = vmul.f32 %v759, %v816
        %v836 = vmul.f32 %v760, %v820
        %v837 = vmul.f32 %v761, %v816
        %v838 = vmul.f32 %v762, %v820
        %v839 = vmul.f32 %v763, %v816
        %v840 = vmul.f32 %v764, %v820
        %v841 = vmul.f32 %v765, %v816
        %v842 = vmul.f32 %v766, %v820
        %v843 = vmul.f32 %v767, %v816
        %v844 = vmul.f32 %v768, %v820
        %v845 = vmul.f32 %v769, %v816
        %v846 = vmul.f32 %v770, %v820
        %v847 = vmul.f32 %v771, %v816
        %v848 = vmul.f32 %v772, %v820
        %v849 = vmul.f32 %v773, %v816
        %v850 = vmul.f32 %v774, %v820
        %v851 = vmul.f32 %v775, %v816
        %v852 = vmul.f32 %v776, %v820
        %v853 = vmul.f32 %v777, %v816
        %v854 = vmul.f32 %v778, %v820
        %v855 = vmul.f32 %v779, %v816
        %v856 = vmul.f32 %v780, %v820
        %v857 = vmul.f32 %v781, %v816
        %v858 = vmul.f32 %v782, %v820
        %v859 = vmul.f32 %v783, %v816
        %v860 = vmul.f32 %v784, %v820
        %v861 = vmul.f32 %v785, %v816
        %v862 = vmul.f32 %v786, %v820
        %v863 = vmul.f32 %v787, %v816
        %v864 = vmul.f32 %v788, %v820
        %v865 = vmul.f32 %v789, %v816
        %v866 = vmul.f32 %v790, %v820
        %v867 = vmul.f32 %v791, %v816
        %v868 = vmul.f32 %v792, %v820
        %v869 = vmul.f32 %v793, %v816
        %v870 = vmul.f32 %v794, %v820
        %v871 = vmul.f32 %v795, %v816
        %v872 = vmul.f32 %v796, %v820
        %v873 = vmul.f32 %v797, %v816
        %v874 = vmul.f32 %v798, %v820
        %v875 = vmul.f32 %v799, %v816
        %v876 = vmul.f32 %v800, %v820
        %v877 = vmul.f32 %v801, %v816
        %v878 = vmul.f32 %v802, %v820
        %v879 = vmul.f32 %v803, %v816
        %v880 = vmul.f32 %v804, %v820
        %v881 = vmul.f32 %v805, %v816
        %v882 = vmul.f32 %v806, %v820
        %v883 = vmul.f32 %v807, %v816
        %v884 = vmul.f32 %v808, %v820
        %v885 = vmul.f32 %v809, %v816
        %v886 = vmul.f32 %v810, %v820
        %v887 = vpack.c.bf16 %v825, %v823
        %v888 = vpack.c.bf16 %v826, %v824
        %v889 = vpack.c.bf16 %v829, %v827
        %v890 = vpack.c.bf16 %v830, %v828
        %v891 = vpack.c.bf16 %v833, %v831
        %v892 = vpack.c.bf16 %v834, %v832
        %v893 = vpack.c.bf16 %v837, %v835
        %v894 = vpack.c.bf16 %v838, %v836
        %v895 = vpack.c.bf16 %v841, %v839
        %v896 = vpack.c.bf16 %v842, %v840
        %v897 = vpack.c.bf16 %v845, %v843
        %v898 = vpack.c.bf16 %v846, %v844
        %v899 = vpack.c.bf16 %v849, %v847
        %v900 = vpack.c.bf16 %v850, %v848
        %v901 = vpack.c.bf16 %v853, %v851
        %v902 = vpack.c.bf16 %v854, %v852
        %v903 = vpack.c.bf16 %v857, %v855
        %v904 = vpack.c.bf16 %v858, %v856
        %v905 = vpack.c.bf16 %v861, %v859
        %v906 = vpack.c.bf16 %v862, %v860
        %v907 = vpack.c.bf16 %v865, %v863
        %v908 = vpack.c.bf16 %v866, %v864
        %v909 = vpack.c.bf16 %v869, %v867
        %v910 = vpack.c.bf16 %v870, %v868
        %v911 = vpack.c.bf16 %v873, %v871
        %v912 = vpack.c.bf16 %v874, %v872
        %v913 = vpack.c.bf16 %v877, %v875
        %v914 = vpack.c.bf16 %v878, %v876
        %v915 = vpack.c.bf16 %v881, %v879
        %v916 = vpack.c.bf16 %v882, %v880
        %v917 = vpack.c.bf16 %v885, %v883
        %v918 = vpack.c.bf16 %v886, %v884
        %v919 = vld [vmem:[#allocation7] sm:$0xff]
        %v920 = vld [vmem:[#allocation7 + $0x8] sm:$0xff]
        %v921 = vld [vmem:[#allocation7 + $0x10] sm:$0xff]
        %v922 = vld [vmem:[#allocation7 + $0x18] sm:$0xff]
        %v923 = vld [vmem:[#allocation7 + $0x20] sm:$0xff]
        %v924 = vld [vmem:[#allocation7 + $0x28] sm:$0xff]
        %v925 = vld [vmem:[#allocation7 + $0x30] sm:$0xff]
        %v926 = vld [vmem:[#allocation7 + $0x38] sm:$0xff]
        %v927 = vld [vmem:[#allocation7 + $0x40] sm:$0xff]
        %v928 = vld [vmem:[#allocation7 + $0x48] sm:$0xff]
        %v929 = vld [vmem:[#allocation7 + $0x50] sm:$0xff]
        %v930 = vld [vmem:[#allocation7 + $0x58] sm:$0xff]
        %v931 = vld [vmem:[#allocation7 + $0x60] sm:$0xff]
        %v932 = vld [vmem:[#allocation7 + $0x68] sm:$0xff]
        %v933 = vld [vmem:[#allocation7 + $0x70] sm:$0xff]
        %v934 = vld [vmem:[#allocation7 + $0x78] sm:$0xff]
        %v935 = vld [vmem:[#allocation7 + $0x80] sm:$0xff]
        %v936 = vld [vmem:[#allocation7 + $0x88] sm:$0xff]
        %v937 = vld [vmem:[#allocation7 + $0x90] sm:$0xff]
        %v938 = vld [vmem:[#allocation7 + $0x98] sm:$0xff]
        %v939 = vld [vmem:[#allocation7 + $0xa0] sm:$0xff]
        %v940 = vld [vmem:[#allocation7 + $0xa8] sm:$0xff]
        %v941 = vld [vmem:[#allocation7 + $0xb0] sm:$0xff]
        %v942 = vld [vmem:[#allocation7 + $0xb8] sm:$0xff]
        %v943 = vld [vmem:[#allocation7 + $0xc0] sm:$0xff]
        %v944 = vld [vmem:[#allocation7 + $0xc8] sm:$0xff]
        %v945 = vld [vmem:[#allocation7 + $0xd0] sm:$0xff]
        %v946 = vld [vmem:[#allocation7 + $0xd8] sm:$0xff]
        %v947 = vld [vmem:[#allocation7 + $0xe0] sm:$0xff]
        %v948 = vld [vmem:[#allocation7 + $0xe8] sm:$0xff]
        %v949 = vld [vmem:[#allocation7 + $0xf0] sm:$0xff]
        %v950 = vld [vmem:[#allocation7 + $0xf8] sm:$0xff]
        %v951 = vld [vmem:[#allocation7 + $0x100] sm:$0xff]
        %v952 = vld [vmem:[#allocation7 + $0x108] sm:$0xff]
        %v953 = vld [vmem:[#allocation7 + $0x110] sm:$0xff]
        %v954 = vld [vmem:[#allocation7 + $0x118] sm:$0xff]
        %v955 = vld [vmem:[#allocation7 + $0x120] sm:$0xff]
        %v956 = vld [vmem:[#allocation7 + $0x128] sm:$0xff]
        %v957 = vld [vmem:[#allocation7 + $0x130] sm:$0xff]
        %v958 = vld [vmem:[#allocation7 + $0x138] sm:$0xff]
        %v959 = vld [vmem:[#allocation7 + $0x140] sm:$0xff]
        %v960 = vld [vmem:[#allocation7 + $0x148] sm:$0xff]
        %v961 = vld [vmem:[#allocation7 + $0x150] sm:$0xff]
        %v962 = vld [vmem:[#allocation7 + $0x158] sm:$0xff]
        %v963 = vld [vmem:[#allocation7 + $0x160] sm:$0xff]
        %v964 = vld [vmem:[#allocation7 + $0x168] sm:$0xff]
        %v965 = vld [vmem:[#allocation7 + $0x170] sm:$0xff]
        %v966 = vld [vmem:[#allocation7 + $0x178] sm:$0xff]
        %v967 = vld [vmem:[#allocation7 + $0x180] sm:$0xff]
        %v968 = vld [vmem:[#allocation7 + $0x188] sm:$0xff]
        %v969 = vld [vmem:[#allocation7 + $0x190] sm:$0xff]
        %v970 = vld [vmem:[#allocation7 + $0x198] sm:$0xff]
        %v971 = vld [vmem:[#allocation7 + $0x1a0] sm:$0xff]
        %v972 = vld [vmem:[#allocation7 + $0x1a8] sm:$0xff]
        %v973 = vld [vmem:[#allocation7 + $0x1b0] sm:$0xff]
        %v974 = vld [vmem:[#allocation7 + $0x1b8] sm:$0xff]
        %v975 = vld [vmem:[#allocation7 + $0x1c0] sm:$0xff]
        %v976 = vld [vmem:[#allocation7 + $0x1c8] sm:$0xff]
        %v977 = vld [vmem:[#allocation7 + $0x1d0] sm:$0xff]
        %v978 = vld [vmem:[#allocation7 + $0x1d8] sm:$0xff]
        %v979 = vld [vmem:[#allocation7 + $0x1e0] sm:$0xff]
        %v980 = vld [vmem:[#allocation7 + $0x1e8] sm:$0xff]
        %v981 = vld [vmem:[#allocation7 + $0x1f0] sm:$0xff]
        %v982 = vld [vmem:[#allocation7 + $0x1f8] sm:$0xff]
        %v983 = vld [vmem:[#allocation7 + $0x200] sm:$0xff]
        %v984 = vld [vmem:[#allocation7 + $0x208] sm:$0xff]
        %v985 = vld [vmem:[#allocation7 + $0x210] sm:$0xff]
        %v986 = vld [vmem:[#allocation7 + $0x218] sm:$0xff]
        %v987 = vld [vmem:[#allocation7 + $0x220] sm:$0xff]
        %v988 = vld [vmem:[#allocation7 + $0x228] sm:$0xff]
        %v989 = vld [vmem:[#allocation7 + $0x230] sm:$0xff]
        %v990 = vld [vmem:[#allocation7 + $0x238] sm:$0xff]
        %v991 = vld [vmem:[#allocation7 + $0x240] sm:$0xff]
        %v992 = vld [vmem:[#allocation7 + $0x248] sm:$0xff]
        %v993 = vld [vmem:[#allocation7 + $0x250] sm:$0xff]
        %v994 = vld [vmem:[#allocation7 + $0x258] sm:$0xff]
        %v995 = vld [vmem:[#allocation7 + $0x260] sm:$0xff]
        %v996 = vld [vmem:[#allocation7 + $0x268] sm:$0xff]
        %v997 = vld [vmem:[#allocation7 + $0x270] sm:$0xff]
        %v998 = vld [vmem:[#allocation7 + $0x278] sm:$0xff]
        %v999 = vld [vmem:[#allocation7 + $0x280] sm:$0xff]
        %v1000 = vld [vmem:[#allocation7 + $0x288] sm:$0xff]
        %v1001 = vld [vmem:[#allocation7 + $0x290] sm:$0xff]
        %v1002 = vld [vmem:[#allocation7 + $0x298] sm:$0xff]
        %v1003 = vld [vmem:[#allocation7 + $0x2a0] sm:$0xff]
        %v1004 = vld [vmem:[#allocation7 + $0x2a8] sm:$0xff]
        %v1005 = vld [vmem:[#allocation7 + $0x2b0] sm:$0xff]
        %v1006 = vld [vmem:[#allocation7 + $0x2b8] sm:$0xff]
        %v1007 = vld [vmem:[#allocation7 + $0x2c0] sm:$0xff]
        %v1008 = vld [vmem:[#allocation7 + $0x2c8] sm:$0xff]
        %v1009 = vld [vmem:[#allocation7 + $0x2d0] sm:$0xff]
        %v1010 = vld [vmem:[#allocation7 + $0x2d8] sm:$0xff]
        %v1011 = vld [vmem:[#allocation7 + $0x2e0] sm:$0xff]
        %v1012 = vld [vmem:[#allocation7 + $0x2e8] sm:$0xff]
        %v1013 = vld [vmem:[#allocation7 + $0x2f0] sm:$0xff]
        %v1014 = vld [vmem:[#allocation7 + $0x2f8] sm:$0xff]
        %v1111 = vunpack.c.l.b16 %v919
        %v1112 = vunpack.c.h.b16 %v919
        %v1113 = vunpack.c.l.b16 %v920
        %v1114 = vunpack.c.h.b16 %v920
        %v1115 = vunpack.c.l.b16 %v921
        %v1116 = vunpack.c.h.b16 %v921
        %v1117 = vunpack.c.l.b16 %v922
        %v1118 = vunpack.c.h.b16 %v922
        %v1119 = vunpack.c.l.b16 %v923
        %v1120 = vunpack.c.h.b16 %v923
        %v1121 = vunpack.c.l.b16 %v924
        %v1122 = vunpack.c.h.b16 %v924
        %v1123 = vunpack.c.l.b16 %v925
        %v1124 = vunpack.c.h.b16 %v925
        %v1125 = vunpack.c.l.b16 %v926
        %v1126 = vunpack.c.h.b16 %v926
        %v1127 = vunpack.c.l.b16 %v927
        %v1128 = vunpack.c.h.b16 %v927
        %v1129 = vunpack.c.l.b16 %v928
        %v1130 = vunpack.c.h.b16 %v928
        %v1131 = vunpack.c.l.b16 %v929
        %v1132 = vunpack.c.h.b16 %v929
        %v1133 = vunpack.c.l.b16 %v930
        %v1134 = vunpack.c.h.b16 %v930
        %v1135 = vunpack.c.l.b16 %v931
        %v1136 = vunpack.c.h.b16 %v931
        %v1137 = vunpack.c.l.b16 %v932
        %v1138 = vunpack.c.h.b16 %v932
        %v1139 = vunpack.c.l.b16 %v933
        %v1140 = vunpack.c.h.b16 %v933
        %v1141 = vunpack.c.l.b16 %v934
        %v1142 = vunpack.c.h.b16 %v934
        %v1143 = vunpack.c.l.b16 %v935
        %v1144 = vunpack.c.h.b16 %v935
        %v1145 = vunpack.c.l.b16 %v936
        %v1146 = vunpack.c.h.b16 %v936
        %v1147 = vunpack.c.l.b16 %v937
        %v1148 = vunpack.c.h.b16 %v937
        %v1149 = vunpack.c.l.b16 %v938
        %v1150 = vunpack.c.h.b16 %v938
        %v1151 = vunpack.c.l.b16 %v939
        %v1152 = vunpack.c.h.b16 %v939
        %v1153 = vunpack.c.l.b16 %v940
        %v1154 = vunpack.c.h.b16 %v940
        %v1155 = vunpack.c.l.b16 %v941
        %v1156 = vunpack.c.h.b16 %v941
        %v1157 = vunpack.c.l.b16 %v942
        %v1158 = vunpack.c.h.b16 %v942
        %v1159 = vunpack.c.l.b16 %v943
        %v1160 = vunpack.c.h.b16 %v943
        %v1161 = vunpack.c.l.b16 %v944
        %v1162 = vunpack.c.h.b16 %v944
        %v1163 = vunpack.c.l.b16 %v945
        %v1164 = vunpack.c.h.b16 %v945
        %v1165 = vunpack.c.l.b16 %v946
        %v1166 = vunpack.c.h.b16 %v946
        %v1167 = vunpack.c.l.b16 %v947
        %v1168 = vunpack.c.h.b16 %v947
        %v1169 = vunpack.c.l.b16 %v948
        %v1170 = vunpack.c.h.b16 %v948
        %v1171 = vunpack.c.l.b16 %v949
        %v1172 = vunpack.c.h.b16 %v949
        %v1173 = vunpack.c.l.b16 %v950
        %v1174 = vunpack.c.h.b16 %v950
        %v1175 = vunpack.c.l.b16 %v951
        %v1176 = vunpack.c.h.b16 %v951
        %v1177 = vunpack.c.l.b16 %v952
        %v1178 = vunpack.c.h.b16 %v952
        %v1179 = vunpack.c.l.b16 %v953
        %v1180 = vunpack.c.h.b16 %v953
        %v1181 = vunpack.c.l.b16 %v954
        %v1182 = vunpack.c.h.b16 %v954
        %v1183 = vunpack.c.l.b16 %v955
        %v1184 = vunpack.c.h.b16 %v955
        %v1185 = vunpack.c.l.b16 %v956
        %v1186 = vunpack.c.h.b16 %v956
        %v1187 = vunpack.c.l.b16 %v957
        %v1188 = vunpack.c.h.b16 %v957
        %v1189 = vunpack.c.l.b16 %v958
        %v1190 = vunpack.c.h.b16 %v958
        %v1191 = vunpack.c.l.b16 %v959
        %v1192 = vunpack.c.h.b16 %v959
        %v1193 = vunpack.c.l.b16 %v960
        %v1194 = vunpack.c.h.b16 %v960
        %v1195 = vunpack.c.l.b16 %v961
        %v1196 = vunpack.c.h.b16 %v961
        %v1197 = vunpack.c.l.b16 %v962
        %v1198 = vunpack.c.h.b16 %v962
        %v1199 = vunpack.c.l.b16 %v963
        %v1200 = vunpack.c.h.b16 %v963
        %v1201 = vunpack.c.l.b16 %v964
        %v1202 = vunpack.c.h.b16 %v964
        %v1203 = vunpack.c.l.b16 %v965
        %v1204 = vunpack.c.h.b16 %v965
        %v1205 = vunpack.c.l.b16 %v966
        %v1206 = vunpack.c.h.b16 %v966
        %v1207 = vunpack.c.l.b16 %v967
        %v1208 = vunpack.c.h.b16 %v967
        %v1209 = vunpack.c.l.b16 %v968
        %v1210 = vunpack.c.h.b16 %v968
        %v1211 = vunpack.c.l.b16 %v969
        %v1212 = vunpack.c.h.b16 %v969
        %v1213 = vunpack.c.l.b16 %v970
        %v1214 = vunpack.c.h.b16 %v970
        %v1215 = vunpack.c.l.b16 %v971
        %v1216 = vunpack.c.h.b16 %v971
        %v1217 = vunpack.c.l.b16 %v972
        %v1218 = vunpack.c.h.b16 %v972
        %v1219 = vunpack.c.l.b16 %v973
        %v1220 = vunpack.c.h.b16 %v973
        %v1221 = vunpack.c.l.b16 %v974
        %v1222 = vunpack.c.h.b16 %v974
        %v1223 = vunpack.c.l.b16 %v975
        %v1224 = vunpack.c.h.b16 %v975
        %v1225 = vunpack.c.l.b16 %v976
        %v1226 = vunpack.c.h.b16 %v976
        %v1227 = vunpack.c.l.b16 %v977
        %v1228 = vunpack.c.h.b16 %v977
        %v1229 = vunpack.c.l.b16 %v978
        %v1230 = vunpack.c.h.b16 %v978
        %v1231 = vunpack.c.l.b16 %v979
        %v1232 = vunpack.c.h.b16 %v979
        %v1233 = vunpack.c.l.b16 %v980
        %v1234 = vunpack.c.h.b16 %v980
        %v1235 = vunpack.c.l.b16 %v981
        %v1236 = vunpack.c.h.b16 %v981
        %v1237 = vunpack.c.l.b16 %v982
        %v1238 = vunpack.c.h.b16 %v982
        %v1239 = vunpack.c.l.b16 %v983
        %v1240 = vunpack.c.h.b16 %v983
        %v1241 = vunpack.c.l.b16 %v984
        %v1242 = vunpack.c.h.b16 %v984
        %v1243 = vunpack.c.l.b16 %v985
        %v1244 = vunpack.c.h.b16 %v985
        %v1245 = vunpack.c.l.b16 %v986
        %v1246 = vunpack.c.h.b16 %v986
        %v1247 = vunpack.c.l.b16 %v987
        %v1248 = vunpack.c.h.b16 %v987
        %v1249 = vunpack.c.l.b16 %v988
        %v1250 = vunpack.c.h.b16 %v988
        %v1251 = vunpack.c.l.b16 %v989
        %v1252 = vunpack.c.h.b16 %v989
        %v1253 = vunpack.c.l.b16 %v990
        %v1254 = vunpack.c.h.b16 %v990
        %v1255 = vunpack.c.l.b16 %v991
        %v1256 = vunpack.c.h.b16 %v991
        %v1257 = vunpack.c.l.b16 %v992
        %v1258 = vunpack.c.h.b16 %v992
        %v1259 = vunpack.c.l.b16 %v993
        %v1260 = vunpack.c.h.b16 %v993
        %v1261 = vunpack.c.l.b16 %v994
        %v1262 = vunpack.c.h.b16 %v994
        %v1263 = vunpack.c.l.b16 %v995
        %v1264 = vunpack.c.h.b16 %v995
        %v1265 = vunpack.c.l.b16 %v996
        %v1266 = vunpack.c.h.b16 %v996
        %v1267 = vunpack.c.l.b16 %v997
        %v1268 = vunpack.c.h.b16 %v997
        %v1269 = vunpack.c.l.b16 %v998
        %v1270 = vunpack.c.h.b16 %v998
        %v1271 = vunpack.c.l.b16 %v999
        %v1272 = vunpack.c.h.b16 %v999
        %v1273 = vunpack.c.l.b16 %v1000
        %v1274 = vunpack.c.h.b16 %v1000
        %v1275 = vunpack.c.l.b16 %v1001
        %v1276 = vunpack.c.h.b16 %v1001
        %v1277 = vunpack.c.l.b16 %v1002
        %v1278 = vunpack.c.h.b16 %v1002
        %v1279 = vunpack.c.l.b16 %v1003
        %v1280 = vunpack.c.h.b16 %v1003
        %v1281 = vunpack.c.l.b16 %v1004
        %v1282 = vunpack.c.h.b16 %v1004
        %v1283 = vunpack.c.l.b16 %v1005
        %v1284 = vunpack.c.h.b16 %v1005
        %v1285 = vunpack.c.l.b16 %v1006
        %v1286 = vunpack.c.h.b16 %v1006
        %v1287 = vunpack.c.l.b16 %v1007
        %v1288 = vunpack.c.h.b16 %v1007
        %v1289 = vunpack.c.l.b16 %v1008
        %v1290 = vunpack.c.h.b16 %v1008
        %v1291 = vunpack.c.l.b16 %v1009
        %v1292 = vunpack.c.h.b16 %v1009
        %v1293 = vunpack.c.l.b16 %v1010
        %v1294 = vunpack.c.h.b16 %v1010
        %v1295 = vunpack.c.l.b16 %v1011
        %v1296 = vunpack.c.h.b16 %v1011
        %v1297 = vunpack.c.l.b16 %v1012
        %v1298 = vunpack.c.h.b16 %v1012
        %v1299 = vunpack.c.l.b16 %v1013
        %v1300 = vunpack.c.h.b16 %v1013
        %v1301 = vunpack.c.l.b16 %v1014
        %v1302 = vunpack.c.h.b16 %v1014
        %v1303 = vpack.c.b16 %v1117, %v1111
        %v1304 = vpack.c.b16 %v1118, %v1112
        %v1305 = vpack.c.b16 %v1119, %v1113
        %v1306 = vpack.c.b16 %v1120, %v1114
        %v1307 = vpack.c.b16 %v1121, %v1115
        %v1308 = vpack.c.b16 %v1122, %v1116
        %v1309 = vpack.c.b16 %v1129, %v1123
        %v1310 = vpack.c.b16 %v1130, %v1124
        %v1311 = vpack.c.b16 %v1131, %v1125
        %v1312 = vpack.c.b16 %v1132, %v1126
        %v1313 = vpack.c.b16 %v1133, %v1127
        %v1314 = vpack.c.b16 %v1134, %v1128
        %v1315 = vpack.c.b16 %v1141, %v1135
        %v1316 = vpack.c.b16 %v1142, %v1136
        %v1317 = vpack.c.b16 %v1143, %v1137
        %v1318 = vpack.c.b16 %v1144, %v1138
        %v1319 = vpack.c.b16 %v1145, %v1139
        %v1320 = vpack.c.b16 %v1146, %v1140
        %v1321 = vpack.c.b16 %v1153, %v1147
        %v1322 = vpack.c.b16 %v1154, %v1148
        %v1323 = vpack.c.b16 %v1155, %v1149
        %v1324 = vpack.c.b16 %v1156, %v1150
        %v1325 = vpack.c.b16 %v1157, %v1151
        %v1326 = vpack.c.b16 %v1158, %v1152
        %v1327 = vpack.c.b16 %v1165, %v1159
        %v1328 = vpack.c.b16 %v1166, %v1160
        %v1329 = vpack.c.b16 %v1167, %v1161
        %v1330 = vpack.c.b16 %v1168, %v1162
        %v1331 = vpack.c.b16 %v1169, %v1163
        %v1332 = vpack.c.b16 %v1170, %v1164
        %v1333 = vpack.c.b16 %v1177, %v1171
        %v1334 = vpack.c.b16 %v1178, %v1172
        %v1335 = vpack.c.b16 %v1179, %v1173
        %v1336 = vpack.c.b16 %v1180, %v1174
        %v1337 = vpack.c.b16 %v1181, %v1175
        %v1338 = vpack.c.b16 %v1182, %v1176
        %v1339 = vpack.c.b16 %v1189, %v1183
        %v1340 = vpack.c.b16 %v1190, %v1184
        %v1341 = vpack.c.b16 %v1191, %v1185
        %v1342 = vpack.c.b16 %v1192, %v1186
        %v1343 = vpack.c.b16 %v1193, %v1187
        %v1344 = vpack.c.b16 %v1194, %v1188
        %v1345 = vpack.c.b16 %v1201, %v1195
        %v1346 = vpack.c.b16 %v1202, %v1196
        %v1347 = vpack.c.b16 %v1203, %v1197
        %v1348 = vpack.c.b16 %v1204, %v1198
        %v1349 = vpack.c.b16 %v1205, %v1199
        %v1350 = vpack.c.b16 %v1206, %v1200
        %v1351 = vpack.c.b16 %v1213, %v1207
        %v1352 = vpack.c.b16 %v1214, %v1208
        %v1353 = vpack.c.b16 %v1215, %v1209
        %v1354 = vpack.c.b16 %v1216, %v1210
        %v1355 = vpack.c.b16 %v1217, %v1211
        %v1356 = vpack.c.b16 %v1218, %v1212
        %v1357 = vpack.c.b16 %v1225, %v1219
        %v1358 = vpack.c.b16 %v1226, %v1220
        %v1359 = vpack.c.b16 %v1227, %v1221
        %v1360 = vpack.c.b16 %v1228, %v1222
        %v1361 = vpack.c.b16 %v1229, %v1223
        %v1362 = vpack.c.b16 %v1230, %v1224
        %v1363 = vpack.c.b16 %v1237, %v1231
        %v1364 = vpack.c.b16 %v1238, %v1232
        %v1365 = vpack.c.b16 %v1239, %v1233
        %v1366 = vpack.c.b16 %v1240, %v1234
        %v1367 = vpack.c.b16 %v1241, %v1235
        %v1368 = vpack.c.b16 %v1242, %v1236
        %v1369 = vpack.c.b16 %v1249, %v1243
        %v1370 = vpack.c.b16 %v1250, %v1244
        %v1371 = vpack.c.b16 %v1251, %v1245
        %v1372 = vpack.c.b16 %v1252, %v1246
        %v1373 = vpack.c.b16 %v1253, %v1247
        %v1374 = vpack.c.b16 %v1254, %v1248
        %v1375 = vpack.c.b16 %v1261, %v1255
        %v1376 = vpack.c.b16 %v1262, %v1256
        %v1377 = vpack.c.b16 %v1263, %v1257
        %v1378 = vpack.c.b16 %v1264, %v1258
        %v1379 = vpack.c.b16 %v1265, %v1259
        %v1380 = vpack.c.b16 %v1266, %v1260
        %v1381 = vpack.c.b16 %v1273, %v1267
        %v1382 = vpack.c.b16 %v1274, %v1268
        %v1383 = vpack.c.b16 %v1275, %v1269
        %v1384 = vpack.c.b16 %v1276, %v1270
        %v1385 = vpack.c.b16 %v1277, %v1271
        %v1386 = vpack.c.b16 %v1278, %v1272
        %v1387 = vpack.c.b16 %v1285, %v1279
        %v1388 = vpack.c.b16 %v1286, %v1280
        %v1389 = vpack.c.b16 %v1287, %v1281
        %v1390 = vpack.c.b16 %v1288, %v1282
        %v1391 = vpack.c.b16 %v1289, %v1283
        %v1392 = vpack.c.b16 %v1290, %v1284
        %v1393 = vpack.c.b16 %v1297, %v1291
        %v1394 = vpack.c.b16 %v1298, %v1292
        %v1395 = vpack.c.b16 %v1299, %v1293
        %v1396 = vpack.c.b16 %v1300, %v1294
        %v1397 = vpack.c.b16 %v1301, %v1295
        %v1398 = vpack.c.b16 %v1302, %v1296
        %1495 = vmatprep.subr.bf16.mxu0 %v1304
        %1496 = vmatpush1.bf16.msra.mxu0 %v1303
        %1497 = vmatprep.subr.bf16.mxu0 %v1310
        %1498 = vmatpush1.bf16.msra.mxu0 %v1309
        %1499 = vmatprep.subr.bf16.mxu0 %v1316
        %1500 = vmatpush1.bf16.msra.mxu0 %v1315
        %1501 = vmatprep.subr.bf16.mxu0 %v1322
        %1502 = vmatpush1.bf16.msra.mxu0 %v1321
        %1503 = vmatprep.subr.bf16.mxu0 %v1328
        %1504 = vmatpush1.bf16.msra.mxu0 %v1327
        %1505 = vmatprep.subr.bf16.mxu0 %v1334
        %1506 = vmatpush1.bf16.msra.mxu0 %v1333
        %1507 = vmatprep.subr.bf16.mxu0 %v1340
        %1508 = vmatpush1.bf16.msra.mxu0 %v1339
        %1509 = vmatprep.subr.bf16.mxu0 %v1346
        %1510 = vmatpush1.bf16.msra.mxu0 %v1345
        %1511 = vmatprep.subr.bf16.mxu0 %v1352
        %1512 = vmatpush1.bf16.msra.mxu0 %v1351
        %1513 = vmatprep.subr.bf16.mxu0 %v1358
        %1514 = vmatpush1.bf16.msra.mxu0 %v1357
        %1515 = vmatprep.subr.bf16.mxu0 %v1364
        %1516 = vmatpush1.bf16.msra.mxu0 %v1363
        %1517 = vmatprep.subr.bf16.mxu0 %v1370
        %1518 = vmatpush1.bf16.msra.mxu0 %v1369
        %1519 = vmatprep.subr.bf16.mxu0 %v1376
        %1520 = vmatpush1.bf16.msra.mxu0 %v1375
        %1521 = vmatprep.subr.bf16.mxu0 %v1382
        %1522 = vmatpush1.bf16.msra.mxu0 %v1381
        %1523 = vmatprep.subr.bf16.mxu0 %v1388
        %1524 = vmatpush1.bf16.msra.mxu0 %v1387
        %1525 = vmatprep.subr.bf16.mxu0 %v1394
        %1526 = vmatpush1.bf16.msra.mxu0 %v1393
        %1527 = vmatprep.mubr.bf16.mxu0 %v888
        %1528 = vmatmul.mubr.bf16.gmra.mrb[0].mxu0 %v887
        %v1529 = vpop.f32.mrb[0].mxu0
        %v1530 = vadd.f32 0.0, %v1529
        %v1531 = vpop.f32.mrb[0].mxu0
        %v1532 = vadd.f32 0.0, %v1531
        %v1533 = vpop.f32.mrb[0].mxu0
        %v1534 = vadd.f32 0.0, %v1533
        %v1535 = vpop.f32.mrb[0].mxu0
        %v1536 = vadd.f32 0.0, %v1535
        %1537 = vmatprep.mubr.bf16.mxu0 %v890
        %1538 = vmatmul.mubr.bf16.gmra.mrb[0].mxu0 %v889
        %v1539 = vpop.f32.mrb[0].mxu0
        %v1540 = vadd.f32 0.0, %v1539
        %v1541 = vpop.f32.mrb[0].mxu0
        %v1542 = vadd.f32 0.0, %v1541
        %v1543 = vpop.f32.mrb[0].mxu0
        %v1544 = vadd.f32 0.0, %v1543
        %v1545 = vpop.f32.mrb[0].mxu0
        %v1546 = vadd.f32 0.0, %v1545
        %1547 = vmatprep.mubr.bf16.mxu0 %v892
        %1548 = vmatmul.mubr.bf16.gmra.mrb[0].mxu0 %v891
        %v1549 = vpop.f32.mrb[0].mxu0
        %v1550 = vadd.f32 0.0, %v1549
        %v1551 = vpop.f32.mrb[0].mxu0
        %v1552 = vadd.f32 0.0, %v1551
        %v1553 = vpop.f32.mrb[0].mxu0
        %v1554 = vadd.f32 0.0, %v1553
        %v1555 = vpop.f32.mrb[0].mxu0
        %v1556 = vadd.f32 0.0, %v1555
        %1557 = vmatprep.mubr.bf16.mxu0 %v894
        %1558 = vmatmul.mubr.bf16.gmra.mrb[0].mxu0 %v893
        %v1559 = vpop.f32.mrb[0].mxu0
        %v1560 = vadd.f32 0.0, %v1559
        %v1561 = vpop.f32.mrb[0].mxu0
        %v1562 = vadd.f32 0.0, %v1561
        %v1563 = vpop.f32.mrb[0].mxu0
        %v1564 = vadd.f32 0.0, %v1563
        %v1565 = vpop.f32.mrb[0].mxu0
        %v1566 = vadd.f32 0.0, %v1565
        %1567 = vmatprep.mubr.bf16.mxu0 %v896
        %1568 = vmatmul.mubr.bf16.gmra.mrb[0].mxu0 %v895
        %v1569 = vpop.f32.mrb[0].mxu0
        %v1570 = vadd.f32 0.0, %v1569
        %v1571 = vpop.f32.mrb[0].mxu0
        %v1572 = vadd.f32 0.0, %v1571
        %v1573 = vpop.f32.mrb[0].mxu0
        %v1574 = vadd.f32 0.0, %v1573
        %v1575 = vpop.f32.mrb[0].mxu0
        %v1576 = vadd.f32 0.0, %v1575
        %1577 = vmatprep.mubr.bf16.mxu0 %v898
        %1578 = vmatmul.mubr.bf16.gmra.mrb[0].mxu0 %v897
        %v1579 = vpop.f32.mrb[0].mxu0
        %v1580 = vadd.f32 0.0, %v1579
        %v1581 = vpop.f32.mrb[0].mxu0
        %v1582 = vadd.f32 0.0, %v1581
        %v1583 = vpop.f32.mrb[0].mxu0
        %v1584 = vadd.f32 0.0, %v1583
        %v1585 = vpop.f32.mrb[0].mxu0
        %v1586 = vadd.f32 0.0, %v1585
        %1587 = vmatprep.mubr.bf16.mxu0 %v900
        %1588 = vmatmul.mubr.bf16.gmra.mrb[0].mxu0 %v899
        %v1589 = vpop.f32.mrb[0].mxu0
        %v1590 = vadd.f32 0.0, %v1589
        %v1591 = vpop.f32.mrb[0].mxu0
        %v1592 = vadd.f32 0.0, %v1591
        %v1593 = vpop.f32.mrb[0].mxu0
        %v1594 = vadd.f32 0.0, %v1593
        %v1595 = vpop.f32.mrb[0].mxu0
        %v1596 = vadd.f32 0.0, %v1595
        %1597 = vmatprep.mubr.bf16.mxu0 %v902
        %1598 = vmatmul.mubr.bf16.gmra.mrb[0].mxu0 %v901
        %v1599 = vpop.f32.mrb[0].mxu0
        %v1600 = vadd.f32 0.0, %v1599
        %v1601 = vpop.f32.mrb[0].mxu0
        %v1602 = vadd.f32 0.0, %v1601
        %v1603 = vpop.f32.mrb[0].mxu0
        %v1604 = vadd.f32 0.0, %v1603
        %v1605 = vpop.f32.mrb[0].mxu0
        %v1606 = vadd.f32 0.0, %v1605
        %1607 = vmatprep.mubr.bf16.mxu0 %v904
        %1608 = vmatmul.mubr.bf16.gmra.mrb[0].mxu0 %v903
        %v1609 = vpop.f32.mrb[0].mxu0
        %v1610 = vadd.f32 0.0, %v1609
        %v1611 = vpop.f32.mrb[0].mxu0
        %v1612 = vadd.f32 0.0, %v1611
        %v1613 = vpop.f32.mrb[0].mxu0
        %v1614 = vadd.f32 0.0, %v1613
        %v1615 = vpop.f32.mrb[0].mxu0
        %v1616 = vadd.f32 0.0, %v1615
        %1617 = vmatprep.mubr.bf16.mxu0 %v906
        %1618 = vmatmul.mubr.bf16.gmra.mrb[0].mxu0 %v905
        %v1619 = vpop.f32.mrb[0].mxu0
        %v1620 = vadd.f32 0.0, %v1619
        %v1621 = vpop.f32.mrb[0].mxu0
        %v1622 = vadd.f32 0.0, %v1621
        %v1623 = vpop.f32.mrb[0].mxu0
        %v1624 = vadd.f32 0.0, %v1623
        %v1625 = vpop.f32.mrb[0].mxu0
        %v1626 = vadd.f32 0.0, %v1625
        %1627 = vmatprep.mubr.bf16.mxu0 %v908
        %1628 = vmatmul.mubr.bf16.gmra.mrb[0].mxu0 %v907
        %v1629 = vpop.f32.mrb[0].mxu0
        %v1630 = vadd.f32 0.0, %v1629
        %v1631 = vpop.f32.mrb[0].mxu0
        %v1632 = vadd.f32 0.0, %v1631
        %v1633 = vpop.f32.mrb[0].mxu0
        %v1634 = vadd.f32 0.0, %v1633
        %v1635 = vpop.f32.mrb[0].mxu0
        %v1636 = vadd.f32 0.0, %v1635
        %1637 = vmatprep.mubr.bf16.mxu0 %v910
        %1638 = vmatmul.mubr.bf16.gmra.mrb[0].mxu0 %v909
        %v1639 = vpop.f32.mrb[0].mxu0
        %v1640 = vadd.f32 0.0, %v1639
        %v1641 = vpop.f32.mrb[0].mxu0
        %v1642 = vadd.f32 0.0, %v1641
        %v1643 = vpop.f32.mrb[0].mxu0
        %v1644 = vadd.f32 0.0, %v1643
        %v1645 = vpop.f32.mrb[0].mxu0
        %v1646 = vadd.f32 0.0, %v1645
        %1647 = vmatprep.mubr.bf16.mxu0 %v912
        %1648 = vmatmul.mubr.bf16.gmra.mrb[0].mxu0 %v911
        %v1649 = vpop.f32.mrb[0].mxu0
        %v1650 = vadd.f32 0.0, %v1649
        %v1651 = vpop.f32.mrb[0].mxu0
        %v1652 = vadd.f32 0.0, %v1651
        %v1653 = vpop.f32.mrb[0].mxu0
        %v1654 = vadd.f32 0.0, %v1653
        %v1655 = vpop.f32.mrb[0].mxu0
        %v1656 = vadd.f32 0.0, %v1655
        %1657 = vmatprep.mubr.bf16.mxu0 %v914
        %1658 = vmatmul.mubr.bf16.gmra.mrb[0].mxu0 %v913
        %v1659 = vpop.f32.mrb[0].mxu0
        %v1660 = vadd.f32 0.0, %v1659
        %v1661 = vpop.f32.mrb[0].mxu0
        %v1662 = vadd.f32 0.0, %v1661
        %v1663 = vpop.f32.mrb[0].mxu0
        %v1664 = vadd.f32 0.0, %v1663
        %v1665 = vpop.f32.mrb[0].mxu0
        %v1666 = vadd.f32 0.0, %v1665
        %1667 = vmatprep.mubr.bf16.mxu0 %v916
        %1668 = vmatmul.mubr.bf16.gmra.mrb[0].mxu0 %v915
        %v1669 = vpop.f32.mrb[0].mxu0
        %v1670 = vadd.f32 0.0, %v1669
        %v1671 = vpop.f32.mrb[0].mxu0
        %v1672 = vadd.f32 0.0, %v1671
        %v1673 = vpop.f32.mrb[0].mxu0
        %v1674 = vadd.f32 0.0, %v1673
        %v1675 = vpop.f32.mrb[0].mxu0
        %v1676 = vadd.f32 0.0, %v1675
        %1677 = vmatprep.mubr.bf16.mxu0 %v918
        %1678 = vmatmul.mubr.bf16.gmra.mrb[0].mxu0 %v917
        %v1679 = vpop.f32.mrb[0].mxu0
        %v1680 = vadd.f32 0.0, %v1679
        %v1681 = vpop.f32.mrb[0].mxu0
        %v1682 = vadd.f32 0.0, %v1681
        %v1683 = vpop.f32.mrb[0].mxu0
        %v1684 = vadd.f32 0.0, %v1683
        %v1685 = vpop.f32.mrb[0].mxu0
        %v1686 = vadd.f32 0.0, %v1685
        %1687 = vdwg.mxu0
        %1688 = vmatprep.subr.bf16.mxu0 %v1306
        %1689 = vmatpush1.bf16.msra.mxu0 %v1305
        %1690 = vmatprep.subr.bf16.mxu0 %v1312
        %1691 = vmatpush1.bf16.msra.mxu0 %v1311
        %1692 = vmatprep.subr.bf16.mxu0 %v1318
        %1693 = vmatpush1.bf16.msra.mxu0 %v1317
        %1694 = vmatprep.subr.bf16.mxu0 %v1324
        %1695 = vmatpush1.bf16.msra.mxu0 %v1323
        %1696 = vmatprep.subr.bf16.mxu0 %v1330
        %1697 = vmatpush1.bf16.msra.mxu0 %v1329
        %1698 = vmatprep.subr.bf16.mxu0 %v1336
        %1699 = vmatpush1.bf16.msra.mxu0 %v1335
        %1700 = vmatprep.subr.bf16.mxu0 %v1342
        %1701 = vmatpush1.bf16.msra.mxu0 %v1341
        %1702 = vmatprep.subr.bf16.mxu0 %v1348
        %1703 = vmatpush1.bf16.msra.mxu0 %v1347
        %1704 = vmatprep.subr.bf16.mxu0 %v1354
        %1705 = vmatpush1.bf16.msra.mxu0 %v1353
        %1706 = vmatprep.subr.bf16.mxu0 %v1360
        %1707 = vmatpush1.bf16.msra.mxu0 %v1359
        %1708 = vmatprep.subr.bf16.mxu0 %v1366
        %1709 = vmatpush1.bf16.msra.mxu0 %v1365
        %1710 = vmatprep.subr.bf16.mxu0 %v1372
        %1711 = vmatpush1.bf16.msra.mxu0 %v1371
        %1712 = vmatprep.subr.bf16.mxu0 %v1378
        %1713 = vmatpush1.bf16.msra.mxu0 %v1377
        %1714 = vmatprep.subr.bf16.mxu0 %v1384
        %1715 = vmatpush1.bf16.msra.mxu0 %v1383
        %1716 = vmatprep.subr.bf16.mxu0 %v1390
        %1717 = vmatpush1.bf16.msra.mxu0 %v1389
        %1718 = vmatprep.subr.bf16.mxu0 %v1396
        %1719 = vmatpush1.bf16.msra.mxu0 %v1395
        %1720 = vmatprep.mubr.bf16.mxu0 %v888
        %1721 = vmatmul.mubr.bf16.gmra.mrb[0].mxu0 %v887
        %v1722 = vpop.f32.mrb[0].mxu0
        %v1723 = vadd.f32 0.0, %v1722
        %v1724 = vpop.f32.mrb[0].mxu0
        %v1725 = vadd.f32 0.0, %v1724
        %v1726 = vpop.f32.mrb[0].mxu0
        %v1727 = vadd.f32 0.0, %v1726
        %v1728 = vpop.f32.mrb[0].mxu0
        %v1729 = vadd.f32 0.0, %v1728
        %1730 = vmatprep.mubr.bf16.mxu0 %v890
        %1731 = vmatmul.mubr.bf16.gmra.mrb[0].mxu0 %v889
        %v1732 = vpop.f32.mrb[0].mxu0
        %v1733 = vadd.f32 0.0, %v1732
        %v1734 = vpop.f32.mrb[0].mxu0
        %v1735 = vadd.f32 0.0, %v1734
        %v1736 = vpop.f32.mrb[0].mxu0
        %v1737 = vadd.f32 0.0, %v1736
        %v1738 = vpop.f32.mrb[0].mxu0
        %v1739 = vadd.f32 0.0, %v1738
        %1740 = vmatprep.mubr.bf16.mxu0 %v892
        %1741 = vmatmul.mubr.bf16.gmra.mrb[0].mxu0 %v891
        %v1742 = vpop.f32.mrb[0].mxu0
        %v1743 = vadd.f32 0.0, %v1742
        %v1744 = vpop.f32.mrb[0].mxu0
        %v1745 = vadd.f32 0.0, %v1744
        %v1746 = vpop.f32.mrb[0].mxu0
        %v1747 = vadd.f32 0.0, %v1746
        %v1748 = vpop.f32.mrb[0].mxu0
        %v1749 = vadd.f32 0.0, %v1748
        %1750 = vmatprep.mubr.bf16.mxu0 %v894
        %1751 = vmatmul.mubr.bf16.gmra.mrb[0].mxu0 %v893
        %v1752 = vpop.f32.mrb[0].mxu0
        %v1753 = vadd.f32 0.0, %v1752
        %v1754 = vpop.f32.mrb[0].mxu0
        %v1755 = vadd.f32 0.0, %v1754
        %v1756 = vpop.f32.mrb[0].mxu0
        %v1757 = vadd.f32 0.0, %v1756
        %v1758 = vpop.f32.mrb[0].mxu0
        %v1759 = vadd.f32 0.0, %v1758
        %1760 = vmatprep.mubr.bf16.mxu0 %v896
        %1761 = vmatmul.mubr.bf16.gmra.mrb[0].mxu0 %v895
        %v1762 = vpop.f32.mrb[0].mxu0
        %v1763 = vadd.f32 0.0, %v1762
        %v1764 = vpop.f32.mrb[0].mxu0
        %v1765 = vadd.f32 0.0, %v1764
        %v1766 = vpop.f32.mrb[0].mxu0
        %v1767 = vadd.f32 0.0, %v1766
        %v1768 = vpop.f32.mrb[0].mxu0
        %v1769 = vadd.f32 0.0, %v1768
        %1770 = vmatprep.mubr.bf16.mxu0 %v898
        %1771 = vmatmul.mubr.bf16.gmra.mrb[0].mxu0 %v897
        %v1772 = vpop.f32.mrb[0].mxu0
        %v1773 = vadd.f32 0.0, %v1772
        %v1774 = vpop.f32.mrb[0].mxu0
        %v1775 = vadd.f32 0.0, %v1774
        %v1776 = vpop.f32.mrb[0].mxu0
        %v1777 = vadd.f32 0.0, %v1776
        %v1778 = vpop.f32.mrb[0].mxu0
        %v1779 = vadd.f32 0.0, %v1778
        %1780 = vmatprep.mubr.bf16.mxu0 %v900
        %1781 = vmatmul.mubr.bf16.gmra.mrb[0].mxu0 %v899
        %v1782 = vpop.f32.mrb[0].mxu0
        %v1783 = vadd.f32 0.0, %v1782
        %v1784 = vpop.f32.mrb[0].mxu0
        %v1785 = vadd.f32 0.0, %v1784
        %v1786 = vpop.f32.mrb[0].mxu0
        %v1787 = vadd.f32 0.0, %v1786
        %v1788 = vpop.f32.mrb[0].mxu0
        %v1789 = vadd.f32 0.0, %v1788
        %1790 = vmatprep.mubr.bf16.mxu0 %v902
        %1791 = vmatmul.mubr.bf16.gmra.mrb[0].mxu0 %v901
        %v1792 = vpop.f32.mrb[0].mxu0
        %v1793 = vadd.f32 0.0, %v1792
        %v1794 = vpop.f32.mrb[0].mxu0
        %v1795 = vadd.f32 0.0, %v1794
        %v1796 = vpop.f32.mrb[0].mxu0
        %v1797 = vadd.f32 0.0, %v1796
        %v1798 = vpop.f32.mrb[0].mxu0
        %v1799 = vadd.f32 0.0, %v1798
        %1800 = vmatprep.mubr.bf16.mxu0 %v904
        %1801 = vmatmul.mubr.bf16.gmra.mrb[0].mxu0 %v903
        %v1802 = vpop.f32.mrb[0].mxu0
        %v1803 = vadd.f32 0.0, %v1802
        %v1804 = vpop.f32.mrb[0].mxu0
        %v1805 = vadd.f32 0.0, %v1804
        %v1806 = vpop.f32.mrb[0].mxu0
        %v1807 = vadd.f32 0.0, %v1806
        %v1808 = vpop.f32.mrb[0].mxu0
        %v1809 = vadd.f32 0.0, %v1808
        %1810 = vmatprep.mubr.bf16.mxu0 %v906
        %1811 = vmatmul.mubr.bf16.gmra.mrb[0].mxu0 %v905
        %v1812 = vpop.f32.mrb[0].mxu0
        %v1813 = vadd.f32 0.0, %v1812
        %v1814 = vpop.f32.mrb[0].mxu0
        %v1815 = vadd.f32 0.0, %v1814
        %v1816 = vpop.f32.mrb[0].mxu0
        %v1817 = vadd.f32 0.0, %v1816
        %v1818 = vpop.f32.mrb[0].mxu0
        %v1819 = vadd.f32 0.0, %v1818
        %1820 = vmatprep.mubr.bf16.mxu0 %v908
        %1821 = vmatmul.mubr.bf16.gmra.mrb[0].mxu0 %v907
        %v1822 = vpop.f32.mrb[0].mxu0
        %v1823 = vadd.f32 0.0, %v1822
        %v1824 = vpop.f32.mrb[0].mxu0
        %v1825 = vadd.f32 0.0, %v1824
        %v1826 = vpop.f32.mrb[0].mxu0
        %v1827 = vadd.f32 0.0, %v1826
        %v1828 = vpop.f32.mrb[0].mxu0
        %v1829 = vadd.f32 0.0, %v1828
        %1830 = vmatprep.mubr.bf16.mxu0 %v910
        %1831 = vmatmul.mubr.bf16.gmra.mrb[0].mxu0 %v909
        %v1832 = vpop.f32.mrb[0].mxu0
        %v1833 = vadd.f32 0.0, %v1832
        %v1834 = vpop.f32.mrb[0].mxu0
        %v1835 = vadd.f32 0.0, %v1834
        %v1836 = vpop.f32.mrb[0].mxu0
        %v1837 = vadd.f32 0.0, %v1836
        %v1838 = vpop.f32.mrb[0].mxu0
        %v1839 = vadd.f32 0.0, %v1838
        %1840 = vmatprep.mubr.bf16.mxu0 %v912
        %1841 = vmatmul.mubr.bf16.gmra.mrb[0].mxu0 %v911
        %v1842 = vpop.f32.mrb[0].mxu0
        %v1843 = vadd.f32 0.0, %v1842
        %v1844 = vpop.f32.mrb[0].mxu0
        %v1845 = vadd.f32 0.0, %v1844
        %v1846 = vpop.f32.mrb[0].mxu0
        %v1847 = vadd.f32 0.0, %v1846
        %v1848 = vpop.f32.mrb[0].mxu0
        %v1849 = vadd.f32 0.0, %v1848
        %1850 = vmatprep.mubr.bf16.mxu0 %v914
        %1851 = vmatmul.mubr.bf16.gmra.mrb[0].mxu0 %v913
        %v1852 = vpop.f32.mrb[0].mxu0
        %v1853 = vadd.f32 0.0, %v1852
        %v1854 = vpop.f32.mrb[0].mxu0
        %v1855 = vadd.f32 0.0, %v1854
        %v1856 = vpop.f32.mrb[0].mxu0
        %v1857 = vadd.f32 0.0, %v1856
        %v1858 = vpop.f32.mrb[0].mxu0
        %v1859 = vadd.f32 0.0, %v1858
        %1860 = vmatprep.mubr.bf16.mxu0 %v916
        %1861 = vmatmul.mubr.bf16.gmra.mrb[0].mxu0 %v915
        %v1862 = vpop.f32.mrb[0].mxu0
        %v1863 = vadd.f32 0.0, %v1862
        %v1864 = vpop.f32.mrb[0].mxu0
        %v1865 = vadd.f32 0.0, %v1864
        %v1866 = vpop.f32.mrb[0].mxu0
        %v1867 = vadd.f32 0.0, %v1866
        %v1868 = vpop.f32.mrb[0].mxu0
        %v1869 = vadd.f32 0.0, %v1868
        %1870 = vmatprep.mubr.bf16.mxu0 %v918
        %1871 = vmatmul.mubr.bf16.gmra.mrb[0].mxu0 %v917
        %v1872 = vpop.f32.mrb[0].mxu0
        %v1873 = vadd.f32 0.0, %v1872
        %v1874 = vpop.f32.mrb[0].mxu0
        %v1875 = vadd.f32 0.0, %v1874
        %v1876 = vpop.f32.mrb[0].mxu0
        %v1877 = vadd.f32 0.0, %v1876
        %v1878 = vpop.f32.mrb[0].mxu0
        %v1879 = vadd.f32 0.0, %v1878
        %1880 = vdwg.mxu0
        %1881 = vmatprep.subr.bf16.mxu0 %v1308
        %1882 = vmatpush1.bf16.msra.mxu0 %v1307
        %1883 = vmatprep.subr.bf16.mxu0 %v1314
        %1884 = vmatpush1.bf16.msra.mxu0 %v1313
        %1885 = vmatprep.subr.bf16.mxu0 %v1320
        %1886 = vmatpush1.bf16.msra.mxu0 %v1319
        %1887 = vmatprep.subr.bf16.mxu0 %v1326
        %1888 = vmatpush1.bf16.msra.mxu0 %v1325
        %1889 = vmatprep.subr.bf16.mxu0 %v1332
        %1890 = vmatpush1.bf16.msra.mxu0 %v1331
        %1891 = vmatprep.subr.bf16.mxu0 %v1338
        %1892 = vmatpush1.bf16.msra.mxu0 %v1337
        %1893 = vmatprep.subr.bf16.mxu0 %v1344
        %1894 = vmatpush1.bf16.msra.mxu0 %v1343
        %1895 = vmatprep.subr.bf16.mxu0 %v1350
        %1896 = vmatpush1.bf16.msra.mxu0 %v1349
        %1897 = vmatprep.subr.bf16.mxu0 %v1356
        %1898 = vmatpush1.bf16.msra.mxu0 %v1355
        %1899 = vmatprep.subr.bf16.mxu0 %v1362
        %1900 = vmatpush1.bf16.msra.mxu0 %v1361
        %1901 = vmatprep.subr.bf16.mxu0 %v1368
        %1902 = vmatpush1.bf16.msra.mxu0 %v1367
        %1903 = vmatprep.subr.bf16.mxu0 %v1374
        %1904 = vmatpush1.bf16.msra.mxu0 %v1373
        %1905 = vmatprep.subr.bf16.mxu0 %v1380
        %1906 = vmatpush1.bf16.msra.mxu0 %v1379
        %1907 = vmatprep.subr.bf16.mxu0 %v1386
        %1908 = vmatpush1.bf16.msra.mxu0 %v1385
        %1909 = vmatprep.subr.bf16.mxu0 %v1392
        %1910 = vmatpush1.bf16.msra.mxu0 %v1391
        %1911 = vmatprep.subr.bf16.mxu0 %v1398
        %1912 = vmatpush1.bf16.msra.mxu0 %v1397
        %1913 = vmatprep.mubr.bf16.mxu0 %v888
        %1914 = vmatmul.mubr.bf16.gmra.mrb[0].mxu0 %v887
        %v1915 = vpop.f32.mrb[0].mxu0
        %v1916 = vadd.f32 0.0, %v1915
        %v1917 = vpop.f32.mrb[0].mxu0
        %v1918 = vadd.f32 0.0, %v1917
        %v1919 = vpop.f32.mrb[0].mxu0
        %v1920 = vadd.f32 0.0, %v1919
        %v1921 = vpop.f32.mrb[0].mxu0
        %v1922 = vadd.f32 0.0, %v1921
        %1923 = vmatprep.mubr.bf16.mxu0 %v890
        %1924 = vmatmul.mubr.bf16.gmra.mrb[0].mxu0 %v889
        %v1925 = vpop.f32.mrb[0].mxu0
        %v1926 = vadd.f32 0.0, %v1925
        %v1927 = vpop.f32.mrb[0].mxu0
        %v1928 = vadd.f32 0.0, %v1927
        %v1929 = vpop.f32.mrb[0].mxu0
        %v1930 = vadd.f32 0.0, %v1929
        %v1931 = vpop.f32.mrb[0].mxu0
        %v1932 = vadd.f32 0.0, %v1931
        %1933 = vmatprep.mubr.bf16.mxu0 %v892
        %1934 = vmatmul.mubr.bf16.gmra.mrb[0].mxu0 %v891
        %v1935 = vpop.f32.mrb[0].mxu0
        %v1936 = vadd.f32 0.0, %v1935
        %v1937 = vpop.f32.mrb[0].mxu0
        %v1938 = vadd.f32 0.0, %v1937
        %v1939 = vpop.f32.mrb[0].mxu0
        %v1940 = vadd.f32 0.0, %v1939
        %v1941 = vpop.f32.mrb[0].mxu0
        %v1942 = vadd.f32 0.0, %v1941
        %1943 = vmatprep.mubr.bf16.mxu0 %v894
        %1944 = vmatmul.mubr.bf16.gmra.mrb[0].mxu0 %v893
        %v1945 = vpop.f32.mrb[0].mxu0
        %v1946 = vadd.f32 0.0, %v1945
        %v1947 = vpop.f32.mrb[0].mxu0
        %v1948 = vadd.f32 0.0, %v1947
        %v1949 = vpop.f32.mrb[0].mxu0
        %v1950 = vadd.f32 0.0, %v1949
        %v1951 = vpop.f32.mrb[0].mxu0
        %v1952 = vadd.f32 0.0, %v1951
        %1953 = vmatprep.mubr.bf16.mxu0 %v896
        %1954 = vmatmul.mubr.bf16.gmra.mrb[0].mxu0 %v895
        %v1955 = vpop.f32.mrb[0].mxu0
        %v1956 = vadd.f32 0.0, %v1955
        %v1957 = vpop.f32.mrb[0].mxu0
        %v1958 = vadd.f32 0.0, %v1957
        %v1959 = vpop.f32.mrb[0].mxu0
        %v1960 = vadd.f32 0.0, %v1959
        %v1961 = vpop.f32.mrb[0].mxu0
        %v1962 = vadd.f32 0.0, %v1961
        %1963 = vmatprep.mubr.bf16.mxu0 %v898
        %1964 = vmatmul.mubr.bf16.gmra.mrb[0].mxu0 %v897
        %v1965 = vpop.f32.mrb[0].mxu0
        %v1966 = vadd.f32 0.0, %v1965
        %v1967 = vpop.f32.mrb[0].mxu0
        %v1968 = vadd.f32 0.0, %v1967
        %v1969 = vpop.f32.mrb[0].mxu0
        %v1970 = vadd.f32 0.0, %v1969
        %v1971 = vpop.f32.mrb[0].mxu0
        %v1972 = vadd.f32 0.0, %v1971
        %1973 = vmatprep.mubr.bf16.mxu0 %v900
        %1974 = vmatmul.mubr.bf16.gmra.mrb[0].mxu0 %v899
        %v1975 = vpop.f32.mrb[0].mxu0
        %v1976 = vadd.f32 0.0, %v1975
        %v1977 = vpop.f32.mrb[0].mxu0
        %v1978 = vadd.f32 0.0, %v1977
        %v1979 = vpop.f32.mrb[0].mxu0
        %v1980 = vadd.f32 0.0, %v1979
        %v1981 = vpop.f32.mrb[0].mxu0
        %v1982 = vadd.f32 0.0, %v1981
        %1983 = vmatprep.mubr.bf16.mxu0 %v902
        %1984 = vmatmul.mubr.bf16.gmra.mrb[0].mxu0 %v901
        %v1985 = vpop.f32.mrb[0].mxu0
        %v1986 = vadd.f32 0.0, %v1985
        %v1987 = vpop.f32.mrb[0].mxu0
        %v1988 = vadd.f32 0.0, %v1987
        %v1989 = vpop.f32.mrb[0].mxu0
        %v1990 = vadd.f32 0.0, %v1989
        %v1991 = vpop.f32.mrb[0].mxu0
        %v1992 = vadd.f32 0.0, %v1991
        %1993 = vmatprep.mubr.bf16.mxu0 %v904
        %1994 = vmatmul.mubr.bf16.gmra.mrb[0].mxu0 %v903
        %v1995 = vpop.f32.mrb[0].mxu0
        %v1996 = vadd.f32 0.0, %v1995
        %v1997 = vpop.f32.mrb[0].mxu0
        %v1998 = vadd.f32 0.0, %v1997
        %v1999 = vpop.f32.mrb[0].mxu0
        %v2000 = vadd.f32 0.0, %v1999
        %v2001 = vpop.f32.mrb[0].mxu0
        %v2002 = vadd.f32 0.0, %v2001
        %2003 = vmatprep.mubr.bf16.mxu0 %v906
        %2004 = vmatmul.mubr.bf16.gmra.mrb[0].mxu0 %v905
        %v2005 = vpop.f32.mrb[0].mxu0
        %v2006 = vadd.f32 0.0, %v2005
        %v2007 = vpop.f32.mrb[0].mxu0
        %v2008 = vadd.f32 0.0, %v2007
        %v2009 = vpop.f32.mrb[0].mxu0
        %v2010 = vadd.f32 0.0, %v2009
        %v2011 = vpop.f32.mrb[0].mxu0
        %v2012 = vadd.f32 0.0, %v2011
        %2013 = vmatprep.mubr.bf16.mxu0 %v908
        %2014 = vmatmul.mubr.bf16.gmra.mrb[0].mxu0 %v907
        %v2015 = vpop.f32.mrb[0].mxu0
        %v2016 = vadd.f32 0.0, %v2015
        %v2017 = vpop.f32.mrb[0].mxu0
        %v2018 = vadd.f32 0.0, %v2017
        %v2019 = vpop.f32.mrb[0].mxu0
        %v2020 = vadd.f32 0.0, %v2019
        %v2021 = vpop.f32.mrb[0].mxu0
        %v2022 = vadd.f32 0.0, %v2021
        %2023 = vmatprep.mubr.bf16.mxu0 %v910
        %2024 = vmatmul.mubr.bf16.gmra.mrb[0].mxu0 %v909
        %v2025 = vpop.f32.mrb[0].mxu0
        %v2026 = vadd.f32 0.0, %v2025
        %v2027 = vpop.f32.mrb[0].mxu0
        %v2028 = vadd.f32 0.0, %v2027
        %v2029 = vpop.f32.mrb[0].mxu0
        %v2030 = vadd.f32 0.0, %v2029
        %v2031 = vpop.f32.mrb[0].mxu0
        %v2032 = vadd.f32 0.0, %v2031
        %2033 = vmatprep.mubr.bf16.mxu0 %v912
        %2034 = vmatmul.mubr.bf16.gmra.mrb[0].mxu0 %v911
        %v2035 = vpop.f32.mrb[0].mxu0
        %v2036 = vadd.f32 0.0, %v2035
        %v2037 = vpop.f32.mrb[0].mxu0
        %v2038 = vadd.f32 0.0, %v2037
        %v2039 = vpop.f32.mrb[0].mxu0
        %v2040 = vadd.f32 0.0, %v2039
        %v2041 = vpop.f32.mrb[0].mxu0
        %v2042 = vadd.f32 0.0, %v2041
        %2043 = vmatprep.mubr.bf16.mxu0 %v914
        %2044 = vmatmul.mubr.bf16.gmra.mrb[0].mxu0 %v913
        %v2045 = vpop.f32.mrb[0].mxu0
        %v2046 = vadd.f32 0.0, %v2045
        %v2047 = vpop.f32.mrb[0].mxu0
        %v2048 = vadd.f32 0.0, %v2047
        %v2049 = vpop.f32.mrb[0].mxu0
        %v2050 = vadd.f32 0.0, %v2049
        %v2051 = vpop.f32.mrb[0].mxu0
        %v2052 = vadd.f32 0.0, %v2051
        %2053 = vmatprep.mubr.bf16.mxu0 %v916
        %2054 = vmatmul.mubr.bf16.gmra.mrb[0].mxu0 %v915
        %v2055 = vpop.f32.mrb[0].mxu0
        %v2056 = vadd.f32 0.0, %v2055
        %v2057 = vpop.f32.mrb[0].mxu0
        %v2058 = vadd.f32 0.0, %v2057
        %v2059 = vpop.f32.mrb[0].mxu0
        %v2060 = vadd.f32 0.0, %v2059
        %v2061 = vpop.f32.mrb[0].mxu0
        %v2062 = vadd.f32 0.0, %v2061
        %2063 = vmatprep.mubr.bf16.mxu0 %v918
        %2064 = vmatmul.mubr.bf16.gmra.mrb[0].mxu0 %v917
        %v2065 = vpop.f32.mrb[0].mxu0
        %v2066 = vadd.f32 0.0, %v2065
        %v2067 = vpop.f32.mrb[0].mxu0
        %v2068 = vadd.f32 0.0, %v2067
        %v2069 = vpop.f32.mrb[0].mxu0
        %v2070 = vadd.f32 0.0, %v2069
        %v2071 = vpop.f32.mrb[0].mxu0
        %v2072 = vadd.f32 0.0, %v2071
        %2073 = vdwg.mxu0
        %v2074 = vld [vmem:[#allocation8] sm:$0x1]
        %v2075 = vld [vmem:[#allocation10] sm:$0x1]
        %v2076 = vmul.f32 %v1530, %v1530
        %v2077 = vmul.f32 %v1534, %v1534
        %v2078 = vmul.f32 %v1540, %v1540
        %v2079 = vmul.f32 %v1544, %v1544
        %v2080 = vmul.f32 %v1550, %v1550
        %v2081 = vmul.f32 %v1554, %v1554
        %v2082 = vmul.f32 %v1560, %v1560
        %v2083 = vmul.f32 %v1564, %v1564
        %v2084 = vmul.f32 %v1570, %v1570
        %v2085 = vmul.f32 %v1574, %v1574
        %v2086 = vmul.f32 %v1580, %v1580
        %v2087 = vmul.f32 %v1584, %v1584
        %v2088 = vmul.f32 %v1590, %v1590
        %v2089 = vmul.f32 %v1594, %v1594
        %v2090 = vmul.f32 %v1600, %v1600
        %v2091 = vmul.f32 %v1604, %v1604
        %v2092 = vmul.f32 %v1610, %v1610
        %v2093 = vmul.f32 %v1614, %v1614
        %v2094 = vmul.f32 %v1620, %v1620
        %v2095 = vmul.f32 %v1624, %v1624
        %v2096 = vmul.f32 %v1630, %v1630
        %v2097 = vmul.f32 %v1634, %v1634
        %v2098 = vmul.f32 %v1640, %v1640
        %v2099 = vmul.f32 %v1644, %v1644
        %v2100 = vmul.f32 %v1650, %v1650
        %v2101 = vmul.f32 %v1654, %v1654
        %v2102 = vmul.f32 %v1660, %v1660
        %v2103 = vmul.f32 %v1664, %v1664
        %v2104 = vmul.f32 %v1670, %v1670
        %v2105 = vmul.f32 %v1674, %v1674
        %v2106 = vmul.f32 %v1680, %v1680
        %v2107 = vmul.f32 %v1684, %v1684
        %2108 = vadd.xlane.f32.xlu0 %v2076
        %v2109 = vpop.xlane.xlu0 %2108
        %2110 = vadd.xlane.f32.xlu0 %v2077
        %v2111 = vpop.xlane.xlu0 %2110
        %2112 = vadd.xlane.f32.xlu0 %v2078
        %v2113 = vpop.xlane.xlu0 %2112
        %2114 = vadd.xlane.f32.xlu0 %v2079
        %v2115 = vpop.xlane.xlu0 %2114
        %2116 = vadd.xlane.f32.xlu0 %v2080
        %v2117 = vpop.xlane.xlu0 %2116
        %2118 = vadd.xlane.f32.xlu0 %v2081
        %v2119 = vpop.xlane.xlu0 %2118
        %2120 = vadd.xlane.f32.xlu0 %v2082
        %v2121 = vpop.xlane.xlu0 %2120
        %2122 = vadd.xlane.f32.xlu0 %v2083
        %v2123 = vpop.xlane.xlu0 %2122
        %2124 = vadd.xlane.f32.xlu0 %v2084
        %v2125 = vpop.xlane.xlu0 %2124
        %2126 = vadd.xlane.f32.xlu0 %v2085
        %v2127 = vpop.xlane.xlu0 %2126
        %2128 = vadd.xlane.f32.xlu0 %v2086
        %v2129 = vpop.xlane.xlu0 %2128
        %2130 = vadd.xlane.f32.xlu0 %v2087
        %v2131 = vpop.xlane.xlu0 %2130
        %2132 = vadd.xlane.f32.xlu0 %v2088
        %v2133 = vpop.xlane.xlu0 %2132
        %2134 = vadd.xlane.f32.xlu0 %v2089
        %v2135 = vpop.xlane.xlu0 %2134
        %2136 = vadd.xlane.f32.xlu0 %v2090
        %v2137 = vpop.xlane.xlu0 %2136
        %2138 = vadd.xlane.f32.xlu0 %v2091
        %v2139 = vpop.xlane.xlu0 %2138
        %2140 = vadd.xlane.f32.xlu0 %v2092
        %v2141 = vpop.xlane.xlu0 %2140
        %2142 = vadd.xlane.f32.xlu0 %v2093
        %v2143 = vpop.xlane.xlu0 %2142
        %2144 = vadd.xlane.f32.xlu0 %v2094
        %v2145 = vpop.xlane.xlu0 %2144
        %2146 = vadd.xlane.f32.xlu0 %v2095
        %v2147 = vpop.xlane.xlu0 %2146
        %2148 = vadd.xlane.f32.xlu0 %v2096
        %v2149 = vpop.xlane.xlu0 %2148
        %2150 = vadd.xlane.f32.xlu0 %v2097
        %v2151 = vpop.xlane.xlu0 %2150
        %2152 = vadd.xlane.f32.xlu0 %v2098
        %v2153 = vpop.xlane.xlu0 %2152
        %2154 = vadd.xlane.f32.xlu0 %v2099
        %v2155 = vpop.xlane.xlu0 %2154
        %2156 = vadd.xlane.f32.xlu0 %v2100
        %v2157 = vpop.xlane.xlu0 %2156
        %2158 = vadd.xlane.f32.xlu0 %v2101
        %v2159 = vpop.xlane.xlu0 %2158
        %2160 = vadd.xlane.f32.xlu0 %v2102
        %v2161 = vpop.xlane.xlu0 %2160
        %2162 = vadd.xlane.f32.xlu0 %v2103
        %v2163 = vpop.xlane.xlu0 %2162
        %2164 = vadd.xlane.f32.xlu0 %v2104
        %v2165 = vpop.xlane.xlu0 %2164
        %2166 = vadd.xlane.f32.xlu0 %v2105
        %v2167 = vpop.xlane.xlu0 %2166
        %2168 = vadd.xlane.f32.xlu0 %v2106
        %v2169 = vpop.xlane.xlu0 %2168
        %2170 = vadd.xlane.f32.xlu0 %v2107
        %v2171 = vpop.xlane.xlu0 %2170
        %v2172 = vrcp.pop 128.0
        %v2173 = vmul.f32 %v2109, %v2172
        %v2174 = vmul.f32 %v2111, %v2172
        %v2175 = vmul.f32 %v2113, %v2172
        %v2176 = vmul.f32 %v2115, %v2172
        %v2177 = vmul.f32 %v2117, %v2172
        %v2178 = vmul.f32 %v2119, %v2172
        %v2179 = vmul.f32 %v2121, %v2172
        %v2180 = vmul.f32 %v2123, %v2172
        %v2181 = vmul.f32 %v2125, %v2172
        %v2182 = vmul.f32 %v2127, %v2172
        %v2183 = vmul.f32 %v2129, %v2172
        %v2184 = vmul.f32 %v2131, %v2172
        %v2185 = vmul.f32 %v2133, %v2172
        %v2186 = vmul.f32 %v2135, %v2172
        %v2187 = vmul.f32 %v2137, %v2172
        %v2188 = vmul.f32 %v2139, %v2172
        %v2189 = vmul.f32 %v2141, %v2172
        %v2190 = vmul.f32 %v2143, %v2172
        %v2191 = vmul.f32 %v2145, %v2172
        %v2192 = vmul.f32 %v2147, %v2172
        %v2193 = vmul.f32 %v2149, %v2172
        %v2194 = vmul.f32 %v2151, %v2172
        %v2195 = vmul.f32 %v2153, %v2172
        %v2196 = vmul.f32 %v2155, %v2172
        %v2197 = vmul.f32 %v2157, %v2172
        %v2198 = vmul.f32 %v2159, %v2172
        %v2199 = vmul.f32 %v2161, %v2172
        %v2200 = vmul.f32 %v2163, %v2172
        %v2201 = vmul.f32 %v2165, %v2172
        %v2202 = vmul.f32 %v2167, %v2172
        %v2203 = vmul.f32 %v2169, %v2172
        %v2204 = vmul.f32 %v2171, %v2172
        %v2205 = vadd.f32 %v2173, 1e-06
        %v2206 = vadd.f32 %v2174, 1e-06
        %v2207 = vadd.f32 %v2175, 1e-06
        %v2208 = vadd.f32 %v2176, 1e-06
        %v2209 = vadd.f32 %v2177, 1e-06
        %v2210 = vadd.f32 %v2178, 1e-06
        %v2211 = vadd.f32 %v2179, 1e-06
        %v2212 = vadd.f32 %v2180, 1e-06
        %v2213 = vadd.f32 %v2181, 1e-06
        %v2214 = vadd.f32 %v2182, 1e-06
        %v2215 = vadd.f32 %v2183, 1e-06
        %v2216 = vadd.f32 %v2184, 1e-06
        %v2217 = vadd.f32 %v2185, 1e-06
        %v2218 = vadd.f32 %v2186, 1e-06
        %v2219 = vadd.f32 %v2187, 1e-06
        %v2220 = vadd.f32 %v2188, 1e-06
        %v2221 = vadd.f32 %v2189, 1e-06
        %v2222 = vadd.f32 %v2190, 1e-06
        %v2223 = vadd.f32 %v2191, 1e-06
        %v2224 = vadd.f32 %v2192, 1e-06
        %v2225 = vadd.f32 %v2193, 1e-06
        %v2226 = vadd.f32 %v2194, 1e-06
        %v2227 = vadd.f32 %v2195, 1e-06
        %v2228 = vadd.f32 %v2196, 1e-06
        %v2229 = vadd.f32 %v2197, 1e-06
        %v2230 = vadd.f32 %v2198, 1e-06
        %v2231 = vadd.f32 %v2199, 1e-06
        %v2232 = vadd.f32 %v2200, 1e-06
        %v2233 = vadd.f32 %v2201, 1e-06
        %v2234 = vadd.f32 %v2202, 1e-06
        %v2235 = vadd.f32 %v2203, 1e-06
        %v2236 = vadd.f32 %v2204, 1e-06
        %v2237 = vrsqrt.pop %v2205
        %v2238 = vrsqrt.pop %v2206
        %v2239 = vrsqrt.pop %v2207
        %v2240 = vrsqrt.pop %v2208
        %v2241 = vrsqrt.pop %v2209
        %v2242 = vrsqrt.pop %v2210
        %v2243 = vrsqrt.pop %v2211
        %v2244 = vrsqrt.pop %v2212
        %v2245 = vrsqrt.pop %v2213
        %v2246 = vrsqrt.pop %v2214
        %v2247 = vrsqrt.pop %v2215
        %v2248 = vrsqrt.pop %v2216
        %v2249 = vrsqrt.pop %v2217
        %v2250 = vrsqrt.pop %v2218
        %v2251 = vrsqrt.pop %v2219
        %v2252 = vrsqrt.pop %v2220
        %v2253 = vrsqrt.pop %v2221
        %v2254 = vrsqrt.pop %v2222
        %v2255 = vrsqrt.pop %v2223
        %v2256 = vrsqrt.pop %v2224
        %v2257 = vrsqrt.pop %v2225
        %v2258 = vrsqrt.pop %v2226
        %v2259 = vrsqrt.pop %v2227
        %v2260 = vrsqrt.pop %v2228
        %v2261 = vrsqrt.pop %v2229
        %v2262 = vrsqrt.pop %v2230
        %v2263 = vrsqrt.pop %v2231
        %v2264 = vrsqrt.pop %v2232
        %v2265 = vrsqrt.pop %v2233
        %v2266 = vrsqrt.pop %v2234
        %v2267 = vrsqrt.pop %v2235
        %v2268 = vrsqrt.pop %v2236
        %v2269 = vmul.f32 %v1530, %v2237
        %v2270 = vmul.f32 %v1534, %v2238
        %v2271 = vmul.f32 %v1540, %v2239
        %v2272 = vmul.f32 %v1544, %v2240
        %v2273 = vmul.f32 %v1550, %v2241
        %v2274 = vmul.f32 %v1554, %v2242
        %v2275 = vmul.f32 %v1560, %v2243
        %v2276 = vmul.f32 %v1564, %v2244
        %v2277 = vmul.f32 %v1570, %v2245
        %v2278 = vmul.f32 %v1574, %v2246
        %v2279 = vmul.f32 %v1580, %v2247
        %v2280 = vmul.f32 %v1584, %v2248
        %v2281 = vmul.f32 %v1590, %v2249
        %v2282 = vmul.f32 %v1594, %v2250
        %v2283 = vmul.f32 %v1600, %v2251
        %v2284 = vmul.f32 %v1604, %v2252
        %v2285 = vmul.f32 %v1610, %v2253
        %v2286 = vmul.f32 %v1614, %v2254
        %v2287 = vmul.f32 %v1620, %v2255
        %v2288 = vmul.f32 %v1624, %v2256
        %v2289 = vmul.f32 %v1630, %v2257
        %v2290 = vmul.f32 %v1634, %v2258
        %v2291 = vmul.f32 %v1640, %v2259
        %v2292 = vmul.f32 %v1644, %v2260
        %v2293 = vmul.f32 %v1650, %v2261
        %v2294 = vmul.f32 %v1654, %v2262
        %v2295 = vmul.f32 %v1660, %v2263
        %v2296 = vmul.f32 %v1664, %v2264
        %v2297 = vmul.f32 %v1670, %v2265
        %v2298 = vmul.f32 %v1674, %v2266
        %v2299 = vmul.f32 %v1680, %v2267
        %v2300 = vmul.f32 %v1684, %v2268
        %v2302 = vlaneseq
        %v2303 = vshrl.u32 %v2302, 7
        %v2304 = vsub.s32 0, %v2303
        %v2305 = vrot.slane %v2074, %v2304
        %v2307 = vmul.f32 %v2269, %v2305
        %v2308 = vmul.f32 %v2270, %v2305
        %v2309 = vmul.f32 %v2271, %v2305
        %v2310 = vmul.f32 %v2272, %v2305
        %v2311 = vmul.f32 %v2273, %v2305
        %v2312 = vmul.f32 %v2274, %v2305
        %v2313 = vmul.f32 %v2275, %v2305
        %v2314 = vmul.f32 %v2276, %v2305
        %v2315 = vmul.f32 %v2277, %v2305
        %v2316 = vmul.f32 %v2278, %v2305
        %v2317 = vmul.f32 %v2279, %v2305
        %v2318 = vmul.f32 %v2280, %v2305
        %v2319 = vmul.f32 %v2281, %v2305
        %v2320 = vmul.f32 %v2282, %v2305
        %v2321 = vmul.f32 %v2283, %v2305
        %v2322 = vmul.f32 %v2284, %v2305
        %v2323 = vmul.f32 %v2285, %v2305
        %v2324 = vmul.f32 %v2286, %v2305
        %v2325 = vmul.f32 %v2287, %v2305
        %v2326 = vmul.f32 %v2288, %v2305
        %v2327 = vmul.f32 %v2289, %v2305
        %v2328 = vmul.f32 %v2290, %v2305
        %v2329 = vmul.f32 %v2291, %v2305
        %v2330 = vmul.f32 %v2292, %v2305
        %v2331 = vmul.f32 %v2293, %v2305
        %v2332 = vmul.f32 %v2294, %v2305
        %v2333 = vmul.f32 %v2295, %v2305
        %v2334 = vmul.f32 %v2296, %v2305
        %v2335 = vmul.f32 %v2297, %v2305
        %v2336 = vmul.f32 %v2298, %v2305
        %v2337 = vmul.f32 %v2299, %v2305
        %v2338 = vmul.f32 %v2300, %v2305
        %v2339 = vmul.f32 %v2307, 0.088388346
        %v2340 = vmul.f32 %v2308, 0.088388346
        %v2341 = vmul.f32 %v2309, 0.088388346
        %v2342 = vmul.f32 %v2310, 0.088388346
        %v2343 = vmul.f32 %v2311, 0.088388346
        %v2344 = vmul.f32 %v2312, 0.088388346
        %v2345 = vmul.f32 %v2313, 0.088388346
        %v2346 = vmul.f32 %v2314, 0.088388346
        %v2347 = vmul.f32 %v2315, 0.088388346
        %v2348 = vmul.f32 %v2316, 0.088388346
        %v2349 = vmul.f32 %v2317, 0.088388346
        %v2350 = vmul.f32 %v2318, 0.088388346
        %v2351 = vmul.f32 %v2319, 0.088388346
        %v2352 = vmul.f32 %v2320, 0.088388346
        %v2353 = vmul.f32 %v2321, 0.088388346
        %v2354 = vmul.f32 %v2322, 0.088388346
        %v2355 = vmul.f32 %v2323, 0.088388346
        %v2356 = vmul.f32 %v2324, 0.088388346
        %v2357 = vmul.f32 %v2325, 0.088388346
        %v2358 = vmul.f32 %v2326, 0.088388346
        %v2359 = vmul.f32 %v2327, 0.088388346
        %v2360 = vmul.f32 %v2328, 0.088388346
        %v2361 = vmul.f32 %v2329, 0.088388346
        %v2362 = vmul.f32 %v2330, 0.088388346
        %v2363 = vmul.f32 %v2331, 0.088388346
        %v2364 = vmul.f32 %v2332, 0.088388346
        %v2365 = vmul.f32 %v2333, 0.088388346
        %v2366 = vmul.f32 %v2334, 0.088388346
        %v2367 = vmul.f32 %v2335, 0.088388346
        %v2368 = vmul.f32 %v2336, 0.088388346
        %v2369 = vmul.f32 %v2337, 0.088388346
        %v2370 = vmul.f32 %v2338, 0.088388346
        %v2371 = vpack.c.bf16 %v2340, %v2339
        %v2372 = vpack.c.bf16 %v2342, %v2341
        %v2373 = vpack.c.bf16 %v2344, %v2343
        %v2374 = vpack.c.bf16 %v2346, %v2345
        %v2375 = vpack.c.bf16 %v2348, %v2347
        %v2376 = vpack.c.bf16 %v2350, %v2349
        %v2377 = vpack.c.bf16 %v2352, %v2351
        %v2378 = vpack.c.bf16 %v2354, %v2353
        %v2379 = vpack.c.bf16 %v2356, %v2355
        %v2380 = vpack.c.bf16 %v2358, %v2357
        %v2381 = vpack.c.bf16 %v2360, %v2359
        %v2382 = vpack.c.bf16 %v2362, %v2361
        %v2383 = vpack.c.bf16 %v2364, %v2363
        %v2384 = vpack.c.bf16 %v2366, %v2365
        %v2385 = vpack.c.bf16 %v2368, %v2367
        %v2386 = vpack.c.bf16 %v2370, %v2369
        %v2403 = vunpack.c.l.b16 %v2371
        %v2404 = vunpack.c.h.b16 %v2371
        %v2405 = vunpack.c.l.b16 %v2372
        %v2406 = vunpack.c.h.b16 %v2372
        %v2407 = vunpack.c.l.b16 %v2373
        %v2408 = vunpack.c.h.b16 %v2373
        %v2409 = vunpack.c.l.b16 %v2374
        %v2410 = vunpack.c.h.b16 %v2374
        %v2411 = vunpack.c.l.b16 %v2375
        %v2412 = vunpack.c.h.b16 %v2375
        %v2413 = vunpack.c.l.b16 %v2376
        %v2414 = vunpack.c.h.b16 %v2376
        %v2415 = vunpack.c.l.b16 %v2377
        %v2416 = vunpack.c.h.b16 %v2377
        %v2417 = vunpack.c.l.b16 %v2378
        %v2418 = vunpack.c.h.b16 %v2378
        %v2419 = vunpack.c.l.b16 %v2379
        %v2420 = vunpack.c.h.b16 %v2379
        %v2421 = vunpack.c.l.b16 %v2380
        %v2422 = vunpack.c.h.b16 %v2380
        %v2423 = vunpack.c.l.b16 %v2381
        %v2424 = vunpack.c.h.b16 %v2381
        %v2425 = vunpack.c.l.b16 %v2382
        %v2426 = vunpack.c.h.b16 %v2382
        %v2427 = vunpack.c.l.b16 %v2383
        %v2428 = vunpack.c.h.b16 %v2383
        %v2429 = vunpack.c.l.b16 %v2384
        %v2430 = vunpack.c.h.b16 %v2384
        %v2431 = vunpack.c.l.b16 %v2385
        %v2432 = vunpack.c.h.b16 %v2385
        %v2433 = vunpack.c.l.b16 %v2386
        %v2434 = vunpack.c.h.b16 %v2386
        %v2435 = vpack.c.b16 %v2403, %v2403
        %v2436 = vpack.c.b16 %v2404, %v2404
        %v2437 = vpack.c.b16 %v2405, %v2405
        %v2438 = vpack.c.b16 %v2406, %v2406
        %v2439 = vpack.c.b16 %v2407, %v2407
        %v2440 = vpack.c.b16 %v2408, %v2408
        %v2441 = vpack.c.b16 %v2409, %v2409
        %v2442 = vpack.c.b16 %v2410, %v2410
        %v2443 = vpack.c.b16 %v2411, %v2411
        %v2444 = vpack.c.b16 %v2412, %v2412
        %v2445 = vpack.c.b16 %v2413, %v2413
        %v2446 = vpack.c.b16 %v2414, %v2414
        %v2447 = vpack.c.b16 %v2415, %v2415
        %v2448 = vpack.c.b16 %v2416, %v2416
        %v2449 = vpack.c.b16 %v2417, %v2417
        %v2450 = vpack.c.b16 %v2418, %v2418
        %v2451 = vpack.c.b16 %v2419, %v2419
        %v2452 = vpack.c.b16 %v2420, %v2420
        %v2453 = vpack.c.b16 %v2421, %v2421
        %v2454 = vpack.c.b16 %v2422, %v2422
        %v2455 = vpack.c.b16 %v2423, %v2423
        %v2456 = vpack.c.b16 %v2424, %v2424
        %v2457 = vpack.c.b16 %v2425, %v2425
        %v2458 = vpack.c.b16 %v2426, %v2426
        %v2459 = vpack.c.b16 %v2427, %v2427
        %v2460 = vpack.c.b16 %v2428, %v2428
        %v2461 = vpack.c.b16 %v2429, %v2429
        %v2462 = vpack.c.b16 %v2430, %v2430
        %v2463 = vpack.c.b16 %v2431, %v2431
        %v2464 = vpack.c.b16 %v2432, %v2432
        %v2465 = vpack.c.b16 %v2433, %v2433
        %v2466 = vpack.c.b16 %v2434, %v2434
        %2499 = vst [vmem:[%s375] sm:$0xf] %v2435
        %2500 = vst [vmem:[%s375 + $0x4] sm:$0xf] %v2436
        %2501 = vst [vmem:[%s375 + $0x8] sm:$0xf] %v2437
        %2502 = vst [vmem:[%s375 + $0xc] sm:$0xf] %v2438
        %2503 = vst [vmem:[%s375 + $0x10] sm:$0xf] %v2439
        %2504 = vst [vmem:[%s375 + $0x14] sm:$0xf] %v2440
        %2505 = vst [vmem:[%s375 + $0x18] sm:$0xf] %v2441
        %2506 = vst [vmem:[%s375 + $0x1c] sm:$0xf] %v2442
        %2507 = vst [vmem:[%s375 + $0x20] sm:$0xf] %v2443
        %2508 = vst [vmem:[%s375 + $0x24] sm:$0xf] %v2444
        %2509 = vst [vmem:[%s375 + $0x28] sm:$0xf] %v2445
        %2510 = vst [vmem:[%s375 + $0x2c] sm:$0xf] %v2446
        %2511 = vst [vmem:[%s375 + $0x30] sm:$0xf] %v2447
        %2512 = vst [vmem:[%s375 + $0x34] sm:$0xf] %v2448
        %2513 = vst [vmem:[%s375 + $0x38] sm:$0xf] %v2449
        %2514 = vst [vmem:[%s375 + $0x3c] sm:$0xf] %v2450
        %2515 = vst [vmem:[%s375 + $0x40] sm:$0xf] %v2451
        %2516 = vst [vmem:[%s375 + $0x44] sm:$0xf] %v2452
        %2517 = vst [vmem:[%s375 + $0x48] sm:$0xf] %v2453
        %2518 = vst [vmem:[%s375 + $0x4c] sm:$0xf] %v2454
        %2519 = vst [vmem:[%s375 + $0x50] sm:$0xf] %v2455
        %2520 = vst [vmem:[%s375 + $0x54] sm:$0xf] %v2456
        %2521 = vst [vmem:[%s375 + $0x58] sm:$0xf] %v2457
        %2522 = vst [vmem:[%s375 + $0x5c] sm:$0xf] %v2458
        %2523 = vst [vmem:[%s375 + $0x60] sm:$0xf] %v2459
        %2524 = vst [vmem:[%s375 + $0x64] sm:$0xf] %v2460
        %2525 = vst [vmem:[%s375 + $0x68] sm:$0xf] %v2461
        %2526 = vst [vmem:[%s375 + $0x6c] sm:$0xf] %v2462
        %2527 = vst [vmem:[%s375 + $0x70] sm:$0xf] %v2463
        %2528 = vst [vmem:[%s375 + $0x74] sm:$0xf] %v2464
        %2529 = vst [vmem:[%s375 + $0x78] sm:$0xf] %v2465
        %2530 = vst [vmem:[%s375 + $0x7c] sm:$0xf] %v2466
        %v2531 = vmul.f32 %v1723, %v1723
        %v2532 = vmul.f32 %v1727, %v1727
        %v2533 = vmul.f32 %v1733, %v1733
        %v2534 = vmul.f32 %v1737, %v1737
        %v2535 = vmul.f32 %v1743, %v1743
        %v2536 = vmul.f32 %v1747, %v1747
        %v2537 = vmul.f32 %v1753, %v1753
        %v2538 = vmul.f32 %v1757, %v1757
        %v2539 = vmul.f32 %v1763, %v1763
        %v2540 = vmul.f32 %v1767, %v1767
        %v2541 = vmul.f32 %v1773, %v1773
        %v2542 = vmul.f32 %v1777, %v1777
        %v2543 = vmul.f32 %v1783, %v1783
        %v2544 = vmul.f32 %v1787, %v1787
        %v2545 = vmul.f32 %v1793, %v1793
        %v2546 = vmul.f32 %v1797, %v1797
        %v2547 = vmul.f32 %v1803, %v1803
        %v2548 = vmul.f32 %v1807, %v1807
        %v2549 = vmul.f32 %v1813, %v1813
        %v2550 = vmul.f32 %v1817, %v1817
        %v2551 = vmul.f32 %v1823, %v1823
        %v2552 = vmul.f32 %v1827, %v1827
        %v2553 = vmul.f32 %v1833, %v1833
        %v2554 = vmul.f32 %v1837, %v1837
        %v2555 = vmul.f32 %v1843, %v1843
        %v2556 = vmul.f32 %v1847, %v1847
        %v2557 = vmul.f32 %v1853, %v1853
        %v2558 = vmul.f32 %v1857, %v1857
        %v2559 = vmul.f32 %v1863, %v1863
        %v2560 = vmul.f32 %v1867, %v1867
        %v2561 = vmul.f32 %v1873, %v1873
        %v2562 = vmul.f32 %v1877, %v1877
        %2563 = vadd.xlane.f32.xlu0 %v2531
        %v2564 = vpop.xlane.xlu0 %2563
        %2565 = vadd.xlane.f32.xlu0 %v2532
        %v2566 = vpop.xlane.xlu0 %2565
        %2567 = vadd.xlane.f32.xlu0 %v2533
        %v2568 = vpop.xlane.xlu0 %2567
        %2569 = vadd.xlane.f32.xlu0 %v2534
        %v2570 = vpop.xlane.xlu0 %2569
        %2571 = vadd.xlane.f32.xlu0 %v2535
        %v2572 = vpop.xlane.xlu0 %2571
        %2573 = vadd.xlane.f32.xlu0 %v2536
        %v2574 = vpop.xlane.xlu0 %2573
        %2575 = vadd.xlane.f32.xlu0 %v2537
        %v2576 = vpop.xlane.xlu0 %2575
        %2577 = vadd.xlane.f32.xlu0 %v2538
        %v2578 = vpop.xlane.xlu0 %2577
        %2579 = vadd.xlane.f32.xlu0 %v2539
        %v2580 = vpop.xlane.xlu0 %2579
        %2581 = vadd.xlane.f32.xlu0 %v2540
        %v2582 = vpop.xlane.xlu0 %2581
        %2583 = vadd.xlane.f32.xlu0 %v2541
        %v2584 = vpop.xlane.xlu0 %2583
        %2585 = vadd.xlane.f32.xlu0 %v2542
        %v2586 = vpop.xlane.xlu0 %2585
        %2587 = vadd.xlane.f32.xlu0 %v2543
        %v2588 = vpop.xlane.xlu0 %2587
        %2589 = vadd.xlane.f32.xlu0 %v2544
        %v2590 = vpop.xlane.xlu0 %2589
        %2591 = vadd.xlane.f32.xlu0 %v2545
        %v2592 = vpop.xlane.xlu0 %2591
        %2593 = vadd.xlane.f32.xlu0 %v2546
        %v2594 = vpop.xlane.xlu0 %2593
        %2595 = vadd.xlane.f32.xlu0 %v2547
        %v2596 = vpop.xlane.xlu0 %2595
        %2597 = vadd.xlane.f32.xlu0 %v2548
        %v2598 = vpop.xlane.xlu0 %2597
        %2599 = vadd.xlane.f32.xlu0 %v2549
        %v2600 = vpop.xlane.xlu0 %2599
        %2601 = vadd.xlane.f32.xlu0 %v2550
        %v2602 = vpop.xlane.xlu0 %2601
        %2603 = vadd.xlane.f32.xlu0 %v2551
        %v2604 = vpop.xlane.xlu0 %2603
        %2605 = vadd.xlane.f32.xlu0 %v2552
        %v2606 = vpop.xlane.xlu0 %2605
        %2607 = vadd.xlane.f32.xlu0 %v2553
        %v2608 = vpop.xlane.xlu0 %2607
        %2609 = vadd.xlane.f32.xlu0 %v2554
        %v2610 = vpop.xlane.xlu0 %2609
        %2611 = vadd.xlane.f32.xlu0 %v2555
        %v2612 = vpop.xlane.xlu0 %2611
        %2613 = vadd.xlane.f32.xlu0 %v2556
        %v2614 = vpop.xlane.xlu0 %2613
        %2615 = vadd.xlane.f32.xlu0 %v2557
        %v2616 = vpop.xlane.xlu0 %2615
        %2617 = vadd.xlane.f32.xlu0 %v2558
        %v2618 = vpop.xlane.xlu0 %2617
        %2619 = vadd.xlane.f32.xlu0 %v2559
        %v2620 = vpop.xlane.xlu0 %2619
        %2621 = vadd.xlane.f32.xlu0 %v2560
        %v2622 = vpop.xlane.xlu0 %2621
        %2623 = vadd.xlane.f32.xlu0 %v2561
        %v2624 = vpop.xlane.xlu0 %2623
        %2625 = vadd.xlane.f32.xlu0 %v2562
        %v2626 = vpop.xlane.xlu0 %2625
        %v2627 = vmul.f32 %v2564, %v2172
        %v2628 = vmul.f32 %v2566, %v2172
        %v2629 = vmul.f32 %v2568, %v2172
        %v2630 = vmul.f32 %v2570, %v2172
        %v2631 = vmul.f32 %v2572, %v2172
        %v2632 = vmul.f32 %v2574, %v2172
        %v2633 = vmul.f32 %v2576, %v2172
        %v2634 = vmul.f32 %v2578, %v2172
        %v2635 = vmul.f32 %v2580, %v2172
        %v2636 = vmul.f32 %v2582, %v2172
        %v2637 = vmul.f32 %v2584, %v2172
        %v2638 = vmul.f32 %v2586, %v2172
        %v2639 = vmul.f32 %v2588, %v2172
        %v2640 = vmul.f32 %v2590, %v2172
        %v2641 = vmul.f32 %v2592, %v2172
        %v2642 = vmul.f32 %v2594, %v2172
        %v2643 = vmul.f32 %v2596, %v2172
        %v2644 = vmul.f32 %v2598, %v2172
        %v2645 = vmul.f32 %v2600, %v2172
        %v2646 = vmul.f32 %v2602, %v2172
        %v2647 = vmul.f32 %v2604, %v2172
        %v2648 = vmul.f32 %v2606, %v2172
        %v2649 = vmul.f32 %v2608, %v2172
        %v2650 = vmul.f32 %v2610, %v2172
        %v2651 = vmul.f32 %v2612, %v2172
        %v2652 = vmul.f32 %v2614, %v2172
        %v2653 = vmul.f32 %v2616, %v2172
        %v2654 = vmul.f32 %v2618, %v2172
        %v2655 = vmul.f32 %v2620, %v2172
        %v2656 = vmul.f32 %v2622, %v2172
        %v2657 = vmul.f32 %v2624, %v2172
        %v2658 = vmul.f32 %v2626, %v2172
        %v2659 = vadd.f32 %v2627, 1e-06
        %v2660 = vadd.f32 %v2628, 1e-06
        %v2661 = vadd.f32 %v2629, 1e-06
        %v2662 = vadd.f32 %v2630, 1e-06
        %v2663 = vadd.f32 %v2631, 1e-06
        %v2664 = vadd.f32 %v2632, 1e-06
        %v2665 = vadd.f32 %v2633, 1e-06
        %v2666 = vadd.f32 %v2634, 1e-06
        %v2667 = vadd.f32 %v2635, 1e-06
        %v2668 = vadd.f32 %v2636, 1e-06
        %v2669 = vadd.f32 %v2637, 1e-06
        %v2670 = vadd.f32 %v2638, 1e-06
        %v2671 = vadd.f32 %v2639, 1e-06
        %v2672 = vadd.f32 %v2640, 1e-06
        %v2673 = vadd.f32 %v2641, 1e-06
        %v2674 = vadd.f32 %v2642, 1e-06
        %v2675 = vadd.f32 %v2643, 1e-06
        %v2676 = vadd.f32 %v2644, 1e-06
        %v2677 = vadd.f32 %v2645, 1e-06
        %v2678 = vadd.f32 %v2646, 1e-06
        %v2679 = vadd.f32 %v2647, 1e-06
        %v2680 = vadd.f32 %v2648, 1e-06
        %v2681 = vadd.f32 %v2649, 1e-06
        %v2682 = vadd.f32 %v2650, 1e-06
        %v2683 = vadd.f32 %v2651, 1e-06
        %v2684 = vadd.f32 %v2652, 1e-06
        %v2685 = vadd.f32 %v2653, 1e-06
        %v2686 = vadd.f32 %v2654, 1e-06
        %v2687 = vadd.f32 %v2655, 1e-06
        %v2688 = vadd.f32 %v2656, 1e-06
        %v2689 = vadd.f32 %v2657, 1e-06
        %v2690 = vadd.f32 %v2658, 1e-06
        %v2691 = vrsqrt.pop %v2659
        %v2692 = vrsqrt.pop %v2660
        %v2693 = vrsqrt.pop %v2661
        %v2694 = vrsqrt.pop %v2662
        %v2695 = vrsqrt.pop %v2663
        %v2696 = vrsqrt.pop %v2664
        %v2697 = vrsqrt.pop %v2665
        %v2698 = vrsqrt.pop %v2666
        %v2699 = vrsqrt.pop %v2667
        %v2700 = vrsqrt.pop %v2668
        %v2701 = vrsqrt.pop %v2669
        %v2702 = vrsqrt.pop %v2670
        %v2703 = vrsqrt.pop %v2671
        %v2704 = vrsqrt.pop %v2672
        %v2705 = vrsqrt.pop %v2673
        %v2706 = vrsqrt.pop %v2674
        %v2707 = vrsqrt.pop %v2675
        %v2708 = vrsqrt.pop %v2676
        %v2709 = vrsqrt.pop %v2677
        %v2710 = vrsqrt.pop %v2678
        %v2711 = vrsqrt.pop %v2679
        %v2712 = vrsqrt.pop %v2680
        %v2713 = vrsqrt.pop %v2681
        %v2714 = vrsqrt.pop %v2682
        %v2715 = vrsqrt.pop %v2683
        %v2716 = vrsqrt.pop %v2684
        %v2717 = vrsqrt.pop %v2685
        %v2718 = vrsqrt.pop %v2686
        %v2719 = vrsqrt.pop %v2687
        %v2720 = vrsqrt.pop %v2688
        %v2721 = vrsqrt.pop %v2689
        %v2722 = vrsqrt.pop %v2690
        %v2723 = vmul.f32 %v1723, %v2691
        %v2724 = vmul.f32 %v1727, %v2692
        %v2725 = vmul.f32 %v1733, %v2693
        %v2726 = vmul.f32 %v1737, %v2694
        %v2727 = vmul.f32 %v1743, %v2695
        %v2728 = vmul.f32 %v1747, %v2696
        %v2729 = vmul.f32 %v1753, %v2697
        %v2730 = vmul.f32 %v1757, %v2698
        %v2731 = vmul.f32 %v1763, %v2699
        %v2732 = vmul.f32 %v1767, %v2700
        %v2733 = vmul.f32 %v1773, %v2701
        %v2734 = vmul.f32 %v1777, %v2702
        %v2735 = vmul.f32 %v1783, %v2703
        %v2736 = vmul.f32 %v1787, %v2704
        %v2737 = vmul.f32 %v1793, %v2705
        %v2738 = vmul.f32 %v1797, %v2706
        %v2739 = vmul.f32 %v1803, %v2707
        %v2740 = vmul.f32 %v1807, %v2708
        %v2741 = vmul.f32 %v1813, %v2709
        %v2742 = vmul.f32 %v1817, %v2710
        %v2743 = vmul.f32 %v1823, %v2711
        %v2744 = vmul.f32 %v1827, %v2712
        %v2745 = vmul.f32 %v1833, %v2713
        %v2746 = vmul.f32 %v1837, %v2714
        %v2747 = vmul.f32 %v1843, %v2715
        %v2748 = vmul.f32 %v1847, %v2716
        %v2749 = vmul.f32 %v1853, %v2717
        %v2750 = vmul.f32 %v1857, %v2718
        %v2751 = vmul.f32 %v1863, %v2719
        %v2752 = vmul.f32 %v1867, %v2720
        %v2753 = vmul.f32 %v1873, %v2721
        %v2754 = vmul.f32 %v1877, %v2722
        %v2756 = vlaneseq
        %v2757 = vshrl.u32 %v2756, 7
        %v2758 = vsub.s32 0, %v2757
        %v2759 = vrot.slane %v2075, %v2758
        %v2761 = vmul.f32 %v2723, %v2759
        %v2762 = vmul.f32 %v2724, %v2759
        %v2763 = vmul.f32 %v2725, %v2759
        %v2764 = vmul.f32 %v2726, %v2759
        %v2765 = vmul.f32 %v2727, %v2759
        %v2766 = vmul.f32 %v2728, %v2759
        %v2767 = vmul.f32 %v2729, %v2759
        %v2768 = vmul.f32 %v2730, %v2759
        %v2769 = vmul.f32 %v2731, %v2759
        %v2770 = vmul.f32 %v2732, %v2759
        %v2771 = vmul.f32 %v2733, %v2759
        %v2772 = vmul.f32 %v2734, %v2759
        %v2773 = vmul.f32 %v2735, %v2759
        %v2774 = vmul.f32 %v2736, %v2759
        %v2775 = vmul.f32 %v2737, %v2759
        %v2776 = vmul.f32 %v2738, %v2759
        %v2777 = vmul.f32 %v2739, %v2759
        %v2778 = vmul.f32 %v2740, %v2759
        %v2779 = vmul.f32 %v2741, %v2759
        %v2780 = vmul.f32 %v2742, %v2759
        %v2781 = vmul.f32 %v2743, %v2759
        %v2782 = vmul.f32 %v2744, %v2759
        %v2783 = vmul.f32 %v2745, %v2759
        %v2784 = vmul.f32 %v2746, %v2759
        %v2785 = vmul.f32 %v2747, %v2759
        %v2786 = vmul.f32 %v2748, %v2759
        %v2787 = vmul.f32 %v2749, %v2759
        %v2788 = vmul.f32 %v2750, %v2759
        %v2789 = vmul.f32 %v2751, %v2759
        %v2790 = vmul.f32 %v2752, %v2759
        %v2791 = vmul.f32 %v2753, %v2759
        %v2792 = vmul.f32 %v2754, %v2759
        %v2793 = vpack.c.bf16 %v2762, %v2761
        %v2794 = vpack.c.bf16 %v2764, %v2763
        %v2795 = vpack.c.bf16 %v2766, %v2765
        %v2796 = vpack.c.bf16 %v2768, %v2767
        %v2797 = vpack.c.bf16 %v2770, %v2769
        %v2798 = vpack.c.bf16 %v2772, %v2771
        %v2799 = vpack.c.bf16 %v2774, %v2773
        %v2800 = vpack.c.bf16 %v2776, %v2775
        %v2801 = vpack.c.bf16 %v2778, %v2777
        %v2802 = vpack.c.bf16 %v2780, %v2779
        %v2803 = vpack.c.bf16 %v2782, %v2781
        %v2804 = vpack.c.bf16 %v2784, %v2783
        %v2805 = vpack.c.bf16 %v2786, %v2785
        %v2806 = vpack.c.bf16 %v2788, %v2787
        %v2807 = vpack.c.bf16 %v2790, %v2789
        %v2808 = vpack.c.bf16 %v2792, %v2791
        %v2825 = vunpack.c.l.b16 %v2793
        %v2826 = vunpack.c.h.b16 %v2793
        %v2827 = vunpack.c.l.b16 %v2794
        %v2828 = vunpack.c.h.b16 %v2794
        %v2829 = vunpack.c.l.b16 %v2795
        %v2830 = vunpack.c.h.b16 %v2795
        %v2831 = vunpack.c.l.b16 %v2796
        %v2832 = vunpack.c.h.b16 %v2796
        %v2833 = vunpack.c.l.b16 %v2797
        %v2834 = vunpack.c.h.b16 %v2797
        %v2835 = vunpack.c.l.b16 %v2798
        %v2836 = vunpack.c.h.b16 %v2798
        %v2837 = vunpack.c.l.b16 %v2799
        %v2838 = vunpack.c.h.b16 %v2799
        %v2839 = vunpack.c.l.b16 %v2800
        %v2840 = vunpack.c.h.b16 %v2800
        %v2841 = vunpack.c.l.b16 %v2801
        %v2842 = vunpack.c.h.b16 %v2801
        %v2843 = vunpack.c.l.b16 %v2802
        %v2844 = vunpack.c.h.b16 %v2802
        %v2845 = vunpack.c.l.b16 %v2803
        %v2846 = vunpack.c.h.b16 %v2803
        %v2847 = vunpack.c.l.b16 %v2804
        %v2848 = vunpack.c.h.b16 %v2804
        %v2849 = vunpack.c.l.b16 %v2805
        %v2850 = vunpack.c.h.b16 %v2805
        %v2851 = vunpack.c.l.b16 %v2806
        %v2852 = vunpack.c.h.b16 %v2806
        %v2853 = vunpack.c.l.b16 %v2807
        %v2854 = vunpack.c.h.b16 %v2807
        %v2855 = vunpack.c.l.b16 %v2808
        %v2856 = vunpack.c.h.b16 %v2808
        %v2857 = vpack.c.b16 %v2825, %v2825
        %v2858 = vpack.c.b16 %v2826, %v2826
        %v2859 = vpack.c.b16 %v2827, %v2827
        %v2860 = vpack.c.b16 %v2828, %v2828
        %v2861 = vpack.c.b16 %v2829, %v2829
        %v2862 = vpack.c.b16 %v2830, %v2830
        %v2863 = vpack.c.b16 %v2831, %v2831
        %v2864 = vpack.c.b16 %v2832, %v2832
        %v2865 = vpack.c.b16 %v2833, %v2833
        %v2866 = vpack.c.b16 %v2834, %v2834
        %v2867 = vpack.c.b16 %v2835, %v2835
        %v2868 = vpack.c.b16 %v2836, %v2836
        %v2869 = vpack.c.b16 %v2837, %v2837
        %v2870 = vpack.c.b16 %v2838, %v2838
        %v2871 = vpack.c.b16 %v2839, %v2839
        %v2872 = vpack.c.b16 %v2840, %v2840
        %v2873 = vpack.c.b16 %v2841, %v2841
        %v2874 = vpack.c.b16 %v2842, %v2842
        %v2875 = vpack.c.b16 %v2843, %v2843
        %v2876 = vpack.c.b16 %v2844, %v2844
        %v2877 = vpack.c.b16 %v2845, %v2845
        %v2878 = vpack.c.b16 %v2846, %v2846
        %v2879 = vpack.c.b16 %v2847, %v2847
        %v2880 = vpack.c.b16 %v2848, %v2848
        %v2881 = vpack.c.b16 %v2849, %v2849
        %v2882 = vpack.c.b16 %v2850, %v2850
        %v2883 = vpack.c.b16 %v2851, %v2851
        %v2884 = vpack.c.b16 %v2852, %v2852
        %v2885 = vpack.c.b16 %v2853, %v2853
        %v2886 = vpack.c.b16 %v2854, %v2854
        %v2887 = vpack.c.b16 %v2855, %v2855
        %v2888 = vpack.c.b16 %v2856, %v2856
        %2921 = vst [vmem:[%s382] sm:$0xf] %v2857
        %2922 = vst [vmem:[%s382 + $0x4] sm:$0xf] %v2858
        %2923 = vst [vmem:[%s382 + $0x8] sm:$0xf] %v2859
        %2924 = vst [vmem:[%s382 + $0xc] sm:$0xf] %v2860
        %2925 = vst [vmem:[%s382 + $0x10] sm:$0xf] %v2861
        %2926 = vst [vmem:[%s382 + $0x14] sm:$0xf] %v2862
        %2927 = vst [vmem:[%s382 + $0x18] sm:$0xf] %v2863
        %2928 = vst [vmem:[%s382 + $0x1c] sm:$0xf] %v2864
        %2929 = vst [vmem:[%s382 + $0x20] sm:$0xf] %v2865
        %2930 = vst [vmem:[%s382 + $0x24] sm:$0xf] %v2866
        %2931 = vst [vmem:[%s382 + $0x28] sm:$0xf] %v2867
        %2932 = vst [vmem:[%s382 + $0x2c] sm:$0xf] %v2868
        %2933 = vst [vmem:[%s382 + $0x30] sm:$0xf] %v2869
        %2934 = vst [vmem:[%s382 + $0x34] sm:$0xf] %v2870
        %2935 = vst [vmem:[%s382 + $0x38] sm:$0xf] %v2871
        %2936 = vst [vmem:[%s382 + $0x3c] sm:$0xf] %v2872
        %2937 = vst [vmem:[%s382 + $0x40] sm:$0xf] %v2873
        %2938 = vst [vmem:[%s382 + $0x44] sm:$0xf] %v2874
        %2939 = vst [vmem:[%s382 + $0x48] sm:$0xf] %v2875
        %2940 = vst [vmem:[%s382 + $0x4c] sm:$0xf] %v2876
        %2941 = vst [vmem:[%s382 + $0x50] sm:$0xf] %v2877
        %2942 = vst [vmem:[%s382 + $0x54] sm:$0xf] %v2878
        %2943 = vst [vmem:[%s382 + $0x58] sm:$0xf] %v2879
        %2944 = vst [vmem:[%s382 + $0x5c] sm:$0xf] %v2880
        %2945 = vst [vmem:[%s382 + $0x60] sm:$0xf] %v2881
        %2946 = vst [vmem:[%s382 + $0x64] sm:$0xf] %v2882
        %2947 = vst [vmem:[%s382 + $0x68] sm:$0xf] %v2883
        %2948 = vst [vmem:[%s382 + $0x6c] sm:$0xf] %v2884
        %2949 = vst [vmem:[%s382 + $0x70] sm:$0xf] %v2885
        %2950 = vst [vmem:[%s382 + $0x74] sm:$0xf] %v2886
        %2951 = vst [vmem:[%s382 + $0x78] sm:$0xf] %v2887
        %2952 = vst [vmem:[%s382 + $0x7c] sm:$0xf] %v2888
        %v2953 = vpack.c.bf16 %v1920, %v1916
        %v2954 = vpack.c.bf16 %v1930, %v1926
        %v2955 = vpack.c.bf16 %v1940, %v1936
        %v2956 = vpack.c.bf16 %v1950, %v1946
        %v2957 = vpack.c.bf16 %v1960, %v1956
        %v2958 = vpack.c.bf16 %v1970, %v1966
        %v2959 = vpack.c.bf16 %v1980, %v1976
        %v2960 = vpack.c.bf16 %v1990, %v1986
        %v2961 = vpack.c.bf16 %v2000, %v1996
        %v2962 = vpack.c.bf16 %v2010, %v2006
        %v2963 = vpack.c.bf16 %v2020, %v2016
        %v2964 = vpack.c.bf16 %v2030, %v2026
        %v2965 = vpack.c.bf16 %v2040, %v2036
        %v2966 = vpack.c.bf16 %v2050, %v2046
        %v2967 = vpack.c.bf16 %v2060, %v2056
        %v2968 = vpack.c.bf16 %v2070, %v2066
        %v2985 = vunpack.c.l.b16 %v2953
        %v2986 = vunpack.c.h.b16 %v2953
        %v2987 = vunpack.c.l.b16 %v2954
        %v2988 = vunpack.c.h.b16 %v2954
        %v2989 = vunpack.c.l.b16 %v2955
        %v2990 = vunpack.c.h.b16 %v2955
        %v2991 = vunpack.c.l.b16 %v2956
        %v2992 = vunpack.c.h.b16 %v2956
        %v2993 = vunpack.c.l.b16 %v2957
        %v2994 = vunpack.c.h.b16 %v2957
        %v2995 = vunpack.c.l.b16 %v2958
        %v2996 = vunpack.c.h.b16 %v2958
        %v2997 = vunpack.c.l.b16 %v2959
        %v2998 = vunpack.c.h.b16 %v2959
        %v2999 = vunpack.c.l.b16 %v2960
        %v3000 = vunpack.c.h.b16 %v2960
        %v3001 = vunpack.c.l.b16 %v2961
        %v3002 = vunpack.c.h.b16 %v2961
        %v3003 = vunpack.c.l.b16 %v2962
        %v3004 = vunpack.c.h.b16 %v2962
        %v3005 = vunpack.c.l.b16 %v2963
        %v3006 = vunpack.c.h.b16 %v2963
        %v3007 = vunpack.c.l.b16 %v2964
        %v3008 = vunpack.c.h.b16 %v2964
        %v3009 = vunpack.c.l.b16 %v2965
        %v3010 = vunpack.c.h.b16 %v2965
        %v3011 = vunpack.c.l.b16 %v2966
        %v3012 = vunpack.c.h.b16 %v2966
        %v3013 = vunpack.c.l.b16 %v2967
        %v3014 = vunpack.c.h.b16 %v2967
        %v3015 = vunpack.c.l.b16 %v2968
        %v3016 = vunpack.c.h.b16 %v2968
        %v3017 = vpack.c.b16 %v2985, %v2985
        %v3018 = vpack.c.b16 %v2986, %v2986
        %v3019 = vpack.c.b16 %v2987, %v2987
        %v3020 = vpack.c.b16 %v2988, %v2988
        %v3021 = vpack.c.b16 %v2989, %v2989
        %v3022 = vpack.c.b16 %v2990, %v2990
        %v3023 = vpack.c.b16 %v2991, %v2991
        %v3024 = vpack.c.b16 %v2992, %v2992
        %v3025 = vpack.c.b16 %v2993, %v2993
        %v3026 = vpack.c.b16 %v2994, %v2994
        %v3027 = vpack.c.b16 %v2995, %v2995
        %v3028 = vpack.c.b16 %v2996, %v2996
        %v3029 = vpack.c.b16 %v2997, %v2997
        %v3030 = vpack.c.b16 %v2998, %v2998
        %v3031 = vpack.c.b16 %v2999, %v2999
        %v3032 = vpack.c.b16 %v3000, %v3000
        %v3033 = vpack.c.b16 %v3001, %v3001
        %v3034 = vpack.c.b16 %v3002, %v3002
        %v3035 = vpack.c.b16 %v3003, %v3003
        %v3036 = vpack.c.b16 %v3004, %v3004
        %v3037 = vpack.c.b16 %v3005, %v3005
        %v3038 = vpack.c.b16 %v3006, %v3006
        %v3039 = vpack.c.b16 %v3007, %v3007
        %v3040 = vpack.c.b16 %v3008, %v3008
        %v3041 = vpack.c.b16 %v3009, %v3009
        %v3042 = vpack.c.b16 %v3010, %v3010
        %v3043 = vpack.c.b16 %v3011, %v3011
        %v3044 = vpack.c.b16 %v3012, %v3012
        %v3045 = vpack.c.b16 %v3013, %v3013
        %v3046 = vpack.c.b16 %v3014, %v3014
        %v3047 = vpack.c.b16 %v3015, %v3015
        %v3048 = vpack.c.b16 %v3016, %v3016
        %3081 = vst [vmem:[%s389] sm:$0xf] %v3017
        %3082 = vst [vmem:[%s389 + $0x4] sm:$0xf] %v3018
        %3083 = vst [vmem:[%s389 + $0x8] sm:$0xf] %v3019
        %3084 = vst [vmem:[%s389 + $0xc] sm:$0xf] %v3020
        %3085 = vst [vmem:[%s389 + $0x10] sm:$0xf] %v3021
        %3086 = vst [vmem:[%s389 + $0x14] sm:$0xf] %v3022
        %3087 = vst [vmem:[%s389 + $0x18] sm:$0xf] %v3023
        %3088 = vst [vmem:[%s389 + $0x1c] sm:$0xf] %v3024
        %3089 = vst [vmem:[%s389 + $0x20] sm:$0xf] %v3025
        %3090 = vst [vmem:[%s389 + $0x24] sm:$0xf] %v3026
        %3091 = vst [vmem:[%s389 + $0x28] sm:$0xf] %v3027
        %3092 = vst [vmem:[%s389 + $0x2c] sm:$0xf] %v3028
        %3093 = vst [vmem:[%s389 + $0x30] sm:$0xf] %v3029
        %3094 = vst [vmem:[%s389 + $0x34] sm:$0xf] %v3030
        %3095 = vst [vmem:[%s389 + $0x38] sm:$0xf] %v3031
        %3096 = vst [vmem:[%s389 + $0x3c] sm:$0xf] %v3032
        %3097 = vst [vmem:[%s389 + $0x40] sm:$0xf] %v3033
        %3098 = vst [vmem:[%s389 + $0x44] sm:$0xf] %v3034
        %3099 = vst [vmem:[%s389 + $0x48] sm:$0xf] %v3035
        %3100 = vst [vmem:[%s389 + $0x4c] sm:$0xf] %v3036
        %3101 = vst [vmem:[%s389 + $0x50] sm:$0xf] %v3037
        %3102 = vst [vmem:[%s389 + $0x54] sm:$0xf] %v3038
        %3103 = vst [vmem:[%s389 + $0x58] sm:$0xf] %v3039
        %3104 = vst [vmem:[%s389 + $0x5c] sm:$0xf] %v3040
        %3105 = vst [vmem:[%s389 + $0x60] sm:$0xf] %v3041
        %3106 = vst [vmem:[%s389 + $0x64] sm:$0xf] %v3042
        %3107 = vst [vmem:[%s389 + $0x68] sm:$0xf] %v3043
        %3108 = vst [vmem:[%s389 + $0x6c] sm:$0xf] %v3044
        %3109 = vst [vmem:[%s389 + $0x70] sm:$0xf] %v3045
        %3110 = vst [vmem:[%s389 + $0x74] sm:$0xf] %v3046
        %3111 = vst [vmem:[%s389 + $0x78] sm:$0xf] %v3047
        %3112 = vst [vmem:[%s389 + $0x7c] sm:$0xf] %v3048
        %v3113 = vmul.f32 %v1532, %v1532
        %v3114 = vmul.f32 %v1536, %v1536
        %v3115 = vmul.f32 %v1542, %v1542
        %v3116 = vmul.f32 %v1546, %v1546
        %v3117 = vmul.f32 %v1552, %v1552
        %v3118 = vmul.f32 %v1556, %v1556
        %v3119 = vmul.f32 %v1562, %v1562
        %v3120 = vmul.f32 %v1566, %v1566
        %v3121 = vmul.f32 %v1572, %v1572
        %v3122 = vmul.f32 %v1576, %v1576
        %v3123 = vmul.f32 %v1582, %v1582
        %v3124 = vmul.f32 %v1586, %v1586
        %v3125 = vmul.f32 %v1592, %v1592
        %v3126 = vmul.f32 %v1596, %v1596
        %v3127 = vmul.f32 %v1602, %v1602
        %v3128 = vmul.f32 %v1606, %v1606
        %v3129 = vmul.f32 %v1612, %v1612
        %v3130 = vmul.f32 %v1616, %v1616
        %v3131 = vmul.f32 %v1622, %v1622
        %v3132 = vmul.f32 %v1626, %v1626
        %v3133 = vmul.f32 %v1632, %v1632
        %v3134 = vmul.f32 %v1636, %v1636
        %v3135 = vmul.f32 %v1642, %v1642
        %v3136 = vmul.f32 %v1646, %v1646
        %v3137 = vmul.f32 %v1652, %v1652
        %v3138 = vmul.f32 %v1656, %v1656
        %v3139 = vmul.f32 %v1662, %v1662
        %v3140 = vmul.f32 %v1666, %v1666
        %v3141 = vmul.f32 %v1672, %v1672
        %v3142 = vmul.f32 %v1676, %v1676
        %v3143 = vmul.f32 %v1682, %v1682
        %v3144 = vmul.f32 %v1686, %v1686
        %3145 = vadd.xlane.f32.xlu0 %v3113
        %v3146 = vpop.xlane.xlu0 %3145
        %3147 = vadd.xlane.f32.xlu0 %v3114
        %v3148 = vpop.xlane.xlu0 %3147
        %3149 = vadd.xlane.f32.xlu0 %v3115
        %v3150 = vpop.xlane.xlu0 %3149
        %3151 = vadd.xlane.f32.xlu0 %v3116
        %v3152 = vpop.xlane.xlu0 %3151
        %3153 = vadd.xlane.f32.xlu0 %v3117
        %v3154 = vpop.xlane.xlu0 %3153
        %3155 = vadd.xlane.f32.xlu0 %v3118
        %v3156 = vpop.xlane.xlu0 %3155
        %3157 = vadd.xlane.f32.xlu0 %v3119
        %v3158 = vpop.xlane.xlu0 %3157
        %3159 = vadd.xlane.f32.xlu0 %v3120
        %v3160 = vpop.xlane.xlu0 %3159
        %3161 = vadd.xlane.f32.xlu0 %v3121
        %v3162 = vpop.xlane.xlu0 %3161
        %3163 = vadd.xlane.f32.xlu0 %v3122
        %v3164 = vpop.xlane.xlu0 %3163
        %3165 = vadd.xlane.f32.xlu0 %v3123
        %v3166 = vpop.xlane.xlu0 %3165
        %3167 = vadd.xlane.f32.xlu0 %v3124
        %v3168 = vpop.xlane.xlu0 %3167
        %3169 = vadd.xlane.f32.xlu0 %v3125
        %v3170 = vpop.xlane.xlu0 %3169
        %3171 = vadd.xlane.f32.xlu0 %v3126
        %v3172 = vpop.xlane.xlu0 %3171
        %3173 = vadd.xlane.f32.xlu0 %v3127
        %v3174 = vpop.xlane.xlu0 %3173
        %3175 = vadd.xlane.f32.xlu0 %v3128
        %v3176 = vpop.xlane.xlu0 %3175
        %3177 = vadd.xlane.f32.xlu0 %v3129
        %v3178 = vpop.xlane.xlu0 %3177
        %3179 = vadd.xlane.f32.xlu0 %v3130
        %v3180 = vpop.xlane.xlu0 %3179
        %3181 = vadd.xlane.f32.xlu0 %v3131
        %v3182 = vpop.xlane.xlu0 %3181
        %3183 = vadd.xlane.f32.xlu0 %v3132
        %v3184 = vpop.xlane.xlu0 %3183
        %3185 = vadd.xlane.f32.xlu0 %v3133
        %v3186 = vpop.xlane.xlu0 %3185
        %3187 = vadd.xlane.f32.xlu0 %v3134
        %v3188 = vpop.xlane.xlu0 %3187
        %3189 = vadd.xlane.f32.xlu0 %v3135
        %v3190 = vpop.xlane.xlu0 %3189
        %3191 = vadd.xlane.f32.xlu0 %v3136
        %v3192 = vpop.xlane.xlu0 %3191
        %3193 = vadd.xlane.f32.xlu0 %v3137
        %v3194 = vpop.xlane.xlu0 %3193
        %3195 = vadd.xlane.f32.xlu0 %v3138
        %v3196 = vpop.xlane.xlu0 %3195
        %3197 = vadd.xlane.f32.xlu0 %v3139
        %v3198 = vpop.xlane.xlu0 %3197
        %3199 = vadd.xlane.f32.xlu0 %v3140
        %v3200 = vpop.xlane.xlu0 %3199
        %3201 = vadd.xlane.f32.xlu0 %v3141
        %v3202 = vpop.xlane.xlu0 %3201
        %3203 = vadd.xlane.f32.xlu0 %v3142
        %v3204 = vpop.xlane.xlu0 %3203
        %3205 = vadd.xlane.f32.xlu0 %v3143
        %v3206 = vpop.xlane.xlu0 %3205
        %3207 = vadd.xlane.f32.xlu0 %v3144
        %v3208 = vpop.xlane.xlu0 %3207
        %v3209 = vmul.f32 %v3146, %v2172
        %v3210 = vmul.f32 %v3148, %v2172
        %v3211 = vmul.f32 %v3150, %v2172
        %v3212 = vmul.f32 %v3152, %v2172
        %v3213 = vmul.f32 %v3154, %v2172
        %v3214 = vmul.f32 %v3156, %v2172
        %v3215 = vmul.f32 %v3158, %v2172
        %v3216 = vmul.f32 %v3160, %v2172
        %v3217 = vmul.f32 %v3162, %v2172
        %v3218 = vmul.f32 %v3164, %v2172
        %v3219 = vmul.f32 %v3166, %v2172
        %v3220 = vmul.f32 %v3168, %v2172
        %v3221 = vmul.f32 %v3170, %v2172
        %v3222 = vmul.f32 %v3172, %v2172
        %v3223 = vmul.f32 %v3174, %v2172
        %v3224 = vmul.f32 %v3176, %v2172
        %v3225 = vmul.f32 %v3178, %v2172
        %v3226 = vmul.f32 %v3180, %v2172
        %v3227 = vmul.f32 %v3182, %v2172
        %v3228 = vmul.f32 %v3184, %v2172
        %v3229 = vmul.f32 %v3186, %v2172
        %v3230 = vmul.f32 %v3188, %v2172
        %v3231 = vmul.f32 %v3190, %v2172
        %v3232 = vmul.f32 %v3192, %v2172
        %v3233 = vmul.f32 %v3194, %v2172
        %v3234 = vmul.f32 %v3196, %v2172
        %v3235 = vmul.f32 %v3198, %v2172
        %v3236 = vmul.f32 %v3200, %v2172
        %v3237 = vmul.f32 %v3202, %v2172
        %v3238 = vmul.f32 %v3204, %v2172
        %v3239 = vmul.f32 %v3206, %v2172
        %v3240 = vmul.f32 %v3208, %v2172
        %v3241 = vadd.f32 %v3209, 1e-06
        %v3242 = vadd.f32 %v3210, 1e-06
        %v3243 = vadd.f32 %v3211, 1e-06
        %v3244 = vadd.f32 %v3212, 1e-06
        %v3245 = vadd.f32 %v3213, 1e-06
        %v3246 = vadd.f32 %v3214, 1e-06
        %v3247 = vadd.f32 %v3215, 1e-06
        %v3248 = vadd.f32 %v3216, 1e-06
        %v3249 = vadd.f32 %v3217, 1e-06
        %v3250 = vadd.f32 %v3218, 1e-06
        %v3251 = vadd.f32 %v3219, 1e-06
        %v3252 = vadd.f32 %v3220, 1e-06
        %v3253 = vadd.f32 %v3221, 1e-06
        %v3254 = vadd.f32 %v3222, 1e-06
        %v3255 = vadd.f32 %v3223, 1e-06
        %v3256 = vadd.f32 %v3224, 1e-06
        %v3257 = vadd.f32 %v3225, 1e-06
        %v3258 = vadd.f32 %v3226, 1e-06
        %v3259 = vadd.f32 %v3227, 1e-06
        %v3260 = vadd.f32 %v3228, 1e-06
        %v3261 = vadd.f32 %v3229, 1e-06
        %v3262 = vadd.f32 %v3230, 1e-06
        %v3263 = vadd.f32 %v3231, 1e-06
        %v3264 = vadd.f32 %v3232, 1e-06
        %v3265 = vadd.f32 %v3233, 1e-06
        %v3266 = vadd.f32 %v3234, 1e-06
        %v3267 = vadd.f32 %v3235, 1e-06
        %v3268 = vadd.f32 %v3236, 1e-06
        %v3269 = vadd.f32 %v3237, 1e-06
        %v3270 = vadd.f32 %v3238, 1e-06
        %v3271 = vadd.f32 %v3239, 1e-06
        %v3272 = vadd.f32 %v3240, 1e-06
        %v3273 = vrsqrt.pop %v3241
        %v3274 = vrsqrt.pop %v3242
        %v3275 = vrsqrt.pop %v3243
        %v3276 = vrsqrt.pop %v3244
        %v3277 = vrsqrt.pop %v3245
        %v3278 = vrsqrt.pop %v3246
        %v3279 = vrsqrt.pop %v3247
        %v3280 = vrsqrt.pop %v3248
        %v3281 = vrsqrt.pop %v3249
        %v3282 = vrsqrt.pop %v3250
        %v3283 = vrsqrt.pop %v3251
        %v3284 = vrsqrt.pop %v3252
        %v3285 = vrsqrt.pop %v3253
        %v3286 = vrsqrt.pop %v3254
        %v3287 = vrsqrt.pop %v3255
        %v3288 = vrsqrt.pop %v3256
        %v3289 = vrsqrt.pop %v3257
        %v3290 = vrsqrt.pop %v3258
        %v3291 = vrsqrt.pop %v3259
        %v3292 = vrsqrt.pop %v3260
        %v3293 = vrsqrt.pop %v3261
        %v3294 = vrsqrt.pop %v3262
        %v3295 = vrsqrt.pop %v3263
        %v3296 = vrsqrt.pop %v3264
        %v3297 = vrsqrt.pop %v3265
        %v3298 = vrsqrt.pop %v3266
        %v3299 = vrsqrt.pop %v3267
        %v3300 = vrsqrt.pop %v3268
        %v3301 = vrsqrt.pop %v3269
        %v3302 = vrsqrt.pop %v3270
        %v3303 = vrsqrt.pop %v3271
        %v3304 = vrsqrt.pop %v3272
        %v3305 = vmul.f32 %v1532, %v3273
        %v3306 = vmul.f32 %v1536, %v3274
        %v3307 = vmul.f32 %v1542, %v3275
        %v3308 = vmul.f32 %v1546, %v3276
        %v3309 = vmul.f32 %v1552, %v3277
        %v3310 = vmul.f32 %v1556, %v3278
        %v3311 = vmul.f32 %v1562, %v3279
        %v3312 = vmul.f32 %v1566, %v3280
        %v3313 = vmul.f32 %v1572, %v3281
        %v3314 = vmul.f32 %v1576, %v3282
        %v3315 = vmul.f32 %v1582, %v3283
        %v3316 = vmul.f32 %v1586, %v3284
        %v3317 = vmul.f32 %v1592, %v3285
        %v3318 = vmul.f32 %v1596, %v3286
        %v3319 = vmul.f32 %v1602, %v3287
        %v3320 = vmul.f32 %v1606, %v3288
        %v3321 = vmul.f32 %v1612, %v3289
        %v3322 = vmul.f32 %v1616, %v3290
        %v3323 = vmul.f32 %v1622, %v3291
        %v3324 = vmul.f32 %v1626, %v3292
        %v3325 = vmul.f32 %v1632, %v3293
        %v3326 = vmul.f32 %v1636, %v3294
        %v3327 = vmul.f32 %v1642, %v3295
        %v3328 = vmul.f32 %v1646, %v3296
        %v3329 = vmul.f32 %v1652, %v3297
        %v3330 = vmul.f32 %v1656, %v3298
        %v3331 = vmul.f32 %v1662, %v3299
        %v3332 = vmul.f32 %v1666, %v3300
        %v3333 = vmul.f32 %v1672, %v3301
        %v3334 = vmul.f32 %v1676, %v3302
        %v3335 = vmul.f32 %v1682, %v3303
        %v3336 = vmul.f32 %v1686, %v3304
        %v3337 = vmul.f32 %v3305, %v2305
        %v3338 = vmul.f32 %v3306, %v2305
        %v3339 = vmul.f32 %v3307, %v2305
        %v3340 = vmul.f32 %v3308, %v2305
        %v3341 = vmul.f32 %v3309, %v2305
        %v3342 = vmul.f32 %v3310, %v2305
        %v3343 = vmul.f32 %v3311, %v2305
        %v3344 = vmul.f32 %v3312, %v2305
        %v3345 = vmul.f32 %v3313, %v2305
        %v3346 = vmul.f32 %v3314, %v2305
        %v3347 = vmul.f32 %v3315, %v2305
        %v3348 = vmul.f32 %v3316, %v2305
        %v3349 = vmul.f32 %v3317, %v2305
        %v3350 = vmul.f32 %v3318, %v2305
        %v3351 = vmul.f32 %v3319, %v2305
        %v3352 = vmul.f32 %v3320, %v2305
        %v3353 = vmul.f32 %v3321, %v2305
        %v3354 = vmul.f32 %v3322, %v2305
        %v3355 = vmul.f32 %v3323, %v2305
        %v3356 = vmul.f32 %v3324, %v2305
        %v3357 = vmul.f32 %v3325, %v2305
        %v3358 = vmul.f32 %v3326, %v2305
        %v3359 = vmul.f32 %v3327, %v2305
        %v3360 = vmul.f32 %v3328, %v2305
        %v3361 = vmul.f32 %v3329, %v2305
        %v3362 = vmul.f32 %v3330, %v2305
        %v3363 = vmul.f32 %v3331, %v2305
        %v3364 = vmul.f32 %v3332, %v2305
        %v3365 = vmul.f32 %v3333, %v2305
        %v3366 = vmul.f32 %v3334, %v2305
        %v3367 = vmul.f32 %v3335, %v2305
        %v3368 = vmul.f32 %v3336, %v2305
        %v3369 = vmul.f32 %v3337, 0.088388346
        %v3370 = vmul.f32 %v3338, 0.088388346
        %v3371 = vmul.f32 %v3339, 0.088388346
        %v3372 = vmul.f32 %v3340, 0.088388346
        %v3373 = vmul.f32 %v3341, 0.088388346
        %v3374 = vmul.f32 %v3342, 0.088388346
        %v3375 = vmul.f32 %v3343, 0.088388346
        %v3376 = vmul.f32 %v3344, 0.088388346
        %v3377 = vmul.f32 %v3345, 0.088388346
        %v3378 = vmul.f32 %v3346, 0.088388346
        %v3379 = vmul.f32 %v3347, 0.088388346
        %v3380 = vmul.f32 %v3348, 0.088388346
        %v3381 = vmul.f32 %v3349, 0.088388346
        %v3382 = vmul.f32 %v3350, 0.088388346
        %v3383 = vmul.f32 %v3351, 0.088388346
        %v3384 = vmul.f32 %v3352, 0.088388346
        %v3385 = vmul.f32 %v3353, 0.088388346
        %v3386 = vmul.f32 %v3354, 0.088388346
        %v3387 = vmul.f32 %v3355, 0.088388346
        %v3388 = vmul.f32 %v3356, 0.088388346
        %v3389 = vmul.f32 %v3357, 0.088388346
        %v3390 = vmul.f32 %v3358, 0.088388346
        %v3391 = vmul.f32 %v3359, 0.088388346
        %v3392 = vmul.f32 %v3360, 0.088388346
        %v3393 = vmul.f32 %v3361, 0.088388346
        %v3394 = vmul.f32 %v3362, 0.088388346
        %v3395 = vmul.f32 %v3363, 0.088388346
        %v3396 = vmul.f32 %v3364, 0.088388346
        %v3397 = vmul.f32 %v3365, 0.088388346
        %v3398 = vmul.f32 %v3366, 0.088388346
        %v3399 = vmul.f32 %v3367, 0.088388346
        %v3400 = vmul.f32 %v3368, 0.088388346
        %v3401 = vpack.c.bf16 %v3370, %v3369
        %v3402 = vpack.c.bf16 %v3372, %v3371
        %v3403 = vpack.c.bf16 %v3374, %v3373
        %v3404 = vpack.c.bf16 %v3376, %v3375
        %v3405 = vpack.c.bf16 %v3378, %v3377
        %v3406 = vpack.c.bf16 %v3380, %v3379
        %v3407 = vpack.c.bf16 %v3382, %v3381
        %v3408 = vpack.c.bf16 %v3384, %v3383
        %v3409 = vpack.c.bf16 %v3386, %v3385
        %v3410 = vpack.c.bf16 %v3388, %v3387
        %v3411 = vpack.c.bf16 %v3390, %v3389
        %v3412 = vpack.c.bf16 %v3392, %v3391
        %v3413 = vpack.c.bf16 %v3394, %v3393
        %v3414 = vpack.c.bf16 %v3396, %v3395
        %v3415 = vpack.c.bf16 %v3398, %v3397
        %v3416 = vpack.c.bf16 %v3400, %v3399
        %v3433 = vunpack.c.l.b16 %v3401
        %v3434 = vunpack.c.h.b16 %v3401
        %v3435 = vunpack.c.l.b16 %v3402
        %v3436 = vunpack.c.h.b16 %v3402
        %v3437 = vunpack.c.l.b16 %v3403
        %v3438 = vunpack.c.h.b16 %v3403
        %v3439 = vunpack.c.l.b16 %v3404
        %v3440 = vunpack.c.h.b16 %v3404
        %v3441 = vunpack.c.l.b16 %v3405
        %v3442 = vunpack.c.h.b16 %v3405
        %v3443 = vunpack.c.l.b16 %v3406
        %v3444 = vunpack.c.h.b16 %v3406
        %v3445 = vunpack.c.l.b16 %v3407
        %v3446 = vunpack.c.h.b16 %v3407
        %v3447 = vunpack.c.l.b16 %v3408
        %v3448 = vunpack.c.h.b16 %v3408
        %v3449 = vunpack.c.l.b16 %v3409
        %v3450 = vunpack.c.h.b16 %v3409
        %v3451 = vunpack.c.l.b16 %v3410
        %v3452 = vunpack.c.h.b16 %v3410
        %v3453 = vunpack.c.l.b16 %v3411
        %v3454 = vunpack.c.h.b16 %v3411
        %v3455 = vunpack.c.l.b16 %v3412
        %v3456 = vunpack.c.h.b16 %v3412
        %v3457 = vunpack.c.l.b16 %v3413
        %v3458 = vunpack.c.h.b16 %v3413
        %v3459 = vunpack.c.l.b16 %v3414
        %v3460 = vunpack.c.h.b16 %v3414
        %v3461 = vunpack.c.l.b16 %v3415
        %v3462 = vunpack.c.h.b16 %v3415
        %v3463 = vunpack.c.l.b16 %v3416
        %v3464 = vunpack.c.h.b16 %v3416
        %v3465 = vpack.c.b16 %v3433, %v3433
        %v3466 = vpack.c.b16 %v3434, %v3434
        %v3467 = vpack.c.b16 %v3435, %v3435
        %v3468 = vpack.c.b16 %v3436, %v3436
        %v3469 = vpack.c.b16 %v3437, %v3437
        %v3470 = vpack.c.b16 %v3438, %v3438
        %v3471 = vpack.c.b16 %v3439, %v3439
        %v3472 = vpack.c.b16 %v3440, %v3440
        %v3473 = vpack.c.b16 %v3441, %v3441
        %v3474 = vpack.c.b16 %v3442, %v3442
        %v3475 = vpack.c.b16 %v3443, %v3443
        %v3476 = vpack.c.b16 %v3444, %v3444
        %v3477 = vpack.c.b16 %v3445, %v3445
        %v3478 = vpack.c.b16 %v3446, %v3446
        %v3479 = vpack.c.b16 %v3447, %v3447
        %v3480 = vpack.c.b16 %v3448, %v3448
        %v3481 = vpack.c.b16 %v3449, %v3449
        %v3482 = vpack.c.b16 %v3450, %v3450
        %v3483 = vpack.c.b16 %v3451, %v3451
        %v3484 = vpack.c.b16 %v3452, %v3452
        %v3485 = vpack.c.b16 %v3453, %v3453
        %v3486 = vpack.c.b16 %v3454, %v3454
        %v3487 = vpack.c.b16 %v3455, %v3455
        %v3488 = vpack.c.b16 %v3456, %v3456
        %v3489 = vpack.c.b16 %v3457, %v3457
        %v3490 = vpack.c.b16 %v3458, %v3458
        %v3491 = vpack.c.b16 %v3459, %v3459
        %v3492 = vpack.c.b16 %v3460, %v3460
        %v3493 = vpack.c.b16 %v3461, %v3461
        %v3494 = vpack.c.b16 %v3462, %v3462
        %v3495 = vpack.c.b16 %v3463, %v3463
        %v3496 = vpack.c.b16 %v3464, %v3464
        %s3529 = scalar_lea.vmem %s375, 128 [#allocation11]
        %3530 = vst [vmem:[%s3529] sm:$0xf] %v3465
        %3531 = vst [vmem:[%s3529 + $0x4] sm:$0xf] %v3466
        %3532 = vst [vmem:[%s3529 + $0x8] sm:$0xf] %v3467
        %3533 = vst [vmem:[%s3529 + $0xc] sm:$0xf] %v3468
        %3534 = vst [vmem:[%s3529 + $0x10] sm:$0xf] %v3469
        %3535 = vst [vmem:[%s3529 + $0x14] sm:$0xf] %v3470
        %3536 = vst [vmem:[%s3529 + $0x18] sm:$0xf] %v3471
        %3537 = vst [vmem:[%s3529 + $0x1c] sm:$0xf] %v3472
        %3538 = vst [vmem:[%s3529 + $0x20] sm:$0xf] %v3473
        %3539 = vst [vmem:[%s3529 + $0x24] sm:$0xf] %v3474
        %3540 = vst [vmem:[%s3529 + $0x28] sm:$0xf] %v3475
        %3541 = vst [vmem:[%s3529 + $0x2c] sm:$0xf] %v3476
        %3542 = vst [vmem:[%s3529 + $0x30] sm:$0xf] %v3477
        %3543 = vst [vmem:[%s3529 + $0x34] sm:$0xf] %v3478
        %3544 = vst [vmem:[%s3529 + $0x38] sm:$0xf] %v3479
        %3545 = vst [vmem:[%s3529 + $0x3c] sm:$0xf] %v3480
        %3546 = vst [vmem:[%s3529 + $0x40] sm:$0xf] %v3481
        %3547 = vst [vmem:[%s3529 + $0x44] sm:$0xf] %v3482
        %3548 = vst [vmem:[%s3529 + $0x48] sm:$0xf] %v3483
        %3549 = vst [vmem:[%s3529 + $0x4c] sm:$0xf] %v3484
        %3550 = vst [vmem:[%s3529 + $0x50] sm:$0xf] %v3485
        %3551 = vst [vmem:[%s3529 + $0x54] sm:$0xf] %v3486
        %3552 = vst [vmem:[%s3529 + $0x58] sm:$0xf] %v3487
        %3553 = vst [vmem:[%s3529 + $0x5c] sm:$0xf] %v3488
        %3554 = vst [vmem:[%s3529 + $0x60] sm:$0xf] %v3489
        %3555 = vst [vmem:[%s3529 + $0x64] sm:$0xf] %v3490
        %3556 = vst [vmem:[%s3529 + $0x68] sm:$0xf] %v3491
        %3557 = vst [vmem:[%s3529 + $0x6c] sm:$0xf] %v3492
        %3558 = vst [vmem:[%s3529 + $0x70] sm:$0xf] %v3493
        %3559 = vst [vmem:[%s3529 + $0x74] sm:$0xf] %v3494
        %3560 = vst [vmem:[%s3529 + $0x78] sm:$0xf] %v3495
        %3561 = vst [vmem:[%s3529 + $0x7c] sm:$0xf] %v3496
        %v3562 = vmul.f32 %v1725, %v1725
        %v3563 = vmul.f32 %v1729, %v1729
        %v3564 = vmul.f32 %v1735, %v1735
        %v3565 = vmul.f32 %v1739, %v1739
        %v3566 = vmul.f32 %v1745, %v1745
        %v3567 = vmul.f32 %v1749, %v1749
        %v3568 = vmul.f32 %v1755, %v1755
        %v3569 = vmul.f32 %v1759, %v1759
        %v3570 = vmul.f32 %v1765, %v1765
        %v3571 = vmul.f32 %v1769, %v1769
        %v3572 = vmul.f32 %v1775, %v1775
        %v3573 = vmul.f32 %v1779, %v1779
        %v3574 = vmul.f32 %v1785, %v1785
        %v3575 = vmul.f32 %v1789, %v1789
        %v3576 = vmul.f32 %v1795, %v1795
        %v3577 = vmul.f32 %v1799, %v1799
        %v3578 = vmul.f32 %v1805, %v1805
        %v3579 = vmul.f32 %v1809, %v1809
        %v3580 = vmul.f32 %v1815, %v1815
        %v3581 = vmul.f32 %v1819, %v1819
        %v3582 = vmul.f32 %v1825, %v1825
        %v3583 = vmul.f32 %v1829, %v1829
        %v3584 = vmul.f32 %v1835, %v1835
        %v3585 = vmul.f32 %v1839, %v1839
        %v3586 = vmul.f32 %v1845, %v1845
        %v3587 = vmul.f32 %v1849, %v1849
        %v3588 = vmul.f32 %v1855, %v1855
        %v3589 = vmul.f32 %v1859, %v1859
        %v3590 = vmul.f32 %v1865, %v1865
        %v3591 = vmul.f32 %v1869, %v1869
        %v3592 = vmul.f32 %v1875, %v1875
        %v3593 = vmul.f32 %v1879, %v1879
        %3594 = vadd.xlane.f32.xlu0 %v3562
        %v3595 = vpop.xlane.xlu0 %3594
        %3596 = vadd.xlane.f32.xlu0 %v3563
        %v3597 = vpop.xlane.xlu0 %3596
        %3598 = vadd.xlane.f32.xlu0 %v3564
        %v3599 = vpop.xlane.xlu0 %3598
        %3600 = vadd.xlane.f32.xlu0 %v3565
        %v3601 = vpop.xlane.xlu0 %3600
        %3602 = vadd.xlane.f32.xlu0 %v3566
        %v3603 = vpop.xlane.xlu0 %3602
        %3604 = vadd.xlane.f32.xlu0 %v3567
        %v3605 = vpop.xlane.xlu0 %3604
        %3606 = vadd.xlane.f32.xlu0 %v3568
        %v3607 = vpop.xlane.xlu0 %3606
        %3608 = vadd.xlane.f32.xlu0 %v3569
        %v3609 = vpop.xlane.xlu0 %3608
        %3610 = vadd.xlane.f32.xlu0 %v3570
        %v3611 = vpop.xlane.xlu0 %3610
        %3612 = vadd.xlane.f32.xlu0 %v3571
        %v3613 = vpop.xlane.xlu0 %3612
        %3614 = vadd.xlane.f32.xlu0 %v3572
        %v3615 = vpop.xlane.xlu0 %3614
        %3616 = vadd.xlane.f32.xlu0 %v3573
        %v3617 = vpop.xlane.xlu0 %3616
        %3618 = vadd.xlane.f32.xlu0 %v3574
        %v3619 = vpop.xlane.xlu0 %3618
        %3620 = vadd.xlane.f32.xlu0 %v3575
        %v3621 = vpop.xlane.xlu0 %3620
        %3622 = vadd.xlane.f32.xlu0 %v3576
        %v3623 = vpop.xlane.xlu0 %3622
        %3624 = vadd.xlane.f32.xlu0 %v3577
        %v3625 = vpop.xlane.xlu0 %3624
        %3626 = vadd.xlane.f32.xlu0 %v3578
        %v3627 = vpop.xlane.xlu0 %3626
        %3628 = vadd.xlane.f32.xlu0 %v3579
        %v3629 = vpop.xlane.xlu0 %3628
        %3630 = vadd.xlane.f32.xlu0 %v3580
        %v3631 = vpop.xlane.xlu0 %3630
        %3632 = vadd.xlane.f32.xlu0 %v3581
        %v3633 = vpop.xlane.xlu0 %3632
        %3634 = vadd.xlane.f32.xlu0 %v3582
        %v3635 = vpop.xlane.xlu0 %3634
        %3636 = vadd.xlane.f32.xlu0 %v3583
        %v3637 = vpop.xlane.xlu0 %3636
        %3638 = vadd.xlane.f32.xlu0 %v3584
        %v3639 = vpop.xlane.xlu0 %3638
        %3640 = vadd.xlane.f32.xlu0 %v3585
        %v3641 = vpop.xlane.xlu0 %3640
        %3642 = vadd.xlane.f32.xlu0 %v3586
        %v3643 = vpop.xlane.xlu0 %3642
        %3644 = vadd.xlane.f32.xlu0 %v3587
        %v3645 = vpop.xlane.xlu0 %3644
        %3646 = vadd.xlane.f32.xlu0 %v3588
        %v3647 = vpop.xlane.xlu0 %3646
        %3648 = vadd.xlane.f32.xlu0 %v3589
        %v3649 = vpop.xlane.xlu0 %3648
        %3650 = vadd.xlane.f32.xlu0 %v3590
        %v3651 = vpop.xlane.xlu0 %3650
        %3652 = vadd.xlane.f32.xlu0 %v3591
        %v3653 = vpop.xlane.xlu0 %3652
        %3654 = vadd.xlane.f32.xlu0 %v3592
        %v3655 = vpop.xlane.xlu0 %3654
        %3656 = vadd.xlane.f32.xlu0 %v3593
        %v3657 = vpop.xlane.xlu0 %3656
        %v3658 = vmul.f32 %v3595, %v2172
        %v3659 = vmul.f32 %v3597, %v2172
        %v3660 = vmul.f32 %v3599, %v2172
        %v3661 = vmul.f32 %v3601, %v2172
        %v3662 = vmul.f32 %v3603, %v2172
        %v3663 = vmul.f32 %v3605, %v2172
        %v3664 = vmul.f32 %v3607, %v2172
        %v3665 = vmul.f32 %v3609, %v2172
        %v3666 = vmul.f32 %v3611, %v2172
        %v3667 = vmul.f32 %v3613, %v2172
        %v3668 = vmul.f32 %v3615, %v2172
        %v3669 = vmul.f32 %v3617, %v2172
        %v3670 = vmul.f32 %v3619, %v2172
        %v3671 = vmul.f32 %v3621, %v2172
        %v3672 = vmul.f32 %v3623, %v2172
        %v3673 = vmul.f32 %v3625, %v2172
        %v3674 = vmul.f32 %v3627, %v2172
        %v3675 = vmul.f32 %v3629, %v2172
        %v3676 = vmul.f32 %v3631, %v2172
        %v3677 = vmul.f32 %v3633, %v2172
        %v3678 = vmul.f32 %v3635, %v2172
        %v3679 = vmul.f32 %v3637, %v2172
        %v3680 = vmul.f32 %v3639, %v2172
        %v3681 = vmul.f32 %v3641, %v2172
        %v3682 = vmul.f32 %v3643, %v2172
        %v3683 = vmul.f32 %v3645, %v2172
        %v3684 = vmul.f32 %v3647, %v2172
        %v3685 = vmul.f32 %v3649, %v2172
        %v3686 = vmul.f32 %v3651, %v2172
        %v3687 = vmul.f32 %v3653, %v2172
        %v3688 = vmul.f32 %v3655, %v2172
        %v3689 = vmul.f32 %v3657, %v2172
        %v3690 = vadd.f32 %v3658, 1e-06
        %v3691 = vadd.f32 %v3659, 1e-06
        %v3692 = vadd.f32 %v3660, 1e-06
        %v3693 = vadd.f32 %v3661, 1e-06
        %v3694 = vadd.f32 %v3662, 1e-06
        %v3695 = vadd.f32 %v3663, 1e-06
        %v3696 = vadd.f32 %v3664, 1e-06
        %v3697 = vadd.f32 %v3665, 1e-06
        %v3698 = vadd.f32 %v3666, 1e-06
        %v3699 = vadd.f32 %v3667, 1e-06
        %v3700 = vadd.f32 %v3668, 1e-06
        %v3701 = vadd.f32 %v3669, 1e-06
        %v3702 = vadd.f32 %v3670, 1e-06
        %v3703 = vadd.f32 %v3671, 1e-06
        %v3704 = vadd.f32 %v3672, 1e-06
        %v3705 = vadd.f32 %v3673, 1e-06
        %v3706 = vadd.f32 %v3674, 1e-06
        %v3707 = vadd.f32 %v3675, 1e-06
        %v3708 = vadd.f32 %v3676, 1e-06
        %v3709 = vadd.f32 %v3677, 1e-06
        %v3710 = vadd.f32 %v3678, 1e-06
        %v3711 = vadd.f32 %v3679, 1e-06
        %v3712 = vadd.f32 %v3680, 1e-06
        %v3713 = vadd.f32 %v3681, 1e-06
        %v3714 = vadd.f32 %v3682, 1e-06
        %v3715 = vadd.f32 %v3683, 1e-06
        %v3716 = vadd.f32 %v3684, 1e-06
        %v3717 = vadd.f32 %v3685, 1e-06
        %v3718 = vadd.f32 %v3686, 1e-06
        %v3719 = vadd.f32 %v3687, 1e-06
        %v3720 = vadd.f32 %v3688, 1e-06
        %v3721 = vadd.f32 %v3689, 1e-06
        %v3722 = vrsqrt.pop %v3690
        %v3723 = vrsqrt.pop %v3691
        %v3724 = vrsqrt.pop %v3692
        %v3725 = vrsqrt.pop %v3693
        %v3726 = vrsqrt.pop %v3694
        %v3727 = vrsqrt.pop %v3695
        %v3728 = vrsqrt.pop %v3696
        %v3729 = vrsqrt.pop %v3697
        %v3730 = vrsqrt.pop %v3698
        %v3731 = vrsqrt.pop %v3699
        %v3732 = vrsqrt.pop %v3700
        %v3733 = vrsqrt.pop %v3701
        %v3734 = vrsqrt.pop %v3702
        %v3735 = vrsqrt.pop %v3703
        %v3736 = vrsqrt.pop %v3704
        %v3737 = vrsqrt.pop %v3705
        %v3738 = vrsqrt.pop %v3706
        %v3739 = vrsqrt.pop %v3707
        %v3740 = vrsqrt.pop %v3708
        %v3741 = vrsqrt.pop %v3709
        %v3742 = vrsqrt.pop %v3710
        %v3743 = vrsqrt.pop %v3711
        %v3744 = vrsqrt.pop %v3712
        %v3745 = vrsqrt.pop %v3713
        %v3746 = vrsqrt.pop %v3714
        %v3747 = vrsqrt.pop %v3715
        %v3748 = vrsqrt.pop %v3716
        %v3749 = vrsqrt.pop %v3717
        %v3750 = vrsqrt.pop %v3718
        %v3751 = vrsqrt.pop %v3719
        %v3752 = vrsqrt.pop %v3720
        %v3753 = vrsqrt.pop %v3721
        %v3754 = vmul.f32 %v1725, %v3722
        %v3755 = vmul.f32 %v1729, %v3723
        %v3756 = vmul.f32 %v1735, %v3724
        %v3757 = vmul.f32 %v1739, %v3725
        %v3758 = vmul.f32 %v1745, %v3726
        %v3759 = vmul.f32 %v1749, %v3727
        %v3760 = vmul.f32 %v1755, %v3728
        %v3761 = vmul.f32 %v1759, %v3729
        %v3762 = vmul.f32 %v1765, %v3730
        %v3763 = vmul.f32 %v1769, %v3731
        %v3764 = vmul.f32 %v1775, %v3732
        %v3765 = vmul.f32 %v1779, %v3733
        %v3766 = vmul.f32 %v1785, %v3734
        %v3767 = vmul.f32 %v1789, %v3735
        %v3768 = vmul.f32 %v1795, %v3736
        %v3769 = vmul.f32 %v1799, %v3737
        %v3770 = vmul.f32 %v1805, %v3738
        %v3771 = vmul.f32 %v1809, %v3739
        %v3772 = vmul.f32 %v1815, %v3740
        %v3773 = vmul.f32 %v1819, %v3741
        %v3774 = vmul.f32 %v1825, %v3742
        %v3775 = vmul.f32 %v1829, %v3743
        %v3776 = vmul.f32 %v1835, %v3744
        %v3777 = vmul.f32 %v1839, %v3745
        %v3778 = vmul.f32 %v1845, %v3746
        %v3779 = vmul.f32 %v1849, %v3747
        %v3780 = vmul.f32 %v1855, %v3748
        %v3781 = vmul.f32 %v1859, %v3749
        %v3782 = vmul.f32 %v1865, %v3750
        %v3783 = vmul.f32 %v1869, %v3751
        %v3784 = vmul.f32 %v1875, %v3752
        %v3785 = vmul.f32 %v1879, %v3753
        %v3786 = vmul.f32 %v3754, %v2759
        %v3787 = vmul.f32 %v3755, %v2759
        %v3788 = vmul.f32 %v3756, %v2759
        %v3789 = vmul.f32 %v3757, %v2759
        %v3790 = vmul.f32 %v3758, %v2759
        %v3791 = vmul.f32 %v3759, %v2759
        %v3792 = vmul.f32 %v3760, %v2759
        %v3793 = vmul.f32 %v3761, %v2759
        %v3794 = vmul.f32 %v3762, %v2759
        %v3795 = vmul.f32 %v3763, %v2759
        %v3796 = vmul.f32 %v3764, %v2759
        %v3797 = vmul.f32 %v3765, %v2759
        %v3798 = vmul.f32 %v3766, %v2759
        %v3799 = vmul.f32 %v3767, %v2759
        %v3800 = vmul.f32 %v3768, %v2759
        %v3801 = vmul.f32 %v3769, %v2759
        %v3802 = vmul.f32 %v3770, %v2759
        %v3803 = vmul.f32 %v3771, %v2759
        %v3804 = vmul.f32 %v3772, %v2759
        %v3805 = vmul.f32 %v3773, %v2759
        %v3806 = vmul.f32 %v3774, %v2759
        %v3807 = vmul.f32 %v3775, %v2759
        %v3808 = vmul.f32 %v3776, %v2759
        %v3809 = vmul.f32 %v3777, %v2759
        %v3810 = vmul.f32 %v3778, %v2759
        %v3811 = vmul.f32 %v3779, %v2759
        %v3812 = vmul.f32 %v3780, %v2759
        %v3813 = vmul.f32 %v3781, %v2759
        %v3814 = vmul.f32 %v3782, %v2759
        %v3815 = vmul.f32 %v3783, %v2759
        %v3816 = vmul.f32 %v3784, %v2759
        %v3817 = vmul.f32 %v3785, %v2759
        %v3818 = vpack.c.bf16 %v3787, %v3786
        %v3819 = vpack.c.bf16 %v3789, %v3788
        %v3820 = vpack.c.bf16 %v3791, %v3790
        %v3821 = vpack.c.bf16 %v3793, %v3792
        %v3822 = vpack.c.bf16 %v3795, %v3794
        %v3823 = vpack.c.bf16 %v3797, %v3796
        %v3824 = vpack.c.bf16 %v3799, %v3798
        %v3825 = vpack.c.bf16 %v3801, %v3800
        %v3826 = vpack.c.bf16 %v3803, %v3802
        %v3827 = vpack.c.bf16 %v3805, %v3804
        %v3828 = vpack.c.bf16 %v3807, %v3806
        %v3829 = vpack.c.bf16 %v3809, %v3808
        %v3830 = vpack.c.bf16 %v3811, %v3810
        %v3831 = vpack.c.bf16 %v3813, %v3812
        %v3832 = vpack.c.bf16 %v3815, %v3814
        %v3833 = vpack.c.bf16 %v3817, %v3816
        %v3850 = vunpack.c.l.b16 %v3818
        %v3851 = vunpack.c.h.b16 %v3818
        %v3852 = vunpack.c.l.b16 %v3819
        %v3853 = vunpack.c.h.b16 %v3819
        %v3854 = vunpack.c.l.b16 %v3820
        %v3855 = vunpack.c.h.b16 %v3820
        %v3856 = vunpack.c.l.b16 %v3821
        %v3857 = vunpack.c.h.b16 %v3821
        %v3858 = vunpack.c.l.b16 %v3822
        %v3859 = vunpack.c.h.b16 %v3822
        %v3860 = vunpack.c.l.b16 %v3823
        %v3861 = vunpack.c.h.b16 %v3823
        %v3862 = vunpack.c.l.b16 %v3824
        %v3863 = vunpack.c.h.b16 %v3824
        %v3864 = vunpack.c.l.b16 %v3825
        %v3865 = vunpack.c.h.b16 %v3825
        %v3866 = vunpack.c.l.b16 %v3826
        %v3867 = vunpack.c.h.b16 %v3826
        %v3868 = vunpack.c.l.b16 %v3827
        %v3869 = vunpack.c.h.b16 %v3827
        %v3870 = vunpack.c.l.b16 %v3828
        %v3871 = vunpack.c.h.b16 %v3828
        %v3872 = vunpack.c.l.b16 %v3829
        %v3873 = vunpack.c.h.b16 %v3829
        %v3874 = vunpack.c.l.b16 %v3830
        %v3875 = vunpack.c.h.b16 %v3830
        %v3876 = vunpack.c.l.b16 %v3831
        %v3877 = vunpack.c.h.b16 %v3831
        %v3878 = vunpack.c.l.b16 %v3832
        %v3879 = vunpack.c.h.b16 %v3832
        %v3880 = vunpack.c.l.b16 %v3833
        %v3881 = vunpack.c.h.b16 %v3833
        %v3882 = vpack.c.b16 %v3850, %v3850
        %v3883 = vpack.c.b16 %v3851, %v3851
        %v3884 = vpack.c.b16 %v3852, %v3852
        %v3885 = vpack.c.b16 %v3853, %v3853
        %v3886 = vpack.c.b16 %v3854, %v3854
        %v3887 = vpack.c.b16 %v3855, %v3855
        %v3888 = vpack.c.b16 %v3856, %v3856
        %v3889 = vpack.c.b16 %v3857, %v3857
        %v3890 = vpack.c.b16 %v3858, %v3858
        %v3891 = vpack.c.b16 %v3859, %v3859
        %v3892 = vpack.c.b16 %v3860, %v3860
        %v3893 = vpack.c.b16 %v3861, %v3861
        %v3894 = vpack.c.b16 %v3862, %v3862
        %v3895 = vpack.c.b16 %v3863, %v3863
        %v3896 = vpack.c.b16 %v3864, %v3864
        %v3897 = vpack.c.b16 %v3865, %v3865
        %v3898 = vpack.c.b16 %v3866, %v3866
        %v3899 = vpack.c.b16 %v3867, %v3867
        %v3900 = vpack.c.b16 %v3868, %v3868
        %v3901 = vpack.c.b16 %v3869, %v3869
        %v3902 = vpack.c.b16 %v3870, %v3870
        %v3903 = vpack.c.b16 %v3871, %v3871
        %v3904 = vpack.c.b16 %v3872, %v3872
        %v3905 = vpack.c.b16 %v3873, %v3873
        %v3906 = vpack.c.b16 %v3874, %v3874
        %v3907 = vpack.c.b16 %v3875, %v3875
        %v3908 = vpack.c.b16 %v3876, %v3876
        %v3909 = vpack.c.b16 %v3877, %v3877
        %v3910 = vpack.c.b16 %v3878, %v3878
        %v3911 = vpack.c.b16 %v3879, %v3879
        %v3912 = vpack.c.b16 %v3880, %v3880
        %v3913 = vpack.c.b16 %v3881, %v3881
        %s3946 = scalar_lea.vmem %s382, 128 [#allocation12]
        %3947 = vst [vmem:[%s3946] sm:$0xf] %v3882
        %3948 = vst [vmem:[%s3946 + $0x4] sm:$0xf] %v3883
        %3949 = vst [vmem:[%s3946 + $0x8] sm:$0xf] %v3884
        %3950 = vst [vmem:[%s3946 + $0xc] sm:$0xf] %v3885
        %3951 = vst [vmem:[%s3946 + $0x10] sm:$0xf] %v3886
        %3952 = vst [vmem:[%s3946 + $0x14] sm:$0xf] %v3887
        %3953 = vst [vmem:[%s3946 + $0x18] sm:$0xf] %v3888
        %3954 = vst [vmem:[%s3946 + $0x1c] sm:$0xf] %v3889
        %3955 = vst [vmem:[%s3946 + $0x20] sm:$0xf] %v3890
        %3956 = vst [vmem:[%s3946 + $0x24] sm:$0xf] %v3891
        %3957 = vst [vmem:[%s3946 + $0x28] sm:$0xf] %v3892
        %3958 = vst [vmem:[%s3946 + $0x2c] sm:$0xf] %v3893
        %3959 = vst [vmem:[%s3946 + $0x30] sm:$0xf] %v3894
        %3960 = vst [vmem:[%s3946 + $0x34] sm:$0xf] %v3895
        %3961 = vst [vmem:[%s3946 + $0x38] sm:$0xf] %v3896
        %3962 = vst [vmem:[%s3946 + $0x3c] sm:$0xf] %v3897
        %3963 = vst [vmem:[%s3946 + $0x40] sm:$0xf] %v3898
        %3964 = vst [vmem:[%s3946 + $0x44] sm:$0xf] %v3899
        %3965 = vst [vmem:[%s3946 + $0x48] sm:$0xf] %v3900
        %3966 = vst [vmem:[%s3946 + $0x4c] sm:$0xf] %v3901
        %3967 = vst [vmem:[%s3946 + $0x50] sm:$0xf] %v3902
        %3968 = vst [vmem:[%s3946 + $0x54] sm:$0xf] %v3903
        %3969 = vst [vmem:[%s3946 + $0x58] sm:$0xf] %v3904
        %3970 = vst [vmem:[%s3946 + $0x5c] sm:$0xf] %v3905
        %3971 = vst [vmem:[%s3946 + $0x60] sm:$0xf] %v3906
        %3972 = vst [vmem:[%s3946 + $0x64] sm:$0xf] %v3907
        %3973 = vst [vmem:[%s3946 + $0x68] sm:$0xf] %v3908
        %3974 = vst [vmem:[%s3946 + $0x6c] sm:$0xf] %v3909
        %3975 = vst [vmem:[%s3946 + $0x70] sm:$0xf] %v3910
        %3976 = vst [vmem:[%s3946 + $0x74] sm:$0xf] %v3911
        %3977 = vst [vmem:[%s3946 + $0x78] sm:$0xf] %v3912
        %3978 = vst [vmem:[%s3946 + $0x7c] sm:$0xf] %v3913
        %v3979 = vpack.c.bf16 %v1922, %v1918
        %v3980 = vpack.c.bf16 %v1932, %v1928
        %v3981 = vpack.c.bf16 %v1942, %v1938
        %v3982 = vpack.c.bf16 %v1952, %v1948
        %v3983 = vpack.c.bf16 %v1962, %v1958
        %v3984 = vpack.c.bf16 %v1972, %v1968
        %v3985 = vpack.c.bf16 %v1982, %v1978
        %v3986 = vpack.c.bf16 %v1992, %v1988
        %v3987 = vpack.c.bf16 %v2002, %v1998
        %v3988 = vpack.c.bf16 %v2012, %v2008
        %v3989 = vpack.c.bf16 %v2022, %v2018
        %v3990 = vpack.c.bf16 %v2032, %v2028
        %v3991 = vpack.c.bf16 %v2042, %v2038
        %v3992 = vpack.c.bf16 %v2052, %v2048
        %v3993 = vpack.c.bf16 %v2062, %v2058
        %v3994 = vpack.c.bf16 %v2072, %v2068
        %v4011 = vunpack.c.l.b16 %v3979
        %v4012 = vunpack.c.h.b16 %v3979
        %v4013 = vunpack.c.l.b16 %v3980
        %v4014 = vunpack.c.h.b16 %v3980
        %v4015 = vunpack.c.l.b16 %v3981
        %v4016 = vunpack.c.h.b16 %v3981
        %v4017 = vunpack.c.l.b16 %v3982
        %v4018 = vunpack.c.h.b16 %v3982
        %v4019 = vunpack.c.l.b16 %v3983
        %v4020 = vunpack.c.h.b16 %v3983
        %v4021 = vunpack.c.l.b16 %v3984
        %v4022 = vunpack.c.h.b16 %v3984
        %v4023 = vunpack.c.l.b16 %v3985
        %v4024 = vunpack.c.h.b16 %v3985
        %v4025 = vunpack.c.l.b16 %v3986
        %v4026 = vunpack.c.h.b16 %v3986
        %v4027 = vunpack.c.l.b16 %v3987
        %v4028 = vunpack.c.h.b16 %v3987
        %v4029 = vunpack.c.l.b16 %v3988
        %v4030 = vunpack.c.h.b16 %v3988
        %v4031 = vunpack.c.l.b16 %v3989
        %v4032 = vunpack.c.h.b16 %v3989
        %v4033 = vunpack.c.l.b16 %v3990
        %v4034 = vunpack.c.h.b16 %v3990
        %v4035 = vunpack.c.l.b16 %v3991
        %v4036 = vunpack.c.h.b16 %v3991
        %v4037 = vunpack.c.l.b16 %v3992
        %v4038 = vunpack.c.h.b16 %v3992
        %v4039 = vunpack.c.l.b16 %v3993
        %v4040 = vunpack.c.h.b16 %v3993
        %v4041 = vunpack.c.l.b16 %v3994
        %v4042 = vunpack.c.h.b16 %v3994
        %v4043 = vpack.c.b16 %v4011, %v4011
        %v4044 = vpack.c.b16 %v4012, %v4012
        %v4045 = vpack.c.b16 %v4013, %v4013
        %v4046 = vpack.c.b16 %v4014, %v4014
        %v4047 = vpack.c.b16 %v4015, %v4015
        %v4048 = vpack.c.b16 %v4016, %v4016
        %v4049 = vpack.c.b16 %v4017, %v4017
        %v4050 = vpack.c.b16 %v4018, %v4018
        %v4051 = vpack.c.b16 %v4019, %v4019
        %v4052 = vpack.c.b16 %v4020, %v4020
        %v4053 = vpack.c.b16 %v4021, %v4021
        %v4054 = vpack.c.b16 %v4022, %v4022
        %v4055 = vpack.c.b16 %v4023, %v4023
        %v4056 = vpack.c.b16 %v4024, %v4024
        %v4057 = vpack.c.b16 %v4025, %v4025
        %v4058 = vpack.c.b16 %v4026, %v4026
        %v4059 = vpack.c.b16 %v4027, %v4027
        %v4060 = vpack.c.b16 %v4028, %v4028
        %v4061 = vpack.c.b16 %v4029, %v4029
        %v4062 = vpack.c.b16 %v4030, %v4030
        %v4063 = vpack.c.b16 %v4031, %v4031
        %v4064 = vpack.c.b16 %v4032, %v4032
        %v4065 = vpack.c.b16 %v4033, %v4033
        %v4066 = vpack.c.b16 %v4034, %v4034
        %v4067 = vpack.c.b16 %v4035, %v4035
        %v4068 = vpack.c.b16 %v4036, %v4036
        %v4069 = vpack.c.b16 %v4037, %v4037
        %v4070 = vpack.c.b16 %v4038, %v4038
        %v4071 = vpack.c.b16 %v4039, %v4039
        %v4072 = vpack.c.b16 %v4040, %v4040
        %v4073 = vpack.c.b16 %v4041, %v4041
        %v4074 = vpack.c.b16 %v4042, %v4042
        %s4107 = scalar_lea.vmem %s389, 128 [#allocation14]
        %4108 = vst [vmem:[%s4107] sm:$0xf] %v4043
        %4109 = vst [vmem:[%s4107 + $0x4] sm:$0xf] %v4044
        %4110 = vst [vmem:[%s4107 + $0x8] sm:$0xf] %v4045
        %4111 = vst [vmem:[%s4107 + $0xc] sm:$0xf] %v4046
        %4112 = vst [vmem:[%s4107 + $0x10] sm:$0xf] %v4047
        %4113 = vst [vmem:[%s4107 + $0x14] sm:$0xf] %v4048
        %4114 = vst [vmem:[%s4107 + $0x18] sm:$0xf] %v4049
        %4115 = vst [vmem:[%s4107 + $0x1c] sm:$0xf] %v4050
        %4116 = vst [vmem:[%s4107 + $0x20] sm:$0xf] %v4051
        %4117 = vst [vmem:[%s4107 + $0x24] sm:$0xf] %v4052
        %4118 = vst [vmem:[%s4107 + $0x28] sm:$0xf] %v4053
        %4119 = vst [vmem:[%s4107 + $0x2c] sm:$0xf] %v4054
        %4120 = vst [vmem:[%s4107 + $0x30] sm:$0xf] %v4055
        %4121 = vst [vmem:[%s4107 + $0x34] sm:$0xf] %v4056
        %4122 = vst [vmem:[%s4107 + $0x38] sm:$0xf] %v4057
        %4123 = vst [vmem:[%s4107 + $0x3c] sm:$0xf] %v4058
        %4124 = vst [vmem:[%s4107 + $0x40] sm:$0xf] %v4059
        %4125 = vst [vmem:[%s4107 + $0x44] sm:$0xf] %v4060
        %4126 = vst [vmem:[%s4107 + $0x48] sm:$0xf] %v4061
        %4127 = vst [vmem:[%s4107 + $0x4c] sm:$0xf] %v4062
        %4128 = vst [vmem:[%s4107 + $0x50] sm:$0xf] %v4063
        %4129 = vst [vmem:[%s4107 + $0x54] sm:$0xf] %v4064
        %4130 = vst [vmem:[%s4107 + $0x58] sm:$0xf] %v4065
        %4131 = vst [vmem:[%s4107 + $0x5c] sm:$0xf] %v4066
        %4132 = vst [vmem:[%s4107 + $0x60] sm:$0xf] %v4067
        %4133 = vst [vmem:[%s4107 + $0x64] sm:$0xf] %v4068
        %4134 = vst [vmem:[%s4107 + $0x68] sm:$0xf] %v4069
        %4135 = vst [vmem:[%s4107 + $0x6c] sm:$0xf] %v4070
        %4136 = vst [vmem:[%s4107 + $0x70] sm:$0xf] %v4071
        %4137 = vst [vmem:[%s4107 + $0x74] sm:$0xf] %v4072
        %4138 = vst [vmem:[%s4107 + $0x78] sm:$0xf] %v4073
        %4139 = vst [vmem:[%s4107 + $0x7c] sm:$0xf] %v4074
        %s4140 = sand.u32 %s164, 1
        %s4141 = scalar_lea.sflag [#allocation4], %s4140
        %s4142 = sand.u32 %s164, 1
        %s4143 = smul.addr %s4142, 256
        %s4144 = scalar_lea.vmem [#allocation11], %s4143
        %s4145 = sand.u32 %s30, 1
        %s4146 = scalar_lea.sflag [#allocation13], %s4145
        %s4147 = sand.u32 %s192, 1
        %s4148 = smul.addr %s4147, 256
        %s4149 = scalar_lea.vmem [#allocation12], %s4148
        %s4150 = sand.u32 %s30, 1
        %s4151 = scalar_lea.sflag [#allocation13], %s4150
        %s4152 = sand.u32 %s220, 1
        %s4153 = smul.addr %s4152, 256
        %s4154 = scalar_lea.vmem [#allocation14], %s4153
        // Predicated region
        $region61: #{tpu_custom_call.1} parent=39 // pred_check
          %p4155 = pneg %p174
        $region62: #{tpu_custom_call.1} parent=39 // pred_check_branch
          %4157 = sbr.rel (%p4155) target = $region64
        $region63: #{tpu_custom_call.1} parent=39 // pred_region
          %s4158 = smul.u32 32, %s35
          %s4160 = ssub.s32 4096, 4096
          %4161 = vsyncadd %s4141, %s4160
          %s4162 = smul.addr %s34, 64
          %s4163 = sadd.s32 %s4158, %s4162
          %s4164 = smul.addr %s4163, 64
          %s4165 = scalar_lea.hbm %s5, %s4164
          %s4166 = sshll.u32 %s4144, 4
          %s4167 = int_to_ptr.vmem [resolvable:$true] %s4166
          %4172 = dma.vmem_to_hbm [thread:$0]  %s4167, 4096, %s4165, %s4141, 64, 64, 4
        $region64: #{tpu_custom_call.1} parent=39 // pred_fallthru
          _
        // Predicated region
        $region65: #{tpu_custom_call.1} parent=39 // pred_check
          %p4173 = pneg %p202
        $region66: #{tpu_custom_call.1} parent=39 // pred_check_branch
          %4175 = sbr.rel (%p4173) target = $region68
        $region67: #{tpu_custom_call.1} parent=39 // pred_region
          %s4176 = smul.u32 32, %s35
          %s4178 = ssub.s32 4096, 4096
          %4179 = vsyncadd %s4146, %s4178
          %s4180 = smul.addr %s34, 64
          %s4181 = sadd.s32 %s4176, %s4180
          %s4182 = smul.addr %s4181, 64
          %s4183 = scalar_lea.hbm %s6, %s4182
          %s4184 = sshll.u32 %s4149, 4
          %s4185 = int_to_ptr.vmem [resolvable:$true] %s4184
          %4190 = dma.vmem_to_hbm [thread:$0]  %s4185, 4096, %s4183, %s4146, 64, 64, 4
        $region68: #{tpu_custom_call.1} parent=39 // pred_fallthru
          _
        // Predicated region
        $region69: #{tpu_custom_call.1} parent=39 // pred_check
          %p4191 = pneg %p230
        $region70: #{tpu_custom_call.1} parent=39 // pred_check_branch
          %4193 = sbr.rel (%p4191) target = $region72
        $region71: #{tpu_custom_call.1} parent=39 // pred_region
          %s4194 = smul.u32 32, %s35
          %s4196 = ssub.s32 4096, 4096
          %4197 = vsyncadd %s4151, %s4196
          %s4198 = smul.addr %s34, 64
          %s4199 = sadd.s32 %s4194, %s4198
          %s4200 = smul.addr %s4199, 64
          %s4201 = scalar_lea.hbm %s7, %s4200
          %s4202 = sshll.u32 %s4154, 4
          %s4203 = int_to_ptr.vmem [resolvable:$true] %s4202
          %4208 = dma.vmem_to_hbm [thread:$0]  %s4203, 4096, %s4201, %s4151, 64, 64, 4
        $region72: #{tpu_custom_call.1} parent=39 // pred_fallthru
          _
      $region40: #{tpu_custom_call.1} parent=5 // pred_fallthru
        _
      %p4209 = scmp.le.s32.totalorder 2, %s25
      // Predicated region
      $region73: #{tpu_custom_call.1} parent=5 // pred_check
        %p4210 = pneg %p4209
      $region74: #{tpu_custom_call.1} parent=5 // pred_check_branch
        %4212 = sbr.rel (%p4210) target = $region76
      $region75: #{tpu_custom_call.1} parent=5 // pred_region
        %s4213 = ssub.s32 %s25, 2
        // Predicated region
        $region77: #{tpu_custom_call.1} parent=75 // pred_check
          %p4214 = pneg %p180
        $region78: #{tpu_custom_call.1} parent=75 // pred_check_branch
          %4216 = sbr.rel (%p4214) target = $region80
        $region79: #{tpu_custom_call.1} parent=75 // pred_region
          %s4217 = sand.u32 %s165, 1
          %s4218 = scalar_lea.sflag [#allocation4], %s4217
          %s4219 = sand.u32 %s165, 1
          %s4220 = smul.addr %s4219, 256
          %s4221 = scalar_lea.vmem [#allocation11], %s4220
          %4222 = dma.done %s4218, 4096
        $region80: #{tpu_custom_call.1} parent=75 // pred_fallthru
          _
        // Predicated region
        $region81: #{tpu_custom_call.1} parent=75 // pred_check
          %p4223 = pneg %p208
        $region82: #{tpu_custom_call.1} parent=75 // pred_check_branch
          %4225 = sbr.rel (%p4223) target = $region84
        $region83: #{tpu_custom_call.1} parent=75 // pred_region
          %s4226 = sand.u32 %s31, 1
          %s4227 = scalar_lea.sflag [#allocation13], %s4226
          %s4228 = sand.u32 %s193, 1
          %s4229 = smul.addr %s4228, 256
          %s4230 = scalar_lea.vmem [#allocation12], %s4229
          %4231 = dma.done %s4227, 4096
        $region84: #{tpu_custom_call.1} parent=75 // pred_fallthru
          _
        // Predicated region
        $region85: #{tpu_custom_call.1} parent=75 // pred_check
          %p4232 = pneg %p236
        $region86: #{tpu_custom_call.1} parent=75 // pred_check_branch
          %4234 = sbr.rel (%p4232) target = $region88
        $region87: #{tpu_custom_call.1} parent=75 // pred_region
          %s4235 = sand.u32 %s31, 1
          %s4236 = scalar_lea.sflag [#allocation13], %s4235
          %s4237 = sand.u32 %s221, 1
          %s4238 = smul.addr %s4237, 256
          %s4239 = scalar_lea.vmem [#allocation14], %s4238
          %4240 = dma.done %s4236, 4096
        $region88: #{tpu_custom_call.1} parent=75 // pred_fallthru
          _
      $region76: #{tpu_custom_call.1} parent=5 // pred_fallthru
        _
    $region6: #{tpu_custom_call.1} parent=1 // loop_footer
      %s29 = sadd.s32 1, %s25
    $region7: #{tpu_custom_call.1} parent=1 // loop_footer_branch
      %24 = sbr.rel target = $region3
    $region8: #{tpu_custom_call.1} parent=1 // loop_exit
      _
    %4241 = vsyncpa [#allocation3], 1
    %s4242 = scalar_lea.sflag [#allocation3], 1
    %4243 = vsyncpa %s4242, 1
    %4244 = vsyncpa [#allocation6], 1
    %4245 = vsyncpa [#allocation9], 1
    %4246 = vsyncpa [#allocation4], 1
    %s4247 = scalar_lea.sflag [#allocation4], 1
    %4248 = vsyncpa %s4247, 1
    %4249 = vsyncpa [#allocation13], 1
    %s4250 = scalar_lea.sflag [#allocation13], 1
    %4251 = vsyncpa %s4250, 1

// kernel: tpu_custom_call.1
$region0: #{tpu_custom_call.1}
  #allocation0 [shape = 'u32[]', space=smem, size = 0x4, offset = 0x4, fixed_abs, tag = 'smem constant byte address 0x4 - core index']
  #allocation1 [shape = 'u32[144,128]{1,0:T(1,128)}', space=vmem, size = 0x12000, scoped, tag = 'internal scratch']
  %s0 = inlined_call_operand.hbm [shape: bf16[2,256,256], index: 0, kind: input, shape index: {}]
  %s1 = inlined_call_operand.hbm [shape: f32[1,256], index: 1, kind: input, shape index: {}]
  %s2 = inlined_call_operand.hbm [shape: bf16[256,768], index: 2, kind: input, shape index: {}]
  %s3 = inlined_call_operand.hbm [shape: f32[1,128], index: 3, kind: input, shape index: {}]
  %s4 = inlined_call_operand.hbm [shape: f32[1,128], index: 4, kind: input, shape index: {}]
  %s5 = inlined_call_operand.hbm [shape: bf16[2,2,256,128], index: 5, kind: output, shape index: {0}]
  %s6 = inlined_call_operand.hbm [shape: bf16[2,2,256,128], index: 6, kind: output, shape index: {1}]
  %s7 = inlined_call_operand.hbm [shape: bf16[2,2,256,128], index: 7, kind: output, shape index: {2}]
  %8 = xla_tuple %s5, %s6, %s7
  %s9 = sld [smem:[#allocation0]]
  $region89: #{tpu_custom_call.1} parent=0
    _
  %s11 = ssub.s32 1, %s9
  %s12 = scalar_select 0, %s11, %s9
  $region1: #{tpu_custom_call.1} parent=0
    #allocation2 [shape = 'u8[262144]{0}', space=vmem, size = 0x40000, scoped, tag = 'input window, operand 0']
    #allocation3 [shape = 's32[2]{0}', space=sflag, size = 0x8, scoped, tag = 'scoped memory for tpu_custom_call.1']
    #allocation4 [shape = 's32[2]{0}', space=sflag, size = 0x8, scoped, tag = 'scoped memory for tpu_custom_call.1']
    #allocation5 [shape = 'u8[1024]{0}', space=vmem, size = 0x400, scoped, tag = 'input window, operand 1, single buffered']
    #allocation6 [shape = 's32[1]{0}', space=sflag, size = 0x4, scoped, tag = 'scoped memory for tpu_custom_call.1']
    #allocation7 [shape = 'u8[393216]{0}', space=vmem, size = 0x60000, scoped, tag = 'input window, operand 2, single buffered']
    #allocation8 [shape = 'u8[512]{0}', space=vmem, size = 0x400, scoped, tag = 'input window, operand 3, single buffered']
    #allocation9 [shape = 's32[1]{0}', space=sflag, size = 0x4, scoped, tag = 'scoped memory for tpu_custom_call.1']
    #allocation10 [shape = 'u8[512]{0}', space=vmem, size = 0x400, scoped, tag = 'input window, operand 4, single buffered']
    #allocation11 [shape = 'u8[262144]{0}', space=vmem, size = 0x40000, scoped, tag = 'output window, operand 0']
    #allocation12 [shape = 'u8[262144]{0}', space=vmem, size = 0x40000, scoped, tag = 'output window, operand 1']
    #allocation13 [shape = 's32[2]{0}', space=sflag, size = 0x8, scoped, tag = 'scoped memory for tpu_custom_call.1']
    #allocation14 [shape = 'u8[262144]{0}', space=vmem, size = 0x40000, scoped, tag = 'output window, operand 2']
    %13 = vsyncpa [#allocation3], 0
    %s14 = scalar_lea.sflag [#allocation3], 1
    %15 = vsyncpa %s14, 0
    %16 = vsyncpa [#allocation6], 0
    %17 = vsyncpa [#allocation9], 0
    %18 = vsyncpa [#allocation4], 0
    %s19 = scalar_lea.sflag [#allocation4], 1
    %20 = vsyncpa %s19, 0
    %21 = vsyncpa [#allocation13], 0
    %s22 = scalar_lea.sflag [#allocation13], 1
    %23 = vsyncpa %s22, 0
    loop: start=0, step=1, limit=4
    $region2: #{tpu_custom_call.1} parent=1 // loop_pre_header
      _
    $region3: #{tpu_custom_call.1} parent=1 // loop_header
      %s25 = sphi 0, %s29
      %p26 = scmp.ge.s32.totalorder %s25, 4
      %s32 = sphi 0, %s44
      %s33 = sphi 0, %s40
      %s34 = sphi 0, %s32
      %s35 = sphi 0, %s33
      %s36 = sphi 0, %s34
      %s37 = sphi 0, %s35
      %s49 = sphi 0, %s51
      %s52 = sphi 0, %s49
      %s53 = sphi 0, %s52
      %s69 = sphi 0, %s53
      %s73 = sphi 0, %s73
      %s75 = sphi 0, %s73
      %s76 = sphi 0, %s75
      %s90 = sphi 0, %s76
      %s94 = sphi 0, %s94
      %s96 = sphi 0, %s94
      %s97 = sphi 0, %s96
      %s111 = sphi 0, %s97
      %s115 = sphi 0, %s115
      %s117 = sphi 0, %s115
      %s118 = sphi 0, %s117
      %s132 = sphi 0, %s118
      %s136 = sphi 0, %s136
      %s138 = sphi 0, %s136
      %s139 = sphi 0, %s138
      %s153 = sphi 0, %s139
      %s161 = sphi 0, %s163
      %s164 = sphi 0, %s161
      %s165 = sphi 0, %s164
      %s181 = sphi 0, %s165
      %s189 = sphi 0, %s191
      %s192 = sphi 0, %s189
      %s193 = sphi 0, %s192
      %s209 = sphi 0, %s193
      %s217 = sphi 0, %s219
      %s220 = sphi 0, %s217
      %s221 = sphi 0, %s220
      %s237 = sphi 0, %s221
    $region4: #{tpu_custom_call.1} parent=1 // loop_header_branch
      %28 = sbr.rel (%p26) target = $region8
    $region5: #{tpu_custom_call.1} parent=1 // loop_body
      %s30 = ssub.s32 %s25, 1
      %s31 = ssub.s32 %s25, 2
      %s38 = sadd.s32 1, %s33
      %p39 = scmp.ge.s32.totalorder %s38, 1
      %s40 = scalar_select %p39, 0, %s38
      %s41 = sadd.s32 1, %s32
      %s42 = scalar_select %p39, %s41, %s32
      %p43 = scmp.ge.s32.totalorder %s42, 2
      %s44 = scalar_select %p43, 0, %s42
      %s45 = ssub.s32 %s32, %s44
      %s46 = ssub.s32 %s33, %s40
      %s47 = sor.u32 %s45, %s46
      %p48 = scmp.eq.s32.totalorder %s47, 0
      %s50 = sadd.s32 %s49, 1
      %s51 = scalar_select %p48, %s49, %s50
      %p54 = pneg %p48
      %p55 = scmp.eq.s32.totalorder %s25, 1
      %p56 = por %p54, %p55
      %p57 = scmp.ne.s32.totalorder %s49, %s52
      %p58 = scmp.eq.s32.totalorder %s25, 0
      %p59 = por %p57, %p58
      %p60 = scmp.ne.s32.totalorder %s49, %s52
      %p61 = scmp.eq.s32.totalorder %s30, 1
      %p62 = por %p60, %p61
      %p63 = scmp.ne.s32.totalorder %s52, %s53
      %p64 = scmp.eq.s32.totalorder %s30, 0
      %p65 = por %p63, %p64
      %p66 = scmp.ne.s32.totalorder %s52, %s53
      %p67 = scmp.eq.s32.totalorder %s31, 1
      %p68 = por %p66, %p67
      %p70 = scmp.ne.s32.totalorder %s53, %s69
      %p71 = scmp.eq.s32.totalorder %s31, 0
      %p72 = por %p70, %p71
      %s74 = sadd.s32 %s73, 1
      %p77 = scmp.eq.s32.totalorder %s25, 1
      %p78 = scmp.ne.s32.totalorder %s73, %s75
      %p79 = scmp.eq.s32.totalorder %s25, 0
      %p80 = por %p78, %p79
      %p81 = scmp.ne.s32.totalorder %s73, %s75
      %p82 = scmp.eq.s32.totalorder %s30, 1
      %p83 = por %p81, %p82
      %p84 = scmp.ne.s32.totalorder %s75, %s76
      %p85 = scmp.eq.s32.totalorder %s30, 0
      %p86 = por %p84, %p85
      %p87 = scmp.ne.s32.totalorder %s75, %s76
      %p88 = scmp.eq.s32.totalorder %s31, 1
      %p89 = por %p87, %p88
      %p91 = scmp.ne.s32.totalorder %s76, %s90
      %p92 = scmp.eq.s32.totalorder %s31, 0
      %p93 = por %p91, %p92
      %s95 = sadd.s32 %s94, 1
      %p98 = scmp.eq.s32.totalorder %s25, 1
      %p99 = scmp.ne.s32.totalorder %s94, %s96
      %p100 = scmp.eq.s32.totalorder %s25, 0
      %p101 = por %p99, %p100
      %p102 = scmp.ne.s32.totalorder %s94, %s96
      %p103 = scmp.eq.s32.totalorder %s30, 1
      %p104 = por %p102, %p103
      %p105 = scmp.ne.s32.totalorder %s96, %s97
      %p106 = scmp.eq.s32.totalorder %s30, 0
      %p107 = por %p105, %p106
      %p108 = scmp.ne.s32.totalorder %s96, %s97
      %p109 = scmp.eq.s32.totalorder %s31, 1
      %p110 = por %p108, %p109
      %p112 = scmp.ne.s32.totalorder %s97, %s111
      %p113 = scmp.eq.s32.totalorder %s31, 0
      %p114 = por %p112, %p113
      %s116 = sadd.s32 %s115, 1
      %p119 = scmp.eq.s32.totalorder %s25, 1
      %p120 = scmp.ne.s32.totalorder %s115, %s117
      %p121 = scmp.eq.s32.totalorder %s25, 0
      %p122 = por %p120, %p121
      %p123 = scmp.ne.s32.totalorder %s115, %s117
      %p124 = scmp.eq.s32.totalorder %s30, 1
      %p125 = por %p123, %p124
      %p126 = scmp.ne.s32.totalorder %s117, %s118
      %p127 = scmp.eq.s32.totalorder %s30, 0
      %p128 = por %p126, %p127
      %p129 = scmp.ne.s32.totalorder %s117, %s118
      %p130 = scmp.eq.s32.totalorder %s31, 1
      %p131 = por %p129, %p130
      %p133 = scmp.ne.s32.totalorder %s118, %s132
      %p134 = scmp.eq.s32.totalorder %s31, 0
      %p135 = por %p133, %p134
      %s137 = sadd.s32 %s136, 1
      %p140 = scmp.eq.s32.totalorder %s25, 1
      %p141 = scmp.ne.s32.totalorder %s136, %s138
      %p142 = scmp.eq.s32.totalorder %s25, 0
      %p143 = por %p141, %p142
      %p144 = scmp.ne.s32.totalorder %s136, %s138
      %p145 = scmp.eq.s32.totalorder %s30, 1
      %p146 = por %p144, %p145
      %p147 = scmp.ne.s32.totalorder %s138, %s139
      %p148 = scmp.eq.s32.totalorder %s30, 0
      %p149 = por %p147, %p148
      %p150 = scmp.ne.s32.totalorder %s138, %s139
      %p151 = scmp.eq.s32.totalorder %s31, 1
      %p152 = por %p150, %p151
      %p154 = scmp.ne.s32.totalorder %s139, %s153
      %p155 = scmp.eq.s32.totalorder %s31, 0
      %p156 = por %p154, %p155
      %s157 = ssub.s32 %s32, %s44
      %s158 = ssub.s32 %s33, %s40
      %s159 = sor.u32 %s157, %s158
      %p160 = scmp.eq.s32.totalorder %s159, 0
      %s162 = sadd.s32 %s161, 1
      %s163 = scalar_select %p160, %s161, %s162
      %p166 = pneg %p160
      %p167 = scmp.eq.s32.totalorder %s25, 1
      %p168 = por %p166, %p167
      %p169 = scmp.ne.s32.totalorder %s161, %s164
      %p170 = scmp.eq.s32.totalorder %s25, 0
      %p171 = por %p169, %p170
      %p172 = scmp.ne.s32.totalorder %s161, %s164
      %p173 = scmp.eq.s32.totalorder %s30, 1
      %p174 = por %p172, %p173
      %p175 = scmp.ne.s32.totalorder %s164, %s165
      %p176 = scmp.eq.s32.totalorder %s30, 0
      %p177 = por %p175, %p176
      %p178 = scmp.ne.s32.totalorder %s164, %s165
      %p179 = scmp.eq.s32.totalorder %s31, 1
      %p180 = por %p178, %p179
      %p182 = scmp.ne.s32.totalorder %s165, %s181
      %p183 = scmp.eq.s32.totalorder %s31, 0
      %p184 = por %p182, %p183
      %s185 = ssub.s32 %s32, %s44
      %s186 = ssub.s32 %s33, %s40
      %s187 = sor.u32 %s185, %s186
      %p188 = scmp.eq.s32.totalorder %s187, 0
      %s190 = sadd.s32 %s189, 1
      %s191 = scalar_select %p188, %s189, %s190
      %p194 = pneg %p188
      %p195 = scmp.eq.s32.totalorder %s25, 1
      %p196 = por %p194, %p195
      %p197 = scmp.ne.s32.totalorder %s189, %s192
      %p198 = scmp.eq.s32.totalorder %s25, 0
      %p199 = por %p197, %p198
      %p200 = scmp.ne.s32.totalorder %s189, %s192
      %p201 = scmp.eq.s32.totalorder %s30, 1
      %p202 = por %p200, %p201
      %p203 = scmp.ne.s32.totalorder %s192, %s193
      %p204 = scmp.eq.s32.totalorder %s30, 0
      %p205 = por %p203, %p204
      %p206 = scmp.ne.s32.totalorder %s192, %s193
      %p207 = scmp.eq.s32.totalorder %s31, 1
      %p208 = por %p206, %p207
      %p210 = scmp.ne.s32.totalorder %s193, %s209
      %p211 = scmp.eq.s32.totalorder %s31, 0
      %p212 = por %p210, %p211
      %s213 = ssub.s32 %s32, %s44
      %s214 = ssub.s32 %s33, %s40
      %s215 = sor.u32 %s213, %s214
      %p216 = scmp.eq.s32.totalorder %s215, 0
      %s218 = sadd.s32 %s217, 1
      %s219 = scalar_select %p216, %s217, %s218
      %p222 = pneg %p216
      %p223 = scmp.eq.s32.totalorder %s25, 1
      %p224 = por %p222, %p223
      %p225 = scmp.ne.s32.totalorder %s217, %s220
      %p226 = scmp.eq.s32.totalorder %s25, 0
      %p227 = por %p225, %p226
      %p228 = scmp.ne.s32.totalorder %s217, %s220
      %p229 = scmp.eq.s32.totalorder %s30, 1
      %p230 = por %p228, %p229
      %p231 = scmp.ne.s32.totalorder %s220, %s221
      %p232 = scmp.eq.s32.totalorder %s30, 0
      %p233 = por %p231, %p232
      %p234 = scmp.ne.s32.totalorder %s220, %s221
      %p235 = scmp.eq.s32.totalorder %s31, 1
      %p236 = por %p234, %p235
      %p238 = scmp.ne.s32.totalorder %s221, %s237
      %p239 = scmp.eq.s32.totalorder %s31, 0
      %p240 = por %p238, %p239
      %p241 = scmp.le.s32.totalorder 1, %s25
      %p242 = scmp.lt.s32.totalorder %s25, 3
      %p243 = pnand %p241, %p242
      %p244 = pneg %p243
      // Predicated region
      $region9: #{tpu_custom_call.1} parent=5 // pred_check
        _
      $region10: #{tpu_custom_call.1} parent=5 // pred_check_branch
        %246 = sbr.rel (%p243) target = $region12
      $region11: #{tpu_custom_call.1} parent=5 // pred_region
        %s247 = ssub.s32 %s25, 1
        // Predicated region
        $region13: #{tpu_custom_call.1} parent=11 // pred_check
          %p248 = pneg %p86
        $region14: #{tpu_custom_call.1} parent=11 // pred_check_branch
          %250 = sbr.rel (%p248) target = $region16
        $region15: #{tpu_custom_call.1} parent=11 // pred_region
          %s252 = ssub.s32 32, 32
          %253 = vsyncadd [#allocation6], %s252
          %s255 = sshll.u32 [#allocation5], 4
          %s256 = int_to_ptr.vmem [resolvable:$true] %s255
          %258 = dma.hbm_to_vmem [thread:$0]  %s1, 32, %s256, [#allocation6]
        $region16: #{tpu_custom_call.1} parent=11 // pred_fallthru
          _
        // Predicated region
        $region17: #{tpu_custom_call.1} parent=11 // pred_check
          %p259 = pneg %p107
        $region18: #{tpu_custom_call.1} parent=11 // pred_check_branch
          %261 = sbr.rel (%p259) target = $region20
        $region19: #{tpu_custom_call.1} parent=11 // pred_region
          %s263 = ssub.s32 12288, 12288
          %264 = vsyncadd [#allocation6], %s263
          %s265 = sshll.u32 [#allocation7], 4
          %s266 = int_to_ptr.vmem [resolvable:$true] %s265
          %271 = dma.hbm_to_vmem [thread:$0]  %s2, 12288, %s266, [#allocation6], 384, 384, 24
        $region20: #{tpu_custom_call.1} parent=11 // pred_fallthru
          _
        // Predicated region
        $region21: #{tpu_custom_call.1} parent=11 // pred_check
          %p272 = pneg %p128
        $region22: #{tpu_custom_call.1} parent=11 // pred_check_branch
          %274 = sbr.rel (%p272) target = $region24
        $region23: #{tpu_custom_call.1} parent=11 // pred_region
          %s276 = ssub.s32 16, 16
          %277 = vsyncadd [#allocation9], %s276
          %s279 = sshll.u32 [#allocation8], 4
          %s280 = int_to_ptr.vmem [resolvable:$true] %s279
          %282 = dma.hbm_to_vmem [thread:$0]  %s3, 16, %s280, [#allocation9]
        $region24: #{tpu_custom_call.1} parent=11 // pred_fallthru
          _
        // Predicated region
        $region25: #{tpu_custom_call.1} parent=11 // pred_check
          %p283 = pneg %p149
        $region26: #{tpu_custom_call.1} parent=11 // pred_check_branch
          %285 = sbr.rel (%p283) target = $region28
        $region27: #{tpu_custom_call.1} parent=11 // pred_region
          %s287 = ssub.s32 16, 16
          %288 = vsyncadd [#allocation9], %s287
          %s290 = sshll.u32 [#allocation10], 4
          %s291 = int_to_ptr.vmem [resolvable:$true] %s290
          %293 = dma.hbm_to_vmem [thread:$0]  %s4, 16, %s291, [#allocation9]
        $region28: #{tpu_custom_call.1} parent=11 // pred_fallthru
          _
      $region12: #{tpu_custom_call.1} parent=5 // pred_fallthru
        _
      %p294 = scmp.lt.s32.totalorder %s25, 2
      // Predicated region
      $region29: #{tpu_custom_call.1} parent=5 // pred_check
        %p295 = pneg %p294
      $region30: #{tpu_custom_call.1} parent=5 // pred_check_branch
        %297 = sbr.rel (%p295) target = $region32
      $region31: #{tpu_custom_call.1} parent=5 // pred_region
        // Predicated region
        $region33: #{tpu_custom_call.1} parent=31 // pred_check
          %p298 = pneg %p59
        $region34: #{tpu_custom_call.1} parent=31 // pred_check_branch
          %300 = sbr.rel (%p298) target = $region36
        $region35: #{tpu_custom_call.1} parent=31 // pred_region
          %s301 = sand.u32 %s49, 1
          %s302 = scalar_lea.sflag [#allocation3], %s301
          %s303 = sand.u32 %s49, 1
          %s304 = smul.addr %s303, 256
          %s305 = scalar_lea.vmem [#allocation2], %s304
          %s306 = smul.u32 32, %s33
          %s308 = ssub.s32 4096, 4096
          %309 = vsyncadd %s302, %s308
          %s310 = smul.addr %s306, 2
          %s311 = smul.addr %s32, 64
          %s312 = sadd.s32 %s310, %s311
          %s313 = smul.addr %s312, 64
          %s314 = scalar_lea.hbm %s0, %s313
          %s315 = sshll.u32 %s305, 4
          %s316 = int_to_ptr.vmem [resolvable:$true] %s315
          %321 = dma.hbm_to_vmem [thread:$0]  %s314, 4096, %s316, %s302, 128, 128, 8
        $region36: #{tpu_custom_call.1} parent=31 // pred_fallthru
          _
      $region32: #{tpu_custom_call.1} parent=5 // pred_fallthru
        _
      %p322 = scmp.le.s32.totalorder 1, %s25
      %p323 = scmp.lt.s32.totalorder %s25, 3
      %p324 = pnand %p322, %p323
      %p325 = pneg %p324
      // Predicated region
      $region37: #{tpu_custom_call.1} parent=5 // pred_check
        _
      $region38: #{tpu_custom_call.1} parent=5 // pred_check_branch
        %327 = sbr.rel (%p324) target = $region40
      $region39: #{tpu_custom_call.1} parent=5 // pred_region
        %s328 = ssub.s32 %s25, 1
        %s329 = sand.u32 %s52, 1
        %s330 = scalar_lea.sflag [#allocation3], %s329
        %s331 = sand.u32 %s52, 1
        %s332 = smul.addr %s331, 256
        %s333 = scalar_lea.vmem [#allocation2], %s332
        // Predicated region
        $region41: #{tpu_custom_call.1} parent=39 // pred_check
          %p334 = pneg %p65
        $region42: #{tpu_custom_call.1} parent=39 // pred_check_branch
          %336 = sbr.rel (%p334) target = $region44
        $region43: #{tpu_custom_call.1} parent=39 // pred_region
          %337 = dma.done %s330, 4096
        $region44: #{tpu_custom_call.1} parent=39 // pred_fallthru
          _
        // Predicated region
        $region45: #{tpu_custom_call.1} parent=39 // pred_check
          %p338 = pneg %p86
        $region46: #{tpu_custom_call.1} parent=39 // pred_check_branch
          %340 = sbr.rel (%p338) target = $region48
        $region47: #{tpu_custom_call.1} parent=39 // pred_region
          %341 = dma.done [#allocation6], 32
        $region48: #{tpu_custom_call.1} parent=39 // pred_fallthru
          _
        // Predicated region
        $region49: #{tpu_custom_call.1} parent=39 // pred_check
          %p342 = pneg %p107
        $region50: #{tpu_custom_call.1} parent=39 // pred_check_branch
          %344 = sbr.rel (%p342) target = $region52
        $region51: #{tpu_custom_call.1} parent=39 // pred_region
          %345 = dma.done [#allocation6], 12288
        $region52: #{tpu_custom_call.1} parent=39 // pred_fallthru
          _
        // Predicated region
        $region53: #{tpu_custom_call.1} parent=39 // pred_check
          %p346 = pneg %p128
        $region54: #{tpu_custom_call.1} parent=39 // pred_check_branch
          %348 = sbr.rel (%p346) target = $region56
        $region55: #{tpu_custom_call.1} parent=39 // pred_region
          %349 = dma.done [#allocation9], 16
        $region56: #{tpu_custom_call.1} parent=39 // pred_fallthru
          _
        // Predicated region
        $region57: #{tpu_custom_call.1} parent=39 // pred_check
          %p350 = pneg %p149
        $region58: #{tpu_custom_call.1} parent=39 // pred_check_branch
          %352 = sbr.rel (%p350) target = $region60
        $region59: #{tpu_custom_call.1} parent=39 // pred_region
          %353 = dma.done [#allocation9], 16
        $region60: #{tpu_custom_call.1} parent=39 // pred_fallthru
          _
        %s354 = sand.u32 %s52, 1
        %s355 = scalar_lea.sflag [#allocation3], %s354
        %s356 = sand.u32 %s52, 1
        %s357 = smul.addr %s356, 256
        %s358 = scalar_lea.vmem [#allocation2], %s357
        %p359 = pneg %p65
        %p360 = pneg %p62
        %p361 = pneg %p86
        %p362 = pneg %p83
        %p363 = pneg %p107
        %p364 = pneg %p104
        %p365 = pneg %p128
        %p366 = pneg %p125
        %p367 = pneg %p149
        %p368 = pneg %p146
        %p369 = pneg %p177
        %p370 = pneg %p174
        %s371 = sand.u32 %s164, 1
        %s372 = scalar_lea.sflag [#allocation4], %s371
        %s373 = sand.u32 %s164, 1
        %s374 = smul.addr %s373, 256
        %s375 = scalar_lea.vmem [#allocation11], %s374
        %p376 = pneg %p205
        %p377 = pneg %p202
        %s378 = sand.u32 %s30, 1
        %s379 = scalar_lea.sflag [#allocation13], %s378
        %s380 = sand.u32 %s192, 1
        %s381 = smul.addr %s380, 256
        %s382 = scalar_lea.vmem [#allocation12], %s381
        %p383 = pneg %p233
        %p384 = pneg %p230
        %s385 = sand.u32 %s30, 1
        %s386 = scalar_lea.sflag [#allocation13], %s385
        %s387 = sand.u32 %s220, 1
        %s388 = smul.addr %s387, 256
        %s389 = scalar_lea.vmem [#allocation14], %s388
        %s390 = smul.u32 32, %s35
        %s391 = smul.u32 32, %s35
        %s392 = smul.u32 32, %s35
        %s393 = smul.u32 32, %s35
        %v394 = vld [vmem:[%s333] sm:$0xff]
        %v395 = vld [vmem:[%s333 + $0x8] sm:$0xff]
        %v396 = vld [vmem:[%s333 + $0x10] sm:$0xff]
        %v397 = vld [vmem:[%s333 + $0x18] sm:$0xff]
        %v398 = vld [vmem:[%s333 + $0x20] sm:$0xff]
        %v399 = vld [vmem:[%s333 + $0x28] sm:$0xff]
        %v400 = vld [vmem:[%s333 + $0x30] sm:$0xff]
        %v401 = vld [vmem:[%s333 + $0x38] sm:$0xff]
        %v402 = vld [vmem:[%s333 + $0x40] sm:$0xff]
        %v403 = vld [vmem:[%s333 + $0x48] sm:$0xff]
        %v404 = vld [vmem:[%s333 + $0x50] sm:$0xff]
        %v405 = vld [vmem:[%s333 + $0x58] sm:$0xff]
        %v406 = vld [vmem:[%s333 + $0x60] sm:$0xff]
        %v407 = vld [vmem:[%s333 + $0x68] sm:$0xff]
        %v408 = vld [vmem:[%s333 + $0x70] sm:$0xff]
        %v409 = vld [vmem:[%s333 + $0x78] sm:$0xff]
        %v410 = vld [vmem:[%s333 + $0x80] sm:$0xff]
        %v411 = vld [vmem:[%s333 + $0x88] sm:$0xff]
        %v412 = vld [vmem:[%s333 + $0x90] sm:$0xff]
        %v413 = vld [vmem:[%s333 + $0x98] sm:$0xff]
        %v414 = vld [vmem:[%s333 + $0xa0] sm:$0xff]
        %v415 = vld [vmem:[%s333 + $0xa8] sm:$0xff]
        %v416 = vld [vmem:[%s333 + $0xb0] sm:$0xff]
        %v417 = vld [vmem:[%s333 + $0xb8] sm:$0xff]
        %v418 = vld [vmem:[%s333 + $0xc0] sm:$0xff]
        %v419 = vld [vmem:[%s333 + $0xc8] sm:$0xff]
        %v420 = vld [vmem:[%s333 + $0xd0] sm:$0xff]
        %v421 = vld [vmem:[%s333 + $0xd8] sm:$0xff]
        %v422 = vld [vmem:[%s333 + $0xe0] sm:$0xff]
        %v423 = vld [vmem:[%s333 + $0xe8] sm:$0xff]
        %v424 = vld [vmem:[%s333 + $0xf0] sm:$0xff]
        %v425 = vld [vmem:[%s333 + $0xf8] sm:$0xff]
        %v426 = vunpack.c.l.bf16 %v394
        %v427 = vunpack.c.h.bf16 %v394
        %v428 = vunpack.c.l.bf16 %v395
        %v429 = vunpack.c.h.bf16 %v395
        %v430 = vunpack.c.l.bf16 %v396
        %v431 = vunpack.c.h.bf16 %v396
        %v432 = vunpack.c.l.bf16 %v397
        %v433 = vunpack.c.h.bf16 %v397
        %v434 = vunpack.c.l.bf16 %v398
        %v435 = vunpack.c.h.bf16 %v398
        %v436 = vunpack.c.l.bf16 %v399
        %v437 = vunpack.c.h.bf16 %v399
        %v438 = vunpack.c.l.bf16 %v400
        %v439 = vunpack.c.h.bf16 %v400
        %v440 = vunpack.c.l.bf16 %v401
        %v441 = vunpack.c.h.bf16 %v401
        %v442 = vunpack.c.l.bf16 %v402
        %v443 = vunpack.c.h.bf16 %v402
        %v444 = vunpack.c.l.bf16 %v403
        %v445 = vunpack.c.h.bf16 %v403
        %v446 = vunpack.c.l.bf16 %v404
        %v447 = vunpack.c.h.bf16 %v404
        %v448 = vunpack.c.l.bf16 %v405
        %v449 = vunpack.c.h.bf16 %v405
        %v450 = vunpack.c.l.bf16 %v406
        %v451 = vunpack.c.h.bf16 %v406
        %v452 = vunpack.c.l.bf16 %v407
        %v453 = vunpack.c.h.bf16 %v407
        %v454 = vunpack.c.l.bf16 %v408
        %v455 = vunpack.c.h.bf16 %v408
        %v456 = vunpack.c.l.bf16 %v409
        %v457 = vunpack.c.h.bf16 %v409
        %v458 = vunpack.c.l.bf16 %v410
        %v459 = vunpack.c.h.bf16 %v410
        %v460 = vunpack.c.l.bf16 %v411
        %v461 = vunpack.c.h.bf16 %v411
        %v462 = vunpack.c.l.bf16 %v412
        %v463 = vunpack.c.h.bf16 %v412
        %v464 = vunpack.c.l.bf16 %v413
        %v465 = vunpack.c.h.bf16 %v413
        %v466 = vunpack.c.l.bf16 %v414
        %v467 = vunpack.c.h.bf16 %v414
        %v468 = vunpack.c.l.bf16 %v415
        %v469 = vunpack.c.h.bf16 %v415
        %v470 = vunpack.c.l.bf16 %v416
        %v471 = vunpack.c.h.bf16 %v416
        %v472 = vunpack.c.l.bf16 %v417
        %v473 = vunpack.c.h.bf16 %v417
        %v474 = vunpack.c.l.bf16 %v418
        %v475 = vunpack.c.h.bf16 %v418
        %v476 = vunpack.c.l.bf16 %v419
        %v477 = vunpack.c.h.bf16 %v419
        %v478 = vunpack.c.l.bf16 %v420
        %v479 = vunpack.c.h.bf16 %v420
        %v480 = vunpack.c.l.bf16 %v421
        %v481 = vunpack.c.h.bf16 %v421
        %v482 = vunpack.c.l.bf16 %v422
        %v483 = vunpack.c.h.bf16 %v422
        %v484 = vunpack.c.l.bf16 %v423
        %v485 = vunpack.c.h.bf16 %v423
        %v486 = vunpack.c.l.bf16 %v424
        %v487 = vunpack.c.h.bf16 %v424
        %v488 = vunpack.c.l.bf16 %v425
        %v489 = vunpack.c.h.bf16 %v425
        %v490 = vmul.f32 %v426, %v426
        %v491 = vmul.f32 %v427, %v427
        %v492 = vmul.f32 %v428, %v428
        %v493 = vmul.f32 %v429, %v429
        %v494 = vmul.f32 %v430, %v430
        %v495 = vmul.f32 %v431, %v431
        %v496 = vmul.f32 %v432, %v432
        %v497 = vmul.f32 %v433, %v433
        %v498 = vmul.f32 %v434, %v434
        %v499 = vmul.f32 %v435, %v435
        %v500 = vmul.f32 %v436, %v436
        %v501 = vmul.f32 %v437, %v437
        %v502 = vmul.f32 %v438, %v438
        %v503 = vmul.f32 %v439, %v439
        %v504 = vmul.f32 %v440, %v440
        %v505 = vmul.f32 %v441, %v441
        %v506 = vmul.f32 %v442, %v442
        %v507 = vmul.f32 %v443, %v443
        %v508 = vmul.f32 %v444, %v444
        %v509 = vmul.f32 %v445, %v445
        %v510 = vmul.f32 %v446, %v446
        %v511 = vmul.f32 %v447, %v447
        %v512 = vmul.f32 %v448, %v448
        %v513 = vmul.f32 %v449, %v449
        %v514 = vmul.f32 %v450, %v450
        %v515 = vmul.f32 %v451, %v451
        %v516 = vmul.f32 %v452, %v452
        %v517 = vmul.f32 %v453, %v453
        %v518 = vmul.f32 %v454, %v454
        %v519 = vmul.f32 %v455, %v455
        %v520 = vmul.f32 %v456, %v456
        %v521 = vmul.f32 %v457, %v457
        %v522 = vmul.f32 %v458, %v458
        %v523 = vmul.f32 %v459, %v459
        %v524 = vmul.f32 %v460, %v460
        %v525 = vmul.f32 %v461, %v461
        %v526 = vmul.f32 %v462, %v462
        %v527 = vmul.f32 %v463, %v463
        %v528 = vmul.f32 %v464, %v464
        %v529 = vmul.f32 %v465, %v465
        %v530 = vmul.f32 %v466, %v466
        %v531 = vmul.f32 %v467, %v467
        %v532 = vmul.f32 %v468, %v468
        %v533 = vmul.f32 %v469, %v469
        %v534 = vmul.f32 %v470, %v470
        %v535 = vmul.f32 %v471, %v471
        %v536 = vmul.f32 %v472, %v472
        %v537 = vmul.f32 %v473, %v473
        %v538 = vmul.f32 %v474, %v474
        %v539 = vmul.f32 %v475, %v475
        %v540 = vmul.f32 %v476, %v476
        %v541 = vmul.f32 %v477, %v477
        %v542 = vmul.f32 %v478, %v478
        %v543 = vmul.f32 %v479, %v479
        %v544 = vmul.f32 %v480, %v480
        %v545 = vmul.f32 %v481, %v481
        %v546 = vmul.f32 %v482, %v482
        %v547 = vmul.f32 %v483, %v483
        %v548 = vmul.f32 %v484, %v484
        %v549 = vmul.f32 %v485, %v485
        %v550 = vmul.f32 %v486, %v486
        %v551 = vmul.f32 %v487, %v487
        %v552 = vmul.f32 %v488, %v488
        %v553 = vmul.f32 %v489, %v489
        %v554 = vadd.f32 %v490, %v491
        %555 = vadd.xlane.f32.xlu0 %v554
        %v556 = vpop.xlane.xlu0 %555
        %v557 = vadd.f32 %v492, %v493
        %558 = vadd.xlane.f32.xlu0 %v557
        %v559 = vpop.xlane.xlu0 %558
        %v560 = vadd.f32 %v494, %v495
        %561 = vadd.xlane.f32.xlu0 %v560
        %v562 = vpop.xlane.xlu0 %561
        %v563 = vadd.f32 %v496, %v497
        %564 = vadd.xlane.f32.xlu0 %v563
        %v565 = vpop.xlane.xlu0 %564
        %v566 = vadd.f32 %v498, %v499
        %567 = vadd.xlane.f32.xlu0 %v566
        %v568 = vpop.xlane.xlu0 %567
        %v569 = vadd.f32 %v500, %v501
        %570 = vadd.xlane.f32.xlu0 %v569
        %v571 = vpop.xlane.xlu0 %570
        %v572 = vadd.f32 %v502, %v503
        %573 = vadd.xlane.f32.xlu0 %v572
        %v574 = vpop.xlane.xlu0 %573
        %v575 = vadd.f32 %v504, %v505
        %576 = vadd.xlane.f32.xlu0 %v575
        %v577 = vpop.xlane.xlu0 %576
        %v578 = vadd.f32 %v506, %v507
        %579 = vadd.xlane.f32.xlu0 %v578
        %v580 = vpop.xlane.xlu0 %579
        %v581 = vadd.f32 %v508, %v509
        %582 = vadd.xlane.f32.xlu0 %v581
        %v583 = vpop.xlane.xlu0 %582
        %v584 = vadd.f32 %v510, %v511
        %585 = vadd.xlane.f32.xlu0 %v584
        %v586 = vpop.xlane.xlu0 %585
        %v587 = vadd.f32 %v512, %v513
        %588 = vadd.xlane.f32.xlu0 %v587
        %v589 = vpop.xlane.xlu0 %588
        %v590 = vadd.f32 %v514, %v515
        %591 = vadd.xlane.f32.xlu0 %v590
        %v592 = vpop.xlane.xlu0 %591
        %v593 = vadd.f32 %v516, %v517
        %594 = vadd.xlane.f32.xlu0 %v593
        %v595 = vpop.xlane.xlu0 %594
        %v596 = vadd.f32 %v518, %v519
        %597 = vadd.xlane.f32.xlu0 %v596
        %v598 = vpop.xlane.xlu0 %597
        %v599 = vadd.f32 %v520, %v521
        %600 = vadd.xlane.f32.xlu0 %v599
        %v601 = vpop.xlane.xlu0 %600
        %v602 = vadd.f32 %v522, %v523
        %603 = vadd.xlane.f32.xlu0 %v602
        %v604 = vpop.xlane.xlu0 %603
        %v605 = vadd.f32 %v524, %v525
        %606 = vadd.xlane.f32.xlu0 %v605
        %v607 = vpop.xlane.xlu0 %606
        %v608 = vadd.f32 %v526, %v527
        %609 = vadd.xlane.f32.xlu0 %v608
        %v610 = vpop.xlane.xlu0 %609
        %v611 = vadd.f32 %v528, %v529
        %612 = vadd.xlane.f32.xlu0 %v611
        %v613 = vpop.xlane.xlu0 %612
        %v614 = vadd.f32 %v530, %v531
        %615 = vadd.xlane.f32.xlu0 %v614
        %v616 = vpop.xlane.xlu0 %615
        %v617 = vadd.f32 %v532, %v533
        %618 = vadd.xlane.f32.xlu0 %v617
        %v619 = vpop.xlane.xlu0 %618
        %v620 = vadd.f32 %v534, %v535
        %621 = vadd.xlane.f32.xlu0 %v620
        %v622 = vpop.xlane.xlu0 %621
        %v623 = vadd.f32 %v536, %v537
        %624 = vadd.xlane.f32.xlu0 %v623
        %v625 = vpop.xlane.xlu0 %624
        %v626 = vadd.f32 %v538, %v539
        %627 = vadd.xlane.f32.xlu0 %v626
        %v628 = vpop.xlane.xlu0 %627
        %v629 = vadd.f32 %v540, %v541
        %630 = vadd.xlane.f32.xlu0 %v629
        %v631 = vpop.xlane.xlu0 %630
        %v632 = vadd.f32 %v542, %v543
        %633 = vadd.xlane.f32.xlu0 %v632
        %v634 = vpop.xlane.xlu0 %633
        %v635 = vadd.f32 %v544, %v545
        %636 = vadd.xlane.f32.xlu0 %v635
        %v637 = vpop.xlane.xlu0 %636
        %v638 = vadd.f32 %v546, %v547
        %639 = vadd.xlane.f32.xlu0 %v638
        %v640 = vpop.xlane.xlu0 %639
        %v641 = vadd.f32 %v548, %v549
        %642 = vadd.xlane.f32.xlu0 %v641
        %v643 = vpop.xlane.xlu0 %642
        %v644 = vadd.f32 %v550, %v551
        %645 = vadd.xlane.f32.xlu0 %v644
        %v646 = vpop.xlane.xlu0 %645
        %v647 = vadd.f32 %v552, %v553
        %648 = vadd.xlane.f32.xlu0 %v647
        %v649 = vpop.xlane.xlu0 %648
        %v650 = vrcp.pop 256.0
        %v651 = vmul.f32 %v556, %v650
        %v652 = vmul.f32 %v559, %v650
        %v653 = vmul.f32 %v562, %v650
        %v654 = vmul.f32 %v565, %v650
        %v655 = vmul.f32 %v568, %v650
        %v656 = vmul.f32 %v571, %v650
        %v657 = vmul.f32 %v574, %v650
        %v658 = vmul.f32 %v577, %v650
        %v659 = vmul.f32 %v580, %v650
        %v660 = vmul.f32 %v583, %v650
        %v661 = vmul.f32 %v586, %v650
        %v662 = vmul.f32 %v589, %v650
        %v663 = vmul.f32 %v592, %v650
        %v664 = vmul.f32 %v595, %v650
        %v665 = vmul.f32 %v598, %v650
        %v666 = vmul.f32 %v601, %v650
        %v667 = vmul.f32 %v604, %v650
        %v668 = vmul.f32 %v607, %v650
        %v669 = vmul.f32 %v610, %v650
        %v670 = vmul.f32 %v613, %v650
        %v671 = vmul.f32 %v616, %v650
        %v672 = vmul.f32 %v619, %v650
        %v673 = vmul.f32 %v622, %v650
        %v674 = vmul.f32 %v625, %v650
        %v675 = vmul.f32 %v628, %v650
        %v676 = vmul.f32 %v631, %v650
        %v677 = vmul.f32 %v634, %v650
        %v678 = vmul.f32 %v637, %v650
        %v679 = vmul.f32 %v640, %v650
        %v680 = vmul.f32 %v643, %v650
        %v681 = vmul.f32 %v646, %v650
        %v682 = vmul.f32 %v649, %v650
        %v683 = vadd.f32 %v651, 1e-06
        %v684 = vadd.f32 %v652, 1e-06
        %v685 = vadd.f32 %v653, 1e-06
        %v686 = vadd.f32 %v654, 1e-06
        %v687 = vadd.f32 %v655, 1e-06
        %v688 = vadd.f32 %v656, 1e-06
        %v689 = vadd.f32 %v657, 1e-06
        %v690 = vadd.f32 %v658, 1e-06
        %v691 = vadd.f32 %v659, 1e-06
        %v692 = vadd.f32 %v660, 1e-06
        %v693 = vadd.f32 %v661, 1e-06
        %v694 = vadd.f32 %v662, 1e-06
        %v695 = vadd.f32 %v663, 1e-06
        %v696 = vadd.f32 %v664, 1e-06
        %v697 = vadd.f32 %v665, 1e-06
        %v698 = vadd.f32 %v666, 1e-06
        %v699 = vadd.f32 %v667, 1e-06
        %v700 = vadd.f32 %v668, 1e-06
        %v701 = vadd.f32 %v669, 1e-06
        %v702 = vadd.f32 %v670, 1e-06
        %v703 = vadd.f32 %v671, 1e-06
        %v704 = vadd.f32 %v672, 1e-06
        %v705 = vadd.f32 %v673, 1e-06
        %v706 = vadd.f32 %v674, 1e-06
        %v707 = vadd.f32 %v675, 1e-06
        %v708 = vadd.f32 %v676, 1e-06
        %v709 = vadd.f32 %v677, 1e-06
        %v710 = vadd.f32 %v678, 1e-06
        %v711 = vadd.f32 %v679, 1e-06
        %v712 = vadd.f32 %v680, 1e-06
        %v713 = vadd.f32 %v681, 1e-06
        %v714 = vadd.f32 %v682, 1e-06
        %v715 = vrsqrt.pop %v683
        %v716 = vrsqrt.pop %v684
        %v717 = vrsqrt.pop %v685
        %v718 = vrsqrt.pop %v686
        %v719 = vrsqrt.pop %v687
        %v720 = vrsqrt.pop %v688
        %v721 = vrsqrt.pop %v689
        %v722 = vrsqrt.pop %v690
        %v723 = vrsqrt.pop %v691
        %v724 = vrsqrt.pop %v692
        %v725 = vrsqrt.pop %v693
        %v726 = vrsqrt.pop %v694
        %v727 = vrsqrt.pop %v695
        %v728 = vrsqrt.pop %v696
        %v729 = vrsqrt.pop %v697
        %v730 = vrsqrt.pop %v698
        %v731 = vrsqrt.pop %v699
        %v732 = vrsqrt.pop %v700
        %v733 = vrsqrt.pop %v701
        %v734 = vrsqrt.pop %v702
        %v735 = vrsqrt.pop %v703
        %v736 = vrsqrt.pop %v704
        %v737 = vrsqrt.pop %v705
        %v738 = vrsqrt.pop %v706
        %v739 = vrsqrt.pop %v707
        %v740 = vrsqrt.pop %v708
        %v741 = vrsqrt.pop %v709
        %v742 = vrsqrt.pop %v710
        %v743 = vrsqrt.pop %v711
        %v744 = vrsqrt.pop %v712
        %v745 = vrsqrt.pop %v713
        %v746 = vrsqrt.pop %v714
        %v747 = vmul.f32 %v426, %v715
        %v748 = vmul.f32 %v427, %v715
        %v749 = vmul.f32 %v428, %v716
        %v750 = vmul.f32 %v429, %v716
        %v751 = vmul.f32 %v430, %v717
        %v752 = vmul.f32 %v431, %v717
        %v753 = vmul.f32 %v432, %v718
        %v754 = vmul.f32 %v433, %v718
        %v755 = vmul.f32 %v434, %v719
        %v756 = vmul.f32 %v435, %v719
        %v757 = vmul.f32 %v436, %v720
        %v758 = vmul.f32 %v437, %v720
        %v759 = vmul.f32 %v438, %v721
        %v760 = vmul.f32 %v439, %v721
        %v761 = vmul.f32 %v440, %v722
        %v762 = vmul.f32 %v441, %v722
        %v763 = vmul.f32 %v442, %v723
        %v764 = vmul.f32 %v443, %v723
        %v765 = vmul.f32 %v444, %v724
        %v766 = vmul.f32 %v445, %v724
        %v767 = vmul.f32 %v446, %v725
        %v768 = vmul.f32 %v447, %v725
        %v769 = vmul.f32 %v448, %v726
        %v770 = vmul.f32 %v449, %v726
        %v771 = vmul.f32 %v450, %v727
        %v772 = vmul.f32 %v451, %v727
        %v773 = vmul.f32 %v452, %v728
        %v774 = vmul.f32 %v453, %v728
        %v775 = vmul.f32 %v454, %v729
        %v776 = vmul.f32 %v455, %v729
        %v777 = vmul.f32 %v456, %v730
        %v778 = vmul.f32 %v457, %v730
        %v779 = vmul.f32 %v458, %v731
        %v780 = vmul.f32 %v459, %v731
        %v781 = vmul.f32 %v460, %v732
        %v782 = vmul.f32 %v461, %v732
        %v783 = vmul.f32 %v462, %v733
        %v784 = vmul.f32 %v463, %v733
        %v785 = vmul.f32 %v464, %v734
        %v786 = vmul.f32 %v465, %v734
        %v787 = vmul.f32 %v466, %v735
        %v788 = vmul.f32 %v467, %v735
        %v789 = vmul.f32 %v468, %v736
        %v790 = vmul.f32 %v469, %v736
        %v791 = vmul.f32 %v470, %v737
        %v792 = vmul.f32 %v471, %v737
        %v793 = vmul.f32 %v472, %v738
        %v794 = vmul.f32 %v473, %v738
        %v795 = vmul.f32 %v474, %v739
        %v796 = vmul.f32 %v475, %v739
        %v797 = vmul.f32 %v476, %v740
        %v798 = vmul.f32 %v477, %v740
        %v799 = vmul.f32 %v478, %v741
        %v800 = vmul.f32 %v479, %v741
        %v801 = vmul.f32 %v480, %v742
        %v802 = vmul.f32 %v481, %v742
        %v803 = vmul.f32 %v482, %v743
        %v804 = vmul.f32 %v483, %v743
        %v805 = vmul.f32 %v484, %v744
        %v806 = vmul.f32 %v485, %v744
        %v807 = vmul.f32 %v486, %v745
        %v808 = vmul.f32 %v487, %v745
        %v809 = vmul.f32 %v488, %v746
        %v810 = vmul.f32 %v489, %v746
        %v811 = vld [vmem:[#allocation5] sm:$0x3]
        %v813 = vlaneseq
        %v814 = vshrl.u32 %v813, 7
        %v815 = vsub.s32 0, %v814
        %v816 = vrot.slane %v811, %v815
        %v817 = vlaneseq
        %v818 = vshrl.u32 %v817, 7
        %v819 = vsub.s32 1, %v818
        %v820 = vrot.slane %v811, %v819
        %v823 = vmul.f32 %v747, %v816
        %v824 = vmul.f32 %v748, %v820
        %v825 = vmul.f32 %v749, %v816
        %v826 = vmul.f32 %v750, %v820
        %v827 = vmul.f32 %v751, %v816
        %v828 = vmul.f32 %v752, %v820
        %v829 = vmul.f32 %v753, %v816
        %v830 = vmul.f32 %v754, %v820
        %v831 = vmul.f32 %v755, %v816
        %v832 = vmul.f32 %v756, %v820
        %v833 = vmul.f32 %v757, %v816
        %v834 = vmul.f32 %v758, %v820
        %v835 = vmul.f32 %v759, %v816
        %v836 = vmul.f32 %v760, %v820
        %v837 = vmul.f32 %v761, %v816
        %v838 = vmul.f32 %v762, %v820
        %v839 = vmul.f32 %v763, %v816
        %v840 = vmul.f32 %v764, %v820
        %v841 = vmul.f32 %v765, %v816
        %v842 = vmul.f32 %v766, %v820
        %v843 = vmul.f32 %v767, %v816
        %v844 = vmul.f32 %v768, %v820
        %v845 = vmul.f32 %v769, %v816
        %v846 = vmul.f32 %v770, %v820
        %v847 = vmul.f32 %v771, %v816
        %v848 = vmul.f32 %v772, %v820
        %v849 = vmul.f32 %v773, %v816
        %v850 = vmul.f32 %v774, %v820
        %v851 = vmul.f32 %v775, %v816
        %v852 = vmul.f32 %v776, %v820
        %v853 = vmul.f32 %v777, %v816
        %v854 = vmul.f32 %v778, %v820
        %v855 = vmul.f32 %v779, %v816
        %v856 = vmul.f32 %v780, %v820
        %v857 = vmul.f32 %v781, %v816
        %v858 = vmul.f32 %v782, %v820
        %v859 = vmul.f32 %v783, %v816
        %v860 = vmul.f32 %v784, %v820
        %v861 = vmul.f32 %v785, %v816
        %v862 = vmul.f32 %v786, %v820
        %v863 = vmul.f32 %v787, %v816
        %v864 = vmul.f32 %v788, %v820
        %v865 = vmul.f32 %v789, %v816
        %v866 = vmul.f32 %v790, %v820
        %v867 = vmul.f32 %v791, %v816
        %v868 = vmul.f32 %v792, %v820
        %v869 = vmul.f32 %v793, %v816
        %v870 = vmul.f32 %v794, %v820
        %v871 = vmul.f32 %v795, %v816
        %v872 = vmul.f32 %v796, %v820
        %v873 = vmul.f32 %v797, %v816
        %v874 = vmul.f32 %v798, %v820
        %v875 = vmul.f32 %v799, %v816
        %v876 = vmul.f32 %v800, %v820
        %v877 = vmul.f32 %v801, %v816
        %v878 = vmul.f32 %v802, %v820
        %v879 = vmul.f32 %v803, %v816
        %v880 = vmul.f32 %v804, %v820
        %v881 = vmul.f32 %v805, %v816
        %v882 = vmul.f32 %v806, %v820
        %v883 = vmul.f32 %v807, %v816
        %v884 = vmul.f32 %v808, %v820
        %v885 = vmul.f32 %v809, %v816
        %v886 = vmul.f32 %v810, %v820
        %v887 = vpack.c.bf16 %v825, %v823
        %v888 = vpack.c.bf16 %v826, %v824
        %v889 = vpack.c.bf16 %v829, %v827
        %v890 = vpack.c.bf16 %v830, %v828
        %v891 = vpack.c.bf16 %v833, %v831
        %v892 = vpack.c.bf16 %v834, %v832
        %v893 = vpack.c.bf16 %v837, %v835
        %v894 = vpack.c.bf16 %v838, %v836
        %v895 = vpack.c.bf16 %v841, %v839
        %v896 = vpack.c.bf16 %v842, %v840
        %v897 = vpack.c.bf16 %v845, %v843
        %v898 = vpack.c.bf16 %v846, %v844
        %v899 = vpack.c.bf16 %v849, %v847
        %v900 = vpack.c.bf16 %v850, %v848
        %v901 = vpack.c.bf16 %v853, %v851
        %v902 = vpack.c.bf16 %v854, %v852
        %v903 = vpack.c.bf16 %v857, %v855
        %v904 = vpack.c.bf16 %v858, %v856
        %v905 = vpack.c.bf16 %v861, %v859
        %v906 = vpack.c.bf16 %v862, %v860
        %v907 = vpack.c.bf16 %v865, %v863
        %v908 = vpack.c.bf16 %v866, %v864
        %v909 = vpack.c.bf16 %v869, %v867
        %v910 = vpack.c.bf16 %v870, %v868
        %v911 = vpack.c.bf16 %v873, %v871
        %v912 = vpack.c.bf16 %v874, %v872
        %v913 = vpack.c.bf16 %v877, %v875
        %v914 = vpack.c.bf16 %v878, %v876
        %v915 = vpack.c.bf16 %v881, %v879
        %v916 = vpack.c.bf16 %v882, %v880
        %v917 = vpack.c.bf16 %v885, %v883
        %v918 = vpack.c.bf16 %v886, %v884
        %v919 = vld [vmem:[#allocation7] sm:$0xff]
        %v920 = vld [vmem:[#allocation7 + $0x8] sm:$0xff]
        %v921 = vld [vmem:[#allocation7 + $0x10] sm:$0xff]
        %v922 = vld [vmem:[#allocation7 + $0x18] sm:$0xff]
        %v923 = vld [vmem:[#allocation7 + $0x20] sm:$0xff]
        %v924 = vld [vmem:[#allocation7 + $0x28] sm:$0xff]
        %v925 = vld [vmem:[#allocation7 + $0x30] sm:$0xff]
        %v926 = vld [vmem:[#allocation7 + $0x38] sm:$0xff]
        %v927 = vld [vmem:[#allocation7 + $0x40] sm:$0xff]
        %v928 = vld [vmem:[#allocation7 + $0x48] sm:$0xff]
        %v929 = vld [vmem:[#allocation7 + $0x50] sm:$0xff]
        %v930 = vld [vmem:[#allocation7 + $0x58] sm:$0xff]
        %v931 = vld [vmem:[#allocation7 + $0x60] sm:$0xff]
        %v932 = vld [vmem:[#allocation7 + $0x68] sm:$0xff]
        %v933 = vld [vmem:[#allocation7 + $0x70] sm:$0xff]
        %v934 = vld [vmem:[#allocation7 + $0x78] sm:$0xff]
        %v935 = vld [vmem:[#allocation7 + $0x80] sm:$0xff]
        %v936 = vld [vmem:[#allocation7 + $0x88] sm:$0xff]
        %v937 = vld [vmem:[#allocation7 + $0x90] sm:$0xff]
        %v938 = vld [vmem:[#allocation7 + $0x98] sm:$0xff]
        %v939 = vld [vmem:[#allocation7 + $0xa0] sm:$0xff]
        %v940 = vld [vmem:[#allocation7 + $0xa8] sm:$0xff]
        %v941 = vld [vmem:[#allocation7 + $0xb0] sm:$0xff]
        %v942 = vld [vmem:[#allocation7 + $0xb8] sm:$0xff]
        %v943 = vld [vmem:[#allocation7 + $0xc0] sm:$0xff]
        %v944 = vld [vmem:[#allocation7 + $0xc8] sm:$0xff]
        %v945 = vld [vmem:[#allocation7 + $0xd0] sm:$0xff]
        %v946 = vld [vmem:[#allocation7 + $0xd8] sm:$0xff]
        %v947 = vld [vmem:[#allocation7 + $0xe0] sm:$0xff]
        %v948 = vld [vmem:[#allocation7 + $0xe8] sm:$0xff]
        %v949 = vld [vmem:[#allocation7 + $0xf0] sm:$0xff]
        %v950 = vld [vmem:[#allocation7 + $0xf8] sm:$0xff]
        %v951 = vld [vmem:[#allocation7 + $0x100] sm:$0xff]
        %v952 = vld [vmem:[#allocation7 + $0x108] sm:$0xff]
        %v953 = vld [vmem:[#allocation7 + $0x110] sm:$0xff]
        %v954 = vld [vmem:[#allocation7 + $0x118] sm:$0xff]
        %v955 = vld [vmem:[#allocation7 + $0x120] sm:$0xff]
        %v956 = vld [vmem:[#allocation7 + $0x128] sm:$0xff]
        %v957 = vld [vmem:[#allocation7 + $0x130] sm:$0xff]
        %v958 = vld [vmem:[#allocation7 + $0x138] sm:$0xff]
        %v959 = vld [vmem:[#allocation7 + $0x140] sm:$0xff]
        %v960 = vld [vmem:[#allocation7 + $0x148] sm:$0xff]
        %v961 = vld [vmem:[#allocation7 + $0x150] sm:$0xff]
        %v962 = vld [vmem:[#allocation7 + $0x158] sm:$0xff]
        %v963 = vld [vmem:[#allocation7 + $0x160] sm:$0xff]
        %v964 = vld [vmem:[#allocation7 + $0x168] sm:$0xff]
        %v965 = vld [vmem:[#allocation7 + $0x170] sm:$0xff]
        %v966 = vld [vmem:[#allocation7 + $0x178] sm:$0xff]
        %v967 = vld [vmem:[#allocation7 + $0x180] sm:$0xff]
        %v968 = vld [vmem:[#allocation7 + $0x188] sm:$0xff]
        %v969 = vld [vmem:[#allocation7 + $0x190] sm:$0xff]
        %v970 = vld [vmem:[#allocation7 + $0x198] sm:$0xff]
        %v971 = vld [vmem:[#allocation7 + $0x1a0] sm:$0xff]
        %v972 = vld [vmem:[#allocation7 + $0x1a8] sm:$0xff]
        %v973 = vld [vmem:[#allocation7 + $0x1b0] sm:$0xff]
        %v974 = vld [vmem:[#allocation7 + $0x1b8] sm:$0xff]
        %v975 = vld [vmem:[#allocation7 + $0x1c0] sm:$0xff]
        %v976 = vld [vmem:[#allocation7 + $0x1c8] sm:$0xff]
        %v977 = vld [vmem:[#allocation7 + $0x1d0] sm:$0xff]
        %v978 = vld [vmem:[#allocation7 + $0x1d8] sm:$0xff]
        %v979 = vld [vmem:[#allocation7 + $0x1e0] sm:$0xff]
        %v980 = vld [vmem:[#allocation7 + $0x1e8] sm:$0xff]
        %v981 = vld [vmem:[#allocation7 + $0x1f0] sm:$0xff]
        %v982 = vld [vmem:[#allocation7 + $0x1f8] sm:$0xff]
        %v983 = vld [vmem:[#allocation7 + $0x200] sm:$0xff]
        %v984 = vld [vmem:[#allocation7 + $0x208] sm:$0xff]
        %v985 = vld [vmem:[#allocation7 + $0x210] sm:$0xff]
        %v986 = vld [vmem:[#allocation7 + $0x218] sm:$0xff]
        %v987 = vld [vmem:[#allocation7 + $0x220] sm:$0xff]
        %v988 = vld [vmem:[#allocation7 + $0x228] sm:$0xff]
        %v989 = vld [vmem:[#allocation7 + $0x230] sm:$0xff]
        %v990 = vld [vmem:[#allocation7 + $0x238] sm:$0xff]
        %v991 = vld [vmem:[#allocation7 + $0x240] sm:$0xff]
        %v992 = vld [vmem:[#allocation7 + $0x248] sm:$0xff]
        %v993 = vld [vmem:[#allocation7 + $0x250] sm:$0xff]
        %v994 = vld [vmem:[#allocation7 + $0x258] sm:$0xff]
        %v995 = vld [vmem:[#allocation7 + $0x260] sm:$0xff]
        %v996 = vld [vmem:[#allocation7 + $0x268] sm:$0xff]
        %v997 = vld [vmem:[#allocation7 + $0x270] sm:$0xff]
        %v998 = vld [vmem:[#allocation7 + $0x278] sm:$0xff]
        %v999 = vld [vmem:[#allocation7 + $0x280] sm:$0xff]
        %v1000 = vld [vmem:[#allocation7 + $0x288] sm:$0xff]
        %v1001 = vld [vmem:[#allocation7 + $0x290] sm:$0xff]
        %v1002 = vld [vmem:[#allocation7 + $0x298] sm:$0xff]
        %v1003 = vld [vmem:[#allocation7 + $0x2a0] sm:$0xff]
        %v1004 = vld [vmem:[#allocation7 + $0x2a8] sm:$0xff]
        %v1005 = vld [vmem:[#allocation7 + $0x2b0] sm:$0xff]
        %v1006 = vld [vmem:[#allocation7 + $0x2b8] sm:$0xff]
        %v1007 = vld [vmem:[#allocation7 + $0x2c0] sm:$0xff]
        %v1008 = vld [vmem:[#allocation7 + $0x2c8] sm:$0xff]
        %v1009 = vld [vmem:[#allocation7 + $0x2d0] sm:$0xff]
        %v1010 = vld [vmem:[#allocation7 + $0x2d8] sm:$0xff]
        %v1011 = vld [vmem:[#allocation7 + $0x2e0] sm:$0xff]
        %v1012 = vld [vmem:[#allocation7 + $0x2e8] sm:$0xff]
        %v1013 = vld [vmem:[#allocation7 + $0x2f0] sm:$0xff]
        %v1014 = vld [vmem:[#allocation7 + $0x2f8] sm:$0xff]
        %v1111 = vunpack.c.l.b16 %v919
        %v1112 = vunpack.c.h.b16 %v919
        %v1113 = vunpack.c.l.b16 %v920
        %v1114 = vunpack.c.h.b16 %v920
        %v1115 = vunpack.c.l.b16 %v921
        %v1116 = vunpack.c.h.b16 %v921
        %v1117 = vunpack.c.l.b16 %v922
        %v1118 = vunpack.c.h.b16 %v922
        %v1119 = vunpack.c.l.b16 %v923
        %v1120 = vunpack.c.h.b16 %v923
        %v1121 = vunpack.c.l.b16 %v924
        %v1122 = vunpack.c.h.b16 %v924
        %v1123 = vunpack.c.l.b16 %v925
        %v1124 = vunpack.c.h.b16 %v925
        %v1125 = vunpack.c.l.b16 %v926
        %v1126 = vunpack.c.h.b16 %v926
        %v1127 = vunpack.c.l.b16 %v927
        %v1128 = vunpack.c.h.b16 %v927
        %v1129 = vunpack.c.l.b16 %v928
        %v1130 = vunpack.c.h.b16 %v928
        %v1131 = vunpack.c.l.b16 %v929
        %v1132 = vunpack.c.h.b16 %v929
        %v1133 = vunpack.c.l.b16 %v930
        %v1134 = vunpack.c.h.b16 %v930
        %v1135 = vunpack.c.l.b16 %v931
        %v1136 = vunpack.c.h.b16 %v931
        %v1137 = vunpack.c.l.b16 %v932
        %v1138 = vunpack.c.h.b16 %v932
        %v1139 = vunpack.c.l.b16 %v933
        %v1140 = vunpack.c.h.b16 %v933
        %v1141 = vunpack.c.l.b16 %v934
        %v1142 = vunpack.c.h.b16 %v934
        %v1143 = vunpack.c.l.b16 %v935
        %v1144 = vunpack.c.h.b16 %v935
        %v1145 = vunpack.c.l.b16 %v936
        %v1146 = vunpack.c.h.b16 %v936
        %v1147 = vunpack.c.l.b16 %v937
        %v1148 = vunpack.c.h.b16 %v937
        %v1149 = vunpack.c.l.b16 %v938
        %v1150 = vunpack.c.h.b16 %v938
        %v1151 = vunpack.c.l.b16 %v939
        %v1152 = vunpack.c.h.b16 %v939
        %v1153 = vunpack.c.l.b16 %v940
        %v1154 = vunpack.c.h.b16 %v940
        %v1155 = vunpack.c.l.b16 %v941
        %v1156 = vunpack.c.h.b16 %v941
        %v1157 = vunpack.c.l.b16 %v942
        %v1158 = vunpack.c.h.b16 %v942
        %v1159 = vunpack.c.l.b16 %v943
        %v1160 = vunpack.c.h.b16 %v943
        %v1161 = vunpack.c.l.b16 %v944
        %v1162 = vunpack.c.h.b16 %v944
        %v1163 = vunpack.c.l.b16 %v945
        %v1164 = vunpack.c.h.b16 %v945
        %v1165 = vunpack.c.l.b16 %v946
        %v1166 = vunpack.c.h.b16 %v946
        %v1167 = vunpack.c.l.b16 %v947
        %v1168 = vunpack.c.h.b16 %v947
        %v1169 = vunpack.c.l.b16 %v948
        %v1170 = vunpack.c.h.b16 %v948
        %v1171 = vunpack.c.l.b16 %v949
        %v1172 = vunpack.c.h.b16 %v949
        %v1173 = vunpack.c.l.b16 %v950
        %v1174 = vunpack.c.h.b16 %v950
        %v1175 = vunpack.c.l.b16 %v951
        %v1176 = vunpack.c.h.b16 %v951
        %v1177 = vunpack.c.l.b16 %v952
        %v1178 = vunpack.c.h.b16 %v952
        %v1179 = vunpack.c.l.b16 %v953
        %v1180 = vunpack.c.h.b16 %v953
        %v1181 = vunpack.c.l.b16 %v954
        %v1182 = vunpack.c.h.b16 %v954
        %v1183 = vunpack.c.l.b16 %v955
        %v1184 = vunpack.c.h.b16 %v955
        %v1185 = vunpack.c.l.b16 %v956
        %v1186 = vunpack.c.h.b16 %v956
        %v1187 = vunpack.c.l.b16 %v957
        %v1188 = vunpack.c.h.b16 %v957
        %v1189 = vunpack.c.l.b16 %v958
        %v1190 = vunpack.c.h.b16 %v958
        %v1191 = vunpack.c.l.b16 %v959
        %v1192 = vunpack.c.h.b16 %v959
        %v1193 = vunpack.c.l.b16 %v960
        %v1194 = vunpack.c.h.b16 %v960
        %v1195 = vunpack.c.l.b16 %v961
        %v1196 = vunpack.c.h.b16 %v961
        %v1197 = vunpack.c.l.b16 %v962
        %v1198 = vunpack.c.h.b16 %v962
        %v1199 = vunpack.c.l.b16 %v963
        %v1200 = vunpack.c.h.b16 %v963
        %v1201 = vunpack.c.l.b16 %v964
        %v1202 = vunpack.c.h.b16 %v964
        %v1203 = vunpack.c.l.b16 %v965
        %v1204 = vunpack.c.h.b16 %v965
        %v1205 = vunpack.c.l.b16 %v966
        %v1206 = vunpack.c.h.b16 %v966
        %v1207 = vunpack.c.l.b16 %v967
        %v1208 = vunpack.c.h.b16 %v967
        %v1209 = vunpack.c.l.b16 %v968
        %v1210 = vunpack.c.h.b16 %v968
        %v1211 = vunpack.c.l.b16 %v969
        %v1212 = vunpack.c.h.b16 %v969
        %v1213 = vunpack.c.l.b16 %v970
        %v1214 = vunpack.c.h.b16 %v970
        %v1215 = vunpack.c.l.b16 %v971
        %v1216 = vunpack.c.h.b16 %v971
        %v1217 = vunpack.c.l.b16 %v972
        %v1218 = vunpack.c.h.b16 %v972
        %v1219 = vunpack.c.l.b16 %v973
        %v1220 = vunpack.c.h.b16 %v973
        %v1221 = vunpack.c.l.b16 %v974
        %v1222 = vunpack.c.h.b16 %v974
        %v1223 = vunpack.c.l.b16 %v975
        %v1224 = vunpack.c.h.b16 %v975
        %v1225 = vunpack.c.l.b16 %v976
        %v1226 = vunpack.c.h.b16 %v976
        %v1227 = vunpack.c.l.b16 %v977
        %v1228 = vunpack.c.h.b16 %v977
        %v1229 = vunpack.c.l.b16 %v978
        %v1230 = vunpack.c.h.b16 %v978
        %v1231 = vunpack.c.l.b16 %v979
        %v1232 = vunpack.c.h.b16 %v979
        %v1233 = vunpack.c.l.b16 %v980
        %v1234 = vunpack.c.h.b16 %v980
        %v1235 = vunpack.c.l.b16 %v981
        %v1236 = vunpack.c.h.b16 %v981
        %v1237 = vunpack.c.l.b16 %v982
        %v1238 = vunpack.c.h.b16 %v982
        %v1239 = vunpack.c.l.b16 %v983
        %v1240 = vunpack.c.h.b16 %v983
        %v1241 = vunpack.c.l.b16 %v984
        %v1242 = vunpack.c.h.b16 %v984
        %v1243 = vunpack.c.l.b16 %v985
        %v1244 = vunpack.c.h.b16 %v985
        %v1245 = vunpack.c.l.b16 %v986
        %v1246 = vunpack.c.h.b16 %v986
        %v1247 = vunpack.c.l.b16 %v987
        %v1248 = vunpack.c.h.b16 %v987
        %v1249 = vunpack.c.l.b16 %v988
        %v1250 = vunpack.c.h.b16 %v988
        %v1251 = vunpack.c.l.b16 %v989
        %v1252 = vunpack.c.h.b16 %v989
        %v1253 = vunpack.c.l.b16 %v990
        %v1254 = vunpack.c.h.b16 %v990
        %v1255 = vunpack.c.l.b16 %v991
        %v1256 = vunpack.c.h.b16 %v991
        %v1257 = vunpack.c.l.b16 %v992
        %v1258 = vunpack.c.h.b16 %v992
        %v1259 = vunpack.c.l.b16 %v993
        %v1260 = vunpack.c.h.b16 %v993
        %v1261 = vunpack.c.l.b16 %v994
        %v1262 = vunpack.c.h.b16 %v994
        %v1263 = vunpack.c.l.b16 %v995
        %v1264 = vunpack.c.h.b16 %v995
        %v1265 = vunpack.c.l.b16 %v996
        %v1266 = vunpack.c.h.b16 %v996
        %v1267 = vunpack.c.l.b16 %v997
        %v1268 = vunpack.c.h.b16 %v997
        %v1269 = vunpack.c.l.b16 %v998
        %v1270 = vunpack.c.h.b16 %v998
        %v1271 = vunpack.c.l.b16 %v999
        %v1272 = vunpack.c.h.b16 %v999
        %v1273 = vunpack.c.l.b16 %v1000
        %v1274 = vunpack.c.h.b16 %v1000
        %v1275 = vunpack.c.l.b16 %v1001
        %v1276 = vunpack.c.h.b16 %v1001
        %v1277 = vunpack.c.l.b16 %v1002
        %v1278 = vunpack.c.h.b16 %v1002
        %v1279 = vunpack.c.l.b16 %v1003
        %v1280 = vunpack.c.h.b16 %v1003
        %v1281 = vunpack.c.l.b16 %v1004
        %v1282 = vunpack.c.h.b16 %v1004
        %v1283 = vunpack.c.l.b16 %v1005
        %v1284 = vunpack.c.h.b16 %v1005
        %v1285 = vunpack.c.l.b16 %v1006
        %v1286 = vunpack.c.h.b16 %v1006
        %v1287 = vunpack.c.l.b16 %v1007
        %v1288 = vunpack.c.h.b16 %v1007
        %v1289 = vunpack.c.l.b16 %v1008
        %v1290 = vunpack.c.h.b16 %v1008
        %v1291 = vunpack.c.l.b16 %v1009
        %v1292 = vunpack.c.h.b16 %v1009
        %v1293 = vunpack.c.l.b16 %v1010
        %v1294 = vunpack.c.h.b16 %v1010
        %v1295 = vunpack.c.l.b16 %v1011
        %v1296 = vunpack.c.h.b16 %v1011
        %v1297 = vunpack.c.l.b16 %v1012
        %v1298 = vunpack.c.h.b16 %v1012
        %v1299 = vunpack.c.l.b16 %v1013
        %v1300 = vunpack.c.h.b16 %v1013
        %v1301 = vunpack.c.l.b16 %v1014
        %v1302 = vunpack.c.h.b16 %v1014
        %v1303 = vpack.c.b16 %v1117, %v1111
        %v1304 = vpack.c.b16 %v1118, %v1112
        %v1305 = vpack.c.b16 %v1119, %v1113
        %v1306 = vpack.c.b16 %v1120, %v1114
        %v1307 = vpack.c.b16 %v1121, %v1115
        %v1308 = vpack.c.b16 %v1122, %v1116
        %v1309 = vpack.c.b16 %v1129, %v1123
        %v1310 = vpack.c.b16 %v1130, %v1124
        %v1311 = vpack.c.b16 %v1131, %v1125
        %v1312 = vpack.c.b16 %v1132, %v1126
        %v1313 = vpack.c.b16 %v1133, %v1127
        %v1314 = vpack.c.b16 %v1134, %v1128
        %v1315 = vpack.c.b16 %v1141, %v1135
        %v1316 = vpack.c.b16 %v1142, %v1136
        %v1317 = vpack.c.b16 %v1143, %v1137
        %v1318 = vpack.c.b16 %v1144, %v1138
        %v1319 = vpack.c.b16 %v1145, %v1139
        %v1320 = vpack.c.b16 %v1146, %v1140
        %v1321 = vpack.c.b16 %v1153, %v1147
        %v1322 = vpack.c.b16 %v1154, %v1148
        %v1323 = vpack.c.b16 %v1155, %v1149
        %v1324 = vpack.c.b16 %v1156, %v1150
        %v1325 = vpack.c.b16 %v1157, %v1151
        %v1326 = vpack.c.b16 %v1158, %v1152
        %v1327 = vpack.c.b16 %v1165, %v1159
        %v1328 = vpack.c.b16 %v1166, %v1160
        %v1329 = vpack.c.b16 %v1167, %v1161
        %v1330 = vpack.c.b16 %v1168, %v1162
        %v1331 = vpack.c.b16 %v1169, %v1163
        %v1332 = vpack.c.b16 %v1170, %v1164
        %v1333 = vpack.c.b16 %v1177, %v1171
        %v1334 = vpack.c.b16 %v1178, %v1172
        %v1335 = vpack.c.b16 %v1179, %v1173
        %v1336 = vpack.c.b16 %v1180, %v1174
        %v1337 = vpack.c.b16 %v1181, %v1175
        %v1338 = vpack.c.b16 %v1182, %v1176
        %v1339 = vpack.c.b16 %v1189, %v1183
        %v1340 = vpack.c.b16 %v1190, %v1184
        %v1341 = vpack.c.b16 %v1191, %v1185
        %v1342 = vpack.c.b16 %v1192, %v1186
        %v1343 = vpack.c.b16 %v1193, %v1187
        %v1344 = vpack.c.b16 %v1194, %v1188
        %v1345 = vpack.c.b16 %v1201, %v1195
        %v1346 = vpack.c.b16 %v1202, %v1196
        %v1347 = vpack.c.b16 %v1203, %v1197
        %v1348 = vpack.c.b16 %v1204, %v1198
        %v1349 = vpack.c.b16 %v1205, %v1199
        %v1350 = vpack.c.b16 %v1206, %v1200
        %v1351 = vpack.c.b16 %v1213, %v1207
        %v1352 = vpack.c.b16 %v1214, %v1208
        %v1353 = vpack.c.b16 %v1215, %v1209
        %v1354 = vpack.c.b16 %v1216, %v1210
        %v1355 = vpack.c.b16 %v1217, %v1211
        %v1356 = vpack.c.b16 %v1218, %v1212
        %v1357 = vpack.c.b16 %v1225, %v1219
        %v1358 = vpack.c.b16 %v1226, %v1220
        %v1359 = vpack.c.b16 %v1227, %v1221
        %v1360 = vpack.c.b16 %v1228, %v1222
        %v1361 = vpack.c.b16 %v1229, %v1223
        %v1362 = vpack.c.b16 %v1230, %v1224
        %v1363 = vpack.c.b16 %v1237, %v1231
        %v1364 = vpack.c.b16 %v1238, %v1232
        %v1365 = vpack.c.b16 %v1239, %v1233
        %v1366 = vpack.c.b16 %v1240, %v1234
        %v1367 = vpack.c.b16 %v1241, %v1235
        %v1368 = vpack.c.b16 %v1242, %v1236
        %v1369 = vpack.c.b16 %v1249, %v1243
        %v1370 = vpack.c.b16 %v1250, %v1244
        %v1371 = vpack.c.b16 %v1251, %v1245
        %v1372 = vpack.c.b16 %v1252, %v1246
        %v1373 = vpack.c.b16 %v1253, %v1247
        %v1374 = vpack.c.b16 %v1254, %v1248
        %v1375 = vpack.c.b16 %v1261, %v1255
        %v1376 = vpack.c.b16 %v1262, %v1256
        %v1377 = vpack.c.b16 %v1263, %v1257
        %v1378 = vpack.c.b16 %v1264, %v1258
        %v1379 = vpack.c.b16 %v1265, %v1259
        %v1380 = vpack.c.b16 %v1266, %v1260
        %v1381 = vpack.c.b16 %v1273, %v1267
        %v1382 = vpack.c.b16 %v1274, %v1268
        %v1383 = vpack.c.b16 %v1275, %v1269
        %v1384 = vpack.c.b16 %v1276, %v1270
        %v1385 = vpack.c.b16 %v1277, %v1271
        %v1386 = vpack.c.b16 %v1278, %v1272
        %v1387 = vpack.c.b16 %v1285, %v1279
        %v1388 = vpack.c.b16 %v1286, %v1280
        %v1389 = vpack.c.b16 %v1287, %v1281
        %v1390 = vpack.c.b16 %v1288, %v1282
        %v1391 = vpack.c.b16 %v1289, %v1283
        %v1392 = vpack.c.b16 %v1290, %v1284
        %v1393 = vpack.c.b16 %v1297, %v1291
        %v1394 = vpack.c.b16 %v1298, %v1292
        %v1395 = vpack.c.b16 %v1299, %v1293
        %v1396 = vpack.c.b16 %v1300, %v1294
        %v1397 = vpack.c.b16 %v1301, %v1295
        %v1398 = vpack.c.b16 %v1302, %v1296
        %1495 = vmatprep.subr.bf16.mxu0 %v1304
        %1496 = vmatpush1.bf16.msra.mxu0 %v1303
        %1497 = vmatprep.subr.bf16.mxu0 %v1310
        %1498 = vmatpush1.bf16.msra.mxu0 %v1309
        %1499 = vmatprep.subr.bf16.mxu0 %v1316
        %1500 = vmatpush1.bf16.msra.mxu0 %v1315
        %1501 = vmatprep.subr.bf16.mxu0 %v1322
        %1502 = vmatpush1.bf16.msra.mxu0 %v1321
        %1503 = vmatprep.subr.bf16.mxu0 %v1328
        %1504 = vmatpush1.bf16.msra.mxu0 %v1327
        %1505 = vmatprep.subr.bf16.mxu0 %v1334
        %1506 = vmatpush1.bf16.msra.mxu0 %v1333
        %1507 = vmatprep.subr.bf16.mxu0 %v1340
        %1508 = vmatpush1.bf16.msra.mxu0 %v1339
        %1509 = vmatprep.subr.bf16.mxu0 %v1346
        %1510 = vmatpush1.bf16.msra.mxu0 %v1345
        %1511 = vmatprep.subr.bf16.mxu0 %v1352
        %1512 = vmatpush1.bf16.msra.mxu0 %v1351
        %1513 = vmatprep.subr.bf16.mxu0 %v1358
        %1514 = vmatpush1.bf16.msra.mxu0 %v1357
        %1515 = vmatprep.subr.bf16.mxu0 %v1364
        %1516 = vmatpush1.bf16.msra.mxu0 %v1363
        %1517 = vmatprep.subr.bf16.mxu0 %v1370
        %1518 = vmatpush1.bf16.msra.mxu0 %v1369
        %1519 = vmatprep.subr.bf16.mxu0 %v1376
        %1520 = vmatpush1.bf16.msra.mxu0 %v1375
        %1521 = vmatprep.subr.bf16.mxu0 %v1382
        %1522 = vmatpush1.bf16.msra.mxu0 %v1381
        %1523 = vmatprep.subr.bf16.mxu0 %v1388
        %1524 = vmatpush1.bf16.msra.mxu0 %v1387
        %1525 = vmatprep.subr.bf16.mxu0 %v1394
        %1526 = vmatpush1.bf16.msra.mxu0 %v1393
        %1527 = vmatprep.mubr.bf16.mxu0 %v888
        %1528 = vmatmul.mubr.bf16.gmra.mrb[0].mxu0 %v887
        %v1529 = vpop.f32.mrb[0].mxu0
        %v1530 = vadd.f32 0.0, %v1529
        %v1531 = vpop.f32.mrb[0].mxu0
        %v1532 = vadd.f32 0.0, %v1531
        %v1533 = vpop.f32.mrb[0].mxu0
        %v1534 = vadd.f32 0.0, %v1533
        %v1535 = vpop.f32.mrb[0].mxu0
        %v1536 = vadd.f32 0.0, %v1535
        %1537 = vmatprep.mubr.bf16.mxu0 %v890
        %1538 = vmatmul.mubr.bf16.gmra.mrb[0].mxu0 %v889
        %v1539 = vpop.f32.mrb[0].mxu0
        %v1540 = vadd.f32 0.0, %v1539
        %v1541 = vpop.f32.mrb[0].mxu0
        %v1542 = vadd.f32 0.0, %v1541
        %v1543 = vpop.f32.mrb[0].mxu0
        %v1544 = vadd.f32 0.0, %v1543
        %v1545 = vpop.f32.mrb[0].mxu0
        %v1546 = vadd.f32 0.0, %v1545
        %1547 = vmatprep.mubr.bf16.mxu0 %v892
        %1548 = vmatmul.mubr.bf16.gmra.mrb[0].mxu0 %v891
        %v1549 = vpop.f32.mrb[0].mxu0
        %v1550 = vadd.f32 0.0, %v1549
        %v1551 = vpop.f32.mrb[0].mxu0
        %v1552 = vadd.f32 0.0, %v1551
        %v1553 = vpop.f32.mrb[0].mxu0
        %v1554 = vadd.f32 0.0, %v1553
        %v1555 = vpop.f32.mrb[0].mxu0
        %v1556 = vadd.f32 0.0, %v1555
        %1557 = vmatprep.mubr.bf16.mxu0 %v894
        %1558 = vmatmul.mubr.bf16.gmra.mrb[0].mxu0 %v893
        %v1559 = vpop.f32.mrb[0].mxu0
        %v1560 = vadd.f32 0.0, %v1559
        %v1561 = vpop.f32.mrb[0].mxu0
        %v1562 = vadd.f32 0.0, %v1561
        %v1563 = vpop.f32.mrb[0].mxu0
        %v1564 = vadd.f32 0.0, %v1563
        %v1565 = vpop.f32.mrb[0].mxu0
        %v1566 = vadd.f32 0.0, %v1565
        %1567 = vmatprep.mubr.bf16.mxu0 %v896
        %1568 = vmatmul.mubr.bf16.gmra.mrb[0].mxu0 %v895
        %v1569 = vpop.f32.mrb[0].mxu0
        %v1570 = vadd.f32 0.0, %v1569
        %v1571 = vpop.f32.mrb[0].mxu0
        %v1572 = vadd.f32 0.0, %v1571
        %v1573 = vpop.f32.mrb[0].mxu0
        %v1574 = vadd.f32 0.0, %v1573
        %v1575 = vpop.f32.mrb[0].mxu0
        %v1576 = vadd.f32 0.0, %v1575
        %1577 = vmatprep.mubr.bf16.mxu0 %v898
        %1578 = vmatmul.mubr.bf16.gmra.mrb[0].mxu0 %v897
        %v1579 = vpop.f32.mrb[0].mxu0
        %v1580 = vadd.f32 0.0, %v1579
        %v1581 = vpop.f32.mrb[0].mxu0
        %v1582 = vadd.f32 0.0, %v1581
        %v1583 = vpop.f32.mrb[0].mxu0
        %v1584 = vadd.f32 0.0, %v1583
        %v1585 = vpop.f32.mrb[0].mxu0
        %v1586 = vadd.f32 0.0, %v1585
        %1587 = vmatprep.mubr.bf16.mxu0 %v900
        %1588 = vmatmul.mubr.bf16.gmra.mrb[0].mxu0 %v899
        %v1589 = vpop.f32.mrb[0].mxu0
        %v1590 = vadd.f32 0.0, %v1589
        %v1591 = vpop.f32.mrb[0].mxu0
        %v1592 = vadd.f32 0.0, %v1591
        %v1593 = vpop.f32.mrb[0].mxu0
        %v1594 = vadd.f32 0.0, %v1593
        %v1595 = vpop.f32.mrb[0].mxu0
        %v1596 = vadd.f32 0.0, %v1595
        %1597 = vmatprep.mubr.bf16.mxu0 %v902
        %1598 = vmatmul.mubr.bf16.gmra.mrb[0].mxu0 %v901
        %v1599 = vpop.f32.mrb[0].mxu0
        %v1600 = vadd.f32 0.0, %v1599
        %v1601 = vpop.f32.mrb[0].mxu0
        %v1602 = vadd.f32 0.0, %v1601
        %v1603 = vpop.f32.mrb[0].mxu0
        %v1604 = vadd.f32 0.0, %v1603
        %v1605 = vpop.f32.mrb[0].mxu0
        %v1606 = vadd.f32 0.0, %v1605
        %1607 = vmatprep.mubr.bf16.mxu0 %v904
        %1608 = vmatmul.mubr.bf16.gmra.mrb[0].mxu0 %v903
        %v1609 = vpop.f32.mrb[0].mxu0
        %v1610 = vadd.f32 0.0, %v1609
        %v1611 = vpop.f32.mrb[0].mxu0
        %v1612 = vadd.f32 0.0, %v1611
        %v1613 = vpop.f32.mrb[0].mxu0
        %v1614 = vadd.f32 0.0, %v1613
        %v1615 = vpop.f32.mrb[0].mxu0
        %v1616 = vadd.f32 0.0, %v1615
        %1617 = vmatprep.mubr.bf16.mxu0 %v906
        %1618 = vmatmul.mubr.bf16.gmra.mrb[0].mxu0 %v905
        %v1619 = vpop.f32.mrb[0].mxu0
        %v1620 = vadd.f32 0.0, %v1619
        %v1621 = vpop.f32.mrb[0].mxu0
        %v1622 = vadd.f32 0.0, %v1621
        %v1623 = vpop.f32.mrb[0].mxu0
        %v1624 = vadd.f32 0.0, %v1623
        %v1625 = vpop.f32.mrb[0].mxu0
        %v1626 = vadd.f32 0.0, %v1625
        %1627 = vmatprep.mubr.bf16.mxu0 %v908
        %1628 = vmatmul.mubr.bf16.gmra.mrb[0].mxu0 %v907
        %v1629 = vpop.f32.mrb[0].mxu0
        %v1630 = vadd.f32 0.0, %v1629
        %v1631 = vpop.f32.mrb[0].mxu0
        %v1632 = vadd.f32 0.0, %v1631
        %v1633 = vpop.f32.mrb[0].mxu0
        %v1634 = vadd.f32 0.0, %v1633
        %v1635 = vpop.f32.mrb[0].mxu0
        %v1636 = vadd.f32 0.0, %v1635
        %1637 = vmatprep.mubr.bf16.mxu0 %v910
        %1638 = vmatmul.mubr.bf16.gmra.mrb[0].mxu0 %v909
        %v1639 = vpop.f32.mrb[0].mxu0
        %v1640 = vadd.f32 0.0, %v1639
        %v1641 = vpop.f32.mrb[0].mxu0
        %v1642 = vadd.f32 0.0, %v1641
        %v1643 = vpop.f32.mrb[0].mxu0
        %v1644 = vadd.f32 0.0, %v1643
        %v1645 = vpop.f32.mrb[0].mxu0
        %v1646 = vadd.f32 0.0, %v1645
        %1647 = vmatprep.mubr.bf16.mxu0 %v912
        %1648 = vmatmul.mubr.bf16.gmra.mrb[0].mxu0 %v911
        %v1649 = vpop.f32.mrb[0].mxu0
        %v1650 = vadd.f32 0.0, %v1649
        %v1651 = vpop.f32.mrb[0].mxu0
        %v1652 = vadd.f32 0.0, %v1651
        %v1653 = vpop.f32.mrb[0].mxu0
        %v1654 = vadd.f32 0.0, %v1653
        %v1655 = vpop.f32.mrb[0].mxu0
        %v1656 = vadd.f32 0.0, %v1655
        %1657 = vmatprep.mubr.bf16.mxu0 %v914
        %1658 = vmatmul.mubr.bf16.gmra.mrb[0].mxu0 %v913
        %v1659 = vpop.f32.mrb[0].mxu0
        %v1660 = vadd.f32 0.0, %v1659
        %v1661 = vpop.f32.mrb[0].mxu0
        %v1662 = vadd.f32 0.0, %v1661
        %v1663 = vpop.f32.mrb[0].mxu0
        %v1664 = vadd.f32 0.0, %v1663
        %v1665 = vpop.f32.mrb[0].mxu0
        %v1666 = vadd.f32 0.0, %v1665
        %1667 = vmatprep.mubr.bf16.mxu0 %v916
        %1668 = vmatmul.mubr.bf16.gmra.mrb[0].mxu0 %v915
        %v1669 = vpop.f32.mrb[0].mxu0
        %v1670 = vadd.f32 0.0, %v1669
        %v1671 = vpop.f32.mrb[0].mxu0
        %v1672 = vadd.f32 0.0, %v1671
        %v1673 = vpop.f32.mrb[0].mxu0
        %v1674 = vadd.f32 0.0, %v1673
        %v1675 = vpop.f32.mrb[0].mxu0
        %v1676 = vadd.f32 0.0, %v1675
        %1677 = vmatprep.mubr.bf16.mxu0 %v918
        %1678 = vmatmul.mubr.bf16.gmra.mrb[0].mxu0 %v917
        %v1679 = vpop.f32.mrb[0].mxu0
        %v1680 = vadd.f32 0.0, %v1679
        %v1681 = vpop.f32.mrb[0].mxu0
        %v1682 = vadd.f32 0.0, %v1681
        %v1683 = vpop.f32.mrb[0].mxu0
        %v1684 = vadd.f32 0.0, %v1683
        %v1685 = vpop.f32.mrb[0].mxu0
        %v1686 = vadd.f32 0.0, %v1685
        %1687 = vdwg.mxu0
        %1688 = vmatprep.subr.bf16.mxu0 %v1306
        %1689 = vmatpush1.bf16.msra.mxu0 %v1305
        %1690 = vmatprep.subr.bf16.mxu0 %v1312
        %1691 = vmatpush1.bf16.msra.mxu0 %v1311
        %1692 = vmatprep.subr.bf16.mxu0 %v1318
        %1693 = vmatpush1.bf16.msra.mxu0 %v1317
        %1694 = vmatprep.subr.bf16.mxu0 %v1324
        %1695 = vmatpush1.bf16.msra.mxu0 %v1323
        %1696 = vmatprep.subr.bf16.mxu0 %v1330
        %1697 = vmatpush1.bf16.msra.mxu0 %v1329
        %1698 = vmatprep.subr.bf16.mxu0 %v1336
        %1699 = vmatpush1.bf16.msra.mxu0 %v1335
        %1700 = vmatprep.subr.bf16.mxu0 %v1342
        %1701 = vmatpush1.bf16.msra.mxu0 %v1341
        %1702 = vmatprep.subr.bf16.mxu0 %v1348
        %1703 = vmatpush1.bf16.msra.mxu0 %v1347
        %1704 = vmatprep.subr.bf16.mxu0 %v1354
        %1705 = vmatpush1.bf16.msra.mxu0 %v1353
        %1706 = vmatprep.subr.bf16.mxu0 %v1360
        %1707 = vmatpush1.bf16.msra.mxu0 %v1359
        %1708 = vmatprep.subr.bf16.mxu0 %v1366
        %1709 = vmatpush1.bf16.msra.mxu0 %v1365
        %1710 = vmatprep.subr.bf16.mxu0 %v1372
        %1711 = vmatpush1.bf16.msra.mxu0 %v1371
        %1712 = vmatprep.subr.bf16.mxu0 %v1378
        %1713 = vmatpush1.bf16.msra.mxu0 %v1377
        %1714 = vmatprep.subr.bf16.mxu0 %v1384
        %1715 = vmatpush1.bf16.msra.mxu0 %v1383
        %1716 = vmatprep.subr.bf16.mxu0 %v1390
        %1717 = vmatpush1.bf16.msra.mxu0 %v1389
        %1718 = vmatprep.subr.bf16.mxu0 %v1396
        %1719 = vmatpush1.bf16.msra.mxu0 %v1395
        %1720 = vmatprep.mubr.bf16.mxu0 %v888
        %1721 = vmatmul.mubr.bf16.gmra.mrb[0].mxu0 %v887
        %v1722 = vpop.f32.mrb[0].mxu0
        %v1723 = vadd.f32 0.0, %v1722
        %v1724 = vpop.f32.mrb[0].mxu0
        %v1725 = vadd.f32 0.0, %v1724
        %v1726 = vpop.f32.mrb[0].mxu0
        %v1727 = vadd.f32 0.0, %v1726
        %v1728 = vpop.f32.mrb[0].mxu0
        %v1729 = vadd.f32 0.0, %v1728
        %1730 = vmatprep.mubr.bf16.mxu0 %v890
        %1731 = vmatmul.mubr.bf16.gmra.mrb[0].mxu0 %v889
        %v1732 = vpop.f32.mrb[0].mxu0
        %v1733 = vadd.f32 0.0, %v1732
        %v1734 = vpop.f32.mrb[0].mxu0
        %v1735 = vadd.f32 0.0, %v1734
        %v1736 = vpop.f32.mrb[0].mxu0
        %v1737 = vadd.f32 0.0, %v1736
        %v1738 = vpop.f32.mrb[0].mxu0
        %v1739 = vadd.f32 0.0, %v1738
        %1740 = vmatprep.mubr.bf16.mxu0 %v892
        %1741 = vmatmul.mubr.bf16.gmra.mrb[0].mxu0 %v891
        %v1742 = vpop.f32.mrb[0].mxu0
        %v1743 = vadd.f32 0.0, %v1742
        %v1744 = vpop.f32.mrb[0].mxu0
        %v1745 = vadd.f32 0.0, %v1744
        %v1746 = vpop.f32.mrb[0].mxu0
        %v1747 = vadd.f32 0.0, %v1746
        %v1748 = vpop.f32.mrb[0].mxu0
        %v1749 = vadd.f32 0.0, %v1748
        %1750 = vmatprep.mubr.bf16.mxu0 %v894
        %1751 = vmatmul.mubr.bf16.gmra.mrb[0].mxu0 %v893
        %v1752 = vpop.f32.mrb[0].mxu0
        %v1753 = vadd.f32 0.0, %v1752
        %v1754 = vpop.f32.mrb[0].mxu0
        %v1755 = vadd.f32 0.0, %v1754
        %v1756 = vpop.f32.mrb[0].mxu0
        %v1757 = vadd.f32 0.0, %v1756
        %v1758 = vpop.f32.mrb[0].mxu0
        %v1759 = vadd.f32 0.0, %v1758
        %1760 = vmatprep.mubr.bf16.mxu0 %v896
        %1761 = vmatmul.mubr.bf16.gmra.mrb[0].mxu0 %v895
        %v1762 = vpop.f32.mrb[0].mxu0
        %v1763 = vadd.f32 0.0, %v1762
        %v1764 = vpop.f32.mrb[0].mxu0
        %v1765 = vadd.f32 0.0, %v1764
        %v1766 = vpop.f32.mrb[0].mxu0
        %v1767 = vadd.f32 0.0, %v1766
        %v1768 = vpop.f32.mrb[0].mxu0
        %v1769 = vadd.f32 0.0, %v1768
        %1770 = vmatprep.mubr.bf16.mxu0 %v898
        %1771 = vmatmul.mubr.bf16.gmra.mrb[0].mxu0 %v897
        %v1772 = vpop.f32.mrb[0].mxu0
        %v1773 = vadd.f32 0.0, %v1772
        %v1774 = vpop.f32.mrb[0].mxu0
        %v1775 = vadd.f32 0.0, %v1774
        %v1776 = vpop.f32.mrb[0].mxu0
        %v1777 = vadd.f32 0.0, %v1776
        %v1778 = vpop.f32.mrb[0].mxu0
        %v1779 = vadd.f32 0.0, %v1778
        %1780 = vmatprep.mubr.bf16.mxu0 %v900
        %1781 = vmatmul.mubr.bf16.gmra.mrb[0].mxu0 %v899
        %v1782 = vpop.f32.mrb[0].mxu0
        %v1783 = vadd.f32 0.0, %v1782
        %v1784 = vpop.f32.mrb[0].mxu0
        %v1785 = vadd.f32 0.0, %v1784
        %v1786 = vpop.f32.mrb[0].mxu0
        %v1787 = vadd.f32 0.0, %v1786
        %v1788 = vpop.f32.mrb[0].mxu0
        %v1789 = vadd.f32 0.0, %v1788
        %1790 = vmatprep.mubr.bf16.mxu0 %v902
        %1791 = vmatmul.mubr.bf16.gmra.mrb[0].mxu0 %v901
        %v1792 = vpop.f32.mrb[0].mxu0
        %v1793 = vadd.f32 0.0, %v1792
        %v1794 = vpop.f32.mrb[0].mxu0
        %v1795 = vadd.f32 0.0, %v1794
        %v1796 = vpop.f32.mrb[0].mxu0
        %v1797 = vadd.f32 0.0, %v1796
        %v1798 = vpop.f32.mrb[0].mxu0
        %v1799 = vadd.f32 0.0, %v1798
        %1800 = vmatprep.mubr.bf16.mxu0 %v904
        %1801 = vmatmul.mubr.bf16.gmra.mrb[0].mxu0 %v903
        %v1802 = vpop.f32.mrb[0].mxu0
        %v1803 = vadd.f32 0.0, %v1802
        %v1804 = vpop.f32.mrb[0].mxu0
        %v1805 = vadd.f32 0.0, %v1804
        %v1806 = vpop.f32.mrb[0].mxu0
        %v1807 = vadd.f32 0.0, %v1806
        %v1808 = vpop.f32.mrb[0].mxu0
        %v1809 = vadd.f32 0.0, %v1808
        %1810 = vmatprep.mubr.bf16.mxu0 %v906
        %1811 = vmatmul.mubr.bf16.gmra.mrb[0].mxu0 %v905
        %v1812 = vpop.f32.mrb[0].mxu0
        %v1813 = vadd.f32 0.0, %v1812
        %v1814 = vpop.f32.mrb[0].mxu0
        %v1815 = vadd.f32 0.0, %v1814
        %v1816 = vpop.f32.mrb[0].mxu0
        %v1817 = vadd.f32 0.0, %v1816
        %v1818 = vpop.f32.mrb[0].mxu0
        %v1819 = vadd.f32 0.0, %v1818
        %1820 = vmatprep.mubr.bf16.mxu0 %v908
        %1821 = vmatmul.mubr.bf16.gmra.mrb[0].mxu0 %v907
        %v1822 = vpop.f32.mrb[0].mxu0
        %v1823 = vadd.f32 0.0, %v1822
        %v1824 = vpop.f32.mrb[0].mxu0
        %v1825 = vadd.f32 0.0, %v1824
        %v1826 = vpop.f32.mrb[0].mxu0
        %v1827 = vadd.f32 0.0, %v1826
        %v1828 = vpop.f32.mrb[0].mxu0
        %v1829 = vadd.f32 0.0, %v1828
        %1830 = vmatprep.mubr.bf16.mxu0 %v910
        %1831 = vmatmul.mubr.bf16.gmra.mrb[0].mxu0 %v909
        %v1832 = vpop.f32.mrb[0].mxu0
        %v1833 = vadd.f32 0.0, %v1832
        %v1834 = vpop.f32.mrb[0].mxu0
        %v1835 = vadd.f32 0.0, %v1834
        %v1836 = vpop.f32.mrb[0].mxu0
        %v1837 = vadd.f32 0.0, %v1836
        %v1838 = vpop.f32.mrb[0].mxu0
        %v1839 = vadd.f32 0.0, %v1838
        %1840 = vmatprep.mubr.bf16.mxu0 %v912
        %1841 = vmatmul.mubr.bf16.gmra.mrb[0].mxu0 %v911
        %v1842 = vpop.f32.mrb[0].mxu0
        %v1843 = vadd.f32 0.0, %v1842
        %v1844 = vpop.f32.mrb[0].mxu0
        %v1845 = vadd.f32 0.0, %v1844
        %v1846 = vpop.f32.mrb[0].mxu0
        %v1847 = vadd.f32 0.0, %v1846
        %v1848 = vpop.f32.mrb[0].mxu0
        %v1849 = vadd.f32 0.0, %v1848
        %1850 = vmatprep.mubr.bf16.mxu0 %v914
        %1851 = vmatmul.mubr.bf16.gmra.mrb[0].mxu0 %v913
        %v1852 = vpop.f32.mrb[0].mxu0
        %v1853 = vadd.f32 0.0, %v1852
        %v1854 = vpop.f32.mrb[0].mxu0
        %v1855 = vadd.f32 0.0, %v1854
        %v1856 = vpop.f32.mrb[0].mxu0
        %v1857 = vadd.f32 0.0, %v1856
        %v1858 = vpop.f32.mrb[0].mxu0
        %v1859 = vadd.f32 0.0, %v1858
        %1860 = vmatprep.mubr.bf16.mxu0 %v916
        %1861 = vmatmul.mubr.bf16.gmra.mrb[0].mxu0 %v915
        %v1862 = vpop.f32.mrb[0].mxu0
        %v1863 = vadd.f32 0.0, %v1862
        %v1864 = vpop.f32.mrb[0].mxu0
        %v1865 = vadd.f32 0.0, %v1864
        %v1866 = vpop.f32.mrb[0].mxu0
        %v1867 = vadd.f32 0.0, %v1866
        %v1868 = vpop.f32.mrb[0].mxu0
        %v1869 = vadd.f32 0.0, %v1868
        %1870 = vmatprep.mubr.bf16.mxu0 %v918
        %1871 = vmatmul.mubr.bf16.gmra.mrb[0].mxu0 %v917
        %v1872 = vpop.f32.mrb[0].mxu0
        %v1873 = vadd.f32 0.0, %v1872
        %v1874 = vpop.f32.mrb[0].mxu0
        %v1875 = vadd.f32 0.0, %v1874
        %v1876 = vpop.f32.mrb[0].mxu0
        %v1877 = vadd.f32 0.0, %v1876
        %v1878 = vpop.f32.mrb[0].mxu0
        %v1879 = vadd.f32 0.0, %v1878
        %1880 = vdwg.mxu0
        %1881 = vmatprep.subr.bf16.mxu0 %v1308
        %1882 = vmatpush1.bf16.msra.mxu0 %v1307
        %1883 = vmatprep.subr.bf16.mxu0 %v1314
        %1884 = vmatpush1.bf16.msra.mxu0 %v1313
        %1885 = vmatprep.subr.bf16.mxu0 %v1320
        %1886 = vmatpush1.bf16.msra.mxu0 %v1319
        %1887 = vmatprep.subr.bf16.mxu0 %v1326
        %1888 = vmatpush1.bf16.msra.mxu0 %v1325
        %1889 = vmatprep.subr.bf16.mxu0 %v1332
        %1890 = vmatpush1.bf16.msra.mxu0 %v1331
        %1891 = vmatprep.subr.bf16.mxu0 %v1338
        %1892 = vmatpush1.bf16.msra.mxu0 %v1337
        %1893 = vmatprep.subr.bf16.mxu0 %v1344
        %1894 = vmatpush1.bf16.msra.mxu0 %v1343
        %1895 = vmatprep.subr.bf16.mxu0 %v1350
        %1896 = vmatpush1.bf16.msra.mxu0 %v1349
        %1897 = vmatprep.subr.bf16.mxu0 %v1356
        %1898 = vmatpush1.bf16.msra.mxu0 %v1355
        %1899 = vmatprep.subr.bf16.mxu0 %v1362
        %1900 = vmatpush1.bf16.msra.mxu0 %v1361
        %1901 = vmatprep.subr.bf16.mxu0 %v1368
        %1902 = vmatpush1.bf16.msra.mxu0 %v1367
        %1903 = vmatprep.subr.bf16.mxu0 %v1374
        %1904 = vmatpush1.bf16.msra.mxu0 %v1373
        %1905 = vmatprep.subr.bf16.mxu0 %v1380
        %1906 = vmatpush1.bf16.msra.mxu0 %v1379
        %1907 = vmatprep.subr.bf16.mxu0 %v1386
        %1908 = vmatpush1.bf16.msra.mxu0 %v1385
        %1909 = vmatprep.subr.bf16.mxu0 %v1392
        %1910 = vmatpush1.bf16.msra.mxu0 %v1391
        %1911 = vmatprep.subr.bf16.mxu0 %v1398
        %1912 = vmatpush1.bf16.msra.mxu0 %v1397
        %1913 = vmatprep.mubr.bf16.mxu0 %v888
        %1914 = vmatmul.mubr.bf16.gmra.mrb[0].mxu0 %v887
        %v1915 = vpop.f32.mrb[0].mxu0
        %v1916 = vadd.f32 0.0, %v1915
        %v1917 = vpop.f32.mrb[0].mxu0
        %v1918 = vadd.f32 0.0, %v1917
        %v1919 = vpop.f32.mrb[0].mxu0
        %v1920 = vadd.f32 0.0, %v1919
        %v1921 = vpop.f32.mrb[0].mxu0
        %v1922 = vadd.f32 0.0, %v1921
        %1923 = vmatprep.mubr.bf16.mxu0 %v890
        %1924 = vmatmul.mubr.bf16.gmra.mrb[0].mxu0 %v889
        %v1925 = vpop.f32.mrb[0].mxu0
        %v1926 = vadd.f32 0.0, %v1925
        %v1927 = vpop.f32.mrb[0].mxu0
        %v1928 = vadd.f32 0.0, %v1927
        %v1929 = vpop.f32.mrb[0].mxu0
        %v1930 = vadd.f32 0.0, %v1929
        %v1931 = vpop.f32.mrb[0].mxu0
        %v1932 = vadd.f32 0.0, %v1931
        %1933 = vmatprep.mubr.bf16.mxu0 %v892
        %1934 = vmatmul.mubr.bf16.gmra.mrb[0].mxu0 %v891
        %v1935 = vpop.f32.mrb[0].mxu0
        %v1936 = vadd.f32 0.0, %v1935
        %v1937 = vpop.f32.mrb[0].mxu0
        %v1938 = vadd.f32 0.0, %v1937
        %v1939 = vpop.f32.mrb[0].mxu0
        %v1940 = vadd.f32 0.0, %v1939
        %v1941 = vpop.f32.mrb[0].mxu0
        %v1942 = vadd.f32 0.0, %v1941
        %1943 = vmatprep.mubr.bf16.mxu0 %v894
        %1944 = vmatmul.mubr.bf16.gmra.mrb[0].mxu0 %v893
        %v1945 = vpop.f32.mrb[0].mxu0
        %v1946 = vadd.f32 0.0, %v1945
        %v1947 = vpop.f32.mrb[0].mxu0
        %v1948 = vadd.f32 0.0, %v1947
        %v1949 = vpop.f32.mrb[0].mxu0
        %v1950 = vadd.f32 0.0, %v1949
        %v1951 = vpop.f32.mrb[0].mxu0
        %v1952 = vadd.f32 0.0, %v1951
        %1953 = vmatprep.mubr.bf16.mxu0 %v896
        %1954 = vmatmul.mubr.bf16.gmra.mrb[0].mxu0 %v895
        %v1955 = vpop.f32.mrb[0].mxu0
        %v1956 = vadd.f32 0.0, %v1955
        %v1957 = vpop.f32.mrb[0].mxu0
        %v1958 = vadd.f32 0.0, %v1957
        %v1959 = vpop.f32.mrb[0].mxu0
        %v1960 = vadd.f32 0.0, %v1959
        %v1961 = vpop.f32.mrb[0].mxu0
        %v1962 = vadd.f32 0.0, %v1961
        %1963 = vmatprep.mubr.bf16.mxu0 %v898
        %1964 = vmatmul.mubr.bf16.gmra.mrb[0].mxu0 %v897
        %v1965 = vpop.f32.mrb[0].mxu0
        %v1966 = vadd.f32 0.0, %v1965
        %v1967 = vpop.f32.mrb[0].mxu0
        %v1968 = vadd.f32 0.0, %v1967
        %v1969 = vpop.f32.mrb[0].mxu0
        %v1970 = vadd.f32 0.0, %v1969
        %v1971 = vpop.f32.mrb[0].mxu0
        %v1972 = vadd.f32 0.0, %v1971
        %1973 = vmatprep.mubr.bf16.mxu0 %v900
        %1974 = vmatmul.mubr.bf16.gmra.mrb[0].mxu0 %v899
        %v1975 = vpop.f32.mrb[0].mxu0
        %v1976 = vadd.f32 0.0, %v1975
        %v1977 = vpop.f32.mrb[0].mxu0
        %v1978 = vadd.f32 0.0, %v1977
        %v1979 = vpop.f32.mrb[0].mxu0
        %v1980 = vadd.f32 0.0, %v1979
        %v1981 = vpop.f32.mrb[0].mxu0
        %v1982 = vadd.f32 0.0, %v1981
        %1983 = vmatprep.mubr.bf16.mxu0 %v902
        %1984 = vmatmul.mubr.bf16.gmra.mrb[0].mxu0 %v901
        %v1985 = vpop.f32.mrb[0].mxu0
        %v1986 = vadd.f32 0.0, %v1985
        %v1987 = vpop.f32.mrb[0].mxu0
        %v1988 = vadd.f32 0.0, %v1987
        %v1989 = vpop.f32.mrb[0].mxu0
        %v1990 = vadd.f32 0.0, %v1989
        %v1991 = vpop.f32.mrb[0].mxu0
        %v1992 = vadd.f32 0.0, %v1991
        %1993 = vmatprep.mubr.bf16.mxu0 %v904
        %1994 = vmatmul.mubr.bf16.gmra.mrb[0].mxu0 %v903
        %v1995 = vpop.f32.mrb[0].mxu0
        %v1996 = vadd.f32 0.0, %v1995
        %v1997 = vpop.f32.mrb[0].mxu0
        %v1998 = vadd.f32 0.0, %v1997
        %v1999 = vpop.f32.mrb[0].mxu0
        %v2000 = vadd.f32 0.0, %v1999
        %v2001 = vpop.f32.mrb[0].mxu0
        %v2002 = vadd.f32 0.0, %v2001
        %2003 = vmatprep.mubr.bf16.mxu0 %v906
        %2004 = vmatmul.mubr.bf16.gmra.mrb[0].mxu0 %v905
        %v2005 = vpop.f32.mrb[0].mxu0
        %v2006 = vadd.f32 0.0, %v2005
        %v2007 = vpop.f32.mrb[0].mxu0
        %v2008 = vadd.f32 0.0, %v2007
        %v2009 = vpop.f32.mrb[0].mxu0
        %v2010 = vadd.f32 0.0, %v2009
        %v2011 = vpop.f32.mrb[0].mxu0
        %v2012 = vadd.f32 0.0, %v2011
        %2013 = vmatprep.mubr.bf16.mxu0 %v908
        %2014 = vmatmul.mubr.bf16.gmra.mrb[0].mxu0 %v907
        %v2015 = vpop.f32.mrb[0].mxu0
        %v2016 = vadd.f32 0.0, %v2015
        %v2017 = vpop.f32.mrb[0].mxu0
        %v2018 = vadd.f32 0.0, %v2017
        %v2019 = vpop.f32.mrb[0].mxu0
        %v2020 = vadd.f32 0.0, %v2019
        %v2021 = vpop.f32.mrb[0].mxu0
        %v2022 = vadd.f32 0.0, %v2021
        %2023 = vmatprep.mubr.bf16.mxu0 %v910
        %2024 = vmatmul.mubr.bf16.gmra.mrb[0].mxu0 %v909
        %v2025 = vpop.f32.mrb[0].mxu0
        %v2026 = vadd.f32 0.0, %v2025
        %v2027 = vpop.f32.mrb[0].mxu0
        %v2028 = vadd.f32 0.0, %v2027
        %v2029 = vpop.f32.mrb[0].mxu0
        %v2030 = vadd.f32 0.0, %v2029
        %v2031 = vpop.f32.mrb[0].mxu0
        %v2032 = vadd.f32 0.0, %v2031
        %2033 = vmatprep.mubr.bf16.mxu0 %v912
        %2034 = vmatmul.mubr.bf16.gmra.mrb[0].mxu0 %v911
        %v2035 = vpop.f32.mrb[0].mxu0
        %v2036 = vadd.f32 0.0, %v2035
        %v2037 = vpop.f32.mrb[0].mxu0
        %v2038 = vadd.f32 0.0, %v2037
        %v2039 = vpop.f32.mrb[0].mxu0
        %v2040 = vadd.f32 0.0, %v2039
        %v2041 = vpop.f32.mrb[0].mxu0
        %v2042 = vadd.f32 0.0, %v2041
        %2043 = vmatprep.mubr.bf16.mxu0 %v914
        %2044 = vmatmul.mubr.bf16.gmra.mrb[0].mxu0 %v913
        %v2045 = vpop.f32.mrb[0].mxu0
        %v2046 = vadd.f32 0.0, %v2045
        %v2047 = vpop.f32.mrb[0].mxu0
        %v2048 = vadd.f32 0.0, %v2047
        %v2049 = vpop.f32.mrb[0].mxu0
        %v2050 = vadd.f32 0.0, %v2049
        %v2051 = vpop.f32.mrb[0].mxu0
        %v2052 = vadd.f32 0.0, %v2051
        %2053 = vmatprep.mubr.bf16.mxu0 %v916
        %2054 = vmatmul.mubr.bf16.gmra.mrb[0].mxu0 %v915
        %v2055 = vpop.f32.mrb[0].mxu0
        %v2056 = vadd.f32 0.0, %v2055
        %v2057 = vpop.f32.mrb[0].mxu0
        %v2058 = vadd.f32 0.0, %v2057
        %v2059 = vpop.f32.mrb[0].mxu0
        %v2060 = vadd.f32 0.0, %v2059
        %v2061 = vpop.f32.mrb[0].mxu0
        %v2062 = vadd.f32 0.0, %v2061
        %2063 = vmatprep.mubr.bf16.mxu0 %v918
        %2064 = vmatmul.mubr.bf16.gmra.mrb[0].mxu0 %v917
        %v2065 = vpop.f32.mrb[0].mxu0
        %v2066 = vadd.f32 0.0, %v2065
        %v2067 = vpop.f32.mrb[0].mxu0
        %v2068 = vadd.f32 0.0, %v2067
        %v2069 = vpop.f32.mrb[0].mxu0
        %v2070 = vadd.f32 0.0, %v2069
        %v2071 = vpop.f32.mrb[0].mxu0
        %v2072 = vadd.f32 0.0, %v2071
        %2073 = vdwg.mxu0
        %v2074 = vld [vmem:[#allocation8] sm:$0x1]
        %v2075 = vld [vmem:[#allocation10] sm:$0x1]
        %v2076 = vmul.f32 %v1530, %v1530
        %v2077 = vmul.f32 %v1534, %v1534
        %v2078 = vmul.f32 %v1540, %v1540
        %v2079 = vmul.f32 %v1544, %v1544
        %v2080 = vmul.f32 %v1550, %v1550
        %v2081 = vmul.f32 %v1554, %v1554
        %v2082 = vmul.f32 %v1560, %v1560
        %v2083 = vmul.f32 %v1564, %v1564
        %v2084 = vmul.f32 %v1570, %v1570
        %v2085 = vmul.f32 %v1574, %v1574
        %v2086 = vmul.f32 %v1580, %v1580
        %v2087 = vmul.f32 %v1584, %v1584
        %v2088 = vmul.f32 %v1590, %v1590
        %v2089 = vmul.f32 %v1594, %v1594
        %v2090 = vmul.f32 %v1600, %v1600
        %v2091 = vmul.f32 %v1604, %v1604
        %v2092 = vmul.f32 %v1610, %v1610
        %v2093 = vmul.f32 %v1614, %v1614
        %v2094 = vmul.f32 %v1620, %v1620
        %v2095 = vmul.f32 %v1624, %v1624
        %v2096 = vmul.f32 %v1630, %v1630
        %v2097 = vmul.f32 %v1634, %v1634
        %v2098 = vmul.f32 %v1640, %v1640
        %v2099 = vmul.f32 %v1644, %v1644
        %v2100 = vmul.f32 %v1650, %v1650
        %v2101 = vmul.f32 %v1654, %v1654
        %v2102 = vmul.f32 %v1660, %v1660
        %v2103 = vmul.f32 %v1664, %v1664
        %v2104 = vmul.f32 %v1670, %v1670
        %v2105 = vmul.f32 %v1674, %v1674
        %v2106 = vmul.f32 %v1680, %v1680
        %v2107 = vmul.f32 %v1684, %v1684
        %2108 = vadd.xlane.f32.xlu0 %v2076
        %v2109 = vpop.xlane.xlu0 %2108
        %2110 = vadd.xlane.f32.xlu0 %v2077
        %v2111 = vpop.xlane.xlu0 %2110
        %2112 = vadd.xlane.f32.xlu0 %v2078
        %v2113 = vpop.xlane.xlu0 %2112
        %2114 = vadd.xlane.f32.xlu0 %v2079
        %v2115 = vpop.xlane.xlu0 %2114
        %2116 = vadd.xlane.f32.xlu0 %v2080
        %v2117 = vpop.xlane.xlu0 %2116
        %2118 = vadd.xlane.f32.xlu0 %v2081
        %v2119 = vpop.xlane.xlu0 %2118
        %2120 = vadd.xlane.f32.xlu0 %v2082
        %v2121 = vpop.xlane.xlu0 %2120
        %2122 = vadd.xlane.f32.xlu0 %v2083
        %v2123 = vpop.xlane.xlu0 %2122
        %2124 = vadd.xlane.f32.xlu0 %v2084
        %v2125 = vpop.xlane.xlu0 %2124
        %2126 = vadd.xlane.f32.xlu0 %v2085
        %v2127 = vpop.xlane.xlu0 %2126
        %2128 = vadd.xlane.f32.xlu0 %v2086
        %v2129 = vpop.xlane.xlu0 %2128
        %2130 = vadd.xlane.f32.xlu0 %v2087
        %v2131 = vpop.xlane.xlu0 %2130
        %2132 = vadd.xlane.f32.xlu0 %v2088
        %v2133 = vpop.xlane.xlu0 %2132
        %2134 = vadd.xlane.f32.xlu0 %v2089
        %v2135 = vpop.xlane.xlu0 %2134
        %2136 = vadd.xlane.f32.xlu0 %v2090
        %v2137 = vpop.xlane.xlu0 %2136
        %2138 = vadd.xlane.f32.xlu0 %v2091
        %v2139 = vpop.xlane.xlu0 %2138
        %2140 = vadd.xlane.f32.xlu0 %v2092
        %v2141 = vpop.xlane.xlu0 %2140
        %2142 = vadd.xlane.f32.xlu0 %v2093
        %v2143 = vpop.xlane.xlu0 %2142
        %2144 = vadd.xlane.f32.xlu0 %v2094
        %v2145 = vpop.xlane.xlu0 %2144
        %2146 = vadd.xlane.f32.xlu0 %v2095
        %v2147 = vpop.xlane.xlu0 %2146
        %2148 = vadd.xlane.f32.xlu0 %v2096
        %v2149 = vpop.xlane.xlu0 %2148
        %2150 = vadd.xlane.f32.xlu0 %v2097
        %v2151 = vpop.xlane.xlu0 %2150
        %2152 = vadd.xlane.f32.xlu0 %v2098
        %v2153 = vpop.xlane.xlu0 %2152
        %2154 = vadd.xlane.f32.xlu0 %v2099
        %v2155 = vpop.xlane.xlu0 %2154
        %2156 = vadd.xlane.f32.xlu0 %v2100
        %v2157 = vpop.xlane.xlu0 %2156
        %2158 = vadd.xlane.f32.xlu0 %v2101
        %v2159 = vpop.xlane.xlu0 %2158
        %2160 = vadd.xlane.f32.xlu0 %v2102
        %v2161 = vpop.xlane.xlu0 %2160
        %2162 = vadd.xlane.f32.xlu0 %v2103
        %v2163 = vpop.xlane.xlu0 %2162
        %2164 = vadd.xlane.f32.xlu0 %v2104
        %v2165 = vpop.xlane.xlu0 %2164
        %2166 = vadd.xlane.f32.xlu0 %v2105
        %v2167 = vpop.xlane.xlu0 %2166
        %2168 = vadd.xlane.f32.xlu0 %v2106
        %v2169 = vpop.xlane.xlu0 %2168
        %2170 = vadd.xlane.f32.xlu0 %v2107
        %v2171 = vpop.xlane.xlu0 %2170
        %v2172 = vrcp.pop 128.0
        %v2173 = vmul.f32 %v2109, %v2172
        %v2174 = vmul.f32 %v2111, %v2172
        %v2175 = vmul.f32 %v2113, %v2172
        %v2176 = vmul.f32 %v2115, %v2172
        %v2177 = vmul.f32 %v2117, %v2172
        %v2178 = vmul.f32 %v2119, %v2172
        %v2179 = vmul.f32 %v2121, %v2172
        %v2180 = vmul.f32 %v2123, %v2172
        %v2181 = vmul.f32 %v2125, %v2172
        %v2182 = vmul.f32 %v2127, %v2172
        %v2183 = vmul.f32 %v2129, %v2172
        %v2184 = vmul.f32 %v2131, %v2172
        %v2185 = vmul.f32 %v2133, %v2172
        %v2186 = vmul.f32 %v2135, %v2172
        %v2187 = vmul.f32 %v2137, %v2172
        %v2188 = vmul.f32 %v2139, %v2172
        %v2189 = vmul.f32 %v2141, %v2172
        %v2190 = vmul.f32 %v2143, %v2172
        %v2191 = vmul.f32 %v2145, %v2172
        %v2192 = vmul.f32 %v2147, %v2172
        %v2193 = vmul.f32 %v2149, %v2172
        %v2194 = vmul.f32 %v2151, %v2172
        %v2195 = vmul.f32 %v2153, %v2172
        %v2196 = vmul.f32 %v2155, %v2172
        %v2197 = vmul.f32 %v2157, %v2172
        %v2198 = vmul.f32 %v2159, %v2172
        %v2199 = vmul.f32 %v2161, %v2172
        %v2200 = vmul.f32 %v2163, %v2172
        %v2201 = vmul.f32 %v2165, %v2172
        %v2202 = vmul.f32 %v2167, %v2172
        %v2203 = vmul.f32 %v2169, %v2172
        %v2204 = vmul.f32 %v2171, %v2172
        %v2205 = vadd.f32 %v2173, 1e-06
        %v2206 = vadd.f32 %v2174, 1e-06
        %v2207 = vadd.f32 %v2175, 1e-06
        %v2208 = vadd.f32 %v2176, 1e-06
        %v2209 = vadd.f32 %v2177, 1e-06
        %v2210 = vadd.f32 %v2178, 1e-06
        %v2211 = vadd.f32 %v2179, 1e-06
        %v2212 = vadd.f32 %v2180, 1e-06
        %v2213 = vadd.f32 %v2181, 1e-06
        %v2214 = vadd.f32 %v2182, 1e-06
        %v2215 = vadd.f32 %v2183, 1e-06
        %v2216 = vadd.f32 %v2184, 1e-06
        %v2217 = vadd.f32 %v2185, 1e-06
        %v2218 = vadd.f32 %v2186, 1e-06
        %v2219 = vadd.f32 %v2187, 1e-06
        %v2220 = vadd.f32 %v2188, 1e-06
        %v2221 = vadd.f32 %v2189, 1e-06
        %v2222 = vadd.f32 %v2190, 1e-06
        %v2223 = vadd.f32 %v2191, 1e-06
        %v2224 = vadd.f32 %v2192, 1e-06
        %v2225 = vadd.f32 %v2193, 1e-06
        %v2226 = vadd.f32 %v2194, 1e-06
        %v2227 = vadd.f32 %v2195, 1e-06
        %v2228 = vadd.f32 %v2196, 1e-06
        %v2229 = vadd.f32 %v2197, 1e-06
        %v2230 = vadd.f32 %v2198, 1e-06
        %v2231 = vadd.f32 %v2199, 1e-06
        %v2232 = vadd.f32 %v2200, 1e-06
        %v2233 = vadd.f32 %v2201, 1e-06
        %v2234 = vadd.f32 %v2202, 1e-06
        %v2235 = vadd.f32 %v2203, 1e-06
        %v2236 = vadd.f32 %v2204, 1e-06
        %v2237 = vrsqrt.pop %v2205
        %v2238 = vrsqrt.pop %v2206
        %v2239 = vrsqrt.pop %v2207
        %v2240 = vrsqrt.pop %v2208
        %v2241 = vrsqrt.pop %v2209
        %v2242 = vrsqrt.pop %v2210
        %v2243 = vrsqrt.pop %v2211
        %v2244 = vrsqrt.pop %v2212
        %v2245 = vrsqrt.pop %v2213
        %v2246 = vrsqrt.pop %v2214
        %v2247 = vrsqrt.pop %v2215
        %v2248 = vrsqrt.pop %v2216
        %v2249 = vrsqrt.pop %v2217
        %v2250 = vrsqrt.pop %v2218
        %v2251 = vrsqrt.pop %v2219
        %v2252 = vrsqrt.pop %v2220
        %v2253 = vrsqrt.pop %v2221
        %v2254 = vrsqrt.pop %v2222
        %v2255 = vrsqrt.pop %v2223
        %v2256 = vrsqrt.pop %v2224
        %v2257 = vrsqrt.pop %v2225
        %v2258 = vrsqrt.pop %v2226
        %v2259 = vrsqrt.pop %v2227
        %v2260 = vrsqrt.pop %v2228
        %v2261 = vrsqrt.pop %v2229
        %v2262 = vrsqrt.pop %v2230
        %v2263 = vrsqrt.pop %v2231
        %v2264 = vrsqrt.pop %v2232
        %v2265 = vrsqrt.pop %v2233
        %v2266 = vrsqrt.pop %v2234
        %v2267 = vrsqrt.pop %v2235
        %v2268 = vrsqrt.pop %v2236
        %v2269 = vmul.f32 %v1530, %v2237
        %v2270 = vmul.f32 %v1534, %v2238
        %v2271 = vmul.f32 %v1540, %v2239
        %v2272 = vmul.f32 %v1544, %v2240
        %v2273 = vmul.f32 %v1550, %v2241
        %v2274 = vmul.f32 %v1554, %v2242
        %v2275 = vmul.f32 %v1560, %v2243
        %v2276 = vmul.f32 %v1564, %v2244
        %v2277 = vmul.f32 %v1570, %v2245
        %v2278 = vmul.f32 %v1574, %v2246
        %v2279 = vmul.f32 %v1580, %v2247
        %v2280 = vmul.f32 %v1584, %v2248
        %v2281 = vmul.f32 %v1590, %v2249
        %v2282 = vmul.f32 %v1594, %v2250
        %v2283 = vmul.f32 %v1600, %v2251
        %v2284 = vmul.f32 %v1604, %v2252
        %v2285 = vmul.f32 %v1610, %v2253
        %v2286 = vmul.f32 %v1614, %v2254
        %v2287 = vmul.f32 %v1620, %v2255
        %v2288 = vmul.f32 %v1624, %v2256
        %v2289 = vmul.f32 %v1630, %v2257
        %v2290 = vmul.f32 %v1634, %v2258
        %v2291 = vmul.f32 %v1640, %v2259
        %v2292 = vmul.f32 %v1644, %v2260
        %v2293 = vmul.f32 %v1650, %v2261
        %v2294 = vmul.f32 %v1654, %v2262
        %v2295 = vmul.f32 %v1660, %v2263
        %v2296 = vmul.f32 %v1664, %v2264
        %v2297 = vmul.f32 %v1670, %v2265
        %v2298 = vmul.f32 %v1674, %v2266
        %v2299 = vmul.f32 %v1680, %v2267
        %v2300 = vmul.f32 %v1684, %v2268
        %v2302 = vlaneseq
        %v2303 = vshrl.u32 %v2302, 7
        %v2304 = vsub.s32 0, %v2303
        %v2305 = vrot.slane %v2074, %v2304
        %v2307 = vmul.f32 %v2269, %v2305
        %v2308 = vmul.f32 %v2270, %v2305
        %v2309 = vmul.f32 %v2271, %v2305
        %v2310 = vmul.f32 %v2272, %v2305
        %v2311 = vmul.f32 %v2273, %v2305
        %v2312 = vmul.f32 %v2274, %v2305
        %v2313 = vmul.f32 %v2275, %v2305
        %v2314 = vmul.f32 %v2276, %v2305
        %v2315 = vmul.f32 %v2277, %v2305
        %v2316 = vmul.f32 %v2278, %v2305
        %v2317 = vmul.f32 %v2279, %v2305
        %v2318 = vmul.f32 %v2280, %v2305
        %v2319 = vmul.f32 %v2281, %v2305
        %v2320 = vmul.f32 %v2282, %v2305
        %v2321 = vmul.f32 %v2283, %v2305
        %v2322 = vmul.f32 %v2284, %v2305
        %v2323 = vmul.f32 %v2285, %v2305
        %v2324 = vmul.f32 %v2286, %v2305
        %v2325 = vmul.f32 %v2287, %v2305
        %v2326 = vmul.f32 %v2288, %v2305
        %v2327 = vmul.f32 %v2289, %v2305
        %v2328 = vmul.f32 %v2290, %v2305
        %v2329 = vmul.f32 %v2291, %v2305
        %v2330 = vmul.f32 %v2292, %v2305
        %v2331 = vmul.f32 %v2293, %v2305
        %v2332 = vmul.f32 %v2294, %v2305
        %v2333 = vmul.f32 %v2295, %v2305
        %v2334 = vmul.f32 %v2296, %v2305
        %v2335 = vmul.f32 %v2297, %v2305
        %v2336 = vmul.f32 %v2298, %v2305
        %v2337 = vmul.f32 %v2299, %v2305
        %v2338 = vmul.f32 %v2300, %v2305
        %v2339 = vmul.f32 %v2307, 0.088388346
        %v2340 = vmul.f32 %v2308, 0.088388346
        %v2341 = vmul.f32 %v2309, 0.088388346
        %v2342 = vmul.f32 %v2310, 0.088388346
        %v2343 = vmul.f32 %v2311, 0.088388346
        %v2344 = vmul.f32 %v2312, 0.088388346
        %v2345 = vmul.f32 %v2313, 0.088388346
        %v2346 = vmul.f32 %v2314, 0.088388346
        %v2347 = vmul.f32 %v2315, 0.088388346
        %v2348 = vmul.f32 %v2316, 0.088388346
        %v2349 = vmul.f32 %v2317, 0.088388346
        %v2350 = vmul.f32 %v2318, 0.088388346
        %v2351 = vmul.f32 %v2319, 0.088388346
        %v2352 = vmul.f32 %v2320, 0.088388346
        %v2353 = vmul.f32 %v2321, 0.088388346
        %v2354 = vmul.f32 %v2322, 0.088388346
        %v2355 = vmul.f32 %v2323, 0.088388346
        %v2356 = vmul.f32 %v2324, 0.088388346
        %v2357 = vmul.f32 %v2325, 0.088388346
        %v2358 = vmul.f32 %v2326, 0.088388346
        %v2359 = vmul.f32 %v2327, 0.088388346
        %v2360 = vmul.f32 %v2328, 0.088388346
        %v2361 = vmul.f32 %v2329, 0.088388346
        %v2362 = vmul.f32 %v2330, 0.088388346
        %v2363 = vmul.f32 %v2331, 0.088388346
        %v2364 = vmul.f32 %v2332, 0.088388346
        %v2365 = vmul.f32 %v2333, 0.088388346
        %v2366 = vmul.f32 %v2334, 0.088388346
        %v2367 = vmul.f32 %v2335, 0.088388346
        %v2368 = vmul.f32 %v2336, 0.088388346
        %v2369 = vmul.f32 %v2337, 0.088388346
        %v2370 = vmul.f32 %v2338, 0.088388346
        %v2371 = vpack.c.bf16 %v2340, %v2339
        %v2372 = vpack.c.bf16 %v2342, %v2341
        %v2373 = vpack.c.bf16 %v2344, %v2343
        %v2374 = vpack.c.bf16 %v2346, %v2345
        %v2375 = vpack.c.bf16 %v2348, %v2347
        %v2376 = vpack.c.bf16 %v2350, %v2349
        %v2377 = vpack.c.bf16 %v2352, %v2351
        %v2378 = vpack.c.bf16 %v2354, %v2353
        %v2379 = vpack.c.bf16 %v2356, %v2355
        %v2380 = vpack.c.bf16 %v2358, %v2357
        %v2381 = vpack.c.bf16 %v2360, %v2359
        %v2382 = vpack.c.bf16 %v2362, %v2361
        %v2383 = vpack.c.bf16 %v2364, %v2363
        %v2384 = vpack.c.bf16 %v2366, %v2365
        %v2385 = vpack.c.bf16 %v2368, %v2367
        %v2386 = vpack.c.bf16 %v2370, %v2369
        %v2403 = vunpack.c.l.b16 %v2371
        %v2404 = vunpack.c.h.b16 %v2371
        %v2405 = vunpack.c.l.b16 %v2372
        %v2406 = vunpack.c.h.b16 %v2372
        %v2407 = vunpack.c.l.b16 %v2373
        %v2408 = vunpack.c.h.b16 %v2373
        %v2409 = vunpack.c.l.b16 %v2374
        %v2410 = vunpack.c.h.b16 %v2374
        %v2411 = vunpack.c.l.b16 %v2375
        %v2412 = vunpack.c.h.b16 %v2375
        %v2413 = vunpack.c.l.b16 %v2376
        %v2414 = vunpack.c.h.b16 %v2376
        %v2415 = vunpack.c.l.b16 %v2377
        %v2416 = vunpack.c.h.b16 %v2377
        %v2417 = vunpack.c.l.b16 %v2378
        %v2418 = vunpack.c.h.b16 %v2378
        %v2419 = vunpack.c.l.b16 %v2379
        %v2420 = vunpack.c.h.b16 %v2379
        %v2421 = vunpack.c.l.b16 %v2380
        %v2422 = vunpack.c.h.b16 %v2380
        %v2423 = vunpack.c.l.b16 %v2381
        %v2424 = vunpack.c.h.b16 %v2381
        %v2425 = vunpack.c.l.b16 %v2382
        %v2426 = vunpack.c.h.b16 %v2382
        %v2427 = vunpack.c.l.b16 %v2383
        %v2428 = vunpack.c.h.b16 %v2383
        %v2429 = vunpack.c.l.b16 %v2384
        %v2430 = vunpack.c.h.b16 %v2384
        %v2431 = vunpack.c.l.b16 %v2385
        %v2432 = vunpack.c.h.b16 %v2385
        %v2433 = vunpack.c.l.b16 %v2386
        %v2434 = vunpack.c.h.b16 %v2386
        %v2435 = vpack.c.b16 %v2403, %v2403
        %v2436 = vpack.c.b16 %v2404, %v2404
        %v2437 = vpack.c.b16 %v2405, %v2405
        %v2438 = vpack.c.b16 %v2406, %v2406
        %v2439 = vpack.c.b16 %v2407, %v2407
        %v2440 = vpack.c.b16 %v2408, %v2408
        %v2441 = vpack.c.b16 %v2409, %v2409
        %v2442 = vpack.c.b16 %v2410, %v2410
        %v2443 = vpack.c.b16 %v2411, %v2411
        %v2444 = vpack.c.b16 %v2412, %v2412
        %v2445 = vpack.c.b16 %v2413, %v2413
        %v2446 = vpack.c.b16 %v2414, %v2414
        %v2447 = vpack.c.b16 %v2415, %v2415
        %v2448 = vpack.c.b16 %v2416, %v2416
        %v2449 = vpack.c.b16 %v2417, %v2417
        %v2450 = vpack.c.b16 %v2418, %v2418
        %v2451 = vpack.c.b16 %v2419, %v2419
        %v2452 = vpack.c.b16 %v2420, %v2420
        %v2453 = vpack.c.b16 %v2421, %v2421
        %v2454 = vpack.c.b16 %v2422, %v2422
        %v2455 = vpack.c.b16 %v2423, %v2423
        %v2456 = vpack.c.b16 %v2424, %v2424
        %v2457 = vpack.c.b16 %v2425, %v2425
        %v2458 = vpack.c.b16 %v2426, %v2426
        %v2459 = vpack.c.b16 %v2427, %v2427
        %v2460 = vpack.c.b16 %v2428, %v2428
        %v2461 = vpack.c.b16 %v2429, %v2429
        %v2462 = vpack.c.b16 %v2430, %v2430
        %v2463 = vpack.c.b16 %v2431, %v2431
        %v2464 = vpack.c.b16 %v2432, %v2432
        %v2465 = vpack.c.b16 %v2433, %v2433
        %v2466 = vpack.c.b16 %v2434, %v2434
        %2499 = vst [vmem:[%s375] sm:$0xf] %v2435
        %2500 = vst [vmem:[%s375 + $0x4] sm:$0xf] %v2436
        %2501 = vst [vmem:[%s375 + $0x8] sm:$0xf] %v2437
        %2502 = vst [vmem:[%s375 + $0xc] sm:$0xf] %v2438
        %2503 = vst [vmem:[%s375 + $0x10] sm:$0xf] %v2439
        %2504 = vst [vmem:[%s375 + $0x14] sm:$0xf] %v2440
        %2505 = vst [vmem:[%s375 + $0x18] sm:$0xf] %v2441
        %2506 = vst [vmem:[%s375 + $0x1c] sm:$0xf] %v2442
        %2507 = vst [vmem:[%s375 + $0x20] sm:$0xf] %v2443
        %2508 = vst [vmem:[%s375 + $0x24] sm:$0xf] %v2444
        %2509 = vst [vmem:[%s375 + $0x28] sm:$0xf] %v2445
        %2510 = vst [vmem:[%s375 + $0x2c] sm:$0xf] %v2446
        %2511 = vst [vmem:[%s375 + $0x30] sm:$0xf] %v2447
        %2512 = vst [vmem:[%s375 + $0x34] sm:$0xf] %v2448
        %2513 = vst [vmem:[%s375 + $0x38] sm:$0xf] %v2449
        %2514 = vst [vmem:[%s375 + $0x3c] sm:$0xf] %v2450
        %2515 = vst [vmem:[%s375 + $0x40] sm:$0xf] %v2451
        %2516 = vst [vmem:[%s375 + $0x44] sm:$0xf] %v2452
        %2517 = vst [vmem:[%s375 + $0x48] sm:$0xf] %v2453
        %2518 = vst [vmem:[%s375 + $0x4c] sm:$0xf] %v2454
        %2519 = vst [vmem:[%s375 + $0x50] sm:$0xf] %v2455
        %2520 = vst [vmem:[%s375 + $0x54] sm:$0xf] %v2456
        %2521 = vst [vmem:[%s375 + $0x58] sm:$0xf] %v2457
        %2522 = vst [vmem:[%s375 + $0x5c] sm:$0xf] %v2458
        %2523 = vst [vmem:[%s375 + $0x60] sm:$0xf] %v2459
        %2524 = vst [vmem:[%s375 + $0x64] sm:$0xf] %v2460
        %2525 = vst [vmem:[%s375 + $0x68] sm:$0xf] %v2461
        %2526 = vst [vmem:[%s375 + $0x6c] sm:$0xf] %v2462
        %2527 = vst [vmem:[%s375 + $0x70] sm:$0xf] %v2463
        %2528 = vst [vmem:[%s375 + $0x74] sm:$0xf] %v2464
        %2529 = vst [vmem:[%s375 + $0x78] sm:$0xf] %v2465
        %2530 = vst [vmem:[%s375 + $0x7c] sm:$0xf] %v2466
        %v2531 = vmul.f32 %v1723, %v1723
        %v2532 = vmul.f32 %v1727, %v1727
        %v2533 = vmul.f32 %v1733, %v1733
        %v2534 = vmul.f32 %v1737, %v1737
        %v2535 = vmul.f32 %v1743, %v1743
        %v2536 = vmul.f32 %v1747, %v1747
        %v2537 = vmul.f32 %v1753, %v1753
        %v2538 = vmul.f32 %v1757, %v1757
        %v2539 = vmul.f32 %v1763, %v1763
        %v2540 = vmul.f32 %v1767, %v1767
        %v2541 = vmul.f32 %v1773, %v1773
        %v2542 = vmul.f32 %v1777, %v1777
        %v2543 = vmul.f32 %v1783, %v1783
        %v2544 = vmul.f32 %v1787, %v1787
        %v2545 = vmul.f32 %v1793, %v1793
        %v2546 = vmul.f32 %v1797, %v1797
        %v2547 = vmul.f32 %v1803, %v1803
        %v2548 = vmul.f32 %v1807, %v1807
        %v2549 = vmul.f32 %v1813, %v1813
        %v2550 = vmul.f32 %v1817, %v1817
        %v2551 = vmul.f32 %v1823, %v1823
        %v2552 = vmul.f32 %v1827, %v1827
        %v2553 = vmul.f32 %v1833, %v1833
        %v2554 = vmul.f32 %v1837, %v1837
        %v2555 = vmul.f32 %v1843, %v1843
        %v2556 = vmul.f32 %v1847, %v1847
        %v2557 = vmul.f32 %v1853, %v1853
        %v2558 = vmul.f32 %v1857, %v1857
        %v2559 = vmul.f32 %v1863, %v1863
        %v2560 = vmul.f32 %v1867, %v1867
        %v2561 = vmul.f32 %v1873, %v1873
        %v2562 = vmul.f32 %v1877, %v1877
        %2563 = vadd.xlane.f32.xlu0 %v2531
        %v2564 = vpop.xlane.xlu0 %2563
        %2565 = vadd.xlane.f32.xlu0 %v2532
        %v2566 = vpop.xlane.xlu0 %2565
        %2567 = vadd.xlane.f32.xlu0 %v2533
        %v2568 = vpop.xlane.xlu0 %2567
        %2569 = vadd.xlane.f32.xlu0 %v2534
        %v2570 = vpop.xlane.xlu0 %2569
        %2571 = vadd.xlane.f32.xlu0 %v2535
        %v2572 = vpop.xlane.xlu0 %2571
        %2573 = vadd.xlane.f32.xlu0 %v2536
        %v2574 = vpop.xlane.xlu0 %2573
        %2575 = vadd.xlane.f32.xlu0 %v2537
        %v2576 = vpop.xlane.xlu0 %2575
        %2577 = vadd.xlane.f32.xlu0 %v2538
        %v2578 = vpop.xlane.xlu0 %2577
        %2579 = vadd.xlane.f32.xlu0 %v2539
        %v2580 = vpop.xlane.xlu0 %2579
        %2581 = vadd.xlane.f32.xlu0 %v2540
        %v2582 = vpop.xlane.xlu0 %2581
        %2583 = vadd.xlane.f32.xlu0 %v2541
        %v2584 = vpop.xlane.xlu0 %2583
        %2585 = vadd.xlane.f32.xlu0 %v2542
        %v2586 = vpop.xlane.xlu0 %2585
        %2587 = vadd.xlane.f32.xlu0 %v2543
        %v2588 = vpop.xlane.xlu0 %2587
        %2589 = vadd.xlane.f32.xlu0 %v2544
        %v2590 = vpop.xlane.xlu0 %2589
        %2591 = vadd.xlane.f32.xlu0 %v2545
        %v2592 = vpop.xlane.xlu0 %2591
        %2593 = vadd.xlane.f32.xlu0 %v2546
        %v2594 = vpop.xlane.xlu0 %2593
        %2595 = vadd.xlane.f32.xlu0 %v2547
        %v2596 = vpop.xlane.xlu0 %2595
        %2597 = vadd.xlane.f32.xlu0 %v2548
        %v2598 = vpop.xlane.xlu0 %2597
        %2599 = vadd.xlane.f32.xlu0 %v2549
        %v2600 = vpop.xlane.xlu0 %2599
        %2601 = vadd.xlane.f32.xlu0 %v2550
        %v2602 = vpop.xlane.xlu0 %2601
        %2603 = vadd.xlane.f32.xlu0 %v2551
        %v2604 = vpop.xlane.xlu0 %2603
        %2605 = vadd.xlane.f32.xlu0 %v2552
        %v2606 = vpop.xlane.xlu0 %2605
        %2607 = vadd.xlane.f32.xlu0 %v2553
        %v2608 = vpop.xlane.xlu0 %2607
        %2609 = vadd.xlane.f32.xlu0 %v2554
        %v2610 = vpop.xlane.xlu0 %2609
        %2611 = vadd.xlane.f32.xlu0 %v2555
        %v2612 = vpop.xlane.xlu0 %2611
        %2613 = vadd.xlane.f32.xlu0 %v2556
        %v2614 = vpop.xlane.xlu0 %2613
        %2615 = vadd.xlane.f32.xlu0 %v2557
        %v2616 = vpop.xlane.xlu0 %2615
        %2617 = vadd.xlane.f32.xlu0 %v2558
        %v2618 = vpop.xlane.xlu0 %2617
        %2619 = vadd.xlane.f32.xlu0 %v2559
        %v2620 = vpop.xlane.xlu0 %2619
        %2621 = vadd.xlane.f32.xlu0 %v2560
        %v2622 = vpop.xlane.xlu0 %2621
        %2623 = vadd.xlane.f32.xlu0 %v2561
        %v2624 = vpop.xlane.xlu0 %2623
        %2625 = vadd.xlane.f32.xlu0 %v2562
        %v2626 = vpop.xlane.xlu0 %2625
        %v2627 = vmul.f32 %v2564, %v2172
        %v2628 = vmul.f32 %v2566, %v2172
        %v2629 = vmul.f32 %v2568, %v2172
        %v2630 = vmul.f32 %v2570, %v2172
        %v2631 = vmul.f32 %v2572, %v2172
        %v2632 = vmul.f32 %v2574, %v2172
        %v2633 = vmul.f32 %v2576, %v2172
        %v2634 = vmul.f32 %v2578, %v2172
        %v2635 = vmul.f32 %v2580, %v2172
        %v2636 = vmul.f32 %v2582, %v2172
        %v2637 = vmul.f32 %v2584, %v2172
        %v2638 = vmul.f32 %v2586, %v2172
        %v2639 = vmul.f32 %v2588, %v2172
        %v2640 = vmul.f32 %v2590, %v2172
        %v2641 = vmul.f32 %v2592, %v2172
        %v2642 = vmul.f32 %v2594, %v2172
        %v2643 = vmul.f32 %v2596, %v2172
        %v2644 = vmul.f32 %v2598, %v2172
        %v2645 = vmul.f32 %v2600, %v2172
        %v2646 = vmul.f32 %v2602, %v2172
        %v2647 = vmul.f32 %v2604, %v2172
        %v2648 = vmul.f32 %v2606, %v2172
        %v2649 = vmul.f32 %v2608, %v2172
        %v2650 = vmul.f32 %v2610, %v2172
        %v2651 = vmul.f32 %v2612, %v2172
        %v2652 = vmul.f32 %v2614, %v2172
        %v2653 = vmul.f32 %v2616, %v2172
        %v2654 = vmul.f32 %v2618, %v2172
        %v2655 = vmul.f32 %v2620, %v2172
        %v2656 = vmul.f32 %v2622, %v2172
        %v2657 = vmul.f32 %v2624, %v2172
        %v2658 = vmul.f32 %v2626, %v2172
        %v2659 = vadd.f32 %v2627, 1e-06
        %v2660 = vadd.f32 %v2628, 1e-06
        %v2661 = vadd.f32 %v2629, 1e-06
        %v2662 = vadd.f32 %v2630, 1e-06
        %v2663 = vadd.f32 %v2631, 1e-06
        %v2664 = vadd.f32 %v2632, 1e-06
        %v2665 = vadd.f32 %v2633, 1e-06
        %v2666 = vadd.f32 %v2634, 1e-06
        %v2667 = vadd.f32 %v2635, 1e-06
        %v2668 = vadd.f32 %v2636, 1e-06
        %v2669 = vadd.f32 %v2637, 1e-06
        %v2670 = vadd.f32 %v2638, 1e-06
        %v2671 = vadd.f32 %v2639, 1e-06
        %v2672 = vadd.f32 %v2640, 1e-06
        %v2673 = vadd.f32 %v2641, 1e-06
        %v2674 = vadd.f32 %v2642, 1e-06
        %v2675 = vadd.f32 %v2643, 1e-06
        %v2676 = vadd.f32 %v2644, 1e-06
        %v2677 = vadd.f32 %v2645, 1e-06
        %v2678 = vadd.f32 %v2646, 1e-06
        %v2679 = vadd.f32 %v2647, 1e-06
        %v2680 = vadd.f32 %v2648, 1e-06
        %v2681 = vadd.f32 %v2649, 1e-06
        %v2682 = vadd.f32 %v2650, 1e-06
        %v2683 = vadd.f32 %v2651, 1e-06
        %v2684 = vadd.f32 %v2652, 1e-06
        %v2685 = vadd.f32 %v2653, 1e-06
        %v2686 = vadd.f32 %v2654, 1e-06
        %v2687 = vadd.f32 %v2655, 1e-06
        %v2688 = vadd.f32 %v2656, 1e-06
        %v2689 = vadd.f32 %v2657, 1e-06
        %v2690 = vadd.f32 %v2658, 1e-06
        %v2691 = vrsqrt.pop %v2659
        %v2692 = vrsqrt.pop %v2660
        %v2693 = vrsqrt.pop %v2661
        %v2694 = vrsqrt.pop %v2662
        %v2695 = vrsqrt.pop %v2663
        %v2696 = vrsqrt.pop %v2664
        %v2697 = vrsqrt.pop %v2665
        %v2698 = vrsqrt.pop %v2666
        %v2699 = vrsqrt.pop %v2667
        %v2700 = vrsqrt.pop %v2668
        %v2701 = vrsqrt.pop %v2669
        %v2702 = vrsqrt.pop %v2670
        %v2703 = vrsqrt.pop %v2671
        %v2704 = vrsqrt.pop %v2672
        %v2705 = vrsqrt.pop %v2673
        %v2706 = vrsqrt.pop %v2674
        %v2707 = vrsqrt.pop %v2675
        %v2708 = vrsqrt.pop %v2676
        %v2709 = vrsqrt.pop %v2677
        %v2710 = vrsqrt.pop %v2678
        %v2711 = vrsqrt.pop %v2679
        %v2712 = vrsqrt.pop %v2680
        %v2713 = vrsqrt.pop %v2681
        %v2714 = vrsqrt.pop %v2682
        %v2715 = vrsqrt.pop %v2683
        %v2716 = vrsqrt.pop %v2684
        %v2717 = vrsqrt.pop %v2685
        %v2718 = vrsqrt.pop %v2686
        %v2719 = vrsqrt.pop %v2687
        %v2720 = vrsqrt.pop %v2688
        %v2721 = vrsqrt.pop %v2689
        %v2722 = vrsqrt.pop %v2690
        %v2723 = vmul.f32 %v1723, %v2691
        %v2724 = vmul.f32 %v1727, %v2692
        %v2725 = vmul.f32 %v1733, %v2693
        %v2726 = vmul.f32 %v1737, %v2694
        %v2727 = vmul.f32 %v1743, %v2695
        %v2728 = vmul.f32 %v1747, %v2696
        %v2729 = vmul.f32 %v1753, %v2697
        %v2730 = vmul.f32 %v1757, %v2698
        %v2731 = vmul.f32 %v1763, %v2699
        %v2732 = vmul.f32 %v1767, %v2700
        %v2733 = vmul.f32 %v1773, %v2701
        %v2734 = vmul.f32 %v1777, %v2702
        %v2735 = vmul.f32 %v1783, %v2703
        %v2736 = vmul.f32 %v1787, %v2704
        %v2737 = vmul.f32 %v1793, %v2705
        %v2738 = vmul.f32 %v1797, %v2706
        %v2739 = vmul.f32 %v1803, %v2707
        %v2740 = vmul.f32 %v1807, %v2708
        %v2741 = vmul.f32 %v1813, %v2709
        %v2742 = vmul.f32 %v1817, %v2710
        %v2743 = vmul.f32 %v1823, %v2711
        %v2744 = vmul.f32 %v1827, %v2712
        %v2745 = vmul.f32 %v1833, %v2713
        %v2746 = vmul.f32 %v1837, %v2714
        %v2747 = vmul.f32 %v1843, %v2715
        %v2748 = vmul.f32 %v1847, %v2716
        %v2749 = vmul.f32 %v1853, %v2717
        %v2750 = vmul.f32 %v1857, %v2718
        %v2751 = vmul.f32 %v1863, %v2719
        %v2752 = vmul.f32 %v1867, %v2720
        %v2753 = vmul.f32 %v1873, %v2721
        %v2754 = vmul.f32 %v1877, %v2722
        %v2756 = vlaneseq
        %v2757 = vshrl.u32 %v2756, 7
        %v2758 = vsub.s32 0, %v2757
        %v2759 = vrot.slane %v2075, %v2758
        %v2761 = vmul.f32 %v2723, %v2759
        %v2762 = vmul.f32 %v2724, %v2759
        %v2763 = vmul.f32 %v2725, %v2759
        %v2764 = vmul.f32 %v2726, %v2759
        %v2765 = vmul.f32 %v2727, %v2759
        %v2766 = vmul.f32 %v2728, %v2759
        %v2767 = vmul.f32 %v2729, %v2759
        %v2768 = vmul.f32 %v2730, %v2759
        %v2769 = vmul.f32 %v2731, %v2759
        %v2770 = vmul.f32 %v2732, %v2759
        %v2771 = vmul.f32 %v2733, %v2759
        %v2772 = vmul.f32 %v2734, %v2759
        %v2773 = vmul.f32 %v2735, %v2759
        %v2774 = vmul.f32 %v2736, %v2759
        %v2775 = vmul.f32 %v2737, %v2759
        %v2776 = vmul.f32 %v2738, %v2759
        %v2777 = vmul.f32 %v2739, %v2759
        %v2778 = vmul.f32 %v2740, %v2759
        %v2779 = vmul.f32 %v2741, %v2759
        %v2780 = vmul.f32 %v2742, %v2759
        %v2781 = vmul.f32 %v2743, %v2759
        %v2782 = vmul.f32 %v2744, %v2759
        %v2783 = vmul.f32 %v2745, %v2759
        %v2784 = vmul.f32 %v2746, %v2759
        %v2785 = vmul.f32 %v2747, %v2759
        %v2786 = vmul.f32 %v2748, %v2759
        %v2787 = vmul.f32 %v2749, %v2759
        %v2788 = vmul.f32 %v2750, %v2759
        %v2789 = vmul.f32 %v2751, %v2759
        %v2790 = vmul.f32 %v2752, %v2759
        %v2791 = vmul.f32 %v2753, %v2759
        %v2792 = vmul.f32 %v2754, %v2759
        %v2793 = vpack.c.bf16 %v2762, %v2761
        %v2794 = vpack.c.bf16 %v2764, %v2763
        %v2795 = vpack.c.bf16 %v2766, %v2765
        %v2796 = vpack.c.bf16 %v2768, %v2767
        %v2797 = vpack.c.bf16 %v2770, %v2769
        %v2798 = vpack.c.bf16 %v2772, %v2771
        %v2799 = vpack.c.bf16 %v2774, %v2773
        %v2800 = vpack.c.bf16 %v2776, %v2775
        %v2801 = vpack.c.bf16 %v2778, %v2777
        %v2802 = vpack.c.bf16 %v2780, %v2779
        %v2803 = vpack.c.bf16 %v2782, %v2781
        %v2804 = vpack.c.bf16 %v2784, %v2783
        %v2805 = vpack.c.bf16 %v2786, %v2785
        %v2806 = vpack.c.bf16 %v2788, %v2787
        %v2807 = vpack.c.bf16 %v2790, %v2789
        %v2808 = vpack.c.bf16 %v2792, %v2791
        %v2825 = vunpack.c.l.b16 %v2793
        %v2826 = vunpack.c.h.b16 %v2793
        %v2827 = vunpack.c.l.b16 %v2794
        %v2828 = vunpack.c.h.b16 %v2794
        %v2829 = vunpack.c.l.b16 %v2795
        %v2830 = vunpack.c.h.b16 %v2795
        %v2831 = vunpack.c.l.b16 %v2796
        %v2832 = vunpack.c.h.b16 %v2796
        %v2833 = vunpack.c.l.b16 %v2797
        %v2834 = vunpack.c.h.b16 %v2797
        %v2835 = vunpack.c.l.b16 %v2798
        %v2836 = vunpack.c.h.b16 %v2798
        %v2837 = vunpack.c.l.b16 %v2799
        %v2838 = vunpack.c.h.b16 %v2799
        %v2839 = vunpack.c.l.b16 %v2800
        %v2840 = vunpack.c.h.b16 %v2800
        %v2841 = vunpack.c.l.b16 %v2801
        %v2842 = vunpack.c.h.b16 %v2801
        %v2843 = vunpack.c.l.b16 %v2802
        %v2844 = vunpack.c.h.b16 %v2802
        %v2845 = vunpack.c.l.b16 %v2803
        %v2846 = vunpack.c.h.b16 %v2803
        %v2847 = vunpack.c.l.b16 %v2804
        %v2848 = vunpack.c.h.b16 %v2804
        %v2849 = vunpack.c.l.b16 %v2805
        %v2850 = vunpack.c.h.b16 %v2805
        %v2851 = vunpack.c.l.b16 %v2806
        %v2852 = vunpack.c.h.b16 %v2806
        %v2853 = vunpack.c.l.b16 %v2807
        %v2854 = vunpack.c.h.b16 %v2807
        %v2855 = vunpack.c.l.b16 %v2808
        %v2856 = vunpack.c.h.b16 %v2808
        %v2857 = vpack.c.b16 %v2825, %v2825
        %v2858 = vpack.c.b16 %v2826, %v2826
        %v2859 = vpack.c.b16 %v2827, %v2827
        %v2860 = vpack.c.b16 %v2828, %v2828
        %v2861 = vpack.c.b16 %v2829, %v2829
        %v2862 = vpack.c.b16 %v2830, %v2830
        %v2863 = vpack.c.b16 %v2831, %v2831
        %v2864 = vpack.c.b16 %v2832, %v2832
        %v2865 = vpack.c.b16 %v2833, %v2833
        %v2866 = vpack.c.b16 %v2834, %v2834
        %v2867 = vpack.c.b16 %v2835, %v2835
        %v2868 = vpack.c.b16 %v2836, %v2836
        %v2869 = vpack.c.b16 %v2837, %v2837
        %v2870 = vpack.c.b16 %v2838, %v2838
        %v2871 = vpack.c.b16 %v2839, %v2839
        %v2872 = vpack.c.b16 %v2840, %v2840
        %v2873 = vpack.c.b16 %v2841, %v2841
        %v2874 = vpack.c.b16 %v2842, %v2842
        %v2875 = vpack.c.b16 %v2843, %v2843
        %v2876 = vpack.c.b16 %v2844, %v2844
        %v2877 = vpack.c.b16 %v2845, %v2845
        %v2878 = vpack.c.b16 %v2846, %v2846
        %v2879 = vpack.c.b16 %v2847, %v2847
        %v2880 = vpack.c.b16 %v2848, %v2848
        %v2881 = vpack.c.b16 %v2849, %v2849
        %v2882 = vpack.c.b16 %v2850, %v2850
        %v2883 = vpack.c.b16 %v2851, %v2851
        %v2884 = vpack.c.b16 %v2852, %v2852
        %v2885 = vpack.c.b16 %v2853, %v2853
        %v2886 = vpack.c.b16 %v2854, %v2854
        %v2887 = vpack.c.b16 %v2855, %v2855
        %v2888 = vpack.c.b16 %v2856, %v2856
        %2921 = vst [vmem:[%s382] sm:$0xf] %v2857
        %2922 = vst [vmem:[%s382 + $0x4] sm:$0xf] %v2858
        %2923 = vst [vmem:[%s382 + $0x8] sm:$0xf] %v2859
        %2924 = vst [vmem:[%s382 + $0xc] sm:$0xf] %v2860
        %2925 = vst [vmem:[%s382 + $0x10] sm:$0xf] %v2861
        %2926 = vst [vmem:[%s382 + $0x14] sm:$0xf] %v2862
        %2927 = vst [vmem:[%s382 + $0x18] sm:$0xf] %v2863
        %2928 = vst [vmem:[%s382 + $0x1c] sm:$0xf] %v2864
        %2929 = vst [vmem:[%s382 + $0x20] sm:$0xf] %v2865
        %2930 = vst [vmem:[%s382 + $0x24] sm:$0xf] %v2866
        %2931 = vst [vmem:[%s382 + $0x28] sm:$0xf] %v2867
        %2932 = vst [vmem:[%s382 + $0x2c] sm:$0xf] %v2868
        %2933 = vst [vmem:[%s382 + $0x30] sm:$0xf] %v2869
        %2934 = vst [vmem:[%s382 + $0x34] sm:$0xf] %v2870
        %2935 = vst [vmem:[%s382 + $0x38] sm:$0xf] %v2871
        %2936 = vst [vmem:[%s382 + $0x3c] sm:$0xf] %v2872
        %2937 = vst [vmem:[%s382 + $0x40] sm:$0xf] %v2873
        %2938 = vst [vmem:[%s382 + $0x44] sm:$0xf] %v2874
        %2939 = vst [vmem:[%s382 + $0x48] sm:$0xf] %v2875
        %2940 = vst [vmem:[%s382 + $0x4c] sm:$0xf] %v2876
        %2941 = vst [vmem:[%s382 + $0x50] sm:$0xf] %v2877
        %2942 = vst [vmem:[%s382 + $0x54] sm:$0xf] %v2878
        %2943 = vst [vmem:[%s382 + $0x58] sm:$0xf] %v2879
        %2944 = vst [vmem:[%s382 + $0x5c] sm:$0xf] %v2880
        %2945 = vst [vmem:[%s382 + $0x60] sm:$0xf] %v2881
        %2946 = vst [vmem:[%s382 + $0x64] sm:$0xf] %v2882
        %2947 = vst [vmem:[%s382 + $0x68] sm:$0xf] %v2883
        %2948 = vst [vmem:[%s382 + $0x6c] sm:$0xf] %v2884
        %2949 = vst [vmem:[%s382 + $0x70] sm:$0xf] %v2885
        %2950 = vst [vmem:[%s382 + $0x74] sm:$0xf] %v2886
        %2951 = vst [vmem:[%s382 + $0x78] sm:$0xf] %v2887
        %2952 = vst [vmem:[%s382 + $0x7c] sm:$0xf] %v2888
        %v2953 = vpack.c.bf16 %v1920, %v1916
        %v2954 = vpack.c.bf16 %v1930, %v1926
        %v2955 = vpack.c.bf16 %v1940, %v1936
        %v2956 = vpack.c.bf16 %v1950, %v1946
        %v2957 = vpack.c.bf16 %v1960, %v1956
        %v2958 = vpack.c.bf16 %v1970, %v1966
        %v2959 = vpack.c.bf16 %v1980, %v1976
        %v2960 = vpack.c.bf16 %v1990, %v1986
        %v2961 = vpack.c.bf16 %v2000, %v1996
        %v2962 = vpack.c.bf16 %v2010, %v2006
        %v2963 = vpack.c.bf16 %v2020, %v2016
        %v2964 = vpack.c.bf16 %v2030, %v2026
        %v2965 = vpack.c.bf16 %v2040, %v2036
        %v2966 = vpack.c.bf16 %v2050, %v2046
        %v2967 = vpack.c.bf16 %v2060, %v2056
        %v2968 = vpack.c.bf16 %v2070, %v2066
        %v2985 = vunpack.c.l.b16 %v2953
        %v2986 = vunpack.c.h.b16 %v2953
        %v2987 = vunpack.c.l.b16 %v2954
        %v2988 = vunpack.c.h.b16 %v2954
        %v2989 = vunpack.c.l.b16 %v2955
        %v2990 = vunpack.c.h.b16 %v2955
        %v2991 = vunpack.c.l.b16 %v2956
        %v2992 = vunpack.c.h.b16 %v2956
        %v2993 = vunpack.c.l.b16 %v2957
        %v2994 = vunpack.c.h.b16 %v2957
        %v2995 = vunpack.c.l.b16 %v2958
        %v2996 = vunpack.c.h.b16 %v2958
        %v2997 = vunpack.c.l.b16 %v2959
        %v2998 = vunpack.c.h.b16 %v2959
        %v2999 = vunpack.c.l.b16 %v2960
        %v3000 = vunpack.c.h.b16 %v2960
        %v3001 = vunpack.c.l.b16 %v2961
        %v3002 = vunpack.c.h.b16 %v2961
        %v3003 = vunpack.c.l.b16 %v2962
        %v3004 = vunpack.c.h.b16 %v2962
        %v3005 = vunpack.c.l.b16 %v2963
        %v3006 = vunpack.c.h.b16 %v2963
        %v3007 = vunpack.c.l.b16 %v2964
        %v3008 = vunpack.c.h.b16 %v2964
        %v3009 = vunpack.c.l.b16 %v2965
        %v3010 = vunpack.c.h.b16 %v2965
        %v3011 = vunpack.c.l.b16 %v2966
        %v3012 = vunpack.c.h.b16 %v2966
        %v3013 = vunpack.c.l.b16 %v2967
        %v3014 = vunpack.c.h.b16 %v2967
        %v3015 = vunpack.c.l.b16 %v2968
        %v3016 = vunpack.c.h.b16 %v2968
        %v3017 = vpack.c.b16 %v2985, %v2985
        %v3018 = vpack.c.b16 %v2986, %v2986
        %v3019 = vpack.c.b16 %v2987, %v2987
        %v3020 = vpack.c.b16 %v2988, %v2988
        %v3021 = vpack.c.b16 %v2989, %v2989
        %v3022 = vpack.c.b16 %v2990, %v2990
        %v3023 = vpack.c.b16 %v2991, %v2991
        %v3024 = vpack.c.b16 %v2992, %v2992
        %v3025 = vpack.c.b16 %v2993, %v2993
        %v3026 = vpack.c.b16 %v2994, %v2994
        %v3027 = vpack.c.b16 %v2995, %v2995
        %v3028 = vpack.c.b16 %v2996, %v2996
        %v3029 = vpack.c.b16 %v2997, %v2997
        %v3030 = vpack.c.b16 %v2998, %v2998
        %v3031 = vpack.c.b16 %v2999, %v2999
        %v3032 = vpack.c.b16 %v3000, %v3000
        %v3033 = vpack.c.b16 %v3001, %v3001
        %v3034 = vpack.c.b16 %v3002, %v3002
        %v3035 = vpack.c.b16 %v3003, %v3003
        %v3036 = vpack.c.b16 %v3004, %v3004
        %v3037 = vpack.c.b16 %v3005, %v3005
        %v3038 = vpack.c.b16 %v3006, %v3006
        %v3039 = vpack.c.b16 %v3007, %v3007
        %v3040 = vpack.c.b16 %v3008, %v3008
        %v3041 = vpack.c.b16 %v3009, %v3009
        %v3042 = vpack.c.b16 %v3010, %v3010
        %v3043 = vpack.c.b16 %v3011, %v3011
        %v3044 = vpack.c.b16 %v3012, %v3012
        %v3045 = vpack.c.b16 %v3013, %v3013
        %v3046 = vpack.c.b16 %v3014, %v3014
        %v3047 = vpack.c.b16 %v3015, %v3015
        %v3048 = vpack.c.b16 %v3016, %v3016
        %3081 = vst [vmem:[%s389] sm:$0xf] %v3017
        %3082 = vst [vmem:[%s389 + $0x4] sm:$0xf] %v3018
        %3083 = vst [vmem:[%s389 + $0x8] sm:$0xf] %v3019
        %3084 = vst [vmem:[%s389 + $0xc] sm:$0xf] %v3020
        %3085 = vst [vmem:[%s389 + $0x10] sm:$0xf] %v3021
        %3086 = vst [vmem:[%s389 + $0x14] sm:$0xf] %v3022
        %3087 = vst [vmem:[%s389 + $0x18] sm:$0xf] %v3023
        %3088 = vst [vmem:[%s389 + $0x1c] sm:$0xf] %v3024
        %3089 = vst [vmem:[%s389 + $0x20] sm:$0xf] %v3025
        %3090 = vst [vmem:[%s389 + $0x24] sm:$0xf] %v3026
        %3091 = vst [vmem:[%s389 + $0x28] sm:$0xf] %v3027
        %3092 = vst [vmem:[%s389 + $0x2c] sm:$0xf] %v3028
        %3093 = vst [vmem:[%s389 + $0x30] sm:$0xf] %v3029
        %3094 = vst [vmem:[%s389 + $0x34] sm:$0xf] %v3030
        %3095 = vst [vmem:[%s389 + $0x38] sm:$0xf] %v3031
        %3096 = vst [vmem:[%s389 + $0x3c] sm:$0xf] %v3032
        %3097 = vst [vmem:[%s389 + $0x40] sm:$0xf] %v3033
        %3098 = vst [vmem:[%s389 + $0x44] sm:$0xf] %v3034
        %3099 = vst [vmem:[%s389 + $0x48] sm:$0xf] %v3035
        %3100 = vst [vmem:[%s389 + $0x4c] sm:$0xf] %v3036
        %3101 = vst [vmem:[%s389 + $0x50] sm:$0xf] %v3037
        %3102 = vst [vmem:[%s389 + $0x54] sm:$0xf] %v3038
        %3103 = vst [vmem:[%s389 + $0x58] sm:$0xf] %v3039
        %3104 = vst [vmem:[%s389 + $0x5c] sm:$0xf] %v3040
        %3105 = vst [vmem:[%s389 + $0x60] sm:$0xf] %v3041
        %3106 = vst [vmem:[%s389 + $0x64] sm:$0xf] %v3042
        %3107 = vst [vmem:[%s389 + $0x68] sm:$0xf] %v3043
        %3108 = vst [vmem:[%s389 + $0x6c] sm:$0xf] %v3044
        %3109 = vst [vmem:[%s389 + $0x70] sm:$0xf] %v3045
        %3110 = vst [vmem:[%s389 + $0x74] sm:$0xf] %v3046
        %3111 = vst [vmem:[%s389 + $0x78] sm:$0xf] %v3047
        %3112 = vst [vmem:[%s389 + $0x7c] sm:$0xf] %v3048
        %v3113 = vmul.f32 %v1532, %v1532
        %v3114 = vmul.f32 %v1536, %v1536
        %v3115 = vmul.f32 %v1542, %v1542
        %v3116 = vmul.f32 %v1546, %v1546
        %v3117 = vmul.f32 %v1552, %v1552
        %v3118 = vmul.f32 %v1556, %v1556
        %v3119 = vmul.f32 %v1562, %v1562
        %v3120 = vmul.f32 %v1566, %v1566
        %v3121 = vmul.f32 %v1572, %v1572
        %v3122 = vmul.f32 %v1576, %v1576
        %v3123 = vmul.f32 %v1582, %v1582
        %v3124 = vmul.f32 %v1586, %v1586
        %v3125 = vmul.f32 %v1592, %v1592
        %v3126 = vmul.f32 %v1596, %v1596
        %v3127 = vmul.f32 %v1602, %v1602
        %v3128 = vmul.f32 %v1606, %v1606
        %v3129 = vmul.f32 %v1612, %v1612
        %v3130 = vmul.f32 %v1616, %v1616
        %v3131 = vmul.f32 %v1622, %v1622
        %v3132 = vmul.f32 %v1626, %v1626
        %v3133 = vmul.f32 %v1632, %v1632
        %v3134 = vmul.f32 %v1636, %v1636
        %v3135 = vmul.f32 %v1642, %v1642
        %v3136 = vmul.f32 %v1646, %v1646
        %v3137 = vmul.f32 %v1652, %v1652
        %v3138 = vmul.f32 %v1656, %v1656
        %v3139 = vmul.f32 %v1662, %v1662
        %v3140 = vmul.f32 %v1666, %v1666
        %v3141 = vmul.f32 %v1672, %v1672
        %v3142 = vmul.f32 %v1676, %v1676
        %v3143 = vmul.f32 %v1682, %v1682
        %v3144 = vmul.f32 %v1686, %v1686
        %3145 = vadd.xlane.f32.xlu0 %v3113
        %v3146 = vpop.xlane.xlu0 %3145
        %3147 = vadd.xlane.f32.xlu0 %v3114
        %v3148 = vpop.xlane.xlu0 %3147
        %3149 = vadd.xlane.f32.xlu0 %v3115
        %v3150 = vpop.xlane.xlu0 %3149
        %3151 = vadd.xlane.f32.xlu0 %v3116
        %v3152 = vpop.xlane.xlu0 %3151
        %3153 = vadd.xlane.f32.xlu0 %v3117
        %v3154 = vpop.xlane.xlu0 %3153
        %3155 = vadd.xlane.f32.xlu0 %v3118
        %v3156 = vpop.xlane.xlu0 %3155
        %3157 = vadd.xlane.f32.xlu0 %v3119
        %v3158 = vpop.xlane.xlu0 %3157
        %3159 = vadd.xlane.f32.xlu0 %v3120
        %v3160 = vpop.xlane.xlu0 %3159
        %3161 = vadd.xlane.f32.xlu0 %v3121
        %v3162 = vpop.xlane.xlu0 %3161
        %3163 = vadd.xlane.f32.xlu0 %v3122
        %v3164 = vpop.xlane.xlu0 %3163
        %3165 = vadd.xlane.f32.xlu0 %v3123
        %v3166 = vpop.xlane.xlu0 %3165
        %3167 = vadd.xlane.f32.xlu0 %v3124
        %v3168 = vpop.xlane.xlu0 %3167
        %3169 = vadd.xlane.f32.xlu0 %v3125
        %v3170 = vpop.xlane.xlu0 %3169
        %3171 = vadd.xlane.f32.xlu0 %v3126
        %v3172 = vpop.xlane.xlu0 %3171
        %3173 = vadd.xlane.f32.xlu0 %v3127
        %v3174 = vpop.xlane.xlu0 %3173
        %3175 = vadd.xlane.f32.xlu0 %v3128
        %v3176 = vpop.xlane.xlu0 %3175
        %3177 = vadd.xlane.f32.xlu0 %v3129
        %v3178 = vpop.xlane.xlu0 %3177
        %3179 = vadd.xlane.f32.xlu0 %v3130
        %v3180 = vpop.xlane.xlu0 %3179
        %3181 = vadd.xlane.f32.xlu0 %v3131
        %v3182 = vpop.xlane.xlu0 %3181
        %3183 = vadd.xlane.f32.xlu0 %v3132
        %v3184 = vpop.xlane.xlu0 %3183
        %3185 = vadd.xlane.f32.xlu0 %v3133
        %v3186 = vpop.xlane.xlu0 %3185
        %3187 = vadd.xlane.f32.xlu0 %v3134
        %v3188 = vpop.xlane.xlu0 %3187
        %3189 = vadd.xlane.f32.xlu0 %v3135
        %v3190 = vpop.xlane.xlu0 %3189
        %3191 = vadd.xlane.f32.xlu0 %v3136
        %v3192 = vpop.xlane.xlu0 %3191
        %3193 = vadd.xlane.f32.xlu0 %v3137
        %v3194 = vpop.xlane.xlu0 %3193
        %3195 = vadd.xlane.f32.xlu0 %v3138
        %v3196 = vpop.xlane.xlu0 %3195
        %3197 = vadd.xlane.f32.xlu0 %v3139
        %v3198 = vpop.xlane.xlu0 %3197
        %3199 = vadd.xlane.f32.xlu0 %v3140
        %v3200 = vpop.xlane.xlu0 %3199
        %3201 = vadd.xlane.f32.xlu0 %v3141
        %v3202 = vpop.xlane.xlu0 %3201
        %3203 = vadd.xlane.f32.xlu0 %v3142
        %v3204 = vpop.xlane.xlu0 %3203
        %3205 = vadd.xlane.f32.xlu0 %v3143
        %v3206 = vpop.xlane.xlu0 %3205
        %3207 = vadd.xlane.f32.xlu0 %v3144
        %v3208 = vpop.xlane.xlu0 %3207
        %v3209 = vmul.f32 %v3146, %v2172
        %v3210 = vmul.f32 %v3148, %v2172
        %v3211 = vmul.f32 %v3150, %v2172
        %v3212 = vmul.f32 %v3152, %v2172
        %v3213 = vmul.f32 %v3154, %v2172
        %v3214 = vmul.f32 %v3156, %v2172
        %v3215 = vmul.f32 %v3158, %v2172
        %v3216 = vmul.f32 %v3160, %v2172
        %v3217 = vmul.f32 %v3162, %v2172
        %v3218 = vmul.f32 %v3164, %v2172
        %v3219 = vmul.f32 %v3166, %v2172
        %v3220 = vmul.f32 %v3168, %v2172
        %v3221 = vmul.f32 %v3170, %v2172
        %v3222 = vmul.f32 %v3172, %v2172
        %v3223 = vmul.f32 %v3174, %v2172
        %v3224 = vmul.f32 %v3176, %v2172
        %v3225 = vmul.f32 %v3178, %v2172
        %v3226 = vmul.f32 %v3180, %v2172
        %v3227 = vmul.f32 %v3182, %v2172
        %v3228 = vmul.f32 %v3184, %v2172
        %v3229 = vmul.f32 %v3186, %v2172
        %v3230 = vmul.f32 %v3188, %v2172
        %v3231 = vmul.f32 %v3190, %v2172
        %v3232 = vmul.f32 %v3192, %v2172
        %v3233 = vmul.f32 %v3194, %v2172
        %v3234 = vmul.f32 %v3196, %v2172
        %v3235 = vmul.f32 %v3198, %v2172
        %v3236 = vmul.f32 %v3200, %v2172
        %v3237 = vmul.f32 %v3202, %v2172
        %v3238 = vmul.f32 %v3204, %v2172
        %v3239 = vmul.f32 %v3206, %v2172
        %v3240 = vmul.f32 %v3208, %v2172
        %v3241 = vadd.f32 %v3209, 1e-06
        %v3242 = vadd.f32 %v3210, 1e-06
        %v3243 = vadd.f32 %v3211, 1e-06
        %v3244 = vadd.f32 %v3212, 1e-06
        %v3245 = vadd.f32 %v3213, 1e-06
        %v3246 = vadd.f32 %v3214, 1e-06
        %v3247 = vadd.f32 %v3215, 1e-06
        %v3248 = vadd.f32 %v3216, 1e-06
        %v3249 = vadd.f32 %v3217, 1e-06
        %v3250 = vadd.f32 %v3218, 1e-06
        %v3251 = vadd.f32 %v3219, 1e-06
        %v3252 = vadd.f32 %v3220, 1e-06
        %v3253 = vadd.f32 %v3221, 1e-06
        %v3254 = vadd.f32 %v3222, 1e-06
        %v3255 = vadd.f32 %v3223, 1e-06
        %v3256 = vadd.f32 %v3224, 1e-06
        %v3257 = vadd.f32 %v3225, 1e-06
        %v3258 = vadd.f32 %v3226, 1e-06
        %v3259 = vadd.f32 %v3227, 1e-06
        %v3260 = vadd.f32 %v3228, 1e-06
        %v3261 = vadd.f32 %v3229, 1e-06
        %v3262 = vadd.f32 %v3230, 1e-06
        %v3263 = vadd.f32 %v3231, 1e-06
        %v3264 = vadd.f32 %v3232, 1e-06
        %v3265 = vadd.f32 %v3233, 1e-06
        %v3266 = vadd.f32 %v3234, 1e-06
        %v3267 = vadd.f32 %v3235, 1e-06
        %v3268 = vadd.f32 %v3236, 1e-06
        %v3269 = vadd.f32 %v3237, 1e-06
        %v3270 = vadd.f32 %v3238, 1e-06
        %v3271 = vadd.f32 %v3239, 1e-06
        %v3272 = vadd.f32 %v3240, 1e-06
        %v3273 = vrsqrt.pop %v3241
        %v3274 = vrsqrt.pop %v3242
        %v3275 = vrsqrt.pop %v3243
        %v3276 = vrsqrt.pop %v3244
        %v3277 = vrsqrt.pop %v3245
        %v3278 = vrsqrt.pop %v3246
        %v3279 = vrsqrt.pop %v3247
        %v3280 = vrsqrt.pop %v3248
        %v3281 = vrsqrt.pop %v3249
        %v3282 = vrsqrt.pop %v3250
        %v3283 = vrsqrt.pop %v3251
        %v3284 = vrsqrt.pop %v3252
        %v3285 = vrsqrt.pop %v3253
        %v3286 = vrsqrt.pop %v3254
        %v3287 = vrsqrt.pop %v3255
        %v3288 = vrsqrt.pop %v3256
        %v3289 = vrsqrt.pop %v3257
        %v3290 = vrsqrt.pop %v3258
        %v3291 = vrsqrt.pop %v3259
        %v3292 = vrsqrt.pop %v3260
        %v3293 = vrsqrt.pop %v3261
        %v3294 = vrsqrt.pop %v3262
        %v3295 = vrsqrt.pop %v3263
        %v3296 = vrsqrt.pop %v3264
        %v3297 = vrsqrt.pop %v3265
        %v3298 = vrsqrt.pop %v3266
        %v3299 = vrsqrt.pop %v3267
        %v3300 = vrsqrt.pop %v3268
        %v3301 = vrsqrt.pop %v3269
        %v3302 = vrsqrt.pop %v3270
        %v3303 = vrsqrt.pop %v3271
        %v3304 = vrsqrt.pop %v3272
        %v3305 = vmul.f32 %v1532, %v3273
        %v3306 = vmul.f32 %v1536, %v3274
        %v3307 = vmul.f32 %v1542, %v3275
        %v3308 = vmul.f32 %v1546, %v3276
        %v3309 = vmul.f32 %v1552, %v3277
        %v3310 = vmul.f32 %v1556, %v3278
        %v3311 = vmul.f32 %v1562, %v3279
        %v3312 = vmul.f32 %v1566, %v3280
        %v3313 = vmul.f32 %v1572, %v3281
        %v3314 = vmul.f32 %v1576, %v3282
        %v3315 = vmul.f32 %v1582, %v3283
        %v3316 = vmul.f32 %v1586, %v3284
        %v3317 = vmul.f32 %v1592, %v3285
        %v3318 = vmul.f32 %v1596, %v3286
        %v3319 = vmul.f32 %v1602, %v3287
        %v3320 = vmul.f32 %v1606, %v3288
        %v3321 = vmul.f32 %v1612, %v3289
        %v3322 = vmul.f32 %v1616, %v3290
        %v3323 = vmul.f32 %v1622, %v3291
        %v3324 = vmul.f32 %v1626, %v3292
        %v3325 = vmul.f32 %v1632, %v3293
        %v3326 = vmul.f32 %v1636, %v3294
        %v3327 = vmul.f32 %v1642, %v3295
        %v3328 = vmul.f32 %v1646, %v3296
        %v3329 = vmul.f32 %v1652, %v3297
        %v3330 = vmul.f32 %v1656, %v3298
        %v3331 = vmul.f32 %v1662, %v3299
        %v3332 = vmul.f32 %v1666, %v3300
        %v3333 = vmul.f32 %v1672, %v3301
        %v3334 = vmul.f32 %v1676, %v3302
        %v3335 = vmul.f32 %v1682, %v3303
        %v3336 = vmul.f32 %v1686, %v3304
        %v3337 = vmul.f32 %v3305, %v2305
        %v3338 = vmul.f32 %v3306, %v2305
        %v3339 = vmul.f32 %v3307, %v2305
        %v3340 = vmul.f32 %v3308, %v2305
        %v3341 = vmul.f32 %v3309, %v2305
        %v3342 = vmul.f32 %v3310, %v2305
        %v3343 = vmul.f32 %v3311, %v2305
        %v3344 = vmul.f32 %v3312, %v2305
        %v3345 = vmul.f32 %v3313, %v2305
        %v3346 = vmul.f32 %v3314, %v2305
        %v3347 = vmul.f32 %v3315, %v2305
        %v3348 = vmul.f32 %v3316, %v2305
        %v3349 = vmul.f32 %v3317, %v2305
        %v3350 = vmul.f32 %v3318, %v2305
        %v3351 = vmul.f32 %v3319, %v2305
        %v3352 = vmul.f32 %v3320, %v2305
        %v3353 = vmul.f32 %v3321, %v2305
        %v3354 = vmul.f32 %v3322, %v2305
        %v3355 = vmul.f32 %v3323, %v2305
        %v3356 = vmul.f32 %v3324, %v2305
        %v3357 = vmul.f32 %v3325, %v2305
        %v3358 = vmul.f32 %v3326, %v2305
        %v3359 = vmul.f32 %v3327, %v2305
        %v3360 = vmul.f32 %v3328, %v2305
        %v3361 = vmul.f32 %v3329, %v2305
        %v3362 = vmul.f32 %v3330, %v2305
        %v3363 = vmul.f32 %v3331, %v2305
        %v3364 = vmul.f32 %v3332, %v2305
        %v3365 = vmul.f32 %v3333, %v2305
        %v3366 = vmul.f32 %v3334, %v2305
        %v3367 = vmul.f32 %v3335, %v2305
        %v3368 = vmul.f32 %v3336, %v2305
        %v3369 = vmul.f32 %v3337, 0.088388346
        %v3370 = vmul.f32 %v3338, 0.088388346
        %v3371 = vmul.f32 %v3339, 0.088388346
        %v3372 = vmul.f32 %v3340, 0.088388346
        %v3373 = vmul.f32 %v3341, 0.088388346
        %v3374 = vmul.f32 %v3342, 0.088388346
        %v3375 = vmul.f32 %v3343, 0.088388346
        %v3376 = vmul.f32 %v3344, 0.088388346
        %v3377 = vmul.f32 %v3345, 0.088388346
        %v3378 = vmul.f32 %v3346, 0.088388346
        %v3379 = vmul.f32 %v3347, 0.088388346
        %v3380 = vmul.f32 %v3348, 0.088388346
        %v3381 = vmul.f32 %v3349, 0.088388346
        %v3382 = vmul.f32 %v3350, 0.088388346
        %v3383 = vmul.f32 %v3351, 0.088388346
        %v3384 = vmul.f32 %v3352, 0.088388346
        %v3385 = vmul.f32 %v3353, 0.088388346
        %v3386 = vmul.f32 %v3354, 0.088388346
        %v3387 = vmul.f32 %v3355, 0.088388346
        %v3388 = vmul.f32 %v3356, 0.088388346
        %v3389 = vmul.f32 %v3357, 0.088388346
        %v3390 = vmul.f32 %v3358, 0.088388346
        %v3391 = vmul.f32 %v3359, 0.088388346
        %v3392 = vmul.f32 %v3360, 0.088388346
        %v3393 = vmul.f32 %v3361, 0.088388346
        %v3394 = vmul.f32 %v3362, 0.088388346
        %v3395 = vmul.f32 %v3363, 0.088388346
        %v3396 = vmul.f32 %v3364, 0.088388346
        %v3397 = vmul.f32 %v3365, 0.088388346
        %v3398 = vmul.f32 %v3366, 0.088388346
        %v3399 = vmul.f32 %v3367, 0.088388346
        %v3400 = vmul.f32 %v3368, 0.088388346
        %v3401 = vpack.c.bf16 %v3370, %v3369
        %v3402 = vpack.c.bf16 %v3372, %v3371
        %v3403 = vpack.c.bf16 %v3374, %v3373
        %v3404 = vpack.c.bf16 %v3376, %v3375
        %v3405 = vpack.c.bf16 %v3378, %v3377
        %v3406 = vpack.c.bf16 %v3380, %v3379
        %v3407 = vpack.c.bf16 %v3382, %v3381
        %v3408 = vpack.c.bf16 %v3384, %v3383
        %v3409 = vpack.c.bf16 %v3386, %v3385
        %v3410 = vpack.c.bf16 %v3388, %v3387
        %v3411 = vpack.c.bf16 %v3390, %v3389
        %v3412 = vpack.c.bf16 %v3392, %v3391
        %v3413 = vpack.c.bf16 %v3394, %v3393
        %v3414 = vpack.c.bf16 %v3396, %v3395
        %v3415 = vpack.c.bf16 %v3398, %v3397
        %v3416 = vpack.c.bf16 %v3400, %v3399
        %v3433 = vunpack.c.l.b16 %v3401
        %v3434 = vunpack.c.h.b16 %v3401
        %v3435 = vunpack.c.l.b16 %v3402
        %v3436 = vunpack.c.h.b16 %v3402
        %v3437 = vunpack.c.l.b16 %v3403
        %v3438 = vunpack.c.h.b16 %v3403
        %v3439 = vunpack.c.l.b16 %v3404
        %v3440 = vunpack.c.h.b16 %v3404
        %v3441 = vunpack.c.l.b16 %v3405
        %v3442 = vunpack.c.h.b16 %v3405
        %v3443 = vunpack.c.l.b16 %v3406
        %v3444 = vunpack.c.h.b16 %v3406
        %v3445 = vunpack.c.l.b16 %v3407
        %v3446 = vunpack.c.h.b16 %v3407
        %v3447 = vunpack.c.l.b16 %v3408
        %v3448 = vunpack.c.h.b16 %v3408
        %v3449 = vunpack.c.l.b16 %v3409
        %v3450 = vunpack.c.h.b16 %v3409
        %v3451 = vunpack.c.l.b16 %v3410
        %v3452 = vunpack.c.h.b16 %v3410
        %v3453 = vunpack.c.l.b16 %v3411
        %v3454 = vunpack.c.h.b16 %v3411
        %v3455 = vunpack.c.l.b16 %v3412
        %v3456 = vunpack.c.h.b16 %v3412
        %v3457 = vunpack.c.l.b16 %v3413
        %v3458 = vunpack.c.h.b16 %v3413
        %v3459 = vunpack.c.l.b16 %v3414
        %v3460 = vunpack.c.h.b16 %v3414
        %v3461 = vunpack.c.l.b16 %v3415
        %v3462 = vunpack.c.h.b16 %v3415
        %v3463 = vunpack.c.l.b16 %v3416
        %v3464 = vunpack.c.h.b16 %v3416
        %v3465 = vpack.c.b16 %v3433, %v3433
        %v3466 = vpack.c.b16 %v3434, %v3434
        %v3467 = vpack.c.b16 %v3435, %v3435
        %v3468 = vpack.c.b16 %v3436, %v3436
        %v3469 = vpack.c.b16 %v3437, %v3437
        %v3470 = vpack.c.b16 %v3438, %v3438
        %v3471 = vpack.c.b16 %v3439, %v3439
        %v3472 = vpack.c.b16 %v3440, %v3440
        %v3473 = vpack.c.b16 %v3441, %v3441
        %v3474 = vpack.c.b16 %v3442, %v3442
        %v3475 = vpack.c.b16 %v3443, %v3443
        %v3476 = vpack.c.b16 %v3444, %v3444
        %v3477 = vpack.c.b16 %v3445, %v3445
        %v3478 = vpack.c.b16 %v3446, %v3446
        %v3479 = vpack.c.b16 %v3447, %v3447
        %v3480 = vpack.c.b16 %v3448, %v3448
        %v3481 = vpack.c.b16 %v3449, %v3449
        %v3482 = vpack.c.b16 %v3450, %v3450
        %v3483 = vpack.c.b16 %v3451, %v3451
        %v3484 = vpack.c.b16 %v3452, %v3452
        %v3485 = vpack.c.b16 %v3453, %v3453
        %v3486 = vpack.c.b16 %v3454, %v3454
        %v3487 = vpack.c.b16 %v3455, %v3455
        %v3488 = vpack.c.b16 %v3456, %v3456
        %v3489 = vpack.c.b16 %v3457, %v3457
        %v3490 = vpack.c.b16 %v3458, %v3458
        %v3491 = vpack.c.b16 %v3459, %v3459
        %v3492 = vpack.c.b16 %v3460, %v3460
        %v3493 = vpack.c.b16 %v3461, %v3461
        %v3494 = vpack.c.b16 %v3462, %v3462
        %v3495 = vpack.c.b16 %v3463, %v3463
        %v3496 = vpack.c.b16 %v3464, %v3464
        %s3529 = scalar_lea.vmem %s375, 128 [#allocation11]
        %3530 = vst [vmem:[%s3529] sm:$0xf] %v3465
        %3531 = vst [vmem:[%s3529 + $0x4] sm:$0xf] %v3466
        %3532 = vst [vmem:[%s3529 + $0x8] sm:$0xf] %v3467
        %3533 = vst [vmem:[%s3529 + $0xc] sm:$0xf] %v3468
        %3534 = vst [vmem:[%s3529 + $0x10] sm:$0xf] %v3469
        %3535 = vst [vmem:[%s3529 + $0x14] sm:$0xf] %v3470
        %3536 = vst [vmem:[%s3529 + $0x18] sm:$0xf] %v3471
        %3537 = vst [vmem:[%s3529 + $0x1c] sm:$0xf] %v3472
        %3538 = vst [vmem:[%s3529 + $0x20] sm:$0xf] %v3473
        %3539 = vst [vmem:[%s3529 + $0x24] sm:$0xf] %v3474
        %3540 = vst [vmem:[%s3529 + $0x28] sm:$0xf] %v3475
        %3541 = vst [vmem:[%s3529 + $0x2c] sm:$0xf] %v3476
        %3542 = vst [vmem:[%s3529 + $0x30] sm:$0xf] %v3477
        %3543 = vst [vmem:[%s3529 + $0x34] sm:$0xf] %v3478
        %3544 = vst [vmem:[%s3529 + $0x38] sm:$0xf] %v3479
        %3545 = vst [vmem:[%s3529 + $0x3c] sm:$0xf] %v3480
        %3546 = vst [vmem:[%s3529 + $0x40] sm:$0xf] %v3481
        %3547 = vst [vmem:[%s3529 + $0x44] sm:$0xf] %v3482
        %3548 = vst [vmem:[%s3529 + $0x48] sm:$0xf] %v3483
        %3549 = vst [vmem:[%s3529 + $0x4c] sm:$0xf] %v3484
        %3550 = vst [vmem:[%s3529 + $0x50] sm:$0xf] %v3485
        %3551 = vst [vmem:[%s3529 + $0x54] sm:$0xf] %v3486
        %3552 = vst [vmem:[%s3529 + $0x58] sm:$0xf] %v3487
        %3553 = vst [vmem:[%s3529 + $0x5c] sm:$0xf] %v3488
        %3554 = vst [vmem:[%s3529 + $0x60] sm:$0xf] %v3489
        %3555 = vst [vmem:[%s3529 + $0x64] sm:$0xf] %v3490
        %3556 = vst [vmem:[%s3529 + $0x68] sm:$0xf] %v3491
        %3557 = vst [vmem:[%s3529 + $0x6c] sm:$0xf] %v3492
        %3558 = vst [vmem:[%s3529 + $0x70] sm:$0xf] %v3493
        %3559 = vst [vmem:[%s3529 + $0x74] sm:$0xf] %v3494
        %3560 = vst [vmem:[%s3529 + $0x78] sm:$0xf] %v3495
        %3561 = vst [vmem:[%s3529 + $0x7c] sm:$0xf] %v3496
        %v3562 = vmul.f32 %v1725, %v1725
        %v3563 = vmul.f32 %v1729, %v1729
        %v3564 = vmul.f32 %v1735, %v1735
        %v3565 = vmul.f32 %v1739, %v1739
        %v3566 = vmul.f32 %v1745, %v1745
        %v3567 = vmul.f32 %v1749, %v1749
        %v3568 = vmul.f32 %v1755, %v1755
        %v3569 = vmul.f32 %v1759, %v1759
        %v3570 = vmul.f32 %v1765, %v1765
        %v3571 = vmul.f32 %v1769, %v1769
        %v3572 = vmul.f32 %v1775, %v1775
        %v3573 = vmul.f32 %v1779, %v1779
        %v3574 = vmul.f32 %v1785, %v1785
        %v3575 = vmul.f32 %v1789, %v1789
        %v3576 = vmul.f32 %v1795, %v1795
        %v3577 = vmul.f32 %v1799, %v1799
        %v3578 = vmul.f32 %v1805, %v1805
        %v3579 = vmul.f32 %v1809, %v1809
        %v3580 = vmul.f32 %v1815, %v1815
        %v3581 = vmul.f32 %v1819, %v1819
        %v3582 = vmul.f32 %v1825, %v1825
        %v3583 = vmul.f32 %v1829, %v1829
        %v3584 = vmul.f32 %v1835, %v1835
        %v3585 = vmul.f32 %v1839, %v1839
        %v3586 = vmul.f32 %v1845, %v1845
        %v3587 = vmul.f32 %v1849, %v1849
        %v3588 = vmul.f32 %v1855, %v1855
        %v3589 = vmul.f32 %v1859, %v1859
        %v3590 = vmul.f32 %v1865, %v1865
        %v3591 = vmul.f32 %v1869, %v1869
        %v3592 = vmul.f32 %v1875, %v1875
        %v3593 = vmul.f32 %v1879, %v1879
        %3594 = vadd.xlane.f32.xlu0 %v3562
        %v3595 = vpop.xlane.xlu0 %3594
        %3596 = vadd.xlane.f32.xlu0 %v3563
        %v3597 = vpop.xlane.xlu0 %3596
        %3598 = vadd.xlane.f32.xlu0 %v3564
        %v3599 = vpop.xlane.xlu0 %3598
        %3600 = vadd.xlane.f32.xlu0 %v3565
        %v3601 = vpop.xlane.xlu0 %3600
        %3602 = vadd.xlane.f32.xlu0 %v3566
        %v3603 = vpop.xlane.xlu0 %3602
        %3604 = vadd.xlane.f32.xlu0 %v3567
        %v3605 = vpop.xlane.xlu0 %3604
        %3606 = vadd.xlane.f32.xlu0 %v3568
        %v3607 = vpop.xlane.xlu0 %3606
        %3608 = vadd.xlane.f32.xlu0 %v3569
        %v3609 = vpop.xlane.xlu0 %3608
        %3610 = vadd.xlane.f32.xlu0 %v3570
        %v3611 = vpop.xlane.xlu0 %3610
        %3612 = vadd.xlane.f32.xlu0 %v3571
        %v3613 = vpop.xlane.xlu0 %3612
        %3614 = vadd.xlane.f32.xlu0 %v3572
        %v3615 = vpop.xlane.xlu0 %3614
        %3616 = vadd.xlane.f32.xlu0 %v3573
        %v3617 = vpop.xlane.xlu0 %3616
        %3618 = vadd.xlane.f32.xlu0 %v3574
        %v3619 = vpop.xlane.xlu0 %3618
        %3620 = vadd.xlane.f32.xlu0 %v3575
        %v3621 = vpop.xlane.xlu0 %3620
        %3622 = vadd.xlane.f32.xlu0 %v3576
        %v3623 = vpop.xlane.xlu0 %3622
        %3624 = vadd.xlane.f32.xlu0 %v3577
        %v3625 = vpop.xlane.xlu0 %3624
        %3626 = vadd.xlane.f32.xlu0 %v3578
        %v3627 = vpop.xlane.xlu0 %3626
        %3628 = vadd.xlane.f32.xlu0 %v3579
        %v3629 = vpop.xlane.xlu0 %3628
        %3630 = vadd.xlane.f32.xlu0 %v3580
        %v3631 = vpop.xlane.xlu0 %3630
        %3632 = vadd.xlane.f32.xlu0 %v3581
        %v3633 = vpop.xlane.xlu0 %3632
        %3634 = vadd.xlane.f32.xlu0 %v3582
        %v3635 = vpop.xlane.xlu0 %3634
        %3636 = vadd.xlane.f32.xlu0 %v3583
        %v3637 = vpop.xlane.xlu0 %3636
        %3638 = vadd.xlane.f32.xlu0 %v3584
        %v3639 = vpop.xlane.xlu0 %3638
        %3640 = vadd.xlane.f32.xlu0 %v3585
        %v3641 = vpop.xlane.xlu0 %3640
        %3642 = vadd.xlane.f32.xlu0 %v3586
        %v3643 = vpop.xlane.xlu0 %3642
        %3644 = vadd.xlane.f32.xlu0 %v3587
        %v3645 = vpop.xlane.xlu0 %3644
        %3646 = vadd.xlane.f32.xlu0 %v3588
        %v3647 = vpop.xlane.xlu0 %3646
        %3648 = vadd.xlane.f32.xlu0 %v3589
        %v3649 = vpop.xlane.xlu0 %3648
        %3650 = vadd.xlane.f32.xlu0 %v3590
        %v3651 = vpop.xlane.xlu0 %3650
        %3652 = vadd.xlane.f32.xlu0 %v3591
        %v3653 = vpop.xlane.xlu0 %3652
        %3654 = vadd.xlane.f32.xlu0 %v3592
        %v3655 = vpop.xlane.xlu0 %3654
        %3656 = vadd.xlane.f32.xlu0 %v3593
        %v3657 = vpop.xlane.xlu0 %3656
        %v3658 = vmul.f32 %v3595, %v2172
        %v3659 = vmul.f32 %v3597, %v2172
        %v3660 = vmul.f32 %v3599, %v2172
        %v3661 = vmul.f32 %v3601, %v2172
        %v3662 = vmul.f32 %v3603, %v2172
        %v3663 = vmul.f32 %v3605, %v2172
        %v3664 = vmul.f32 %v3607, %v2172
        %v3665 = vmul.f32 %v3609, %v2172
        %v3666 = vmul.f32 %v3611, %v2172
        %v3667 = vmul.f32 %v3613, %v2172
        %v3668 = vmul.f32 %v3615, %v2172
        %v3669 = vmul.f32 %v3617, %v2172
        %v3670 = vmul.f32 %v3619, %v2172
        %v3671 = vmul.f32 %v3621, %v2172
        %v3672 = vmul.f32 %v3623, %v2172
        %v3673 = vmul.f32 %v3625, %v2172
        %v3674 = vmul.f32 %v3627, %v2172
        %v3675 = vmul.f32 %v3629, %v2172
        %v3676 = vmul.f32 %v3631, %v2172
        %v3677 = vmul.f32 %v3633, %v2172
        %v3678 = vmul.f32 %v3635, %v2172
        %v3679 = vmul.f32 %v3637, %v2172
        %v3680 = vmul.f32 %v3639, %v2172
        %v3681 = vmul.f32 %v3641, %v2172
        %v3682 = vmul.f32 %v3643, %v2172
        %v3683 = vmul.f32 %v3645, %v2172
        %v3684 = vmul.f32 %v3647, %v2172
        %v3685 = vmul.f32 %v3649, %v2172
        %v3686 = vmul.f32 %v3651, %v2172
        %v3687 = vmul.f32 %v3653, %v2172
        %v3688 = vmul.f32 %v3655, %v2172
        %v3689 = vmul.f32 %v3657, %v2172
        %v3690 = vadd.f32 %v3658, 1e-06
        %v3691 = vadd.f32 %v3659, 1e-06
        %v3692 = vadd.f32 %v3660, 1e-06
        %v3693 = vadd.f32 %v3661, 1e-06
        %v3694 = vadd.f32 %v3662, 1e-06
        %v3695 = vadd.f32 %v3663, 1e-06
        %v3696 = vadd.f32 %v3664, 1e-06
        %v3697 = vadd.f32 %v3665, 1e-06
        %v3698 = vadd.f32 %v3666, 1e-06
        %v3699 = vadd.f32 %v3667, 1e-06
        %v3700 = vadd.f32 %v3668, 1e-06
        %v3701 = vadd.f32 %v3669, 1e-06
        %v3702 = vadd.f32 %v3670, 1e-06
        %v3703 = vadd.f32 %v3671, 1e-06
        %v3704 = vadd.f32 %v3672, 1e-06
        %v3705 = vadd.f32 %v3673, 1e-06
        %v3706 = vadd.f32 %v3674, 1e-06
        %v3707 = vadd.f32 %v3675, 1e-06
        %v3708 = vadd.f32 %v3676, 1e-06
        %v3709 = vadd.f32 %v3677, 1e-06
        %v3710 = vadd.f32 %v3678, 1e-06
        %v3711 = vadd.f32 %v3679, 1e-06
        %v3712 = vadd.f32 %v3680, 1e-06
        %v3713 = vadd.f32 %v3681, 1e-06
        %v3714 = vadd.f32 %v3682, 1e-06
        %v3715 = vadd.f32 %v3683, 1e-06
        %v3716 = vadd.f32 %v3684, 1e-06
        %v3717 = vadd.f32 %v3685, 1e-06
        %v3718 = vadd.f32 %v3686, 1e-06
        %v3719 = vadd.f32 %v3687, 1e-06
        %v3720 = vadd.f32 %v3688, 1e-06
        %v3721 = vadd.f32 %v3689, 1e-06
        %v3722 = vrsqrt.pop %v3690
        %v3723 = vrsqrt.pop %v3691
        %v3724 = vrsqrt.pop %v3692
        %v3725 = vrsqrt.pop %v3693
        %v3726 = vrsqrt.pop %v3694
        %v3727 = vrsqrt.pop %v3695
        %v3728 = vrsqrt.pop %v3696
        %v3729 = vrsqrt.pop %v3697
        %v3730 = vrsqrt.pop %v3698
        %v3731 = vrsqrt.pop %v3699
        %v3732 = vrsqrt.pop %v3700
        %v3733 = vrsqrt.pop %v3701
        %v3734 = vrsqrt.pop %v3702
        %v3735 = vrsqrt.pop %v3703
        %v3736 = vrsqrt.pop %v3704
        %v3737 = vrsqrt.pop %v3705
        %v3738 = vrsqrt.pop %v3706
        %v3739 = vrsqrt.pop %v3707
        %v3740 = vrsqrt.pop %v3708
        %v3741 = vrsqrt.pop %v3709
        %v3742 = vrsqrt.pop %v3710
        %v3743 = vrsqrt.pop %v3711
        %v3744 = vrsqrt.pop %v3712
        %v3745 = vrsqrt.pop %v3713
        %v3746 = vrsqrt.pop %v3714
        %v3747 = vrsqrt.pop %v3715
        %v3748 = vrsqrt.pop %v3716
        %v3749 = vrsqrt.pop %v3717
        %v3750 = vrsqrt.pop %v3718
        %v3751 = vrsqrt.pop %v3719
        %v3752 = vrsqrt.pop %v3720
        %v3753 = vrsqrt.pop %v3721
        %v3754 = vmul.f32 %v1725, %v3722
        %v3755 = vmul.f32 %v1729, %v3723
        %v3756 = vmul.f32 %v1735, %v3724
        %v3757 = vmul.f32 %v1739, %v3725
        %v3758 = vmul.f32 %v1745, %v3726
        %v3759 = vmul.f32 %v1749, %v3727
        %v3760 = vmul.f32 %v1755, %v3728
        %v3761 = vmul.f32 %v1759, %v3729
        %v3762 = vmul.f32 %v1765, %v3730
        %v3763 = vmul.f32 %v1769, %v3731
        %v3764 = vmul.f32 %v1775, %v3732
        %v3765 = vmul.f32 %v1779, %v3733
        %v3766 = vmul.f32 %v1785, %v3734
        %v3767 = vmul.f32 %v1789, %v3735
        %v3768 = vmul.f32 %v1795, %v3736
        %v3769 = vmul.f32 %v1799, %v3737
        %v3770 = vmul.f32 %v1805, %v3738
        %v3771 = vmul.f32 %v1809, %v3739
        %v3772 = vmul.f32 %v1815, %v3740
        %v3773 = vmul.f32 %v1819, %v3741
        %v3774 = vmul.f32 %v1825, %v3742
        %v3775 = vmul.f32 %v1829, %v3743
        %v3776 = vmul.f32 %v1835, %v3744
        %v3777 = vmul.f32 %v1839, %v3745
        %v3778 = vmul.f32 %v1845, %v3746
        %v3779 = vmul.f32 %v1849, %v3747
        %v3780 = vmul.f32 %v1855, %v3748
        %v3781 = vmul.f32 %v1859, %v3749
        %v3782 = vmul.f32 %v1865, %v3750
        %v3783 = vmul.f32 %v1869, %v3751
        %v3784 = vmul.f32 %v1875, %v3752
        %v3785 = vmul.f32 %v1879, %v3753
        %v3786 = vmul.f32 %v3754, %v2759
        %v3787 = vmul.f32 %v3755, %v2759
        %v3788 = vmul.f32 %v3756, %v2759
        %v3789 = vmul.f32 %v3757, %v2759
        %v3790 = vmul.f32 %v3758, %v2759
        %v3791 = vmul.f32 %v3759, %v2759
        %v3792 = vmul.f32 %v3760, %v2759
        %v3793 = vmul.f32 %v3761, %v2759
        %v3794 = vmul.f32 %v3762, %v2759
        %v3795 = vmul.f32 %v3763, %v2759
        %v3796 = vmul.f32 %v3764, %v2759
        %v3797 = vmul.f32 %v3765, %v2759
        %v3798 = vmul.f32 %v3766, %v2759
        %v3799 = vmul.f32 %v3767, %v2759
        %v3800 = vmul.f32 %v3768, %v2759
        %v3801 = vmul.f32 %v3769, %v2759
        %v3802 = vmul.f32 %v3770, %v2759
        %v3803 = vmul.f32 %v3771, %v2759
        %v3804 = vmul.f32 %v3772, %v2759
        %v3805 = vmul.f32 %v3773, %v2759
        %v3806 = vmul.f32 %v3774, %v2759
        %v3807 = vmul.f32 %v3775, %v2759
        %v3808 = vmul.f32 %v3776, %v2759
        %v3809 = vmul.f32 %v3777, %v2759
        %v3810 = vmul.f32 %v3778, %v2759
        %v3811 = vmul.f32 %v3779, %v2759
        %v3812 = vmul.f32 %v3780, %v2759
        %v3813 = vmul.f32 %v3781, %v2759
        %v3814 = vmul.f32 %v3782, %v2759
        %v3815 = vmul.f32 %v3783, %v2759
        %v3816 = vmul.f32 %v3784, %v2759
        %v3817 = vmul.f32 %v3785, %v2759
        %v3818 = vpack.c.bf16 %v3787, %v3786
        %v3819 = vpack.c.bf16 %v3789, %v3788
        %v3820 = vpack.c.bf16 %v3791, %v3790
        %v3821 = vpack.c.bf16 %v3793, %v3792
        %v3822 = vpack.c.bf16 %v3795, %v3794
        %v3823 = vpack.c.bf16 %v3797, %v3796
        %v3824 = vpack.c.bf16 %v3799, %v3798
        %v3825 = vpack.c.bf16 %v3801, %v3800
        %v3826 = vpack.c.bf16 %v3803, %v3802
        %v3827 = vpack.c.bf16 %v3805, %v3804
        %v3828 = vpack.c.bf16 %v3807, %v3806
        %v3829 = vpack.c.bf16 %v3809, %v3808
        %v3830 = vpack.c.bf16 %v3811, %v3810
        %v3831 = vpack.c.bf16 %v3813, %v3812
        %v3832 = vpack.c.bf16 %v3815, %v3814
        %v3833 = vpack.c.bf16 %v3817, %v3816
        %v3850 = vunpack.c.l.b16 %v3818
        %v3851 = vunpack.c.h.b16 %v3818
        %v3852 = vunpack.c.l.b16 %v3819
        %v3853 = vunpack.c.h.b16 %v3819
        %v3854 = vunpack.c.l.b16 %v3820
        %v3855 = vunpack.c.h.b16 %v3820
        %v3856 = vunpack.c.l.b16 %v3821
        %v3857 = vunpack.c.h.b16 %v3821
        %v3858 = vunpack.c.l.b16 %v3822
        %v3859 = vunpack.c.h.b16 %v3822
        %v3860 = vunpack.c.l.b16 %v3823
        %v3861 = vunpack.c.h.b16 %v3823
        %v3862 = vunpack.c.l.b16 %v3824
        %v3863 = vunpack.c.h.b16 %v3824
        %v3864 = vunpack.c.l.b16 %v3825
        %v3865 = vunpack.c.h.b16 %v3825
        %v3866 = vunpack.c.l.b16 %v3826
        %v3867 = vunpack.c.h.b16 %v3826
        %v3868 = vunpack.c.l.b16 %v3827
        %v3869 = vunpack.c.h.b16 %v3827
        %v3870 = vunpack.c.l.b16 %v3828
        %v3871 = vunpack.c.h.b16 %v3828
        %v3872 = vunpack.c.l.b16 %v3829
        %v3873 = vunpack.c.h.b16 %v3829
        %v3874 = vunpack.c.l.b16 %v3830
        %v3875 = vunpack.c.h.b16 %v3830
        %v3876 = vunpack.c.l.b16 %v3831
        %v3877 = vunpack.c.h.b16 %v3831
        %v3878 = vunpack.c.l.b16 %v3832
        %v3879 = vunpack.c.h.b16 %v3832
        %v3880 = vunpack.c.l.b16 %v3833
        %v3881 = vunpack.c.h.b16 %v3833
        %v3882 = vpack.c.b16 %v3850, %v3850
        %v3883 = vpack.c.b16 %v3851, %v3851
        %v3884 = vpack.c.b16 %v3852, %v3852
        %v3885 = vpack.c.b16 %v3853, %v3853
        %v3886 = vpack.c.b16 %v3854, %v3854
        %v3887 = vpack.c.b16 %v3855, %v3855
        %v3888 = vpack.c.b16 %v3856, %v3856
        %v3889 = vpack.c.b16 %v3857, %v3857
        %v3890 = vpack.c.b16 %v3858, %v3858
        %v3891 = vpack.c.b16 %v3859, %v3859
        %v3892 = vpack.c.b16 %v3860, %v3860
        %v3893 = vpack.c.b16 %v3861, %v3861
        %v3894 = vpack.c.b16 %v3862, %v3862
        %v3895 = vpack.c.b16 %v3863, %v3863
        %v3896 = vpack.c.b16 %v3864, %v3864
        %v3897 = vpack.c.b16 %v3865, %v3865
        %v3898 = vpack.c.b16 %v3866, %v3866
        %v3899 = vpack.c.b16 %v3867, %v3867
        %v3900 = vpack.c.b16 %v3868, %v3868
        %v3901 = vpack.c.b16 %v3869, %v3869
        %v3902 = vpack.c.b16 %v3870, %v3870
        %v3903 = vpack.c.b16 %v3871, %v3871
        %v3904 = vpack.c.b16 %v3872, %v3872
        %v3905 = vpack.c.b16 %v3873, %v3873
        %v3906 = vpack.c.b16 %v3874, %v3874
        %v3907 = vpack.c.b16 %v3875, %v3875
        %v3908 = vpack.c.b16 %v3876, %v3876
        %v3909 = vpack.c.b16 %v3877, %v3877
        %v3910 = vpack.c.b16 %v3878, %v3878
        %v3911 = vpack.c.b16 %v3879, %v3879
        %v3912 = vpack.c.b16 %v3880, %v3880
        %v3913 = vpack.c.b16 %v3881, %v3881
        %s3946 = scalar_lea.vmem %s382, 128 [#allocation12]
        %3947 = vst [vmem:[%s3946] sm:$0xf] %v3882
        %3948 = vst [vmem:[%s3946 + $0x4] sm:$0xf] %v3883
        %3949 = vst [vmem:[%s3946 + $0x8] sm:$0xf] %v3884
        %3950 = vst [vmem:[%s3946 + $0xc] sm:$0xf] %v3885
        %3951 = vst [vmem:[%s3946 + $0x10] sm:$0xf] %v3886
        %3952 = vst [vmem:[%s3946 + $0x14] sm:$0xf] %v3887
        %3953 = vst [vmem:[%s3946 + $0x18] sm:$0xf] %v3888
        %3954 = vst [vmem:[%s3946 + $0x1c] sm:$0xf] %v3889
        %3955 = vst [vmem:[%s3946 + $0x20] sm:$0xf] %v3890
        %3956 = vst [vmem:[%s3946 + $0x24] sm:$0xf] %v3891
        %3957 = vst [vmem:[%s3946 + $0x28] sm:$0xf] %v3892
        %3958 = vst [vmem:[%s3946 + $0x2c] sm:$0xf] %v3893
        %3959 = vst [vmem:[%s3946 + $0x30] sm:$0xf] %v3894
        %3960 = vst [vmem:[%s3946 + $0x34] sm:$0xf] %v3895
        %3961 = vst [vmem:[%s3946 + $0x38] sm:$0xf] %v3896
        %3962 = vst [vmem:[%s3946 + $0x3c] sm:$0xf] %v3897
        %3963 = vst [vmem:[%s3946 + $0x40] sm:$0xf] %v3898
        %3964 = vst [vmem:[%s3946 + $0x44] sm:$0xf] %v3899
        %3965 = vst [vmem:[%s3946 + $0x48] sm:$0xf] %v3900
        %3966 = vst [vmem:[%s3946 + $0x4c] sm:$0xf] %v3901
        %3967 = vst [vmem:[%s3946 + $0x50] sm:$0xf] %v3902
        %3968 = vst [vmem:[%s3946 + $0x54] sm:$0xf] %v3903
        %3969 = vst [vmem:[%s3946 + $0x58] sm:$0xf] %v3904
        %3970 = vst [vmem:[%s3946 + $0x5c] sm:$0xf] %v3905
        %3971 = vst [vmem:[%s3946 + $0x60] sm:$0xf] %v3906
        %3972 = vst [vmem:[%s3946 + $0x64] sm:$0xf] %v3907
        %3973 = vst [vmem:[%s3946 + $0x68] sm:$0xf] %v3908
        %3974 = vst [vmem:[%s3946 + $0x6c] sm:$0xf] %v3909
        %3975 = vst [vmem:[%s3946 + $0x70] sm:$0xf] %v3910
        %3976 = vst [vmem:[%s3946 + $0x74] sm:$0xf] %v3911
        %3977 = vst [vmem:[%s3946 + $0x78] sm:$0xf] %v3912
        %3978 = vst [vmem:[%s3946 + $0x7c] sm:$0xf] %v3913
        %v3979 = vpack.c.bf16 %v1922, %v1918
        %v3980 = vpack.c.bf16 %v1932, %v1928
        %v3981 = vpack.c.bf16 %v1942, %v1938
        %v3982 = vpack.c.bf16 %v1952, %v1948
        %v3983 = vpack.c.bf16 %v1962, %v1958
        %v3984 = vpack.c.bf16 %v1972, %v1968
        %v3985 = vpack.c.bf16 %v1982, %v1978
        %v3986 = vpack.c.bf16 %v1992, %v1988
        %v3987 = vpack.c.bf16 %v2002, %v1998
        %v3988 = vpack.c.bf16 %v2012, %v2008
        %v3989 = vpack.c.bf16 %v2022, %v2018
        %v3990 = vpack.c.bf16 %v2032, %v2028
        %v3991 = vpack.c.bf16 %v2042, %v2038
        %v3992 = vpack.c.bf16 %v2052, %v2048
        %v3993 = vpack.c.bf16 %v2062, %v2058
        %v3994 = vpack.c.bf16 %v2072, %v2068
        %v4011 = vunpack.c.l.b16 %v3979
        %v4012 = vunpack.c.h.b16 %v3979
        %v4013 = vunpack.c.l.b16 %v3980
        %v4014 = vunpack.c.h.b16 %v3980
        %v4015 = vunpack.c.l.b16 %v3981
        %v4016 = vunpack.c.h.b16 %v3981
        %v4017 = vunpack.c.l.b16 %v3982
        %v4018 = vunpack.c.h.b16 %v3982
        %v4019 = vunpack.c.l.b16 %v3983
        %v4020 = vunpack.c.h.b16 %v3983
        %v4021 = vunpack.c.l.b16 %v3984
        %v4022 = vunpack.c.h.b16 %v3984
        %v4023 = vunpack.c.l.b16 %v3985
        %v4024 = vunpack.c.h.b16 %v3985
        %v4025 = vunpack.c.l.b16 %v3986
        %v4026 = vunpack.c.h.b16 %v3986
        %v4027 = vunpack.c.l.b16 %v3987
        %v4028 = vunpack.c.h.b16 %v3987
        %v4029 = vunpack.c.l.b16 %v3988
        %v4030 = vunpack.c.h.b16 %v3988
        %v4031 = vunpack.c.l.b16 %v3989
        %v4032 = vunpack.c.h.b16 %v3989
        %v4033 = vunpack.c.l.b16 %v3990
        %v4034 = vunpack.c.h.b16 %v3990
        %v4035 = vunpack.c.l.b16 %v3991
        %v4036 = vunpack.c.h.b16 %v3991
        %v4037 = vunpack.c.l.b16 %v3992
        %v4038 = vunpack.c.h.b16 %v3992
        %v4039 = vunpack.c.l.b16 %v3993
        %v4040 = vunpack.c.h.b16 %v3993
        %v4041 = vunpack.c.l.b16 %v3994
        %v4042 = vunpack.c.h.b16 %v3994
        %v4043 = vpack.c.b16 %v4011, %v4011
        %v4044 = vpack.c.b16 %v4012, %v4012
        %v4045 = vpack.c.b16 %v4013, %v4013
        %v4046 = vpack.c.b16 %v4014, %v4014
        %v4047 = vpack.c.b16 %v4015, %v4015
        %v4048 = vpack.c.b16 %v4016, %v4016
        %v4049 = vpack.c.b16 %v4017, %v4017
        %v4050 = vpack.c.b16 %v4018, %v4018
        %v4051 = vpack.c.b16 %v4019, %v4019
        %v4052 = vpack.c.b16 %v4020, %v4020
        %v4053 = vpack.c.b16 %v4021, %v4021
        %v4054 = vpack.c.b16 %v4022, %v4022
        %v4055 = vpack.c.b16 %v4023, %v4023
        %v4056 = vpack.c.b16 %v4024, %v4024
        %v4057 = vpack.c.b16 %v4025, %v4025
        %v4058 = vpack.c.b16 %v4026, %v4026
        %v4059 = vpack.c.b16 %v4027, %v4027
        %v4060 = vpack.c.b16 %v4028, %v4028
        %v4061 = vpack.c.b16 %v4029, %v4029
        %v4062 = vpack.c.b16 %v4030, %v4030
        %v4063 = vpack.c.b16 %v4031, %v4031
        %v4064 = vpack.c.b16 %v4032, %v4032
        %v4065 = vpack.c.b16 %v4033, %v4033
        %v4066 = vpack.c.b16 %v4034, %v4034
        %v4067 = vpack.c.b16 %v4035, %v4035
        %v4068 = vpack.c.b16 %v4036, %v4036
        %v4069 = vpack.c.b16 %v4037, %v4037
        %v4070 = vpack.c.b16 %v4038, %v4038
        %v4071 = vpack.c.b16 %v4039, %v4039
        %v4072 = vpack.c.b16 %v4040, %v4040
        %v4073 = vpack.c.b16 %v4041, %v4041
        %v4074 = vpack.c.b16 %v4042, %v4042
        %s4107 = scalar_lea.vmem %s389, 128 [#allocation14]
        %4108 = vst [vmem:[%s4107] sm:$0xf] %v4043
        %4109 = vst [vmem:[%s4107 + $0x4] sm:$0xf] %v4044
        %4110 = vst [vmem:[%s4107 + $0x8] sm:$0xf] %v4045
        %4111 = vst [vmem:[%s4107 + $0xc] sm:$0xf] %v4046
        %4112 = vst [vmem:[%s4107 + $0x10] sm:$0xf] %v4047
        %4113 = vst [vmem:[%s4107 + $0x14] sm:$0xf] %v4048
        %4114 = vst [vmem:[%s4107 + $0x18] sm:$0xf] %v4049
        %4115 = vst [vmem:[%s4107 + $0x1c] sm:$0xf] %v4050
        %4116 = vst [vmem:[%s4107 + $0x20] sm:$0xf] %v4051
        %4117 = vst [vmem:[%s4107 + $0x24] sm:$0xf] %v4052
        %4118 = vst [vmem:[%s4107 + $0x28] sm:$0xf] %v4053
        %4119 = vst [vmem:[%s4107 + $0x2c] sm:$0xf] %v4054
        %4120 = vst [vmem:[%s4107 + $0x30] sm:$0xf] %v4055
        %4121 = vst [vmem:[%s4107 + $0x34] sm:$0xf] %v4056
        %4122 = vst [vmem:[%s4107 + $0x38] sm:$0xf] %v4057
        %4123 = vst [vmem:[%s4107 + $0x3c] sm:$0xf] %v4058
        %4124 = vst [vmem:[%s4107 + $0x40] sm:$0xf] %v4059
        %4125 = vst [vmem:[%s4107 + $0x44] sm:$0xf] %v4060
        %4126 = vst [vmem:[%s4107 + $0x48] sm:$0xf] %v4061
        %4127 = vst [vmem:[%s4107 + $0x4c] sm:$0xf] %v4062
        %4128 = vst [vmem:[%s4107 + $0x50] sm:$0xf] %v4063
        %4129 = vst [vmem:[%s4107 + $0x54] sm:$0xf] %v4064
        %4130 = vst [vmem:[%s4107 + $0x58] sm:$0xf] %v4065
        %4131 = vst [vmem:[%s4107 + $0x5c] sm:$0xf] %v4066
        %4132 = vst [vmem:[%s4107 + $0x60] sm:$0xf] %v4067
        %4133 = vst [vmem:[%s4107 + $0x64] sm:$0xf] %v4068
        %4134 = vst [vmem:[%s4107 + $0x68] sm:$0xf] %v4069
        %4135 = vst [vmem:[%s4107 + $0x6c] sm:$0xf] %v4070
        %4136 = vst [vmem:[%s4107 + $0x70] sm:$0xf] %v4071
        %4137 = vst [vmem:[%s4107 + $0x74] sm:$0xf] %v4072
        %4138 = vst [vmem:[%s4107 + $0x78] sm:$0xf] %v4073
        %4139 = vst [vmem:[%s4107 + $0x7c] sm:$0xf] %v4074
        %s4140 = sand.u32 %s164, 1
        %s4141 = scalar_lea.sflag [#allocation4], %s4140
        %s4142 = sand.u32 %s164, 1
        %s4143 = smul.addr %s4142, 256
        %s4144 = scalar_lea.vmem [#allocation11], %s4143
        %s4145 = sand.u32 %s30, 1
        %s4146 = scalar_lea.sflag [#allocation13], %s4145
        %s4147 = sand.u32 %s192, 1
        %s4148 = smul.addr %s4147, 256
        %s4149 = scalar_lea.vmem [#allocation12], %s4148
        %s4150 = sand.u32 %s30, 1
        %s4151 = scalar_lea.sflag [#allocation13], %s4150
        %s4152 = sand.u32 %s220, 1
        %s4153 = smul.addr %s4152, 256
        %s4154 = scalar_lea.vmem [#allocation14], %s4153
        // Predicated region
        $region61: #{tpu_custom_call.1} parent=39 // pred_check
          %p4155 = pneg %p174
        $region62: #{tpu_custom_call.1} parent=39 // pred_check_branch
          %4157 = sbr.rel (%p4155) target = $region64
        $region63: #{tpu_custom_call.1} parent=39 // pred_region
          %s4158 = smul.u32 32, %s35
          %s4160 = ssub.s32 4096, 4096
          %4161 = vsyncadd %s4141, %s4160
          %s4162 = smul.addr %s34, 64
          %s4163 = sadd.s32 %s4158, %s4162
          %s4164 = smul.addr %s4163, 64
          %s4165 = scalar_lea.hbm %s5, %s4164
          %s4166 = sshll.u32 %s4144, 4
          %s4167 = int_to_ptr.vmem [resolvable:$true] %s4166
          %4172 = dma.vmem_to_hbm [thread:$0]  %s4167, 4096, %s4165, %s4141, 64, 64, 4
        $region64: #{tpu_custom_call.1} parent=39 // pred_fallthru
          _
        // Predicated region
        $region65: #{tpu_custom_call.1} parent=39 // pred_check
          %p4173 = pneg %p202
        $region66: #{tpu_custom_call.1} parent=39 // pred_check_branch
          %4175 = sbr.rel (%p4173) target = $region68
        $region67: #{tpu_custom_call.1} parent=39 // pred_region
          %s4176 = smul.u32 32, %s35
          %s4178 = ssub.s32 4096, 4096
          %4179 = vsyncadd %s4146, %s4178
          %s4180 = smul.addr %s34, 64
          %s4181 = sadd.s32 %s4176, %s4180
          %s4182 = smul.addr %s4181, 64
          %s4183 = scalar_lea.hbm %s6, %s4182
          %s4184 = sshll.u32 %s4149, 4
          %s4185 = int_to_ptr.vmem [resolvable:$true] %s4184
          %4190 = dma.vmem_to_hbm [thread:$0]  %s4185, 4096, %s4183, %s4146, 64, 64, 4
        $region68: #{tpu_custom_call.1} parent=39 // pred_fallthru
          _
        // Predicated region
        $region69: #{tpu_custom_call.1} parent=39 // pred_check
          %p4191 = pneg %p230
        $region70: #{tpu_custom_call.1} parent=39 // pred_check_branch
          %4193 = sbr.rel (%p4191) target = $region72
        $region71: #{tpu_custom_call.1} parent=39 // pred_region
          %s4194 = smul.u32 32, %s35
          %s4196 = ssub.s32 4096, 4096
          %4197 = vsyncadd %s4151, %s4196
          %s4198 = smul.addr %s34, 64
          %s4199 = sadd.s32 %s4194, %s4198
          %s4200 = smul.addr %s4199, 64
          %s4201 = scalar_lea.hbm %s7, %s4200
          %s4202 = sshll.u32 %s4154, 4
          %s4203 = int_to_ptr.vmem [resolvable:$true] %s4202
          %4208 = dma.vmem_to_hbm [thread:$0]  %s4203, 4096, %s4201, %s4151, 64, 64, 4
        $region72: #{tpu_custom_call.1} parent=39 // pred_fallthru
          _
      $region40: #{tpu_custom_call.1} parent=5 // pred_fallthru
        _
      %p4209 = scmp.le.s32.totalorder 2, %s25
      // Predicated region
      $region73: #{tpu_custom_call.1} parent=5 // pred_check
        %p4210 = pneg %p4209
      $region74: #{tpu_custom_call.1} parent=5 // pred_check_branch
        %4212 = sbr.rel (%p4210) target = $region76
      $region75: #{tpu_custom_call.1} parent=5 // pred_region
        %s4213 = ssub.s32 %s25, 2
        // Predicated region
        $region77: #{tpu_custom_call.1} parent=75 // pred_check
          %p4214 = pneg %p180
        $region78: #{tpu_custom_call.1} parent=75 // pred_check_branch
          %4216 = sbr.rel (%p4214) target = $region80
        $region79: #{tpu_custom_call.1} parent=75 // pred_region
          %s4217 = sand.u32 %s165, 1
          %s4218 = scalar_lea.sflag [#allocation4], %s4217
          %s4219 = sand.u32 %s165, 1
          %s4220 = smul.addr %s4219, 256
          %s4221 = scalar_lea.vmem [#allocation11], %s4220
          %4222 = dma.done %s4218, 4096
        $region80: #{tpu_custom_call.1} parent=75 // pred_fallthru
          _
        // Predicated region
        $region81: #{tpu_custom_call.1} parent=75 // pred_check
          %p4223 = pneg %p208
        $region82: #{tpu_custom_call.1} parent=75 // pred_check_branch
          %4225 = sbr.rel (%p4223) target = $region84
        $region83: #{tpu_custom_call.1} parent=75 // pred_region
          %s4226 = sand.u32 %s31, 1
          %s4227 = scalar_lea.sflag [#allocation13], %s4226
          %s4228 = sand.u32 %s193, 1
          %s4229 = smul.addr %s4228, 256
          %s4230 = scalar_lea.vmem [#allocation12], %s4229
          %4231 = dma.done %s4227, 4096
        $region84: #{tpu_custom_call.1} parent=75 // pred_fallthru
          _
        // Predicated region
        $region85: #{tpu_custom_call.1} parent=75 // pred_check
          %p4232 = pneg %p236
        $region86: #{tpu_custom_call.1} parent=75 // pred_check_branch
          %4234 = sbr.rel (%p4232) target = $region88
        $region87: #{tpu_custom_call.1} parent=75 // pred_region
          %s4235 = sand.u32 %s31, 1
          %s4236 = scalar_lea.sflag [#allocation13], %s4235
          %s4237 = sand.u32 %s221, 1
          %s4238 = smul.addr %s4237, 256
          %s4239 = scalar_lea.vmem [#allocation14], %s4238
          %4240 = dma.done %s4236, 4096
        $region88: #{tpu_custom_call.1} parent=75 // pred_fallthru
          _
      $region76: #{tpu_custom_call.1} parent=5 // pred_fallthru
        _
    $region6: #{tpu_custom_call.1} parent=1 // loop_footer
      %s29 = sadd.s32 1, %s25
    $region7: #{tpu_custom_call.1} parent=1 // loop_footer_branch
      %24 = sbr.rel target = $region3
    $region8: #{tpu_custom_call.1} parent=1 // loop_exit
      _
    %4241 = vsyncpa [#allocation3], 1
    %s4242 = scalar_lea.sflag [#allocation3], 1
    %4243 = vsyncpa %s4242, 1
    %4244 = vsyncpa [#allocation6], 1
    %4245 = vsyncpa [#allocation9], 1
    %4246 = vsyncpa [#allocation4], 1
    %s4247 = scalar_lea.sflag [#allocation4], 1
    %4248 = vsyncpa %s4247, 1
    %4249 = vsyncpa [#allocation13], 1
    %s4250 = scalar_lea.sflag [#allocation13], 1
    %4251 = vsyncpa %s4250, 1

</llo_original>
